<compile_context>
chip_gen: v5e
topology: v5e:2x2
jax: 0.10.0
libtpu: 0.0.40
codegen_flags: <defaults>
</compile_context>

<pallas_src>
import functools
import math

import jax
import jax.numpy as jnp
from jax.experimental import pallas as pl
from jax.experimental.pallas import tpu as pltpu

REARRANGE_INDICES = [14, 0, 1, 2, 3, 4, 5, 6, 7, 8, 9, 10, 11, 12, 13]
N_CLASSES = len(REARRANGE_INDICES)
LN_EPS = 1e-5
LSTM_UNROLL = 4


# ----------------------------------------------------------------------------
# small helpers
# ----------------------------------------------------------------------------
def _ln(x, g, b, eps):
    mu = jnp.mean(x, axis=-1, keepdims=True)
    xc = x - mu
    var = jnp.mean(xc * xc, axis=-1, keepdims=True)
    return xc * jax.lax.rsqrt(var + eps) * g + b


def _full_spec(arr):
    nd = arr.ndim
    return pl.BlockSpec(arr.shape, lambda i, nd=nd: (0,) * nd)


# ----------------------------------------------------------------------------
# Kernel 1: fused transformer-encoder block, block-diagonal attention
# ----------------------------------------------------------------------------
def _backbone_kernel(scale, eps,
                     h_ref, mb_ref,
                     wqkv_ref, bqkv_ref, wo_ref, bo_ref, ln1g_ref, ln1b_ref,
                     w1_ref, b1_ref, w2_ref, b2_ref, ln2g_ref, ln2b_ref,
                     o_ref):
    TB, W, D = h_ref.shape
    R = TB * W                                        # 128 rows per block
    hf = h_ref[...].reshape(R, D)                     # bf16 activations

    # fused QKV: one (R, D) @ (D, 3D) bf16 matmul, f32 accumulate
    qkv = jnp.dot(hf, wqkv_ref[...],
                  preferred_element_type=jnp.float32) + bqkv_ref[...]
    q = qkv[:, 0 * D:1 * D]
    k = qkv[:, 1 * D:2 * D]
    v = qkv[:, 2 * D:3 * D]

    # block-diagonal attention: one dense lane-full (R, R) score matmul; the
    # additive mask carries both the window structure and key padding.
    s = jnp.einsum("md,nd->mn", q.astype(jnp.bfloat16), k.astype(jnp.bfloat16),
                   preferred_element_type=jnp.float32) * scale + mb_ref[...]
    s = s - jnp.max(s, axis=-1, keepdims=True)
    p = jnp.exp(s)
    p = p * pl.reciprocal(jnp.sum(p, axis=-1, keepdims=True), approx=True)
    a = jnp.dot(p.astype(jnp.bfloat16), v.astype(jnp.bfloat16),
                preferred_element_type=jnp.float32)

    # output projection + residual + LN1 (f32 statistics)
    a = jnp.dot(a.astype(jnp.bfloat16), wo_ref[...],
                preferred_element_type=jnp.float32) + bo_ref[...]
    h1 = _ln(hf.astype(jnp.float32) + a, ln1g_ref[...], ln1b_ref[...], eps)

    # FFN (w1 -> gelu -> w2) + residual + LN2, all VMEM resident
    f = jax.nn.gelu(jnp.dot(h1.astype(jnp.bfloat16), w1_ref[...],
                            preferred_element_type=jnp.float32) + b1_ref[...])
    f = jnp.dot(f.astype(jnp.bfloat16), w2_ref[...],
                preferred_element_type=jnp.float32) + b2_ref[...]
    h2 = _ln(h1 + f, ln2g_ref[...], ln2b_ref[...], eps)

    o_ref[...] = h2.reshape(TB, W, D).astype(o_ref.dtype)


def backbone(params, ids, mask):
    # TODO(synk): real module loads a pretrained HF AutoModel; stood in by a
    # deterministic single-layer post-LN transformer encoder.
    BW, W = ids.shape
    D = params["emb"].shape[1]

    TB = max(1, 128 // W)                       # windows per block (lane-dense)
    NB = max(2, -(-BW // TB))                   # >= 2 grid steps (v7x megacore)
    BWp = NB * TB
    if BWp > BW:                                # pad with dummy windows
        ids = jnp.concatenate(
            [ids, jnp.zeros((BWp - BW, W), ids.dtype)], axis=0)
        mask = jnp.concatenate(
            [mask, jnp.ones((BWp - BW, W), mask.dtype)], axis=0)

    # embedding gather + positional add stay in plain JAX glue; bf16 activations
    h = (params["emb"][ids] + params["pos"][:W][None, :, :]).astype(jnp.bfloat16)

    # combined block-diagonal / key-padding additive mask, one (R,R) per block
    R = TB * W
    row_win = jnp.arange(R, dtype=jnp.int32) // W
    same_win = row_win[:, None] == row_win[None, :]                    # (R, R)
    key_valid = (mask.reshape(NB, R) > 0)                              # (NB, R)
    allowed = jnp.logical_and(same_win[None, :, :], key_valid[:, None, :])
    mask_bias = jnp.where(allowed, 0.0, -1e9).astype(jnp.float32)
    mask_bias = mask_bias.reshape(NB * R, R)

    weights = [params["wqkv"], params["bqkv"], params["wo"], params["bo"],
               params["ln1_g"], params["ln1_b"], params["w1"], params["b1"],
               params["w2"], params["b2"], params["ln2_g"], params["ln2_b"]]

    out = pl.pallas_call(
        functools.partial(_backbone_kernel, 1.0 / math.sqrt(D), LN_EPS),
        out_shape=jax.ShapeDtypeStruct((BWp, W, D), jnp.bfloat16),
        grid=(NB,),
        in_specs=[pl.BlockSpec((TB, W, D), lambda i: (i, 0, 0)),
                  pl.BlockSpec((R, R), lambda i: (i, 0))]
                 + [_full_spec(w) for w in weights],
        out_specs=pl.BlockSpec((TB, W, D), lambda i: (i, 0, 0)),
        compiler_params=pltpu.CompilerParams(dimension_semantics=("parallel",)),
    )(h, mask_bias, *weights)
    return out[:BW]


# ----------------------------------------------------------------------------
# Kernel 2: fused LSTM path — gate projection -> recurrence -> LN/FFN/head
# ----------------------------------------------------------------------------
def _lstm_head_kernel(B, H, unroll, eps,
                      x_ref, wih_ref, bih_ref, whh_ref,
                      g1_ref, b1_ref, l1w_ref, l1b_ref,
                      l2w_ref, l2b_ref, g2_ref, b2_ref,
                      hw_ref, hb_ref,
                      o_ref, gx_ref, hs_ref):
    # TODO(synk): exact ResidualLSTM definition is external; stood in by
    # (folded) projection -> single-layer LSTM -> LN -> FFN -> residual -> LN.
    M = x_ref.shape[0]                     # Tp * B  (time-major flattened)
    xf = x_ref[...]                        # (M, D) bf16

    # folded (downsample ∘ input-proj) gate projection: one bf16 MXU matmul
    gx_ref[...] = (jnp.dot(xf, wih_ref[...],
                           preferred_element_type=jnp.float32) + bih_ref[...])

    blk = unroll * B                       # 8 rows -> full (8,128) tile stores

    def outer(tt, carry):
        h, c = carry
        start = pl.multiple_of(tt * blk, blk)
        gblk = gx_ref[pl.ds(start, blk), :]            # (blk, 4H) f32, aligned
        h_rows = []
        for u in range(unroll):                        # manual 4x unroll
            gates = gblk[u * B:(u + 1) * B, :] + jnp.dot(
                h.astype(jnp.bfloat16), whh_ref[...],
                preferred_element_type=jnp.float32)
            i = jax.nn.sigmoid(gates[:, 0 * H:1 * H])  # PyTorch order i,f,g,o
            f = jax.nn.sigmoid(gates[:, 1 * H:2 * H])
            g = jnp.tanh(gates[:, 2 * H:3 * H])
            o = jax.nn.sigmoid(gates[:, 3 * H:4 * H])
            c = f * c + i * g
            h = o * jnp.tanh(c)
            h_rows.append(h)
        hs_ref[pl.ds(start, blk), :] = jnp.concatenate(h_rows, axis=0)
        return h, c

    init = (jnp.zeros((B, H), jnp.float32), jnp.zeros((B, H), jnp.float32))
    jax.lax.fori_loop(0, M // blk, outer, init)

    # post block: LN -> FFN(relu) -> residual -> LN -> permuted/padded head
    hs = hs_ref[...]
    hf = _ln(hs, g1_ref[...], b1_ref[...], eps)
    y = jnp.dot(hf.astype(jnp.bfloat16), l1w_ref[...],
                preferred_element_type=jnp.float32) + l1b_ref[...]
    y = jnp.maximum(y, 0.0)
    y = jnp.dot(y.astype(jnp.bfloat16), l2w_ref[...],
                preferred_element_type=jnp.float32) + l2b_ref[...]
    y = _ln(xf.astype(jnp.float32) + y, g2_ref[...], b2_ref[...], eps)
    o_ref[...] = (jnp.dot(y.astype(jnp.bfloat16), hw_ref[...],
                          preferred_element_type=jnp.float32)
                  + hb_ref[...]).astype(o_ref.dtype)


def residual_lstm_and_head(p, x):
    B, L, D = x.shape
    H = p["lstm_whh"].shape[0]
    NP = p["head_w_perm"].shape[1]

    # pad time to a multiple of the unroll factor (extra steps are discarded)
    Tp = -(-L // LSTM_UNROLL) * LSTM_UNROLL
    xt = jnp.transpose(x, (1, 0, 2))                         # (L, B, D) bf16
    if Tp > L:
        xt = jnp.concatenate(
            [xt, jnp.zeros((Tp - L, B, D), xt.dtype)], axis=0)
    x_flat = xt.reshape(Tp * B, D)

    logits = pl.pallas_call(
        functools.partial(_lstm_head_kernel, B, H, LSTM_UNROLL, LN_EPS),
        out_shape=jax.ShapeDtypeStruct((Tp * B, NP), jnp.float32),
        scratch_shapes=[pltpu.VMEM((Tp * B, 4 * H), jnp.float32),
                        pltpu.VMEM((Tp * B, H), jnp.float32)],
    )(x_flat, p["lstm_wih_eff"], p["lstm_bih_eff"], p["lstm_whh"],
      p["lnr1_g"], p["lnr1_b"], p["lin1_w"], p["lin1_b"],
      p["lin2_w"], p["lin2_b"], p["lnr2_g"], p["lnr2_b"],
      p["head_w_perm"], p["head_b_perm"])

    logits = logits[:L * B, :N_CLASSES].reshape(L, B, N_CLASSES)
    return jnp.transpose(logits, (1, 0, 2))                  # (B, L, n_classes)


# ----------------------------------------------------------------------------
# model glue: sliding-window segmentation (reproduces forward() exactly)
# ----------------------------------------------------------------------------
def sliding_window_transformer(params, input_ids, attention_mask,
                               window_size=16, edge_len=4):
    inner_len = window_size - edge_len * 2
    B, L = input_ids.shape

    if L <= window_size:
        W = L
        starts = [0]
        keep = [(0, L)]
    else:
        W = window_size
        segments = (L - window_size) // inner_len
        if (L - window_size) % inner_len > edge_len:
            segments += 1
        elif segments == 0:
            segments += 1
        starts = [0]
        keep = [(0, window_size)]
        for i in range(1, segments + 1):
            start = window_size - edge_len + (i - 1) * inner_len
            end = min(start + window_size, L)
            starts.append(start)
            keep.append((edge_len,
                         inner_len if i != segments else end - start - edge_len))

    # Batch every window into ONE backbone invocation; the short last window is
    # right-padded + masked so all windows share width W.
    pad_to = max(s + W for s in starts)
    if pad_to > L:
        ids_p = jnp.pad(input_ids, ((0, 0), (0, pad_to - L)))
        msk_p = jnp.pad(attention_mask, ((0, 0), (0, pad_to - L)))
    else:
        ids_p, msk_p = input_ids, attention_mask
    win_ids = jnp.concatenate([ids_p[:, s:s + W] for s in starts], axis=0)
    win_msk = jnp.concatenate([msk_p[:, s:s + W] for s in starts], axis=0)

    x_all = backbone(params, win_ids, win_msk)               # (NW*B, W, D) bf16
    NW = len(starts)
    D = x_all.shape[-1]
    x_all = x_all.reshape(NW, B, W, D)
    x = jnp.concatenate(
        [x_all[i, :, ks:ks + kl] for i, (ks, kl) in enumerate(keep)], axis=1)

    return [residual_lstm_and_head(params, x)]


# ----------------------------------------------------------------------------
# deterministic parameter init + one-time weight preparation
# ----------------------------------------------------------------------------
def init_params(key, vocab=97, d_model=128, window_size=16, n_classes=15,
                d_rnn=128):
    # TODO(synk): real module loads pretrained HF / ResidualLSTM weights;
    # synthetic deterministic weights used instead (d_rnn kept at 128 so LSTM
    # gate boundaries are 128-lane aligned).
    d_ff = 4 * d_model
    shapes = {
        "emb": (vocab, d_model), "pos": (window_size, d_model),
        "wq": (d_model, d_model), "bq": (d_model,),
        "wk": (d_model, d_model), "bk": (d_model,),
        "wv": (d_model, d_model), "bv": (d_model,),
        "wo": (d_model, d_model), "bo": (d_model,),
        "w1": (d_model, d_ff), "b1": (d_ff,),
        "w2": (d_ff, d_model), "b2": (d_model,),
        "down_w": (d_model, d_rnn), "down_b": (d_rnn,),
        "lstm_wih": (d_rnn, 4 * d_rnn), "lstm_b": (4 * d_rnn,),
        "lstm_whh": (d_rnn, 4 * d_rnn),
        "lin1_w": (d_rnn, d_ff), "lin1_b": (d_ff,),
        "lin2_w": (d_ff, d_model), "lin2_b": (d_model,),
        "head_w": (d_model, n_classes), "head_b": (n_classes,),
    }
    params = {}
    keys = jax.random.split(key, len(shapes))
    for k_, (name, shp) in zip(keys, sorted(shapes.items())):
        params[name] = 0.02 * jax.random.normal(k_, shp, dtype=jnp.float32)
    for nm, dim in [("ln1", d_model), ("ln2", d_model),
                    ("lnr1", d_rnn), ("lnr2", d_model)]:
        params[nm + "_g"] = jnp.ones((dim,), jnp.float32)
        params[nm + "_b"] = jnp.zeros((dim,), jnp.float32)
    return params


def prepare_params(p, lane_pad=128):
    """One-time derived weights: fused QKV, downsample folded into LSTM input
    weights, rearrangement folded + lane-padded head, bf16 weight casts,
    2-D biases / LN params."""
    D = p["emb"].shape[1]
    n_cls = p["head_w"].shape[1]
    idx = jnp.asarray(REARRANGE_INDICES, dtype=jnp.int32)
    bf16 = jnp.bfloat16
    q = dict(p)

    # fused QKV (bf16 weights, f32 bias)
    q["wqkv"] = jnp.concatenate([p["wq"], p["wk"], p["wv"]], axis=1).astype(bf16)
    q["bqkv"] = jnp.concatenate([p["bq"], p["bk"], p["bv"]]).reshape(1, 3 * D)
    q["wo"] = p["wo"].astype(bf16)
    q["w1"] = p["w1"].astype(bf16)
    q["w2"] = p["w2"].astype(bf16)

    # fold downsample projection into LSTM input projection (exact)
    q["lstm_wih_eff"] = (p["down_w"] @ p["lstm_wih"]).astype(bf16)
    q["lstm_bih_eff"] = (p["down_b"] @ p["lstm_wih"] + p["lstm_b"]).reshape(1, -1)
    q["lstm_whh"] = p["lstm_whh"].astype(bf16)
    q["lin1_w"] = p["lin1_w"].astype(bf16)
    q["lin2_w"] = p["lin2_w"].astype(bf16)

    # rearrangement folded into the head weight, output lane-padded 15 -> 128
    hw = jnp.zeros((D, lane_pad), jnp.float32).at[:, :n_cls].set(
        p["head_w"][:, idx])
    hb = jnp.zeros((1, lane_pad), jnp.float32).at[:, :n_cls].set(
        p["head_b"][idx])
    q["head_w_perm"] = hw.astype(bf16)
    q["head_b_perm"] = hb

    for name in ["bo", "b1", "b2", "ln1_g", "ln1_b", "ln2_g", "ln2_b",
                 "lin1_b", "lin2_b", "lnr1_g", "lnr1_b", "lnr2_g", "lnr2_b"]:
        q[name] = p[name].reshape(1, -1)
    for name in ["wq", "bq", "wk", "bk", "wv", "bv", "head_w", "head_b",
                 "down_w", "down_b", "lstm_wih", "lstm_b"]:
        del q[name]
    return q


if __name__ == "__main__":
    VOCAB, D, WINDOW, EDGE = 97, 128, 16, 4
    B, L = 2, 40   # L > window_size exercises the sliding-window path

    key = jax.random.PRNGKey(0)
    pkey, ikey = jax.random.split(key)
    params = prepare_params(init_params(pkey, vocab=VOCAB, d_model=D,
                                        window_size=WINDOW))

    input_ids = jax.random.randint(ikey, (B, L), 0, VOCAB, dtype=jnp.int32)
    attention_mask = jnp.ones((B, L), dtype=jnp.int32)

    fwd = jax.jit(functools.partial(sliding_window_transformer,
                                    window_size=WINDOW, edge_len=EDGE))
    out = fwd(params, input_ids, attention_mask)
    out = [jax.block_until_ready(o) for o in out]
    assert out[0].shape == (B, L, N_CLASSES), out[0].shape
    assert bool(jnp.all(jnp.isfinite(out[0])))
    print("KERNEL_OK")
</pallas_src>

<mosaic_0001>
module attributes {stable_mosaic.version = 11 : i64} {
  func.func @_lstm_head_kernel(%arg0: memref<80x128xbf16, #tpu.memory_space<vmem>>, %arg1: memref<128x512xbf16, #tpu.memory_space<vmem>>, %arg2: memref<1x512xf32, #tpu.memory_space<vmem>>, %arg3: memref<128x512xbf16, #tpu.memory_space<vmem>>, %arg4: memref<1x128xf32, #tpu.memory_space<vmem>>, %arg5: memref<1x128xf32, #tpu.memory_space<vmem>>, %arg6: memref<128x512xbf16, #tpu.memory_space<vmem>>, %arg7: memref<1x512xf32, #tpu.memory_space<vmem>>, %arg8: memref<512x128xbf16, #tpu.memory_space<vmem>>, %arg9: memref<1x128xf32, #tpu.memory_space<vmem>>, %arg10: memref<1x128xf32, #tpu.memory_space<vmem>>, %arg11: memref<1x128xf32, #tpu.memory_space<vmem>>, %arg12: memref<128x128xbf16, #tpu.memory_space<vmem>>, %arg13: memref<1x128xf32, #tpu.memory_space<vmem>>, %arg14: memref<80x128xf32, #tpu.memory_space<vmem>>, %arg15: memref<80x512xf32, #tpu.memory_space<vmem>>, %arg16: memref<80x128xf32, #tpu.memory_space<vmem>>) attributes {dimension_semantics = [], scalar_prefetch = 0 : i64, scratch_operands = 2 : i64, tpu.core_type = #tpu.core_type<tc>} {
    %c0 = arith.constant 0 : index
    %c0_0 = arith.constant 0 : index
    %0 = vector.load %arg0[%c0, %c0_0] : memref<80x128xbf16, #tpu.memory_space<vmem>>, vector<80x128xbf16>
    %c0_1 = arith.constant 0 : index
    %c0_2 = arith.constant 0 : index
    %1 = vector.load %arg1[%c0_1, %c0_2] : memref<128x512xbf16, #tpu.memory_space<vmem>>, vector<128x512xbf16>
    %cst = arith.constant dense<0.000000e+00> : vector<80x512xf32>
    %2 = tpu.matmul %0, %1, %cst {dimension_numbers = #tpu.dot_dimension_numbers<[1], [0], [0], [1], [0, 0, 1, 1], [], []>} : vector<80x128xbf16>, vector<128x512xbf16>, vector<80x512xf32> -> vector<80x512xf32>
    %c0_3 = arith.constant 0 : index
    %c0_4 = arith.constant 0 : index
    %3 = vector.load %arg2[%c0_3, %c0_4] : memref<1x512xf32, #tpu.memory_space<vmem>>, vector<1x512xf32>
    %4 = vector.broadcast %3 : vector<1x512xf32> to vector<80x512xf32>
    %5 = arith.addf %2, %4 : vector<80x512xf32>
    %c0_5 = arith.constant 0 : index
    %c0_6 = arith.constant 0 : index
    %6 = vector.load %arg15[%c0_5, %c0_6] : memref<80x512xf32, #tpu.memory_space<vmem>>, vector<80x512xf32>
    tpu.vector_store %arg15[%c0_5, %c0_6], %5 {strides = array<i32>} : memref<80x512xf32, #tpu.memory_space<vmem>>, vector<80x512xf32>,
    %cst_7 = arith.constant 0.000000e+00 : f32
    %7 = vector.broadcast %cst_7 : f32 to vector<2x128xf32>
    %cst_8 = arith.constant 0.000000e+00 : f32
    %8 = vector.broadcast %cst_8 : f32 to vector<2x128xf32>
    %c0_i32 = arith.constant 0 : i32
    %c10_i32 = arith.constant 10 : i32
    %9 = arith.addi %c0_i32, %c10_i32 : i32
    %c1_i32 = arith.constant 1 : i32
    %10:2 = scf.for %arg17 = %c0_i32 to %9 step %c1_i32 iter_args(%arg18 = %7, %arg19 = %8) -> (vector<2x128xf32>, vector<2x128xf32>)  : i32 {
      %c8_i32 = arith.constant 8 : i32
      %79 = arith.muli %arg17, %c8_i32 : i32
      %80 = tpu.assume_multiple %79, 8 : i32
      %81 = arith.index_cast %80 : i32 to index
      %c0_48 = arith.constant 0 : index
      %82 = vector.load %arg15[%81, %c0_48] : memref<80x512xf32, #tpu.memory_space<vmem>>, vector<8x512xf32>
      %83 = vector.extract_strided_slice %82 {offsets = [0, 0], sizes = [2, 512], strides = [1, 1]} : vector<8x512xf32> to vector<2x512xf32>
      %84 = arith.truncf %arg18 : vector<2x128xf32> to vector<2x128xbf16>
      %c0_49 = arith.constant 0 : index
      %c0_50 = arith.constant 0 : index
      %85 = vector.load %arg3[%c0_49, %c0_50] : memref<128x512xbf16, #tpu.memory_space<vmem>>, vector<128x512xbf16>
      %cst_51 = arith.constant dense<0.000000e+00> : vector<2x512xf32>
      %86 = tpu.matmul %84, %85, %cst_51 {dimension_numbers = #tpu.dot_dimension_numbers<[1], [0], [0], [1], [0, 0, 1, 1], [], []>} : vector<2x128xbf16>, vector<128x512xbf16>, vector<2x512xf32> -> vector<2x512xf32>
      %87 = arith.addf %83, %86 : vector<2x512xf32>
      %88 = vector.extract_strided_slice %87 {offsets = [0, 0], sizes = [2, 128], strides = [1, 1]} : vector<2x512xf32> to vector<2x128xf32>
      %89 = arith.negf %88 : vector<2x128xf32>
      %90 = math.exp %89 : vector<2x128xf32>
      %cst_52 = arith.constant 1.000000e+00 : f32
      %91 = vector.broadcast %cst_52 : f32 to vector<2x128xf32>
      %92 = arith.addf %91, %90 : vector<2x128xf32>
      %93 = arith.divf %91, %92 : vector<2x128xf32>
      %94 = vector.extract_strided_slice %87 {offsets = [0, 128], sizes = [2, 128], strides = [1, 1]} : vector<2x512xf32> to vector<2x128xf32>
      %95 = arith.negf %94 : vector<2x128xf32>
      %96 = math.exp %95 : vector<2x128xf32>
      %cst_53 = arith.constant 1.000000e+00 : f32
      %97 = vector.broadcast %cst_53 : f32 to vector<2x128xf32>
      %98 = arith.addf %97, %96 : vector<2x128xf32>
      %99 = arith.divf %97, %98 : vector<2x128xf32>
      %100 = vector.extract_strided_slice %87 {offsets = [0, 256], sizes = [2, 128], strides = [1, 1]} : vector<2x512xf32> to vector<2x128xf32>
      %101 = math.tanh %100 : vector<2x128xf32>
      %102 = vector.extract_strided_slice %87 {offsets = [0, 384], sizes = [2, 128], strides = [1, 1]} : vector<2x512xf32> to vector<2x128xf32>
      %103 = arith.negf %102 : vector<2x128xf32>
      %104 = math.exp %103 : vector<2x128xf32>
      %cst_54 = arith.constant 1.000000e+00 : f32
      %105 = vector.broadcast %cst_54 : f32 to vector<2x128xf32>
      %106 = arith.addf %105, %104 : vector<2x128xf32>
      %107 = arith.divf %105, %106 : vector<2x128xf32>
      %108 = arith.mulf %99, %arg19 : vector<2x128xf32>
      %109 = arith.mulf %93, %101 : vector<2x128xf32>
      %110 = arith.addf %108, %109 : vector<2x128xf32>
      %111 = math.tanh %110 : vector<2x128xf32>
      %112 = arith.mulf %107, %111 : vector<2x128xf32>
      %113 = vector.extract_strided_slice %82 {offsets = [2, 0], sizes = [2, 512], strides = [1, 1]} : vector<8x512xf32> to vector<2x512xf32>
      %114 = arith.truncf %112 : vector<2x128xf32> to vector<2x128xbf16>
      %c0_55 = arith.constant 0 : index
      %c0_56 = arith.constant 0 : index
      %115 = vector.load %arg3[%c0_55, %c0_56] : memref<128x512xbf16, #tpu.memory_space<vmem>>, vector<128x512xbf16>
      %cst_57 = arith.constant dense<0.000000e+00> : vector<2x512xf32>
      %116 = tpu.matmul %114, %115, %cst_57 {dimension_numbers = #tpu.dot_dimension_numbers<[1], [0], [0], [1], [0, 0, 1, 1], [], []>} : vector<2x128xbf16>, vector<128x512xbf16>, vector<2x512xf32> -> vector<2x512xf32>
      %117 = arith.addf %113, %116 : vector<2x512xf32>
      %118 = vector.extract_strided_slice %117 {offsets = [0, 0], sizes = [2, 128], strides = [1, 1]} : vector<2x512xf32> to vector<2x128xf32>
      %119 = arith.negf %118 : vector<2x128xf32>
      %120 = math.exp %119 : vector<2x128xf32>
      %cst_58 = arith.constant 1.000000e+00 : f32
      %121 = vector.broadcast %cst_58 : f32 to vector<2x128xf32>
      %122 = arith.addf %121, %120 : vector<2x128xf32>
      %123 = arith.divf %121, %122 : vector<2x128xf32>
      %124 = vector.extract_strided_slice %117 {offsets = [0, 128], sizes = [2, 128], strides = [1, 1]} : vector<2x512xf32> to vector<2x128xf32>
      %125 = arith.negf %124 : vector<2x128xf32>
      %126 = math.exp %125 : vector<2x128xf32>
      %cst_59 = arith.constant 1.000000e+00 : f32
      %127 = vector.broadcast %cst_59 : f32 to vector<2x128xf32>
      %128 = arith.addf %127, %126 : vector<2x128xf32>
      %129 = arith.divf %127, %128 : vector<2x128xf32>
      %130 = vector.extract_strided_slice %117 {offsets = [0, 256], sizes = [2, 128], strides = [1, 1]} : vector<2x512xf32> to vector<2x128xf32>
      %131 = math.tanh %130 : vector<2x128xf32>
      %132 = vector.extract_strided_slice %117 {offsets = [0, 384], sizes = [2, 128], strides = [1, 1]} : vector<2x512xf32> to vector<2x128xf32>
      %133 = arith.negf %132 : vector<2x128xf32>
      %134 = math.exp %133 : vector<2x128xf32>
      %cst_60 = arith.constant 1.000000e+00 : f32
      %135 = vector.broadcast %cst_60 : f32 to vector<2x128xf32>
      %136 = arith.addf %135, %134 : vector<2x128xf32>
      %137 = arith.divf %135, %136 : vector<2x128xf32>
      %138 = arith.mulf %129, %110 : vector<2x128xf32>
      %139 = arith.mulf %123, %131 : vector<2x128xf32>
      %140 = arith.addf %138, %139 : vector<2x128xf32>
      %141 = math.tanh %140 : vector<2x128xf32>
      %142 = arith.mulf %137, %141 : vector<2x128xf32>
      %143 = vector.extract_strided_slice %82 {offsets = [4, 0], sizes = [2, 512], strides = [1, 1]} : vector<8x512xf32> to vector<2x512xf32>
      %144 = arith.truncf %142 : vector<2x128xf32> to vector<2x128xbf16>
      %c0_61 = arith.constant 0 : index
      %c0_62 = arith.constant 0 : index
      %145 = vector.load %arg3[%c0_61, %c0_62] : memref<128x512xbf16, #tpu.memory_space<vmem>>, vector<128x512xbf16>
      %cst_63 = arith.constant dense<0.000000e+00> : vector<2x512xf32>
      %146 = tpu.matmul %144, %145, %cst_63 {dimension_numbers = #tpu.dot_dimension_numbers<[1], [0], [0], [1], [0, 0, 1, 1], [], []>} : vector<2x128xbf16>, vector<128x512xbf16>, vector<2x512xf32> -> vector<2x512xf32>
      %147 = arith.addf %143, %146 : vector<2x512xf32>
      %148 = vector.extract_strided_slice %147 {offsets = [0, 0], sizes = [2, 128], strides = [1, 1]} : vector<2x512xf32> to vector<2x128xf32>
      %149 = arith.negf %148 : vector<2x128xf32>
      %150 = math.exp %149 : vector<2x128xf32>
      %cst_64 = arith.constant 1.000000e+00 : f32
      %151 = vector.broadcast %cst_64 : f32 to vector<2x128xf32>
      %152 = arith.addf %151, %150 : vector<2x128xf32>
      %153 = arith.divf %151, %152 : vector<2x128xf32>
      %154 = vector.extract_strided_slice %147 {offsets = [0, 128], sizes = [2, 128], strides = [1, 1]} : vector<2x512xf32> to vector<2x128xf32>
      %155 = arith.negf %154 : vector<2x128xf32>
      %156 = math.exp %155 : vector<2x128xf32>
      %cst_65 = arith.constant 1.000000e+00 : f32
      %157 = vector.broadcast %cst_65 : f32 to vector<2x128xf32>
      %158 = arith.addf %157, %156 : vector<2x128xf32>
      %159 = arith.divf %157, %158 : vector<2x128xf32>
      %160 = vector.extract_strided_slice %147 {offsets = [0, 256], sizes = [2, 128], strides = [1, 1]} : vector<2x512xf32> to vector<2x128xf32>
      %161 = math.tanh %160 : vector<2x128xf32>
      %162 = vector.extract_strided_slice %147 {offsets = [0, 384], sizes = [2, 128], strides = [1, 1]} : vector<2x512xf32> to vector<2x128xf32>
      %163 = arith.negf %162 : vector<2x128xf32>
      %164 = math.exp %163 : vector<2x128xf32>
      %cst_66 = arith.constant 1.000000e+00 : f32
      %165 = vector.broadcast %cst_66 : f32 to vector<2x128xf32>
      %166 = arith.addf %165, %164 : vector<2x128xf32>
      %167 = arith.divf %165, %166 : vector<2x128xf32>
      %168 = arith.mulf %159, %140 : vector<2x128xf32>
      %169 = arith.mulf %153, %161 : vector<2x128xf32>
      %170 = arith.addf %168, %169 : vector<2x128xf32>
      %171 = math.tanh %170 : vector<2x128xf32>
      %172 = arith.mulf %167, %171 : vector<2x128xf32>
      %173 = vector.extract_strided_slice %82 {offsets = [6, 0], sizes = [2, 512], strides = [1, 1]} : vector<8x512xf32> to vector<2x512xf32>
      %174 = arith.truncf %172 : vector<2x128xf32> to vector<2x128xbf16>
      %c0_67 = arith.constant 0 : index
      %c0_68 = arith.constant 0 : index
      %175 = vector.load %arg3[%c0_67, %c0_68] : memref<128x512xbf16, #tpu.memory_space<vmem>>, vector<128x512xbf16>
      %cst_69 = arith.constant dense<0.000000e+00> : vector<2x512xf32>
      %176 = tpu.matmul %174, %175, %cst_69 {dimension_numbers = #tpu.dot_dimension_numbers<[1], [0], [0], [1], [0, 0, 1, 1], [], []>} : vector<2x128xbf16>, vector<128x512xbf16>, vector<2x512xf32> -> vector<2x512xf32>
      %177 = arith.addf %173, %176 : vector<2x512xf32>
      %178 = vector.extract_strided_slice %177 {offsets = [0, 0], sizes = [2, 128], strides = [1, 1]} : vector<2x512xf32> to vector<2x128xf32>
      %179 = arith.negf %178 : vector<2x128xf32>
      %180 = math.exp %179 : vector<2x128xf32>
      %cst_70 = arith.constant 1.000000e+00 : f32
      %181 = vector.broadcast %cst_70 : f32 to vector<2x128xf32>
      %182 = arith.addf %181, %180 : vector<2x128xf32>
      %183 = arith.divf %181, %182 : vector<2x128xf32>
      %184 = vector.extract_strided_slice %177 {offsets = [0, 128], sizes = [2, 128], strides = [1, 1]} : vector<2x512xf32> to vector<2x128xf32>
      %185 = arith.negf %184 : vector<2x128xf32>
      %186 = math.exp %185 : vector<2x128xf32>
      %cst_71 = arith.constant 1.000000e+00 : f32
      %187 = vector.broadcast %cst_71 : f32 to vector<2x128xf32>
      %188 = arith.addf %187, %186 : vector<2x128xf32>
      %189 = arith.divf %187, %188 : vector<2x128xf32>
      %190 = vector.extract_strided_slice %177 {offsets = [0, 256], sizes = [2, 128], strides = [1, 1]} : vector<2x512xf32> to vector<2x128xf32>
      %191 = math.tanh %190 : vector<2x128xf32>
      %192 = vector.extract_strided_slice %177 {offsets = [0, 384], sizes = [2, 128], strides = [1, 1]} : vector<2x512xf32> to vector<2x128xf32>
      %193 = arith.negf %192 : vector<2x128xf32>
      %194 = math.exp %193 : vector<2x128xf32>
      %cst_72 = arith.constant 1.000000e+00 : f32
      %195 = vector.broadcast %cst_72 : f32 to vector<2x128xf32>
      %196 = arith.addf %195, %194 : vector<2x128xf32>
      %197 = arith.divf %195, %196 : vector<2x128xf32>
      %198 = arith.mulf %189, %170 : vector<2x128xf32>
      %199 = arith.mulf %183, %191 : vector<2x128xf32>
      %200 = arith.addf %198, %199 : vector<2x128xf32>
      %201 = math.tanh %200 : vector<2x128xf32>
      %202 = arith.mulf %197, %201 : vector<2x128xf32>
      %203 = tpu.concatenate %112, %142, %172, %202 in 0 : vector<2x128xf32>, vector<2x128xf32>, vector<2x128xf32>, vector<2x128xf32> -> vector<8x128xf32>
      %204 = arith.index_cast %80 : i32 to index
      %c0_73 = arith.constant 0 : index
      %205 = vector.load %arg16[%204, %c0_73] : memref<80x128xf32, #tpu.memory_space<vmem>>, vector<8x128xf32>
      tpu.vector_store %arg16[%204, %c0_73], %203 {strides = array<i32>} : memref<80x128xf32, #tpu.memory_space<vmem>>, vector<8x128xf32>,
      scf.yield %202, %200 : vector<2x128xf32>, vector<2x128xf32>
    }
    %c10_i32_9 = arith.constant 10 : i32
    %c0_10 = arith.constant 0 : index
    %c0_11 = arith.constant 0 : index
    %11 = vector.load %arg16[%c0_10, %c0_11] : memref<80x128xf32, #tpu.memory_space<vmem>>, vector<80x128xf32>
    %c0_12 = arith.constant 0 : index
    %c0_13 = arith.constant 0 : index
    %12 = vector.load %arg4[%c0_12, %c0_13] : memref<1x128xf32, #tpu.memory_space<vmem>>, vector<1x128xf32>
    %c0_14 = arith.constant 0 : index
    %c0_15 = arith.constant 0 : index
    %13 = vector.load %arg5[%c0_14, %c0_15] : memref<1x128xf32, #tpu.memory_space<vmem>>, vector<1x128xf32>
    %cst_16 = arith.constant dense<0.000000e+00> : vector<80xf32>
    %14 = vector.multi_reduction <add>, %11, %cst_16 [1] : vector<80x128xf32> to vector<80xf32>
    %15 = vector.shape_cast %14 : vector<80xf32> to vector<80x1xf32>
    %cst_17 = arith.constant 1.280000e+02 : f32
    %16 = vector.broadcast %cst_17 : f32 to vector<80x1xf32>
    %17 = arith.divf %15, %16 : vector<80x1xf32>
    %18 = vector.broadcast %17 : vector<80x1xf32> to vector<80x128xf32>
    %19 = arith.subf %11, %18 : vector<80x128xf32>
    %20 = arith.mulf %19, %19 : vector<80x128xf32>
    %cst_18 = arith.constant dense<0.000000e+00> : vector<80xf32>
    %21 = vector.multi_reduction <add>, %20, %cst_18 [1] : vector<80x128xf32> to vector<80xf32>
    %22 = vector.shape_cast %21 : vector<80xf32> to vector<80x1xf32>
    %cst_19 = arith.constant 1.280000e+02 : f32
    %23 = vector.broadcast %cst_19 : f32 to vector<80x1xf32>
    %24 = arith.divf %22, %23 : vector<80x1xf32>
    %cst_20 = arith.constant 9.99999974E-6 : f32
    %25 = vector.broadcast %cst_20 : f32 to vector<80x1xf32>
    %26 = arith.addf %24, %25 : vector<80x1xf32>
    %27 = math.rsqrt %26 : vector<80x1xf32>
    %28 = vector.broadcast %27 : vector<80x1xf32> to vector<80x128xf32>
    %29 = arith.mulf %19, %28 : vector<80x128xf32>
    %30 = vector.broadcast %12 : vector<1x128xf32> to vector<80x128xf32>
    %31 = arith.mulf %29, %30 : vector<80x128xf32>
    %32 = vector.broadcast %13 : vector<1x128xf32> to vector<80x128xf32>
    %33 = arith.addf %31, %32 : vector<80x128xf32>
    %34 = arith.truncf %33 : vector<80x128xf32> to vector<80x128xbf16>
    %c0_21 = arith.constant 0 : index
    %c0_22 = arith.constant 0 : index
    %35 = vector.load %arg6[%c0_21, %c0_22] : memref<128x512xbf16, #tpu.memory_space<vmem>>, vector<128x512xbf16>
    %cst_23 = arith.constant dense<0.000000e+00> : vector<80x512xf32>
    %36 = tpu.matmul %34, %35, %cst_23 {dimension_numbers = #tpu.dot_dimension_numbers<[1], [0], [0], [1], [0, 0, 1, 1], [], []>} : vector<80x128xbf16>, vector<128x512xbf16>, vector<80x512xf32> -> vector<80x512xf32>
    %c0_24 = arith.constant 0 : index
    %c0_25 = arith.constant 0 : index
    %37 = vector.load %arg7[%c0_24, %c0_25] : memref<1x512xf32, #tpu.memory_space<vmem>>, vector<1x512xf32>
    %38 = vector.broadcast %37 : vector<1x512xf32> to vector<80x512xf32>
    %39 = arith.addf %36, %38 : vector<80x512xf32>
    %cst_26 = arith.constant 0.000000e+00 : f32
    %40 = vector.broadcast %cst_26 : f32 to vector<80x512xf32>
    %41 = arith.maximumf %39, %40 : vector<80x512xf32>
    %42 = arith.truncf %41 : vector<80x512xf32> to vector<80x512xbf16>
    %c0_27 = arith.constant 0 : index
    %c0_28 = arith.constant 0 : index
    %43 = vector.load %arg8[%c0_27, %c0_28] : memref<512x128xbf16, #tpu.memory_space<vmem>>, vector<512x128xbf16>
    %cst_29 = arith.constant dense<0.000000e+00> : vector<80x128xf32>
    %44 = tpu.matmul %42, %43, %cst_29 {dimension_numbers = #tpu.dot_dimension_numbers<[1], [0], [0], [1], [0, 0, 1, 1], [], []>} : vector<80x512xbf16>, vector<512x128xbf16>, vector<80x128xf32> -> vector<80x128xf32>
    %c0_30 = arith.constant 0 : index
    %c0_31 = arith.constant 0 : index
    %45 = vector.load %arg9[%c0_30, %c0_31] : memref<1x128xf32, #tpu.memory_space<vmem>>, vector<1x128xf32>
    %46 = vector.broadcast %45 : vector<1x128xf32> to vector<80x128xf32>
    %47 = arith.addf %44, %46 : vector<80x128xf32>
    %48 = arith.extf %0 : vector<80x128xbf16> to vector<80x128xf32>
    %49 = arith.addf %48, %47 : vector<80x128xf32>
    %c0_32 = arith.constant 0 : index
    %c0_33 = arith.constant 0 : index
    %50 = vector.load %arg10[%c0_32, %c0_33] : memref<1x128xf32, #tpu.memory_space<vmem>>, vector<1x128xf32>
    %c0_34 = arith.constant 0 : index
    %c0_35 = arith.constant 0 : index
    %51 = vector.load %arg11[%c0_34, %c0_35] : memref<1x128xf32, #tpu.memory_space<vmem>>, vector<1x128xf32>
    %cst_36 = arith.constant dense<0.000000e+00> : vector<80xf32>
    %52 = vector.multi_reduction <add>, %49, %cst_36 [1] : vector<80x128xf32> to vector<80xf32>
    %53 = vector.shape_cast %52 : vector<80xf32> to vector<80x1xf32>
    %cst_37 = arith.constant 1.280000e+02 : f32
    %54 = vector.broadcast %cst_37 : f32 to vector<80x1xf32>
    %55 = arith.divf %53, %54 : vector<80x1xf32>
    %56 = vector.broadcast %55 : vector<80x1xf32> to vector<80x128xf32>
    %57 = arith.subf %49, %56 : vector<80x128xf32>
    %58 = arith.mulf %57, %57 : vector<80x128xf32>
    %cst_38 = arith.constant dense<0.000000e+00> : vector<80xf32>
    %59 = vector.multi_reduction <add>, %58, %cst_38 [1] : vector<80x128xf32> to vector<80xf32>
    %60 = vector.shape_cast %59 : vector<80xf32> to vector<80x1xf32>
    %cst_39 = arith.constant 1.280000e+02 : f32
    %61 = vector.broadcast %cst_39 : f32 to vector<80x1xf32>
    %62 = arith.divf %60, %61 : vector<80x1xf32>
    %cst_40 = arith.constant 9.99999974E-6 : f32
    %63 = vector.broadcast %cst_40 : f32 to vector<80x1xf32>
    %64 = arith.addf %62, %63 : vector<80x1xf32>
    %65 = math.rsqrt %64 : vector<80x1xf32>
    %66 = vector.broadcast %65 : vector<80x1xf32> to vector<80x128xf32>
    %67 = arith.mulf %57, %66 : vector<80x128xf32>
    %68 = vector.broadcast %50 : vector<1x128xf32> to vector<80x128xf32>
    %69 = arith.mulf %67, %68 : vector<80x128xf32>
    %70 = vector.broadcast %51 : vector<1x128xf32> to vector<80x128xf32>
    %71 = arith.addf %69, %70 : vector<80x128xf32>
    %72 = arith.truncf %71 : vector<80x128xf32> to vector<80x128xbf16>
    %c0_41 = arith.constant 0 : index
    %c0_42 = arith.constant 0 : index
    %73 = vector.load %arg12[%c0_41, %c0_42] : memref<128x128xbf16, #tpu.memory_space<vmem>>, vector<128x128xbf16>
    %cst_43 = arith.constant dense<0.000000e+00> : vector<80x128xf32>
    %74 = tpu.matmul %72, %73, %cst_43 {dimension_numbers = #tpu.dot_dimension_numbers<[1], [0], [0], [1], [0, 0, 1, 1], [], []>} : vector<80x128xbf16>, vector<128x128xbf16>, vector<80x128xf32> -> vector<80x128xf32>
    %c0_44 = arith.constant 0 : index
    %c0_45 = arith.constant 0 : index
    %75 = vector.load %arg13[%c0_44, %c0_45] : memref<1x128xf32, #tpu.memory_space<vmem>>, vector<1x128xf32>
    %76 = vector.broadcast %75 : vector<1x128xf32> to vector<80x128xf32>
    %77 = arith.addf %74, %76 : vector<80x128xf32>
    %c0_46 = arith.constant 0 : index
    %c0_47 = arith.constant 0 : index
    %78 = vector.load %arg14[%c0_46, %c0_47] : memref<80x128xf32, #tpu.memory_space<vmem>>, vector<80x128xf32>
    tpu.vector_store %arg14[%c0_46, %c0_47], %77 {strides = array<i32>} : memref<80x128xf32, #tpu.memory_space<vmem>>, vector<80x128xf32>,
    return
  }
}

module attributes {stable_mosaic.version = 11 : i64} {
  func.func @_backbone_kernel(%arg0: i32, %arg1: memref<8x16x128xbf16, #tpu.memory_space<vmem>>, %arg2: memref<128x128xf32, #tpu.memory_space<vmem>>, %arg3: memref<128x384xbf16, #tpu.memory_space<vmem>>, %arg4: memref<1x384xf32, #tpu.memory_space<vmem>>, %arg5: memref<128x128xbf16, #tpu.memory_space<vmem>>, %arg6: memref<1x128xf32, #tpu.memory_space<vmem>>, %arg7: memref<1x128xf32, #tpu.memory_space<vmem>>, %arg8: memref<1x128xf32, #tpu.memory_space<vmem>>, %arg9: memref<128x512xbf16, #tpu.memory_space<vmem>>, %arg10: memref<1x512xf32, #tpu.memory_space<vmem>>, %arg11: memref<512x128xbf16, #tpu.memory_space<vmem>>, %arg12: memref<1x128xf32, #tpu.memory_space<vmem>>, %arg13: memref<1x128xf32, #tpu.memory_space<vmem>>, %arg14: memref<1x128xf32, #tpu.memory_space<vmem>>, %arg15: memref<8x16x128xbf16, #tpu.memory_space<vmem>>) attributes {dimension_semantics = [#tpu.dimension_semantics<parallel>], iteration_bounds = array<i64: 2>, scalar_prefetch = 0 : i64, scratch_operands = 0 : i64, tpu.core_type = #tpu.core_type<tc>, window_params = [{transform_indices = @transform_0, window_bounds = array<i64: 8, 16, 128>}, {transform_indices = @transform_1, window_bounds = array<i64: 128, 128>}, {pipeline_mode = #tpu.pipeline_mode<synchronous>, transform_indices = @transform_2, window_bounds = array<i64: 128, 384>}, {pipeline_mode = #tpu.pipeline_mode<synchronous>, transform_indices = @transform_3, window_bounds = array<i64: 1, 384>}, {pipeline_mode = #tpu.pipeline_mode<synchronous>, transform_indices = @transform_4, window_bounds = array<i64: 128, 128>}, {pipeline_mode = #tpu.pipeline_mode<synchronous>, transform_indices = @transform_5, window_bounds = array<i64: 1, 128>}, {pipeline_mode = #tpu.pipeline_mode<synchronous>, transform_indices = @transform_6, window_bounds = array<i64: 1, 128>}, {pipeline_mode = #tpu.pipeline_mode<synchronous>, transform_indices = @transform_7, window_bounds = array<i64: 1, 128>}, {pipeline_mode = #tpu.pipeline_mode<synchronous>, transform_indices = @transform_8, window_bounds = array<i64: 128, 512>}, {pipeline_mode = #tpu.pipeline_mode<synchronous>, transform_indices = @transform_9, window_bounds = array<i64: 1, 512>}, {pipeline_mode = #tpu.pipeline_mode<synchronous>, transform_indices = @transform_10, window_bounds = array<i64: 512, 128>}, {pipeline_mode = #tpu.pipeline_mode<synchronous>, transform_indices = @transform_11, window_bounds = array<i64: 1, 128>}, {pipeline_mode = #tpu.pipeline_mode<synchronous>, transform_indices = @transform_12, window_bounds = array<i64: 1, 128>}, {pipeline_mode = #tpu.pipeline_mode<synchronous>, transform_indices = @transform_13, window_bounds = array<i64: 1, 128>}, {transform_indices = @transform_14, window_bounds = array<i64: 8, 16, 128>}]} {
    %c0 = arith.constant 0 : index
    %c0_0 = arith.constant 0 : index
    %c0_1 = arith.constant 0 : index
    %0 = vector.load %arg1[%c0, %c0_0, %c0_1] : memref<8x16x128xbf16, #tpu.memory_space<vmem>>, vector<8x16x128xbf16>
    %1 = vector.shape_cast %0 : vector<8x16x128xbf16> to vector<128x128xbf16>
    %c0_2 = arith.constant 0 : index
    %c0_3 = arith.constant 0 : index
    %2 = vector.load %arg3[%c0_2, %c0_3] : memref<128x384xbf16, #tpu.memory_space<vmem>>, vector<128x384xbf16>
    %cst = arith.constant dense<0.000000e+00> : vector<128x384xf32>
    %3 = tpu.matmul %1, %2, %cst {dimension_numbers = #tpu.dot_dimension_numbers<[1], [0], [0], [1], [0, 0, 1, 1], [], []>} : vector<128x128xbf16>, vector<128x384xbf16>, vector<128x384xf32> -> vector<128x384xf32>
    %c0_4 = arith.constant 0 : index
    %c0_5 = arith.constant 0 : index
    %4 = vector.load %arg4[%c0_4, %c0_5] : memref<1x384xf32, #tpu.memory_space<vmem>>, vector<1x384xf32>
    %5 = vector.broadcast %4 : vector<1x384xf32> to vector<128x384xf32>
    %6 = arith.addf %3, %5 : vector<128x384xf32>
    %7 = vector.extract_strided_slice %6 {offsets = [0, 0], sizes = [128, 128], strides = [1, 1]} : vector<128x384xf32> to vector<128x128xf32>
    %8 = vector.extract_strided_slice %6 {offsets = [0, 128], sizes = [128, 128], strides = [1, 1]} : vector<128x384xf32> to vector<128x128xf32>
    %9 = vector.extract_strided_slice %6 {offsets = [0, 256], sizes = [128, 128], strides = [1, 1]} : vector<128x384xf32> to vector<128x128xf32>
    %10 = arith.truncf %7 : vector<128x128xf32> to vector<128x128xbf16>
    %11 = arith.truncf %8 : vector<128x128xf32> to vector<128x128xbf16>
    "tpu.trace_start"() <{level = 10 : i32, message = "md,nd->mn"}> : () -> ()
    %cst_6 = arith.constant dense<0.000000e+00> : vector<128x128xf32>
    %12 = tpu.matmul %10, %11, %cst_6 {dimension_numbers = #tpu.dot_dimension_numbers<[1], [1], [0], [0], [0, 0, 1, 0], [], []>} : vector<128x128xbf16>, vector<128x128xbf16>, vector<128x128xf32> -> vector<128x128xf32>
    "tpu.trace_stop"() : () -> ()
    %cst_7 = arith.constant 0.0883883461 : f32
    %13 = vector.broadcast %cst_7 : f32 to vector<128x128xf32>
    %14 = arith.mulf %12, %13 : vector<128x128xf32>
    %c0_8 = arith.constant 0 : index
    %c0_9 = arith.constant 0 : index
    %15 = vector.load %arg2[%c0_8, %c0_9] : memref<128x128xf32, #tpu.memory_space<vmem>>, vector<128x128xf32>
    %16 = arith.addf %14, %15 : vector<128x128xf32>
    %cst_10 = arith.constant dense<0xFF800000> : vector<128xf32>
    %17 = vector.multi_reduction <maximumf>, %16, %cst_10 [1] : vector<128x128xf32> to vector<128xf32>
    %18 = vector.shape_cast %17 : vector<128xf32> to vector<128x1xf32>
    %19 = vector.broadcast %18 : vector<128x1xf32> to vector<128x128xf32>
    %20 = arith.subf %16, %19 : vector<128x128xf32>
    %21 = math.exp %20 : vector<128x128xf32>
    %cst_11 = arith.constant dense<0.000000e+00> : vector<128xf32>
    %22 = vector.multi_reduction <add>, %21, %cst_11 [1] : vector<128x128xf32> to vector<128xf32>
    %23 = vector.shape_cast %22 : vector<128xf32> to vector<128x1xf32>
    %24 = tpu.reciprocal %23 {approx = true} : vector<128x1xf32> -> vector<128x1xf32>
    %25 = vector.broadcast %24 : vector<128x1xf32> to vector<128x128xf32>
    %26 = arith.mulf %21, %25 : vector<128x128xf32>
    %27 = arith.truncf %26 : vector<128x128xf32> to vector<128x128xbf16>
    %28 = arith.truncf %9 : vector<128x128xf32> to vector<128x128xbf16>
    %cst_12 = arith.constant dense<0.000000e+00> : vector<128x128xf32>
    %29 = tpu.matmul %27, %28, %cst_12 {dimension_numbers = #tpu.dot_dimension_numbers<[1], [0], [0], [1], [0, 0, 1, 1], [], []>} : vector<128x128xbf16>, vector<128x128xbf16>, vector<128x128xf32> -> vector<128x128xf32>
    %30 = arith.truncf %29 : vector<128x128xf32> to vector<128x128xbf16>
    %c0_13 = arith.constant 0 : index
    %c0_14 = arith.constant 0 : index
    %31 = vector.load %arg5[%c0_13, %c0_14] : memref<128x128xbf16, #tpu.memory_space<vmem>>, vector<128x128xbf16>
    %cst_15 = arith.constant dense<0.000000e+00> : vector<128x128xf32>
    %32 = tpu.matmul %30, %31, %cst_15 {dimension_numbers = #tpu.dot_dimension_numbers<[1], [0], [0], [1], [0, 0, 1, 1], [], []>} : vector<128x128xbf16>, vector<128x128xbf16>, vector<128x128xf32> -> vector<128x128xf32>
    %c0_16 = arith.constant 0 : index
    %c0_17 = arith.constant 0 : index
    %33 = vector.load %arg6[%c0_16, %c0_17] : memref<1x128xf32, #tpu.memory_space<vmem>>, vector<1x128xf32>
    %34 = vector.broadcast %33 : vector<1x128xf32> to vector<128x128xf32>
    %35 = arith.addf %32, %34 : vector<128x128xf32>
    %36 = arith.extf %1 : vector<128x128xbf16> to vector<128x128xf32>
    %37 = arith.addf %36, %35 : vector<128x128xf32>
    %c0_18 = arith.constant 0 : index
    %c0_19 = arith.constant 0 : index
    %38 = vector.load %arg7[%c0_18, %c0_19] : memref<1x128xf32, #tpu.memory_space<vmem>>, vector<1x128xf32>
    %c0_20 = arith.constant 0 : index
    %c0_21 = arith.constant 0 : index
    %39 = vector.load %arg8[%c0_20, %c0_21] : memref<1x128xf32, #tpu.memory_space<vmem>>, vector<1x128xf32>
    %cst_22 = arith.constant dense<0.000000e+00> : vector<128xf32>
    %40 = vector.multi_reduction <add>, %37, %cst_22 [1] : vector<128x128xf32> to vector<128xf32>
    %41 = vector.shape_cast %40 : vector<128xf32> to vector<128x1xf32>
    %cst_23 = arith.constant 1.280000e+02 : f32
    %42 = vector.broadcast %cst_23 : f32 to vector<128x1xf32>
    %43 = arith.divf %41, %42 : vector<128x1xf32>
    %44 = vector.broadcast %43 : vector<128x1xf32> to vector<128x128xf32>
    %45 = arith.subf %37, %44 : vector<128x128xf32>
    %46 = arith.mulf %45, %45 : vector<128x128xf32>
    %cst_24 = arith.constant dense<0.000000e+00> : vector<128xf32>
    %47 = vector.multi_reduction <add>, %46, %cst_24 [1] : vector<128x128xf32> to vector<128xf32>
    %48 = vector.shape_cast %47 : vector<128xf32> to vector<128x1xf32>
    %cst_25 = arith.constant 1.280000e+02 : f32
    %49 = vector.broadcast %cst_25 : f32 to vector<128x1xf32>
    %50 = arith.divf %48, %49 : vector<128x1xf32>
    %cst_26 = arith.constant 9.99999974E-6 : f32
    %51 = vector.broadcast %cst_26 : f32 to vector<128x1xf32>
    %52 = arith.addf %50, %51 : vector<128x1xf32>
    %53 = math.rsqrt %52 : vector<128x1xf32>
    %54 = vector.broadcast %53 : vector<128x1xf32> to vector<128x128xf32>
    %55 = arith.mulf %45, %54 : vector<128x128xf32>
    %56 = vector.broadcast %38 : vector<1x128xf32> to vector<128x128xf32>
    %57 = arith.mulf %55, %56 : vector<128x128xf32>
    %58 = vector.broadcast %39 : vector<1x128xf32> to vector<128x128xf32>
    %59 = arith.addf %57, %58 : vector<128x128xf32>
    %60 = arith.truncf %59 : vector<128x128xf32> to vector<128x128xbf16>
    %c0_27 = arith.constant 0 : index
    %c0_28 = arith.constant 0 : index
    %61 = vector.load %arg9[%c0_27, %c0_28] : memref<128x512xbf16, #tpu.memory_space<vmem>>, vector<128x512xbf16>
    %cst_29 = arith.constant dense<0.000000e+00> : vector<128x512xf32>
    %62 = tpu.matmul %60, %61, %cst_29 {dimension_numbers = #tpu.dot_dimension_numbers<[1], [0], [0], [1], [0, 0, 1, 1], [], []>} : vector<128x128xbf16>, vector<128x512xbf16>, vector<128x512xf32> -> vector<128x512xf32>
    %c0_30 = arith.constant 0 : index
    %c0_31 = arith.constant 0 : index
    %63 = vector.load %arg10[%c0_30, %c0_31] : memref<1x512xf32, #tpu.memory_space<vmem>>, vector<1x512xf32>
    %64 = vector.broadcast %63 : vector<1x512xf32> to vector<128x512xf32>
    %65 = arith.addf %62, %64 : vector<128x512xf32>
    %66 = arith.mulf %65, %65 : vector<128x512xf32>
    %67 = arith.mulf %65, %66 : vector<128x512xf32>
    %cst_32 = arith.constant 4.471500e-02 : f32
    %68 = vector.broadcast %cst_32 : f32 to vector<128x512xf32>
    %69 = arith.mulf %68, %67 : vector<128x512xf32>
    %70 = arith.addf %65, %69 : vector<128x512xf32>
    %cst_33 = arith.constant 0.797884583 : f32
    %71 = vector.broadcast %cst_33 : f32 to vector<128x512xf32>
    %72 = arith.mulf %71, %70 : vector<128x512xf32>
    %73 = math.tanh %72 : vector<128x512xf32>
    %cst_34 = arith.constant 1.000000e+00 : f32
    %74 = vector.broadcast %cst_34 : f32 to vector<128x512xf32>
    %75 = arith.addf %74, %73 : vector<128x512xf32>
    %cst_35 = arith.constant 5.000000e-01 : f32
    %76 = vector.broadcast %cst_35 : f32 to vector<128x512xf32>
    %77 = arith.mulf %76, %75 : vector<128x512xf32>
    %78 = arith.mulf %65, %77 : vector<128x512xf32>
    %79 = arith.truncf %78 : vector<128x512xf32> to vector<128x512xbf16>
    %c0_36 = arith.constant 0 : index
    %c0_37 = arith.constant 0 : index
    %80 = vector.load %arg11[%c0_36, %c0_37] : memref<512x128xbf16, #tpu.memory_space<vmem>>, vector<512x128xbf16>
    %cst_38 = arith.constant dense<0.000000e+00> : vector<128x128xf32>
    %81 = tpu.matmul %79, %80, %cst_38 {dimension_numbers = #tpu.dot_dimension_numbers<[1], [0], [0], [1], [0, 0, 1, 1], [], []>} : vector<128x512xbf16>, vector<512x128xbf16>, vector<128x128xf32> -> vector<128x128xf32>
    %c0_39 = arith.constant 0 : index
    %c0_40 = arith.constant 0 : index
    %82 = vector.load %arg12[%c0_39, %c0_40] : memref<1x128xf32, #tpu.memory_space<vmem>>, vector<1x128xf32>
    %83 = vector.broadcast %82 : vector<1x128xf32> to vector<128x128xf32>
    %84 = arith.addf %81, %83 : vector<128x128xf32>
    %85 = arith.addf %59, %84 : vector<128x128xf32>
    %c0_41 = arith.constant 0 : index
    %c0_42 = arith.constant 0 : index
    %86 = vector.load %arg13[%c0_41, %c0_42] : memref<1x128xf32, #tpu.memory_space<vmem>>, vector<1x128xf32>
    %c0_43 = arith.constant 0 : index
    %c0_44 = arith.constant 0 : index
    %87 = vector.load %arg14[%c0_43, %c0_44] : memref<1x128xf32, #tpu.memory_space<vmem>>, vector<1x128xf32>
    %cst_45 = arith.constant dense<0.000000e+00> : vector<128xf32>
    %88 = vector.multi_reduction <add>, %85, %cst_45 [1] : vector<128x128xf32> to vector<128xf32>
    %89 = vector.shape_cast %88 : vector<128xf32> to vector<128x1xf32>
    %cst_46 = arith.constant 1.280000e+02 : f32
    %90 = vector.broadcast %cst_46 : f32 to vector<128x1xf32>
    %91 = arith.divf %89, %90 : vector<128x1xf32>
    %92 = vector.broadcast %91 : vector<128x1xf32> to vector<128x128xf32>
    %93 = arith.subf %85, %92 : vector<128x128xf32>
    %94 = arith.mulf %93, %93 : vector<128x128xf32>
    %cst_47 = arith.constant dense<0.000000e+00> : vector<128xf32>
    %95 = vector.multi_reduction <add>, %94, %cst_47 [1] : vector<128x128xf32> to vector<128xf32>
    %96 = vector.shape_cast %95 : vector<128xf32> to vector<128x1xf32>
    %cst_48 = arith.constant 1.280000e+02 : f32
    %97 = vector.broadcast %cst_48 : f32 to vector<128x1xf32>
    %98 = arith.divf %96, %97 : vector<128x1xf32>
    %cst_49 = arith.constant 9.99999974E-6 : f32
    %99 = vector.broadcast %cst_49 : f32 to vector<128x1xf32>
    %100 = arith.addf %98, %99 : vector<128x1xf32>
    %101 = math.rsqrt %100 : vector<128x1xf32>
    %102 = vector.broadcast %101 : vector<128x1xf32> to vector<128x128xf32>
    %103 = arith.mulf %93, %102 : vector<128x128xf32>
    %104 = vector.broadcast %86 : vector<1x128xf32> to vector<128x128xf32>
    %105 = arith.mulf %103, %104 : vector<128x128xf32>
    %106 = vector.broadcast %87 : vector<1x128xf32> to vector<128x128xf32>
    %107 = arith.addf %105, %106 : vector<128x128xf32>
    %108 = vector.shape_cast %107 : vector<128x128xf32> to vector<8x16x128xf32>
    %109 = arith.truncf %108 : vector<8x16x128xf32> to vector<8x16x128xbf16>
    %c0_50 = arith.constant 0 : index
    %c0_51 = arith.constant 0 : index
    %c0_52 = arith.constant 0 : index
    %110 = vector.load %arg15[%c0_50, %c0_51, %c0_52] : memref<8x16x128xbf16, #tpu.memory_space<vmem>>, vector<8x16x128xbf16>
    tpu.vector_store %arg15[%c0_50, %c0_51, %c0_52], %109 {strides = array<i32>} : memref<8x16x128xbf16, #tpu.memory_space<vmem>>, vector<8x16x128xbf16>,
    return
  }
  func.func @transform_0(%arg0: i32) -> (i32, i32, i32) {
    %c0_i32 = arith.constant 0 : i32
    %c0_i32_0 = arith.constant 0 : i32
    %c0_i32_1 = arith.constant 0 : i32
    return %arg0, %c0_i32, %c0_i32_0 : i32, i32, i32
  }
  func.func @transform_1(%arg0: i32) -> (i32, i32) {
    %c0_i32 = arith.constant 0 : i32
    %c0_i32_0 = arith.constant 0 : i32
    return %arg0, %c0_i32 : i32, i32
  }
  func.func @transform_2(%arg0: i32) -> (i32, i32) {
    %c0_i32 = arith.constant 0 : i32
    %c0_i32_0 = arith.constant 0 : i32
    %c0_i32_1 = arith.constant 0 : i32
    return %c0_i32, %c0_i32_0 : i32, i32
  }
  func.func @transform_3(%arg0: i32) -> (i32, i32) {
    %c0_i32 = arith.constant 0 : i32
    %c0_i32_0 = arith.constant 0 : i32
    %c0_i32_1 = arith.constant 0 : i32
    return %c0_i32, %c0_i32_0 : i32, i32
  }
  func.func @transform_4(%arg0: i32) -> (i32, i32) {
    %c0_i32 = arith.constant 0 : i32
    %c0_i32_0 = arith.constant 0 : i32
    %c0_i32_1 = arith.constant 0 : i32
    return %c0_i32, %c0_i32_0 : i32, i32
  }
  func.func @transform_5(%arg0: i32) -> (i32, i32) {
    %c0_i32 = arith.constant 0 : i32
    %c0_i32_0 = arith.constant 0 : i32
    %c0_i32_1 = arith.constant 0 : i32
    return %c0_i32, %c0_i32_0 : i32, i32
  }
  func.func @transform_6(%arg0: i32) -> (i32, i32) {
    %c0_i32 = arith.constant 0 : i32
    %c0_i32_0 = arith.constant 0 : i32
    %c0_i32_1 = arith.constant 0 : i32
    return %c0_i32, %c0_i32_0 : i32, i32
  }
  func.func @transform_7(%arg0: i32) -> (i32, i32) {
    %c0_i32 = arith.constant 0 : i32
    %c0_i32_0 = arith.constant 0 : i32
    %c0_i32_1 = arith.constant 0 : i32
    return %c0_i32, %c0_i32_0 : i32, i32
  }
  func.func @transform_8(%arg0: i32) -> (i32, i32) {
    %c0_i32 = arith.constant 0 : i32
    %c0_i32_0 = arith.constant 0 : i32
    %c0_i32_1 = arith.constant 0 : i32
    return %c0_i32, %c0_i32_0 : i32, i32
  }
  func.func @transform_9(%arg0: i32) -> (i32, i32) {
    %c0_i32 = arith.constant 0 : i32
    %c0_i32_0 = arith.constant 0 : i32
    %c0_i32_1 = arith.constant 0 : i32
    return %c0_i32, %c0_i32_0 : i32, i32
  }
  func.func @transform_10(%arg0: i32) -> (i32, i32) {
    %c0_i32 = arith.constant 0 : i32
    %c0_i32_0 = arith.constant 0 : i32
    %c0_i32_1 = arith.constant 0 : i32
    return %c0_i32, %c0_i32_0 : i32, i32
  }
  func.func @transform_11(%arg0: i32) -> (i32, i32) {
    %c0_i32 = arith.constant 0 : i32
    %c0_i32_0 = arith.constant 0 : i32
    %c0_i32_1 = arith.constant 0 : i32
    return %c0_i32, %c0_i32_0 : i32, i32
  }
  func.func @transform_12(%arg0: i32) -> (i32, i32) {
    %c0_i32 = arith.constant 0 : i32
    %c0_i32_0 = arith.constant 0 : i32
    %c0_i32_1 = arith.constant 0 : i32
    return %c0_i32, %c0_i32_0 : i32, i32
  }
  func.func @transform_13(%arg0: i32) -> (i32, i32) {
    %c0_i32 = arith.constant 0 : i32
    %c0_i32_0 = arith.constant 0 : i32
    %c0_i32_1 = arith.constant 0 : i32
    return %c0_i32, %c0_i32_0 : i32, i32
  }
  func.func @transform_14(%arg0: i32) -> (i32, i32, i32) {
    %c0_i32 = arith.constant 0 : i32
    %c0_i32_0 = arith.constant 0 : i32
    %c0_i32_1 = arith.constant 0 : i32
    return %arg0, %c0_i32, %c0_i32_0 : i32, i32, i32
  }
}

</mosaic_0001>

<llo_original>
// kernel: sliding_window_transformer.3
$region0: #{sliding_window_transformer.3}
  #allocation0 [shape = 'u32[]', space=smem, size = 0x4, offset = 0x4, fixed_abs, tag = 'smem constant byte address 0x4 - core index']
  #allocation1 [shape = 'u32[72,128]{1,0:T(1,128)}', space=vmem, size = 0x9000, scoped, tag = 'internal scratch']
  #allocation2 [shape = 'f32[80,512]{1,0:T(8,128)}', space=vmem, size = 0x28000, scoped, tag = 'scratch operand']
  #allocation3 [shape = 'f32[80,128]{1,0:T(8,128)}', space=vmem, size = 0xa000, scoped, tag = 'scratch operand']
  %s0 = inlined_call_operand.vmem [shape: bf16[80,128], index: 0, kind: input, shape index: {}]
  %s1 = inlined_call_operand.vmem [shape: bf16[128,512], index: 1, kind: input, shape index: {}]
  %s2 = inlined_call_operand.vmem [shape: f32[1,512], index: 2, kind: input, shape index: {}]
  %s3 = inlined_call_operand.vmem [shape: bf16[128,512], index: 3, kind: input, shape index: {}]
  %s4 = inlined_call_operand.vmem [shape: f32[1,128], index: 4, kind: input, shape index: {}]
  %s5 = inlined_call_operand.vmem [shape: f32[1,128], index: 5, kind: input, shape index: {}]
  %s6 = inlined_call_operand.vmem [shape: bf16[128,512], index: 6, kind: input, shape index: {}]
  %s7 = inlined_call_operand.vmem [shape: f32[1,512], index: 7, kind: input, shape index: {}]
  %s8 = inlined_call_operand.vmem [shape: bf16[512,128], index: 8, kind: input, shape index: {}]
  %s9 = inlined_call_operand.vmem [shape: f32[1,128], index: 9, kind: input, shape index: {}]
  %s10 = inlined_call_operand.vmem [shape: f32[1,128], index: 10, kind: input, shape index: {}]
  %s11 = inlined_call_operand.vmem [shape: f32[1,128], index: 11, kind: input, shape index: {}]
  %s12 = inlined_call_operand.vmem [shape: bf16[128,128], index: 12, kind: input, shape index: {}]
  %s13 = inlined_call_operand.vmem [shape: f32[1,128], index: 13, kind: input, shape index: {}]
  %s14 = inlined_call_operand.vmem [shape: f32[80,128], index: 14, kind: output, shape index: {}]
  %s15 = sld [smem:[#allocation0]]
  $region73: #{sliding_window_transformer.3} parent=0
    _
  %s17 = ssub.s32 1, %s15
  %s18 = scalar_select 0, %s17, %s15
  // Predicated region
  $region2: #{sliding_window_transformer.3} parent=0 // pred_check
    _
  $region3: #{sliding_window_transformer.3} parent=0 // pred_check_branch
    %20 = sbr.rel (0) target = $region5
  $region4: #{sliding_window_transformer.3} parent=0 // pred_region
    _
  $region5: #{sliding_window_transformer.3} parent=0 // pred_fallthru
    _
  // Predicated region
  $region6: #{sliding_window_transformer.3} parent=0 // pred_check
    _
  $region7: #{sliding_window_transformer.3} parent=0 // pred_check_branch
    %22 = sbr.rel (0) target = $region9
  $region8: #{sliding_window_transformer.3} parent=0 // pred_region
    _
  $region9: #{sliding_window_transformer.3} parent=0 // pred_fallthru
    _
  // Predicated region
  $region10: #{sliding_window_transformer.3} parent=0 // pred_check
    _
  $region11: #{sliding_window_transformer.3} parent=0 // pred_check_branch
    %24 = sbr.rel (0) target = $region13
  $region12: #{sliding_window_transformer.3} parent=0 // pred_region
    _
  $region13: #{sliding_window_transformer.3} parent=0 // pred_fallthru
    _
  // Predicated region
  $region14: #{sliding_window_transformer.3} parent=0 // pred_check
    _
  $region15: #{sliding_window_transformer.3} parent=0 // pred_check_branch
    %26 = sbr.rel (0) target = $region17
  $region16: #{sliding_window_transformer.3} parent=0 // pred_region
    _
  $region17: #{sliding_window_transformer.3} parent=0 // pred_fallthru
    _
  // Predicated region
  $region18: #{sliding_window_transformer.3} parent=0 // pred_check
    _
  $region19: #{sliding_window_transformer.3} parent=0 // pred_check_branch
    %28 = sbr.rel (0) target = $region21
  $region20: #{sliding_window_transformer.3} parent=0 // pred_region
    _
  $region21: #{sliding_window_transformer.3} parent=0 // pred_fallthru
    _
  // Predicated region
  $region22: #{sliding_window_transformer.3} parent=0 // pred_check
    _
  $region23: #{sliding_window_transformer.3} parent=0 // pred_check_branch
    %30 = sbr.rel (0) target = $region25
  $region24: #{sliding_window_transformer.3} parent=0 // pred_region
    _
  $region25: #{sliding_window_transformer.3} parent=0 // pred_fallthru
    _
  // Predicated region
  $region26: #{sliding_window_transformer.3} parent=0 // pred_check
    _
  $region27: #{sliding_window_transformer.3} parent=0 // pred_check_branch
    %32 = sbr.rel (0) target = $region29
  $region28: #{sliding_window_transformer.3} parent=0 // pred_region
    _
  $region29: #{sliding_window_transformer.3} parent=0 // pred_fallthru
    _
  // Predicated region
  $region30: #{sliding_window_transformer.3} parent=0 // pred_check
    _
  $region31: #{sliding_window_transformer.3} parent=0 // pred_check_branch
    %34 = sbr.rel (0) target = $region33
  $region32: #{sliding_window_transformer.3} parent=0 // pred_region
    _
  $region33: #{sliding_window_transformer.3} parent=0 // pred_fallthru
    _
  // Predicated region
  $region34: #{sliding_window_transformer.3} parent=0 // pred_check
    _
  $region35: #{sliding_window_transformer.3} parent=0 // pred_check_branch
    %36 = sbr.rel (0) target = $region37
  $region36: #{sliding_window_transformer.3} parent=0 // pred_region
    _
  $region37: #{sliding_window_transformer.3} parent=0 // pred_fallthru
    _
  // Predicated region
  $region38: #{sliding_window_transformer.3} parent=0 // pred_check
    _
  $region39: #{sliding_window_transformer.3} parent=0 // pred_check_branch
    %38 = sbr.rel (0) target = $region41
  $region40: #{sliding_window_transformer.3} parent=0 // pred_region
    _
  $region41: #{sliding_window_transformer.3} parent=0 // pred_fallthru
    _
  // Predicated region
  $region42: #{sliding_window_transformer.3} parent=0 // pred_check
    _
  $region43: #{sliding_window_transformer.3} parent=0 // pred_check_branch
    %40 = sbr.rel (0) target = $region45
  $region44: #{sliding_window_transformer.3} parent=0 // pred_region
    _
  $region45: #{sliding_window_transformer.3} parent=0 // pred_fallthru
    _
  // Predicated region
  $region46: #{sliding_window_transformer.3} parent=0 // pred_check
    _
  $region47: #{sliding_window_transformer.3} parent=0 // pred_check_branch
    %42 = sbr.rel (0) target = $region49
  $region48: #{sliding_window_transformer.3} parent=0 // pred_region
    _
  $region49: #{sliding_window_transformer.3} parent=0 // pred_fallthru
    _
  // Predicated region
  $region50: #{sliding_window_transformer.3} parent=0 // pred_check
    _
  $region51: #{sliding_window_transformer.3} parent=0 // pred_check_branch
    %44 = sbr.rel (0) target = $region53
  $region52: #{sliding_window_transformer.3} parent=0 // pred_region
    _
  $region53: #{sliding_window_transformer.3} parent=0 // pred_fallthru
    _
  // Predicated region
  $region54: #{sliding_window_transformer.3} parent=0 // pred_check
    _
  $region55: #{sliding_window_transformer.3} parent=0 // pred_check_branch
    %46 = sbr.rel (0) target = $region57
  $region56: #{sliding_window_transformer.3} parent=0 // pred_region
    _
  $region57: #{sliding_window_transformer.3} parent=0 // pred_fallthru
    _
  %v47 = vld [vmem:[%s0] sm:$0xf]
  %v48 = vld [vmem:[%s0 + $0x4] sm:$0xf]
  %v49 = vld [vmem:[%s0 + $0x8] sm:$0xf]
  %v50 = vld [vmem:[%s0 + $0xc] sm:$0xf]
  %v51 = vld [vmem:[%s0 + $0x10] sm:$0xf]
  %v52 = vld [vmem:[%s0 + $0x14] sm:$0xf]
  %v53 = vld [vmem:[%s0 + $0x18] sm:$0xf]
  %v54 = vld [vmem:[%s0 + $0x1c] sm:$0xf]
  %v55 = vld [vmem:[%s0 + $0x20] sm:$0xf]
  %v56 = vld [vmem:[%s0 + $0x24] sm:$0xf]
  %v57 = vld [vmem:[%s1] sm:$0xff]
  %v58 = vld [vmem:[%s1 + $0x8] sm:$0xff]
  %v59 = vld [vmem:[%s1 + $0x10] sm:$0xff]
  %v60 = vld [vmem:[%s1 + $0x18] sm:$0xff]
  %v61 = vld [vmem:[%s1 + $0x20] sm:$0xff]
  %v62 = vld [vmem:[%s1 + $0x28] sm:$0xff]
  %v63 = vld [vmem:[%s1 + $0x30] sm:$0xff]
  %v64 = vld [vmem:[%s1 + $0x38] sm:$0xff]
  %v65 = vld [vmem:[%s1 + $0x40] sm:$0xff]
  %v66 = vld [vmem:[%s1 + $0x48] sm:$0xff]
  %v67 = vld [vmem:[%s1 + $0x50] sm:$0xff]
  %v68 = vld [vmem:[%s1 + $0x58] sm:$0xff]
  %v69 = vld [vmem:[%s1 + $0x60] sm:$0xff]
  %v70 = vld [vmem:[%s1 + $0x68] sm:$0xff]
  %v71 = vld [vmem:[%s1 + $0x70] sm:$0xff]
  %v72 = vld [vmem:[%s1 + $0x78] sm:$0xff]
  %v73 = vld [vmem:[%s1 + $0x80] sm:$0xff]
  %v74 = vld [vmem:[%s1 + $0x88] sm:$0xff]
  %v75 = vld [vmem:[%s1 + $0x90] sm:$0xff]
  %v76 = vld [vmem:[%s1 + $0x98] sm:$0xff]
  %v77 = vld [vmem:[%s1 + $0xa0] sm:$0xff]
  %v78 = vld [vmem:[%s1 + $0xa8] sm:$0xff]
  %v79 = vld [vmem:[%s1 + $0xb0] sm:$0xff]
  %v80 = vld [vmem:[%s1 + $0xb8] sm:$0xff]
  %v81 = vld [vmem:[%s1 + $0xc0] sm:$0xff]
  %v82 = vld [vmem:[%s1 + $0xc8] sm:$0xff]
  %v83 = vld [vmem:[%s1 + $0xd0] sm:$0xff]
  %v84 = vld [vmem:[%s1 + $0xd8] sm:$0xff]
  %v85 = vld [vmem:[%s1 + $0xe0] sm:$0xff]
  %v86 = vld [vmem:[%s1 + $0xe8] sm:$0xff]
  %v87 = vld [vmem:[%s1 + $0xf0] sm:$0xff]
  %v88 = vld [vmem:[%s1 + $0xf8] sm:$0xff]
  %v89 = vld [vmem:[%s2] sm:$0xf]
  %v91 = vperm.slane %v89, 0
  %v92 = vperm.slane %v89, 1
  %v93 = vperm.slane %v89, 2
  %v94 = vperm.slane %v89, 3
  %v109 = vunpack.c.l.b16 %v47
  %v110 = vunpack.c.l.b16 %v48
  %v111 = vunpack.c.l.b16 %v49
  %v112 = vunpack.c.l.b16 %v50
  %v113 = vunpack.c.l.b16 %v51
  %v114 = vunpack.c.l.b16 %v52
  %v115 = vunpack.c.l.b16 %v53
  %v116 = vunpack.c.l.b16 %v54
  %v117 = vunpack.c.l.b16 %v55
  %v118 = vunpack.c.l.b16 %v56
  %v119 = vpack.c.b16 %v110, %v109
  %v120 = vpack.c.b16 %v112, %v111
  %v121 = vpack.c.b16 %v114, %v113
  %v122 = vpack.c.b16 %v116, %v115
  %v123 = vpack.c.b16 %v118, %v117
  %v161 = vunpack.c.l.b16 %v57
  %v162 = vunpack.c.h.b16 %v57
  %v163 = vunpack.c.l.b16 %v58
  %v164 = vunpack.c.h.b16 %v58
  %v165 = vunpack.c.l.b16 %v59
  %v166 = vunpack.c.h.b16 %v59
  %v167 = vunpack.c.l.b16 %v60
  %v168 = vunpack.c.h.b16 %v60
  %v169 = vunpack.c.l.b16 %v61
  %v170 = vunpack.c.h.b16 %v61
  %v171 = vunpack.c.l.b16 %v62
  %v172 = vunpack.c.h.b16 %v62
  %v173 = vunpack.c.l.b16 %v63
  %v174 = vunpack.c.h.b16 %v63
  %v175 = vunpack.c.l.b16 %v64
  %v176 = vunpack.c.h.b16 %v64
  %v177 = vunpack.c.l.b16 %v65
  %v178 = vunpack.c.h.b16 %v65
  %v179 = vunpack.c.l.b16 %v66
  %v180 = vunpack.c.h.b16 %v66
  %v181 = vunpack.c.l.b16 %v67
  %v182 = vunpack.c.h.b16 %v67
  %v183 = vunpack.c.l.b16 %v68
  %v184 = vunpack.c.h.b16 %v68
  %v185 = vunpack.c.l.b16 %v69
  %v186 = vunpack.c.h.b16 %v69
  %v187 = vunpack.c.l.b16 %v70
  %v188 = vunpack.c.h.b16 %v70
  %v189 = vunpack.c.l.b16 %v71
  %v190 = vunpack.c.h.b16 %v71
  %v191 = vunpack.c.l.b16 %v72
  %v192 = vunpack.c.h.b16 %v72
  %v193 = vunpack.c.l.b16 %v73
  %v194 = vunpack.c.h.b16 %v73
  %v195 = vunpack.c.l.b16 %v74
  %v196 = vunpack.c.h.b16 %v74
  %v197 = vunpack.c.l.b16 %v75
  %v198 = vunpack.c.h.b16 %v75
  %v199 = vunpack.c.l.b16 %v76
  %v200 = vunpack.c.h.b16 %v76
  %v201 = vunpack.c.l.b16 %v77
  %v202 = vunpack.c.h.b16 %v77
  %v203 = vunpack.c.l.b16 %v78
  %v204 = vunpack.c.h.b16 %v78
  %v205 = vunpack.c.l.b16 %v79
  %v206 = vunpack.c.h.b16 %v79
  %v207 = vunpack.c.l.b16 %v80
  %v208 = vunpack.c.h.b16 %v80
  %v209 = vunpack.c.l.b16 %v81
  %v210 = vunpack.c.h.b16 %v81
  %v211 = vunpack.c.l.b16 %v82
  %v212 = vunpack.c.h.b16 %v82
  %v213 = vunpack.c.l.b16 %v83
  %v214 = vunpack.c.h.b16 %v83
  %v215 = vunpack.c.l.b16 %v84
  %v216 = vunpack.c.h.b16 %v84
  %v217 = vunpack.c.l.b16 %v85
  %v218 = vunpack.c.h.b16 %v85
  %v219 = vunpack.c.l.b16 %v86
  %v220 = vunpack.c.h.b16 %v86
  %v221 = vunpack.c.l.b16 %v87
  %v222 = vunpack.c.h.b16 %v87
  %v223 = vunpack.c.l.b16 %v88
  %v224 = vunpack.c.h.b16 %v88
  %v225 = vpack.c.b16 %v165, %v161
  %v226 = vpack.c.b16 %v166, %v162
  %v227 = vpack.c.b16 %v167, %v163
  %v228 = vpack.c.b16 %v168, %v164
  %v229 = vpack.c.b16 %v173, %v169
  %v230 = vpack.c.b16 %v174, %v170
  %v231 = vpack.c.b16 %v175, %v171
  %v232 = vpack.c.b16 %v176, %v172
  %v233 = vpack.c.b16 %v181, %v177
  %v234 = vpack.c.b16 %v182, %v178
  %v235 = vpack.c.b16 %v183, %v179
  %v236 = vpack.c.b16 %v184, %v180
  %v237 = vpack.c.b16 %v189, %v185
  %v238 = vpack.c.b16 %v190, %v186
  %v239 = vpack.c.b16 %v191, %v187
  %v240 = vpack.c.b16 %v192, %v188
  %v241 = vpack.c.b16 %v197, %v193
  %v242 = vpack.c.b16 %v198, %v194
  %v243 = vpack.c.b16 %v199, %v195
  %v244 = vpack.c.b16 %v200, %v196
  %v245 = vpack.c.b16 %v205, %v201
  %v246 = vpack.c.b16 %v206, %v202
  %v247 = vpack.c.b16 %v207, %v203
  %v248 = vpack.c.b16 %v208, %v204
  %v249 = vpack.c.b16 %v213, %v209
  %v250 = vpack.c.b16 %v214, %v210
  %v251 = vpack.c.b16 %v215, %v211
  %v252 = vpack.c.b16 %v216, %v212
  %v253 = vpack.c.b16 %v221, %v217
  %v254 = vpack.c.b16 %v222, %v218
  %v255 = vpack.c.b16 %v223, %v219
  %v256 = vpack.c.b16 %v224, %v220
  %289 = vmatpush.bf16.msra.mxu0 %v253
  %290 = vmatpush.bf16.msra.mxu0 %v249
  %291 = vmatpush.bf16.msra.mxu0 %v245
  %292 = vmatpush.bf16.msra.mxu0 %v241
  %293 = vmatpush.bf16.msra.mxu0 %v237
  %294 = vmatpush.bf16.msra.mxu0 %v233
  %295 = vmatpush.bf16.msra.mxu0 %v229
  %296 = vmatpush.bf16.msra.mxu0 %v225
  %297 = vmatmul.bf16.gmra.mxu0 %v119
  %v298 = vpop.f32.mrf.mxu0
  %v299 = vadd.f32 %v91, %v298
  %v300 = vpop.f32.mrf.mxu0
  %v301 = vadd.f32 %v91, %v300
  %302 = vmatmul.bf16.gmra.mxu0 %v120
  %v303 = vpop.f32.mrf.mxu0
  %v304 = vadd.f32 %v91, %v303
  %v305 = vpop.f32.mrf.mxu0
  %v306 = vadd.f32 %v91, %v305
  %307 = vmatmul.bf16.gmra.mxu0 %v121
  %v308 = vpop.f32.mrf.mxu0
  %v309 = vadd.f32 %v91, %v308
  %v310 = vpop.f32.mrf.mxu0
  %v311 = vadd.f32 %v91, %v310
  %312 = vmatmul.bf16.gmra.mxu0 %v122
  %v313 = vpop.f32.mrf.mxu0
  %v314 = vadd.f32 %v91, %v313
  %v315 = vpop.f32.mrf.mxu0
  %v316 = vadd.f32 %v91, %v315
  %317 = vmatmul.bf16.gmra.mxu0 %v123
  %v318 = vpop.f32.mrf.mxu0
  %v319 = vadd.f32 %v91, %v318
  %v320 = vpop.f32.mrf.mxu0
  %v321 = vadd.f32 %v91, %v320
  %322 = vdwg.mxu0
  %323 = vmatpush.bf16.msra.mxu0 %v254
  %324 = vmatpush.bf16.msra.mxu0 %v250
  %325 = vmatpush.bf16.msra.mxu0 %v246
  %326 = vmatpush.bf16.msra.mxu0 %v242
  %327 = vmatpush.bf16.msra.mxu0 %v238
  %328 = vmatpush.bf16.msra.mxu0 %v234
  %329 = vmatpush.bf16.msra.mxu0 %v230
  %330 = vmatpush.bf16.msra.mxu0 %v226
  %331 = vmatmul.bf16.gmra.mxu0 %v119
  %v332 = vpop.f32.mrf.mxu0
  %v333 = vadd.f32 %v92, %v332
  %v334 = vpop.f32.mrf.mxu0
  %v335 = vadd.f32 %v92, %v334
  %336 = vmatmul.bf16.gmra.mxu0 %v120
  %v337 = vpop.f32.mrf.mxu0
  %v338 = vadd.f32 %v92, %v337
  %v339 = vpop.f32.mrf.mxu0
  %v340 = vadd.f32 %v92, %v339
  %341 = vmatmul.bf16.gmra.mxu0 %v121
  %v342 = vpop.f32.mrf.mxu0
  %v343 = vadd.f32 %v92, %v342
  %v344 = vpop.f32.mrf.mxu0
  %v345 = vadd.f32 %v92, %v344
  %346 = vmatmul.bf16.gmra.mxu0 %v122
  %v347 = vpop.f32.mrf.mxu0
  %v348 = vadd.f32 %v92, %v347
  %v349 = vpop.f32.mrf.mxu0
  %v350 = vadd.f32 %v92, %v349
  %351 = vmatmul.bf16.gmra.mxu0 %v123
  %v352 = vpop.f32.mrf.mxu0
  %v353 = vadd.f32 %v92, %v352
  %v354 = vpop.f32.mrf.mxu0
  %v355 = vadd.f32 %v92, %v354
  %356 = vdwg.mxu0
  %357 = vmatpush.bf16.msra.mxu0 %v255
  %358 = vmatpush.bf16.msra.mxu0 %v251
  %359 = vmatpush.bf16.msra.mxu0 %v247
  %360 = vmatpush.bf16.msra.mxu0 %v243
  %361 = vmatpush.bf16.msra.mxu0 %v239
  %362 = vmatpush.bf16.msra.mxu0 %v235
  %363 = vmatpush.bf16.msra.mxu0 %v231
  %364 = vmatpush.bf16.msra.mxu0 %v227
  %365 = vmatmul.bf16.gmra.mxu0 %v119
  %v366 = vpop.f32.mrf.mxu0
  %v367 = vadd.f32 %v93, %v366
  %v368 = vpop.f32.mrf.mxu0
  %v369 = vadd.f32 %v93, %v368
  %370 = vmatmul.bf16.gmra.mxu0 %v120
  %v371 = vpop.f32.mrf.mxu0
  %v372 = vadd.f32 %v93, %v371
  %v373 = vpop.f32.mrf.mxu0
  %v374 = vadd.f32 %v93, %v373
  %375 = vmatmul.bf16.gmra.mxu0 %v121
  %v376 = vpop.f32.mrf.mxu0
  %v377 = vadd.f32 %v93, %v376
  %v378 = vpop.f32.mrf.mxu0
  %v379 = vadd.f32 %v93, %v378
  %380 = vmatmul.bf16.gmra.mxu0 %v122
  %v381 = vpop.f32.mrf.mxu0
  %v382 = vadd.f32 %v93, %v381
  %v383 = vpop.f32.mrf.mxu0
  %v384 = vadd.f32 %v93, %v383
  %385 = vmatmul.bf16.gmra.mxu0 %v123
  %v386 = vpop.f32.mrf.mxu0
  %v387 = vadd.f32 %v93, %v386
  %v388 = vpop.f32.mrf.mxu0
  %v389 = vadd.f32 %v93, %v388
  %390 = vdwg.mxu0
  %391 = vmatpush.bf16.msra.mxu0 %v256
  %392 = vmatpush.bf16.msra.mxu0 %v252
  %393 = vmatpush.bf16.msra.mxu0 %v248
  %394 = vmatpush.bf16.msra.mxu0 %v244
  %395 = vmatpush.bf16.msra.mxu0 %v240
  %396 = vmatpush.bf16.msra.mxu0 %v236
  %397 = vmatpush.bf16.msra.mxu0 %v232
  %398 = vmatpush.bf16.msra.mxu0 %v228
  %399 = vmatmul.bf16.gmra.mxu0 %v119
  %v400 = vpop.f32.mrf.mxu0
  %v401 = vadd.f32 %v94, %v400
  %v402 = vpop.f32.mrf.mxu0
  %v403 = vadd.f32 %v94, %v402
  %404 = vmatmul.bf16.gmra.mxu0 %v120
  %v405 = vpop.f32.mrf.mxu0
  %v406 = vadd.f32 %v94, %v405
  %v407 = vpop.f32.mrf.mxu0
  %v408 = vadd.f32 %v94, %v407
  %409 = vmatmul.bf16.gmra.mxu0 %v121
  %v410 = vpop.f32.mrf.mxu0
  %v411 = vadd.f32 %v94, %v410
  %v412 = vpop.f32.mrf.mxu0
  %v413 = vadd.f32 %v94, %v412
  %414 = vmatmul.bf16.gmra.mxu0 %v122
  %v415 = vpop.f32.mrf.mxu0
  %v416 = vadd.f32 %v94, %v415
  %v417 = vpop.f32.mrf.mxu0
  %v418 = vadd.f32 %v94, %v417
  %419 = vmatmul.bf16.gmra.mxu0 %v123
  %v420 = vpop.f32.mrf.mxu0
  %v421 = vadd.f32 %v94, %v420
  %v422 = vpop.f32.mrf.mxu0
  %v423 = vadd.f32 %v94, %v422
  %424 = vdwg.mxu0
  %425 = vst [vmem:[#allocation2] sm:$0xff] %v299
  %426 = vst [vmem:[#allocation2 + $0x8] sm:$0xff] %v333
  %427 = vst [vmem:[#allocation2 + $0x10] sm:$0xff] %v367
  %428 = vst [vmem:[#allocation2 + $0x18] sm:$0xff] %v401
  %429 = vst [vmem:[#allocation2 + $0x20] sm:$0xff] %v301
  %430 = vst [vmem:[#allocation2 + $0x28] sm:$0xff] %v335
  %431 = vst [vmem:[#allocation2 + $0x30] sm:$0xff] %v369
  %432 = vst [vmem:[#allocation2 + $0x38] sm:$0xff] %v403
  %433 = vst [vmem:[#allocation2 + $0x40] sm:$0xff] %v304
  %434 = vst [vmem:[#allocation2 + $0x48] sm:$0xff] %v338
  %435 = vst [vmem:[#allocation2 + $0x50] sm:$0xff] %v372
  %436 = vst [vmem:[#allocation2 + $0x58] sm:$0xff] %v406
  %437 = vst [vmem:[#allocation2 + $0x60] sm:$0xff] %v306
  %438 = vst [vmem:[#allocation2 + $0x68] sm:$0xff] %v340
  %439 = vst [vmem:[#allocation2 + $0x70] sm:$0xff] %v374
  %440 = vst [vmem:[#allocation2 + $0x78] sm:$0xff] %v408
  %441 = vst [vmem:[#allocation2 + $0x80] sm:$0xff] %v309
  %442 = vst [vmem:[#allocation2 + $0x88] sm:$0xff] %v343
  %443 = vst [vmem:[#allocation2 + $0x90] sm:$0xff] %v377
  %444 = vst [vmem:[#allocation2 + $0x98] sm:$0xff] %v411
  %445 = vst [vmem:[#allocation2 + $0xa0] sm:$0xff] %v311
  %446 = vst [vmem:[#allocation2 + $0xa8] sm:$0xff] %v345
  %447 = vst [vmem:[#allocation2 + $0xb0] sm:$0xff] %v379
  %448 = vst [vmem:[#allocation2 + $0xb8] sm:$0xff] %v413
  %449 = vst [vmem:[#allocation2 + $0xc0] sm:$0xff] %v314
  %450 = vst [vmem:[#allocation2 + $0xc8] sm:$0xff] %v348
  %451 = vst [vmem:[#allocation2 + $0xd0] sm:$0xff] %v382
  %452 = vst [vmem:[#allocation2 + $0xd8] sm:$0xff] %v416
  %453 = vst [vmem:[#allocation2 + $0xe0] sm:$0xff] %v316
  %454 = vst [vmem:[#allocation2 + $0xe8] sm:$0xff] %v350
  %455 = vst [vmem:[#allocation2 + $0xf0] sm:$0xff] %v384
  %456 = vst [vmem:[#allocation2 + $0xf8] sm:$0xff] %v418
  %457 = vst [vmem:[#allocation2 + $0x100] sm:$0xff] %v319
  %458 = vst [vmem:[#allocation2 + $0x108] sm:$0xff] %v353
  %459 = vst [vmem:[#allocation2 + $0x110] sm:$0xff] %v387
  %460 = vst [vmem:[#allocation2 + $0x118] sm:$0xff] %v421
  %461 = vst [vmem:[#allocation2 + $0x120] sm:$0xff] %v321
  %462 = vst [vmem:[#allocation2 + $0x128] sm:$0xff] %v355
  %463 = vst [vmem:[#allocation2 + $0x130] sm:$0xff] %v389
  %464 = vst [vmem:[#allocation2 + $0x138] sm:$0xff] %v423
  loop: start=0, step=1, limit=10
  $region58: #{sliding_window_transformer.3} parent=0 // loop_pre_header
    _
  $region59: #{sliding_window_transformer.3} parent=0 // loop_header
    %s466 = sphi 0, %s470
    %p467 = scmp.ge.s32.totalorder %s466, 10
    %v471 = vphi 0.0, %v1211
    %v472 = vphi 0.0, %v1209
  $region60: #{sliding_window_transformer.3} parent=0 // loop_header_branch
    %469 = sbr.rel (%p467) target = $region64
  $region61: #{sliding_window_transformer.3} parent=0 // loop_body
    %s473 = smul.u32 %s466, 8
    %s474 = sshra.s32 %s473, 3
    %s475 = sand.u32 %s473, 7
    %s476 = smul.u32 %s474, 4
    %s477 = smul.addr %s476, 8
    %s478 = scalar_lea.vmem [#allocation2], %s477
    %v479 = vld [vmem:[%s478] sm:$0xff]
    %v480 = vld [vmem:[%s478 + $0x8] sm:$0xff]
    %v481 = vld [vmem:[%s478 + $0x10] sm:$0xff]
    %v482 = vld [vmem:[%s478 + $0x18] sm:$0xff]
    %v483 = vpack.c.bf16 %v471, %v471
    %v484 = vld [vmem:[%s3] sm:$0xff]
    %v485 = vld [vmem:[%s3 + $0x8] sm:$0xff]
    %v486 = vld [vmem:[%s3 + $0x10] sm:$0xff]
    %v487 = vld [vmem:[%s3 + $0x18] sm:$0xff]
    %v488 = vld [vmem:[%s3 + $0x20] sm:$0xff]
    %v489 = vld [vmem:[%s3 + $0x28] sm:$0xff]
    %v490 = vld [vmem:[%s3 + $0x30] sm:$0xff]
    %v491 = vld [vmem:[%s3 + $0x38] sm:$0xff]
    %v492 = vld [vmem:[%s3 + $0x40] sm:$0xff]
    %v493 = vld [vmem:[%s3 + $0x48] sm:$0xff]
    %v494 = vld [vmem:[%s3 + $0x50] sm:$0xff]
    %v495 = vld [vmem:[%s3 + $0x58] sm:$0xff]
    %v496 = vld [vmem:[%s3 + $0x60] sm:$0xff]
    %v497 = vld [vmem:[%s3 + $0x68] sm:$0xff]
    %v498 = vld [vmem:[%s3 + $0x70] sm:$0xff]
    %v499 = vld [vmem:[%s3 + $0x78] sm:$0xff]
    %v500 = vld [vmem:[%s3 + $0x80] sm:$0xff]
    %v501 = vld [vmem:[%s3 + $0x88] sm:$0xff]
    %v502 = vld [vmem:[%s3 + $0x90] sm:$0xff]
    %v503 = vld [vmem:[%s3 + $0x98] sm:$0xff]
    %v504 = vld [vmem:[%s3 + $0xa0] sm:$0xff]
    %v505 = vld [vmem:[%s3 + $0xa8] sm:$0xff]
    %v506 = vld [vmem:[%s3 + $0xb0] sm:$0xff]
    %v507 = vld [vmem:[%s3 + $0xb8] sm:$0xff]
    %v508 = vld [vmem:[%s3 + $0xc0] sm:$0xff]
    %v509 = vld [vmem:[%s3 + $0xc8] sm:$0xff]
    %v510 = vld [vmem:[%s3 + $0xd0] sm:$0xff]
    %v511 = vld [vmem:[%s3 + $0xd8] sm:$0xff]
    %v512 = vld [vmem:[%s3 + $0xe0] sm:$0xff]
    %v513 = vld [vmem:[%s3 + $0xe8] sm:$0xff]
    %v514 = vld [vmem:[%s3 + $0xf0] sm:$0xff]
    %v515 = vld [vmem:[%s3 + $0xf8] sm:$0xff]
    %v517 = vrot.slane %v483, 3
    %v551 = vunpack.c.l.b16 %v484
    %v552 = vunpack.c.h.b16 %v484
    %v553 = vunpack.c.l.b16 %v485
    %v554 = vunpack.c.h.b16 %v485
    %v555 = vunpack.c.l.b16 %v486
    %v556 = vunpack.c.h.b16 %v486
    %v557 = vunpack.c.l.b16 %v487
    %v558 = vunpack.c.h.b16 %v487
    %v559 = vunpack.c.l.b16 %v488
    %v560 = vunpack.c.h.b16 %v488
    %v561 = vunpack.c.l.b16 %v489
    %v562 = vunpack.c.h.b16 %v489
    %v563 = vunpack.c.l.b16 %v490
    %v564 = vunpack.c.h.b16 %v490
    %v565 = vunpack.c.l.b16 %v491
    %v566 = vunpack.c.h.b16 %v491
    %v567 = vunpack.c.l.b16 %v492
    %v568 = vunpack.c.h.b16 %v492
    %v569 = vunpack.c.l.b16 %v493
    %v570 = vunpack.c.h.b16 %v493
    %v571 = vunpack.c.l.b16 %v494
    %v572 = vunpack.c.h.b16 %v494
    %v573 = vunpack.c.l.b16 %v495
    %v574 = vunpack.c.h.b16 %v495
    %v575 = vunpack.c.l.b16 %v496
    %v576 = vunpack.c.h.b16 %v496
    %v577 = vunpack.c.l.b16 %v497
    %v578 = vunpack.c.h.b16 %v497
    %v579 = vunpack.c.l.b16 %v498
    %v580 = vunpack.c.h.b16 %v498
    %v581 = vunpack.c.l.b16 %v499
    %v582 = vunpack.c.h.b16 %v499
    %v583 = vunpack.c.l.b16 %v500
    %v584 = vunpack.c.h.b16 %v500
    %v585 = vunpack.c.l.b16 %v501
    %v586 = vunpack.c.h.b16 %v501
    %v587 = vunpack.c.l.b16 %v502
    %v588 = vunpack.c.h.b16 %v502
    %v589 = vunpack.c.l.b16 %v503
    %v590 = vunpack.c.h.b16 %v503
    %v591 = vunpack.c.l.b16 %v504
    %v592 = vunpack.c.h.b16 %v504
    %v593 = vunpack.c.l.b16 %v505
    %v594 = vunpack.c.h.b16 %v505
    %v595 = vunpack.c.l.b16 %v506
    %v596 = vunpack.c.h.b16 %v506
    %v597 = vunpack.c.l.b16 %v507
    %v598 = vunpack.c.h.b16 %v507
    %v599 = vunpack.c.l.b16 %v508
    %v600 = vunpack.c.h.b16 %v508
    %v601 = vunpack.c.l.b16 %v509
    %v602 = vunpack.c.h.b16 %v509
    %v603 = vunpack.c.l.b16 %v510
    %v604 = vunpack.c.h.b16 %v510
    %v605 = vunpack.c.l.b16 %v511
    %v606 = vunpack.c.h.b16 %v511
    %v607 = vunpack.c.l.b16 %v512
    %v608 = vunpack.c.h.b16 %v512
    %v609 = vunpack.c.l.b16 %v513
    %v610 = vunpack.c.h.b16 %v513
    %v611 = vunpack.c.l.b16 %v514
    %v612 = vunpack.c.h.b16 %v514
    %v613 = vunpack.c.l.b16 %v515
    %v614 = vunpack.c.h.b16 %v515
    %v615 = vpack.c.b16 %v555, %v551
    %v616 = vpack.c.b16 %v556, %v552
    %v617 = vpack.c.b16 %v557, %v553
    %v618 = vpack.c.b16 %v558, %v554
    %v619 = vpack.c.b16 %v563, %v559
    %v620 = vpack.c.b16 %v564, %v560
    %v621 = vpack.c.b16 %v565, %v561
    %v622 = vpack.c.b16 %v566, %v562
    %v623 = vpack.c.b16 %v571, %v567
    %v624 = vpack.c.b16 %v572, %v568
    %v625 = vpack.c.b16 %v573, %v569
    %v626 = vpack.c.b16 %v574, %v570
    %v627 = vpack.c.b16 %v579, %v575
    %v628 = vpack.c.b16 %v580, %v576
    %v629 = vpack.c.b16 %v581, %v577
    %v630 = vpack.c.b16 %v582, %v578
    %v631 = vpack.c.b16 %v587, %v583
    %v632 = vpack.c.b16 %v588, %v584
    %v633 = vpack.c.b16 %v589, %v585
    %v634 = vpack.c.b16 %v590, %v586
    %v635 = vpack.c.b16 %v595, %v591
    %v636 = vpack.c.b16 %v596, %v592
    %v637 = vpack.c.b16 %v597, %v593
    %v638 = vpack.c.b16 %v598, %v594
    %v639 = vpack.c.b16 %v603, %v599
    %v640 = vpack.c.b16 %v604, %v600
    %v641 = vpack.c.b16 %v605, %v601
    %v642 = vpack.c.b16 %v606, %v602
    %v643 = vpack.c.b16 %v611, %v607
    %v644 = vpack.c.b16 %v612, %v608
    %v645 = vpack.c.b16 %v613, %v609
    %v646 = vpack.c.b16 %v614, %v610
    %679 = vmatpush.bf16.msra.mxu0 %v643
    %680 = vmatpush.bf16.msra.mxu0 %v639
    %681 = vmatpush.bf16.msra.mxu0 %v635
    %682 = vmatpush.bf16.msra.mxu0 %v631
    %683 = vmatpush.bf16.msra.mxu0 %v627
    %684 = vmatpush.bf16.msra.mxu0 %v623
    %685 = vmatpush.bf16.msra.mxu0 %v619
    %686 = vmatpush.bf16.msra.mxu0 %v615
    %687 = vmatmul.bf16.gmra.mxu0 %v517
    %v688 = vpop.f32.mrf.mxu0
    %v689 = vadd.f32 0.0, %v688
    %v690 = vpop.f32.mrf.mxu0
    %691 = vdwg.mxu0
    %692 = vmatpush.bf16.msra.mxu0 %v644
    %693 = vmatpush.bf16.msra.mxu0 %v640
    %694 = vmatpush.bf16.msra.mxu0 %v636
    %695 = vmatpush.bf16.msra.mxu0 %v632
    %696 = vmatpush.bf16.msra.mxu0 %v628
    %697 = vmatpush.bf16.msra.mxu0 %v624
    %698 = vmatpush.bf16.msra.mxu0 %v620
    %699 = vmatpush.bf16.msra.mxu0 %v616
    %700 = vmatmul.bf16.gmra.mxu0 %v517
    %v701 = vpop.f32.mrf.mxu0
    %v702 = vadd.f32 0.0, %v701
    %v703 = vpop.f32.mrf.mxu0
    %704 = vdwg.mxu0
    %705 = vmatpush.bf16.msra.mxu0 %v645
    %706 = vmatpush.bf16.msra.mxu0 %v641
    %707 = vmatpush.bf16.msra.mxu0 %v637
    %708 = vmatpush.bf16.msra.mxu0 %v633
    %709 = vmatpush.bf16.msra.mxu0 %v629
    %710 = vmatpush.bf16.msra.mxu0 %v625
    %711 = vmatpush.bf16.msra.mxu0 %v621
    %712 = vmatpush.bf16.msra.mxu0 %v617
    %713 = vmatmul.bf16.gmra.mxu0 %v517
    %v714 = vpop.f32.mrf.mxu0
    %v715 = vadd.f32 0.0, %v714
    %v716 = vpop.f32.mrf.mxu0
    %717 = vdwg.mxu0
    %718 = vmatpush.bf16.msra.mxu0 %v646
    %719 = vmatpush.bf16.msra.mxu0 %v642
    %720 = vmatpush.bf16.msra.mxu0 %v638
    %721 = vmatpush.bf16.msra.mxu0 %v634
    %722 = vmatpush.bf16.msra.mxu0 %v630
    %723 = vmatpush.bf16.msra.mxu0 %v626
    %724 = vmatpush.bf16.msra.mxu0 %v622
    %725 = vmatpush.bf16.msra.mxu0 %v618
    %726 = vmatmul.bf16.gmra.mxu0 %v517
    %v727 = vpop.f32.mrf.mxu0
    %v728 = vadd.f32 0.0, %v727
    %v729 = vpop.f32.mrf.mxu0
    %730 = vdwg.mxu0
    %v731 = vadd.f32 %v479, %v689
    %v732 = vadd.f32 %v480, %v702
    %v733 = vadd.f32 %v481, %v715
    %v734 = vadd.f32 %v482, %v728
    %v735 = vxor.u32 %v731, 2147483648
    %v736 = vmul.f32 %v735, 1.442695
    %v737 = vpow.pop %v736
    %v738 = vadd.f32 %v737, 1.0
    %v739 = vrcp.pop %v738
    %v740 = vmul.f32 %v738, %v739
    %v741 = vsub.f32 1.0, %v740
    %v742 = vmul.f32 %v739, %v741
    %v743 = vadd.f32 %v739, %v742
    %vm744 = vweird.f32 %v738
    %vm745 = vweird.f32 %v739
    %vm746 = vmor %vm744, %vm745
    %v747 = vsel %vm746, %v739, %v743
    %v748 = vand.u32 2147483647, %v738
    %vm749 = vcmp.eq.f32.partialorder %v748, 8.507059e+37
    %v750 = vand.u32 %v738, 2147483648
    %v751 = vor.u32 1.1754944e-38, %v750
    %v752 = vsel %vm749, %v751, %v747
    %v753 = vmul.f32 1.0, %v752
    %v754 = vxor.u32 %v732, 2147483648
    %v755 = vmul.f32 %v754, 1.442695
    %v756 = vpow.pop %v755
    %v757 = vadd.f32 %v756, 1.0
    %v758 = vrcp.pop %v757
    %v759 = vmul.f32 %v757, %v758
    %v760 = vsub.f32 1.0, %v759
    %v761 = vmul.f32 %v758, %v760
    %v762 = vadd.f32 %v758, %v761
    %vm763 = vweird.f32 %v757
    %vm764 = vweird.f32 %v758
    %vm765 = vmor %vm763, %vm764
    %v766 = vsel %vm765, %v758, %v762
    %v767 = vand.u32 2147483647, %v757
    %vm768 = vcmp.eq.f32.partialorder %v767, 8.507059e+37
    %v769 = vand.u32 %v757, 2147483648
    %v770 = vor.u32 1.1754944e-38, %v769
    %v771 = vsel %vm768, %v770, %v766
    %v772 = vmul.f32 1.0, %v771
    %v773 = vtanh.pop %v733
    %v774 = vxor.u32 %v734, 2147483648
    %v775 = vmul.f32 %v774, 1.442695
    %v776 = vpow.pop %v775
    %v777 = vadd.f32 %v776, 1.0
    %v778 = vrcp.pop %v777
    %v779 = vmul.f32 %v777, %v778
    %v780 = vsub.f32 1.0, %v779
    %v781 = vmul.f32 %v778, %v780
    %v782 = vadd.f32 %v778, %v781
    %vm783 = vweird.f32 %v777
    %vm784 = vweird.f32 %v778
    %vm785 = vmor %vm783, %vm784
    %v786 = vsel %vm785, %v778, %v782
    %v787 = vand.u32 2147483647, %v777
    %vm788 = vcmp.eq.f32.partialorder %v787, 8.507059e+37
    %v789 = vand.u32 %v777, 2147483648
    %v790 = vor.u32 1.1754944e-38, %v789
    %v791 = vsel %vm788, %v790, %v786
    %v792 = vmul.f32 1.0, %v791
    %v794 = vrot.slane %v472, 6
    %v796 = vmul.f32 %v772, %v794
    %v797 = vmul.f32 %v753, %v773
    %v798 = vadd.f32 %v796, %v797
    %v799 = vtanh.pop %v798
    %v800 = vmul.f32 %v792, %v799
    %v801 = vpack.c.bf16 %v800, %v800
    %802 = vmatpush.bf16.msra.mxu0 %v643
    %803 = vmatpush.bf16.msra.mxu0 %v639
    %804 = vmatpush.bf16.msra.mxu0 %v635
    %805 = vmatpush.bf16.msra.mxu0 %v631
    %806 = vmatpush.bf16.msra.mxu0 %v627
    %807 = vmatpush.bf16.msra.mxu0 %v623
    %808 = vmatpush.bf16.msra.mxu0 %v619
    %809 = vmatpush.bf16.msra.mxu0 %v615
    %810 = vmatmul.bf16.gmra.mxu0 %v801
    %v811 = vpop.f32.mrf.mxu0
    %v812 = vadd.f32 0.0, %v811
    %v813 = vpop.f32.mrf.mxu0
    %814 = vdwg.mxu0
    %815 = vmatpush.bf16.msra.mxu0 %v644
    %816 = vmatpush.bf16.msra.mxu0 %v640
    %817 = vmatpush.bf16.msra.mxu0 %v636
    %818 = vmatpush.bf16.msra.mxu0 %v632
    %819 = vmatpush.bf16.msra.mxu0 %v628
    %820 = vmatpush.bf16.msra.mxu0 %v624
    %821 = vmatpush.bf16.msra.mxu0 %v620
    %822 = vmatpush.bf16.msra.mxu0 %v616
    %823 = vmatmul.bf16.gmra.mxu0 %v801
    %v824 = vpop.f32.mrf.mxu0
    %v825 = vadd.f32 0.0, %v824
    %v826 = vpop.f32.mrf.mxu0
    %827 = vdwg.mxu0
    %828 = vmatpush.bf16.msra.mxu0 %v645
    %829 = vmatpush.bf16.msra.mxu0 %v641
    %830 = vmatpush.bf16.msra.mxu0 %v637
    %831 = vmatpush.bf16.msra.mxu0 %v633
    %832 = vmatpush.bf16.msra.mxu0 %v629
    %833 = vmatpush.bf16.msra.mxu0 %v625
    %834 = vmatpush.bf16.msra.mxu0 %v621
    %835 = vmatpush.bf16.msra.mxu0 %v617
    %836 = vmatmul.bf16.gmra.mxu0 %v801
    %v837 = vpop.f32.mrf.mxu0
    %v838 = vadd.f32 0.0, %v837
    %v839 = vpop.f32.mrf.mxu0
    %840 = vdwg.mxu0
    %841 = vmatpush.bf16.msra.mxu0 %v646
    %842 = vmatpush.bf16.msra.mxu0 %v642
    %843 = vmatpush.bf16.msra.mxu0 %v638
    %844 = vmatpush.bf16.msra.mxu0 %v634
    %845 = vmatpush.bf16.msra.mxu0 %v630
    %846 = vmatpush.bf16.msra.mxu0 %v626
    %847 = vmatpush.bf16.msra.mxu0 %v622
    %848 = vmatpush.bf16.msra.mxu0 %v618
    %849 = vmatmul.bf16.gmra.mxu0 %v801
    %v850 = vpop.f32.mrf.mxu0
    %v851 = vadd.f32 0.0, %v850
    %v852 = vpop.f32.mrf.mxu0
    %853 = vdwg.mxu0
    %v858 = vrot.slane %v812, 6
    %v859 = vrot.slane %v825, 6
    %v860 = vrot.slane %v838, 6
    %v861 = vrot.slane %v851, 6
    %v866 = vadd.f32 %v479, %v858
    %v867 = vadd.f32 %v480, %v859
    %v868 = vadd.f32 %v481, %v860
    %v869 = vadd.f32 %v482, %v861
    %v870 = vxor.u32 %v866, 2147483648
    %v871 = vmul.f32 %v870, 1.442695
    %v872 = vpow.pop %v871
    %v873 = vadd.f32 %v872, 1.0
    %v874 = vrcp.pop %v873
    %v875 = vmul.f32 %v873, %v874
    %v876 = vsub.f32 1.0, %v875
    %v877 = vmul.f32 %v874, %v876
    %v878 = vadd.f32 %v874, %v877
    %vm879 = vweird.f32 %v873
    %vm880 = vweird.f32 %v874
    %vm881 = vmor %vm879, %vm880
    %v882 = vsel %vm881, %v874, %v878
    %v883 = vand.u32 2147483647, %v873
    %vm884 = vcmp.eq.f32.partialorder %v883, 8.507059e+37
    %v885 = vand.u32 %v873, 2147483648
    %v886 = vor.u32 1.1754944e-38, %v885
    %v887 = vsel %vm884, %v886, %v882
    %v888 = vmul.f32 1.0, %v887
    %v889 = vxor.u32 %v867, 2147483648
    %v890 = vmul.f32 %v889, 1.442695
    %v891 = vpow.pop %v890
    %v892 = vadd.f32 %v891, 1.0
    %v893 = vrcp.pop %v892
    %v894 = vmul.f32 %v892, %v893
    %v895 = vsub.f32 1.0, %v894
    %v896 = vmul.f32 %v893, %v895
    %v897 = vadd.f32 %v893, %v896
    %vm898 = vweird.f32 %v892
    %vm899 = vweird.f32 %v893
    %vm900 = vmor %vm898, %vm899
    %v901 = vsel %vm900, %v893, %v897
    %v902 = vand.u32 2147483647, %v892
    %vm903 = vcmp.eq.f32.partialorder %v902, 8.507059e+37
    %v904 = vand.u32 %v892, 2147483648
    %v905 = vor.u32 1.1754944e-38, %v904
    %v906 = vsel %vm903, %v905, %v901
    %v907 = vmul.f32 1.0, %v906
    %v908 = vtanh.pop %v868
    %v909 = vxor.u32 %v869, 2147483648
    %v910 = vmul.f32 %v909, 1.442695
    %v911 = vpow.pop %v910
    %v912 = vadd.f32 %v911, 1.0
    %v913 = vrcp.pop %v912
    %v914 = vmul.f32 %v912, %v913
    %v915 = vsub.f32 1.0, %v914
    %v916 = vmul.f32 %v913, %v915
    %v917 = vadd.f32 %v913, %v916
    %vm918 = vweird.f32 %v912
    %vm919 = vweird.f32 %v913
    %vm920 = vmor %vm918, %vm919
    %v921 = vsel %vm920, %v913, %v917
    %v922 = vand.u32 2147483647, %v912
    %vm923 = vcmp.eq.f32.partialorder %v922, 8.507059e+37
    %v924 = vand.u32 %v912, 2147483648
    %v925 = vor.u32 1.1754944e-38, %v924
    %v926 = vsel %vm923, %v925, %v921
    %v927 = vmul.f32 1.0, %v926
    %v929 = vrot.slane %v798, 6
    %v931 = vmul.f32 %v907, %v929
    %v932 = vmul.f32 %v888, %v908
    %v933 = vadd.f32 %v931, %v932
    %v934 = vtanh.pop %v933
    %v935 = vmul.f32 %v927, %v934
    %v936 = vpack.c.bf16 %v935, %v935
    %v938 = vrot.slane %v936, 1
    %940 = vmatpush.bf16.msra.mxu0 %v643
    %941 = vmatpush.bf16.msra.mxu0 %v639
    %942 = vmatpush.bf16.msra.mxu0 %v635
    %943 = vmatpush.bf16.msra.mxu0 %v631
    %944 = vmatpush.bf16.msra.mxu0 %v627
    %945 = vmatpush.bf16.msra.mxu0 %v623
    %946 = vmatpush.bf16.msra.mxu0 %v619
    %947 = vmatpush.bf16.msra.mxu0 %v615
    %948 = vmatmul.bf16.gmra.mxu0 %v938
    %v949 = vpop.f32.mrf.mxu0
    %v950 = vadd.f32 0.0, %v949
    %v951 = vpop.f32.mrf.mxu0
    %952 = vdwg.mxu0
    %953 = vmatpush.bf16.msra.mxu0 %v644
    %954 = vmatpush.bf16.msra.mxu0 %v640
    %955 = vmatpush.bf16.msra.mxu0 %v636
    %956 = vmatpush.bf16.msra.mxu0 %v632
    %957 = vmatpush.bf16.msra.mxu0 %v628
    %958 = vmatpush.bf16.msra.mxu0 %v624
    %959 = vmatpush.bf16.msra.mxu0 %v620
    %960 = vmatpush.bf16.msra.mxu0 %v616
    %961 = vmatmul.bf16.gmra.mxu0 %v938
    %v962 = vpop.f32.mrf.mxu0
    %v963 = vadd.f32 0.0, %v962
    %v964 = vpop.f32.mrf.mxu0
    %965 = vdwg.mxu0
    %966 = vmatpush.bf16.msra.mxu0 %v645
    %967 = vmatpush.bf16.msra.mxu0 %v641
    %968 = vmatpush.bf16.msra.mxu0 %v637
    %969 = vmatpush.bf16.msra.mxu0 %v633
    %970 = vmatpush.bf16.msra.mxu0 %v629
    %971 = vmatpush.bf16.msra.mxu0 %v625
    %972 = vmatpush.bf16.msra.mxu0 %v621
    %973 = vmatpush.bf16.msra.mxu0 %v617
    %974 = vmatmul.bf16.gmra.mxu0 %v938
    %v975 = vpop.f32.mrf.mxu0
    %v976 = vadd.f32 0.0, %v975
    %v977 = vpop.f32.mrf.mxu0
    %978 = vdwg.mxu0
    %979 = vmatpush.bf16.msra.mxu0 %v646
    %980 = vmatpush.bf16.msra.mxu0 %v642
    %981 = vmatpush.bf16.msra.mxu0 %v638
    %982 = vmatpush.bf16.msra.mxu0 %v634
    %983 = vmatpush.bf16.msra.mxu0 %v630
    %984 = vmatpush.bf16.msra.mxu0 %v626
    %985 = vmatpush.bf16.msra.mxu0 %v622
    %986 = vmatpush.bf16.msra.mxu0 %v618
    %987 = vmatmul.bf16.gmra.mxu0 %v938
    %v988 = vpop.f32.mrf.mxu0
    %v989 = vadd.f32 0.0, %v988
    %v990 = vpop.f32.mrf.mxu0
    %991 = vdwg.mxu0
    %v996 = vrot.slane %v950, 4
    %v997 = vrot.slane %v963, 4
    %v998 = vrot.slane %v976, 4
    %v999 = vrot.slane %v989, 4
    %v1004 = vadd.f32 %v479, %v996
    %v1005 = vadd.f32 %v480, %v997
    %v1006 = vadd.f32 %v481, %v998
    %v1007 = vadd.f32 %v482, %v999
    %v1008 = vxor.u32 %v1004, 2147483648
    %v1009 = vmul.f32 %v1008, 1.442695
    %v1010 = vpow.pop %v1009
    %v1011 = vadd.f32 %v1010, 1.0
    %v1012 = vrcp.pop %v1011
    %v1013 = vmul.f32 %v1011, %v1012
    %v1014 = vsub.f32 1.0, %v1013
    %v1015 = vmul.f32 %v1012, %v1014
    %v1016 = vadd.f32 %v1012, %v1015
    %vm1017 = vweird.f32 %v1011
    %vm1018 = vweird.f32 %v1012
    %vm1019 = vmor %vm1017, %vm1018
    %v1020 = vsel %vm1019, %v1012, %v1016
    %v1021 = vand.u32 2147483647, %v1011
    %vm1022 = vcmp.eq.f32.partialorder %v1021, 8.507059e+37
    %v1023 = vand.u32 %v1011, 2147483648
    %v1024 = vor.u32 1.1754944e-38, %v1023
    %v1025 = vsel %vm1022, %v1024, %v1020
    %v1026 = vmul.f32 1.0, %v1025
    %v1027 = vxor.u32 %v1005, 2147483648
    %v1028 = vmul.f32 %v1027, 1.442695
    %v1029 = vpow.pop %v1028
    %v1030 = vadd.f32 %v1029, 1.0
    %v1031 = vrcp.pop %v1030
    %v1032 = vmul.f32 %v1030, %v1031
    %v1033 = vsub.f32 1.0, %v1032
    %v1034 = vmul.f32 %v1031, %v1033
    %v1035 = vadd.f32 %v1031, %v1034
    %vm1036 = vweird.f32 %v1030
    %vm1037 = vweird.f32 %v1031
    %vm1038 = vmor %vm1036, %vm1037
    %v1039 = vsel %vm1038, %v1031, %v1035
    %v1040 = vand.u32 2147483647, %v1030
    %vm1041 = vcmp.eq.f32.partialorder %v1040, 8.507059e+37
    %v1042 = vand.u32 %v1030, 2147483648
    %v1043 = vor.u32 1.1754944e-38, %v1042
    %v1044 = vsel %vm1041, %v1043, %v1039
    %v1045 = vmul.f32 1.0, %v1044
    %v1046 = vtanh.pop %v1006
    %v1047 = vxor.u32 %v1007, 2147483648
    %v1048 = vmul.f32 %v1047, 1.442695
    %v1049 = vpow.pop %v1048
    %v1050 = vadd.f32 %v1049, 1.0
    %v1051 = vrcp.pop %v1050
    %v1052 = vmul.f32 %v1050, %v1051
    %v1053 = vsub.f32 1.0, %v1052
    %v1054 = vmul.f32 %v1051, %v1053
    %v1055 = vadd.f32 %v1051, %v1054
    %vm1056 = vweird.f32 %v1050
    %vm1057 = vweird.f32 %v1051
    %vm1058 = vmor %vm1056, %vm1057
    %v1059 = vsel %vm1058, %v1051, %v1055
    %v1060 = vand.u32 2147483647, %v1050
    %vm1061 = vcmp.eq.f32.partialorder %v1060, 8.507059e+37
    %v1062 = vand.u32 %v1050, 2147483648
    %v1063 = vor.u32 1.1754944e-38, %v1062
    %v1064 = vsel %vm1061, %v1063, %v1059
    %v1065 = vmul.f32 1.0, %v1064
    %v1067 = vrot.slane %v933, 6
    %v1069 = vmul.f32 %v1045, %v1067
    %v1070 = vmul.f32 %v1026, %v1046
    %v1071 = vadd.f32 %v1069, %v1070
    %v1072 = vtanh.pop %v1071
    %v1073 = vmul.f32 %v1065, %v1072
    %v1074 = vpack.c.bf16 %v1073, %v1073
    %v1076 = vrot.slane %v1074, 2
    %1078 = vmatpush.bf16.msra.mxu0 %v643
    %1079 = vmatpush.bf16.msra.mxu0 %v639
    %1080 = vmatpush.bf16.msra.mxu0 %v635
    %1081 = vmatpush.bf16.msra.mxu0 %v631
    %1082 = vmatpush.bf16.msra.mxu0 %v627
    %1083 = vmatpush.bf16.msra.mxu0 %v623
    %1084 = vmatpush.bf16.msra.mxu0 %v619
    %1085 = vmatpush.bf16.msra.mxu0 %v615
    %1086 = vmatmul.bf16.gmra.mxu0 %v1076
    %v1087 = vpop.f32.mrf.mxu0
    %v1088 = vadd.f32 0.0, %v1087
    %v1089 = vpop.f32.mrf.mxu0
    %1090 = vdwg.mxu0
    %1091 = vmatpush.bf16.msra.mxu0 %v644
    %1092 = vmatpush.bf16.msra.mxu0 %v640
    %1093 = vmatpush.bf16.msra.mxu0 %v636
    %1094 = vmatpush.bf16.msra.mxu0 %v632
    %1095 = vmatpush.bf16.msra.mxu0 %v628
    %1096 = vmatpush.bf16.msra.mxu0 %v624
    %1097 = vmatpush.bf16.msra.mxu0 %v620
    %1098 = vmatpush.bf16.msra.mxu0 %v616
    %1099 = vmatmul.bf16.gmra.mxu0 %v1076
    %v1100 = vpop.f32.mrf.mxu0
    %v1101 = vadd.f32 0.0, %v1100
    %v1102 = vpop.f32.mrf.mxu0
    %1103 = vdwg.mxu0
    %1104 = vmatpush.bf16.msra.mxu0 %v645
    %1105 = vmatpush.bf16.msra.mxu0 %v641
    %1106 = vmatpush.bf16.msra.mxu0 %v637
    %1107 = vmatpush.bf16.msra.mxu0 %v633
    %1108 = vmatpush.bf16.msra.mxu0 %v629
    %1109 = vmatpush.bf16.msra.mxu0 %v625
    %1110 = vmatpush.bf16.msra.mxu0 %v621
    %1111 = vmatpush.bf16.msra.mxu0 %v617
    %1112 = vmatmul.bf16.gmra.mxu0 %v1076
    %v1113 = vpop.f32.mrf.mxu0
    %v1114 = vadd.f32 0.0, %v1113
    %v1115 = vpop.f32.mrf.mxu0
    %1116 = vdwg.mxu0
    %1117 = vmatpush.bf16.msra.mxu0 %v646
    %1118 = vmatpush.bf16.msra.mxu0 %v642
    %1119 = vmatpush.bf16.msra.mxu0 %v638
    %1120 = vmatpush.bf16.msra.mxu0 %v634
    %1121 = vmatpush.bf16.msra.mxu0 %v630
    %1122 = vmatpush.bf16.msra.mxu0 %v626
    %1123 = vmatpush.bf16.msra.mxu0 %v622
    %1124 = vmatpush.bf16.msra.mxu0 %v618
    %1125 = vmatmul.bf16.gmra.mxu0 %v1076
    %v1126 = vpop.f32.mrf.mxu0
    %v1127 = vadd.f32 0.0, %v1126
    %v1128 = vpop.f32.mrf.mxu0
    %1129 = vdwg.mxu0
    %v1134 = vrot.slane %v1088, 2
    %v1135 = vrot.slane %v1101, 2
    %v1136 = vrot.slane %v1114, 2
    %v1137 = vrot.slane %v1127, 2
    %v1142 = vadd.f32 %v479, %v1134
    %v1143 = vadd.f32 %v480, %v1135
    %v1144 = vadd.f32 %v481, %v1136
    %v1145 = vadd.f32 %v482, %v1137
    %v1146 = vxor.u32 %v1142, 2147483648
    %v1147 = vmul.f32 %v1146, 1.442695
    %v1148 = vpow.pop %v1147
    %v1149 = vadd.f32 %v1148, 1.0
    %v1150 = vrcp.pop %v1149
    %v1151 = vmul.f32 %v1149, %v1150
    %v1152 = vsub.f32 1.0, %v1151
    %v1153 = vmul.f32 %v1150, %v1152
    %v1154 = vadd.f32 %v1150, %v1153
    %vm1155 = vweird.f32 %v1149
    %vm1156 = vweird.f32 %v1150
    %vm1157 = vmor %vm1155, %vm1156
    %v1158 = vsel %vm1157, %v1150, %v1154
    %v1159 = vand.u32 2147483647, %v1149
    %vm1160 = vcmp.eq.f32.partialorder %v1159, 8.507059e+37
    %v1161 = vand.u32 %v1149, 2147483648
    %v1162 = vor.u32 1.1754944e-38, %v1161
    %v1163 = vsel %vm1160, %v1162, %v1158
    %v1164 = vmul.f32 1.0, %v1163
    %v1165 = vxor.u32 %v1143, 2147483648
    %v1166 = vmul.f32 %v1165, 1.442695
    %v1167 = vpow.pop %v1166
    %v1168 = vadd.f32 %v1167, 1.0
    %v1169 = vrcp.pop %v1168
    %v1170 = vmul.f32 %v1168, %v1169
    %v1171 = vsub.f32 1.0, %v1170
    %v1172 = vmul.f32 %v1169, %v1171
    %v1173 = vadd.f32 %v1169, %v1172
    %vm1174 = vweird.f32 %v1168
    %vm1175 = vweird.f32 %v1169
    %vm1176 = vmor %vm1174, %vm1175
    %v1177 = vsel %vm1176, %v1169, %v1173
    %v1178 = vand.u32 2147483647, %v1168
    %vm1179 = vcmp.eq.f32.partialorder %v1178, 8.507059e+37
    %v1180 = vand.u32 %v1168, 2147483648
    %v1181 = vor.u32 1.1754944e-38, %v1180
    %v1182 = vsel %vm1179, %v1181, %v1177
    %v1183 = vmul.f32 1.0, %v1182
    %v1184 = vtanh.pop %v1144
    %v1185 = vxor.u32 %v1145, 2147483648
    %v1186 = vmul.f32 %v1185, 1.442695
    %v1187 = vpow.pop %v1186
    %v1188 = vadd.f32 %v1187, 1.0
    %v1189 = vrcp.pop %v1188
    %v1190 = vmul.f32 %v1188, %v1189
    %v1191 = vsub.f32 1.0, %v1190
    %v1192 = vmul.f32 %v1189, %v1191
    %v1193 = vadd.f32 %v1189, %v1192
    %vm1194 = vweird.f32 %v1188
    %vm1195 = vweird.f32 %v1189
    %vm1196 = vmor %vm1194, %vm1195
    %v1197 = vsel %vm1196, %v1189, %v1193
    %v1198 = vand.u32 2147483647, %v1188
    %vm1199 = vcmp.eq.f32.partialorder %v1198, 8.507059e+37
    %v1200 = vand.u32 %v1188, 2147483648
    %v1201 = vor.u32 1.1754944e-38, %v1200
    %v1202 = vsel %vm1199, %v1201, %v1197
    %v1203 = vmul.f32 1.0, %v1202
    %v1205 = vrot.slane %v1071, 6
    %v1207 = vmul.f32 %v1183, %v1205
    %v1208 = vmul.f32 %v1164, %v1184
    %v1209 = vadd.f32 %v1207, %v1208
    %v1210 = vtanh.pop %v1209
    %v1211 = vmul.f32 %v1203, %v1210
    %vm1212 = vcmask 1041408
    %v1213 = vsel %vm1212, %v800, %v935
    %vm1214 = vcmask 1043456
    %v1215 = vsel %vm1214, %v1213, %v1073
    %vm1216 = vcmask 1045504
    %v1217 = vsel %vm1216, %v1215, %v1211
    %s1218 = scalar_lea.vmem [#allocation3], %s473
    %1219 = vst [vmem:[%s1218] sm:$0xff] %v1217
  $region62: #{sliding_window_transformer.3} parent=0 // loop_footer
    %s470 = sadd.s32 1, %s466
  $region63: #{sliding_window_transformer.3} parent=0 // loop_footer_branch
    %465 = sbr.rel target = $region59
  $region64: #{sliding_window_transformer.3} parent=0 // loop_exit
    _
  %v1220 = vld [vmem:[#allocation3] sm:$0xff]
  %v1221 = vld [vmem:[#allocation3 + $0x8] sm:$0xff]
  %v1222 = vld [vmem:[#allocation3 + $0x10] sm:$0xff]
  %v1223 = vld [vmem:[#allocation3 + $0x18] sm:$0xff]
  %v1224 = vld [vmem:[#allocation3 + $0x20] sm:$0xff]
  %v1225 = vld [vmem:[#allocation3 + $0x28] sm:$0xff]
  %v1226 = vld [vmem:[#allocation3 + $0x30] sm:$0xff]
  %v1227 = vld [vmem:[#allocation3 + $0x38] sm:$0xff]
  %v1228 = vld [vmem:[#allocation3 + $0x40] sm:$0xff]
  %v1229 = vld [vmem:[#allocation3 + $0x48] sm:$0xff]
  %v1230 = vld [vmem:[%s4] sm:$0x1]
  %v1231 = vld [vmem:[%s5] sm:$0x1]
  %1232 = vadd.xlane.f32.xlu0 %v1220
  %v1233 = vpop.xlane.xlu0 %1232
  %1234 = vadd.xlane.f32.xlu0 %v1221
  %v1235 = vpop.xlane.xlu0 %1234
  %1236 = vadd.xlane.f32.xlu0 %v1222
  %v1237 = vpop.xlane.xlu0 %1236
  %1238 = vadd.xlane.f32.xlu0 %v1223
  %v1239 = vpop.xlane.xlu0 %1238
  %1240 = vadd.xlane.f32.xlu0 %v1224
  %v1241 = vpop.xlane.xlu0 %1240
  %1242 = vadd.xlane.f32.xlu0 %v1225
  %v1243 = vpop.xlane.xlu0 %1242
  %1244 = vadd.xlane.f32.xlu0 %v1226
  %v1245 = vpop.xlane.xlu0 %1244
  %1246 = vadd.xlane.f32.xlu0 %v1227
  %v1247 = vpop.xlane.xlu0 %1246
  %1248 = vadd.xlane.f32.xlu0 %v1228
  %v1249 = vpop.xlane.xlu0 %1248
  %1250 = vadd.xlane.f32.xlu0 %v1229
  %v1251 = vpop.xlane.xlu0 %1250
  %v1252 = vrcp.pop 128.0
  %v1253 = vmul.f32 128.0, %v1252
  %v1254 = vsub.f32 1.0, %v1253
  %v1255 = vmul.f32 %v1252, %v1254
  %v1256 = vadd.f32 %v1252, %v1255
  %vm1257 = vweird.f32 %v1252
  %v1258 = vsel %vm1257, %v1252, %v1256
  %v1259 = vmul.f32 %v1233, %v1258
  %v1260 = vmul.f32 %v1235, %v1258
  %v1261 = vmul.f32 %v1237, %v1258
  %v1262 = vmul.f32 %v1239, %v1258
  %v1263 = vmul.f32 %v1241, %v1258
  %v1264 = vmul.f32 %v1243, %v1258
  %v1265 = vmul.f32 %v1245, %v1258
  %v1266 = vmul.f32 %v1247, %v1258
  %v1267 = vmul.f32 %v1249, %v1258
  %v1268 = vmul.f32 %v1251, %v1258
  %v1269 = vsub.f32 %v1220, %v1259
  %v1270 = vsub.f32 %v1221, %v1260
  %v1271 = vsub.f32 %v1222, %v1261
  %v1272 = vsub.f32 %v1223, %v1262
  %v1273 = vsub.f32 %v1224, %v1263
  %v1274 = vsub.f32 %v1225, %v1264
  %v1275 = vsub.f32 %v1226, %v1265
  %v1276 = vsub.f32 %v1227, %v1266
  %v1277 = vsub.f32 %v1228, %v1267
  %v1278 = vsub.f32 %v1229, %v1268
  %v1279 = vmul.f32 %v1269, %v1269
  %v1280 = vmul.f32 %v1270, %v1270
  %v1281 = vmul.f32 %v1271, %v1271
  %v1282 = vmul.f32 %v1272, %v1272
  %v1283 = vmul.f32 %v1273, %v1273
  %v1284 = vmul.f32 %v1274, %v1274
  %v1285 = vmul.f32 %v1275, %v1275
  %v1286 = vmul.f32 %v1276, %v1276
  %v1287 = vmul.f32 %v1277, %v1277
  %v1288 = vmul.f32 %v1278, %v1278
  %1289 = vadd.xlane.f32.xlu0 %v1279
  %v1290 = vpop.xlane.xlu0 %1289
  %1291 = vadd.xlane.f32.xlu0 %v1280
  %v1292 = vpop.xlane.xlu0 %1291
  %1293 = vadd.xlane.f32.xlu0 %v1281
  %v1294 = vpop.xlane.xlu0 %1293
  %1295 = vadd.xlane.f32.xlu0 %v1282
  %v1296 = vpop.xlane.xlu0 %1295
  %1297 = vadd.xlane.f32.xlu0 %v1283
  %v1298 = vpop.xlane.xlu0 %1297
  %1299 = vadd.xlane.f32.xlu0 %v1284
  %v1300 = vpop.xlane.xlu0 %1299
  %1301 = vadd.xlane.f32.xlu0 %v1285
  %v1302 = vpop.xlane.xlu0 %1301
  %1303 = vadd.xlane.f32.xlu0 %v1286
  %v1304 = vpop.xlane.xlu0 %1303
  %1305 = vadd.xlane.f32.xlu0 %v1287
  %v1306 = vpop.xlane.xlu0 %1305
  %1307 = vadd.xlane.f32.xlu0 %v1288
  %v1308 = vpop.xlane.xlu0 %1307
  %v1309 = vmul.f32 %v1290, %v1258
  %v1310 = vmul.f32 %v1292, %v1258
  %v1311 = vmul.f32 %v1294, %v1258
  %v1312 = vmul.f32 %v1296, %v1258
  %v1313 = vmul.f32 %v1298, %v1258
  %v1314 = vmul.f32 %v1300, %v1258
  %v1315 = vmul.f32 %v1302, %v1258
  %v1316 = vmul.f32 %v1304, %v1258
  %v1317 = vmul.f32 %v1306, %v1258
  %v1318 = vmul.f32 %v1308, %v1258
  %v1319 = vadd.f32 %v1309, 1e-05
  %v1320 = vadd.f32 %v1310, 1e-05
  %v1321 = vadd.f32 %v1311, 1e-05
  %v1322 = vadd.f32 %v1312, 1e-05
  %v1323 = vadd.f32 %v1313, 1e-05
  %v1324 = vadd.f32 %v1314, 1e-05
  %v1325 = vadd.f32 %v1315, 1e-05
  %v1326 = vadd.f32 %v1316, 1e-05
  %v1327 = vadd.f32 %v1317, 1e-05
  %v1328 = vadd.f32 %v1318, 1e-05
  %v1329 = vrsqrt.pop %v1319
  %v1330 = vmul.f32 %v1329, %v1319
  %v1331 = vmul.f32 %v1330, %v1329
  %v1332 = vmul.f32 0.5, %v1331
  %v1333 = vsub.f32 1.5, %v1332
  %v1334 = vmul.f32 %v1329, %v1333
  %vm1335 = vweird.f32 %v1319
  %vm1336 = vweird.f32 %v1329
  %vm1337 = vmor %vm1335, %vm1336
  %v1338 = vsel %vm1337, %v1329, %v1334
  %v1339 = vrsqrt.pop %v1320
  %v1340 = vmul.f32 %v1339, %v1320
  %v1341 = vmul.f32 %v1340, %v1339
  %v1342 = vmul.f32 0.5, %v1341
  %v1343 = vsub.f32 1.5, %v1342
  %v1344 = vmul.f32 %v1339, %v1343
  %vm1345 = vweird.f32 %v1320
  %vm1346 = vweird.f32 %v1339
  %vm1347 = vmor %vm1345, %vm1346
  %v1348 = vsel %vm1347, %v1339, %v1344
  %v1349 = vrsqrt.pop %v1321
  %v1350 = vmul.f32 %v1349, %v1321
  %v1351 = vmul.f32 %v1350, %v1349
  %v1352 = vmul.f32 0.5, %v1351
  %v1353 = vsub.f32 1.5, %v1352
  %v1354 = vmul.f32 %v1349, %v1353
  %vm1355 = vweird.f32 %v1321
  %vm1356 = vweird.f32 %v1349
  %vm1357 = vmor %vm1355, %vm1356
  %v1358 = vsel %vm1357, %v1349, %v1354
  %v1359 = vrsqrt.pop %v1322
  %v1360 = vmul.f32 %v1359, %v1322
  %v1361 = vmul.f32 %v1360, %v1359
  %v1362 = vmul.f32 0.5, %v1361
  %v1363 = vsub.f32 1.5, %v1362
  %v1364 = vmul.f32 %v1359, %v1363
  %vm1365 = vweird.f32 %v1322
  %vm1366 = vweird.f32 %v1359
  %vm1367 = vmor %vm1365, %vm1366
  %v1368 = vsel %vm1367, %v1359, %v1364
  %v1369 = vrsqrt.pop %v1323
  %v1370 = vmul.f32 %v1369, %v1323
  %v1371 = vmul.f32 %v1370, %v1369
  %v1372 = vmul.f32 0.5, %v1371
  %v1373 = vsub.f32 1.5, %v1372
  %v1374 = vmul.f32 %v1369, %v1373
  %vm1375 = vweird.f32 %v1323
  %vm1376 = vweird.f32 %v1369
  %vm1377 = vmor %vm1375, %vm1376
  %v1378 = vsel %vm1377, %v1369, %v1374
  %v1379 = vrsqrt.pop %v1324
  %v1380 = vmul.f32 %v1379, %v1324
  %v1381 = vmul.f32 %v1380, %v1379
  %v1382 = vmul.f32 0.5, %v1381
  %v1383 = vsub.f32 1.5, %v1382
  %v1384 = vmul.f32 %v1379, %v1383
  %vm1385 = vweird.f32 %v1324
  %vm1386 = vweird.f32 %v1379
  %vm1387 = vmor %vm1385, %vm1386
  %v1388 = vsel %vm1387, %v1379, %v1384
  %v1389 = vrsqrt.pop %v1325
  %v1390 = vmul.f32 %v1389, %v1325
  %v1391 = vmul.f32 %v1390, %v1389
  %v1392 = vmul.f32 0.5, %v1391
  %v1393 = vsub.f32 1.5, %v1392
  %v1394 = vmul.f32 %v1389, %v1393
  %vm1395 = vweird.f32 %v1325
  %vm1396 = vweird.f32 %v1389
  %vm1397 = vmor %vm1395, %vm1396
  %v1398 = vsel %vm1397, %v1389, %v1394
  %v1399 = vrsqrt.pop %v1326
  %v1400 = vmul.f32 %v1399, %v1326
  %v1401 = vmul.f32 %v1400, %v1399
  %v1402 = vmul.f32 0.5, %v1401
  %v1403 = vsub.f32 1.5, %v1402
  %v1404 = vmul.f32 %v1399, %v1403
  %vm1405 = vweird.f32 %v1326
  %vm1406 = vweird.f32 %v1399
  %vm1407 = vmor %vm1405, %vm1406
  %v1408 = vsel %vm1407, %v1399, %v1404
  %v1409 = vrsqrt.pop %v1327
  %v1410 = vmul.f32 %v1409, %v1327
  %v1411 = vmul.f32 %v1410, %v1409
  %v1412 = vmul.f32 0.5, %v1411
  %v1413 = vsub.f32 1.5, %v1412
  %v1414 = vmul.f32 %v1409, %v1413
  %vm1415 = vweird.f32 %v1327
  %vm1416 = vweird.f32 %v1409
  %vm1417 = vmor %vm1415, %vm1416
  %v1418 = vsel %vm1417, %v1409, %v1414
  %v1419 = vrsqrt.pop %v1328
  %v1420 = vmul.f32 %v1419, %v1328
  %v1421 = vmul.f32 %v1420, %v1419
  %v1422 = vmul.f32 0.5, %v1421
  %v1423 = vsub.f32 1.5, %v1422
  %v1424 = vmul.f32 %v1419, %v1423
  %vm1425 = vweird.f32 %v1328
  %vm1426 = vweird.f32 %v1419
  %vm1427 = vmor %vm1425, %vm1426
  %v1428 = vsel %vm1427, %v1419, %v1424
  %v1429 = vmul.f32 %v1269, %v1338
  %v1430 = vmul.f32 %v1270, %v1348
  %v1431 = vmul.f32 %v1271, %v1358
  %v1432 = vmul.f32 %v1272, %v1368
  %v1433 = vmul.f32 %v1273, %v1378
  %v1434 = vmul.f32 %v1274, %v1388
  %v1435 = vmul.f32 %v1275, %v1398
  %v1436 = vmul.f32 %v1276, %v1408
  %v1437 = vmul.f32 %v1277, %v1418
  %v1438 = vmul.f32 %v1278, %v1428
  %v1440 = vperm.slane %v1230, 0
  %v1442 = vmul.f32 %v1429, %v1440
  %v1443 = vmul.f32 %v1430, %v1440
  %v1444 = vmul.f32 %v1431, %v1440
  %v1445 = vmul.f32 %v1432, %v1440
  %v1446 = vmul.f32 %v1433, %v1440
  %v1447 = vmul.f32 %v1434, %v1440
  %v1448 = vmul.f32 %v1435, %v1440
  %v1449 = vmul.f32 %v1436, %v1440
  %v1450 = vmul.f32 %v1437, %v1440
  %v1451 = vmul.f32 %v1438, %v1440
  %v1453 = vperm.slane %v1231, 0
  %v1455 = vadd.f32 %v1442, %v1453
  %v1456 = vadd.f32 %v1443, %v1453
  %v1457 = vadd.f32 %v1444, %v1453
  %v1458 = vadd.f32 %v1445, %v1453
  %v1459 = vadd.f32 %v1446, %v1453
  %v1460 = vadd.f32 %v1447, %v1453
  %v1461 = vadd.f32 %v1448, %v1453
  %v1462 = vadd.f32 %v1449, %v1453
  %v1463 = vadd.f32 %v1450, %v1453
  %v1464 = vadd.f32 %v1451, %v1453
  %v1465 = vpack.c.bf16 %v1456, %v1455
  %v1466 = vpack.c.bf16 %v1458, %v1457
  %v1467 = vpack.c.bf16 %v1460, %v1459
  %v1468 = vpack.c.bf16 %v1462, %v1461
  %v1469 = vpack.c.bf16 %v1464, %v1463
  %v1470 = vld [vmem:[%s6] sm:$0xff]
  %v1471 = vld [vmem:[%s6 + $0x8] sm:$0xff]
  %v1472 = vld [vmem:[%s6 + $0x10] sm:$0xff]
  %v1473 = vld [vmem:[%s6 + $0x18] sm:$0xff]
  %v1474 = vld [vmem:[%s6 + $0x20] sm:$0xff]
  %v1475 = vld [vmem:[%s6 + $0x28] sm:$0xff]
  %v1476 = vld [vmem:[%s6 + $0x30] sm:$0xff]
  %v1477 = vld [vmem:[%s6 + $0x38] sm:$0xff]
  %v1478 = vld [vmem:[%s6 + $0x40] sm:$0xff]
  %v1479 = vld [vmem:[%s6 + $0x48] sm:$0xff]
  %v1480 = vld [vmem:[%s6 + $0x50] sm:$0xff]
  %v1481 = vld [vmem:[%s6 + $0x58] sm:$0xff]
  %v1482 = vld [vmem:[%s6 + $0x60] sm:$0xff]
  %v1483 = vld [vmem:[%s6 + $0x68] sm:$0xff]
  %v1484 = vld [vmem:[%s6 + $0x70] sm:$0xff]
  %v1485 = vld [vmem:[%s6 + $0x78] sm:$0xff]
  %v1486 = vld [vmem:[%s6 + $0x80] sm:$0xff]
  %v1487 = vld [vmem:[%s6 + $0x88] sm:$0xff]
  %v1488 = vld [vmem:[%s6 + $0x90] sm:$0xff]
  %v1489 = vld [vmem:[%s6 + $0x98] sm:$0xff]
  %v1490 = vld [vmem:[%s6 + $0xa0] sm:$0xff]
  %v1491 = vld [vmem:[%s6 + $0xa8] sm:$0xff]
  %v1492 = vld [vmem:[%s6 + $0xb0] sm:$0xff]
  %v1493 = vld [vmem:[%s6 + $0xb8] sm:$0xff]
  %v1494 = vld [vmem:[%s6 + $0xc0] sm:$0xff]
  %v1495 = vld [vmem:[%s6 + $0xc8] sm:$0xff]
  %v1496 = vld [vmem:[%s6 + $0xd0] sm:$0xff]
  %v1497 = vld [vmem:[%s6 + $0xd8] sm:$0xff]
  %v1498 = vld [vmem:[%s6 + $0xe0] sm:$0xff]
  %v1499 = vld [vmem:[%s6 + $0xe8] sm:$0xff]
  %v1500 = vld [vmem:[%s6 + $0xf0] sm:$0xff]
  %v1501 = vld [vmem:[%s6 + $0xf8] sm:$0xff]
  %v1502 = vld [vmem:[%s7] sm:$0xf]
  %v1504 = vperm.slane %v1502, 0
  %v1505 = vperm.slane %v1502, 1
  %v1506 = vperm.slane %v1502, 2
  %v1507 = vperm.slane %v1502, 3
  %v1544 = vunpack.c.l.b16 %v1470
  %v1545 = vunpack.c.h.b16 %v1470
  %v1546 = vunpack.c.l.b16 %v1471
  %v1547 = vunpack.c.h.b16 %v1471
  %v1548 = vunpack.c.l.b16 %v1472
  %v1549 = vunpack.c.h.b16 %v1472
  %v1550 = vunpack.c.l.b16 %v1473
  %v1551 = vunpack.c.h.b16 %v1473
  %v1552 = vunpack.c.l.b16 %v1474
  %v1553 = vunpack.c.h.b16 %v1474
  %v1554 = vunpack.c.l.b16 %v1475
  %v1555 = vunpack.c.h.b16 %v1475
  %v1556 = vunpack.c.l.b16 %v1476
  %v1557 = vunpack.c.h.b16 %v1476
  %v1558 = vunpack.c.l.b16 %v1477
  %v1559 = vunpack.c.h.b16 %v1477
  %v1560 = vunpack.c.l.b16 %v1478
  %v1561 = vunpack.c.h.b16 %v1478
  %v1562 = vunpack.c.l.b16 %v1479
  %v1563 = vunpack.c.h.b16 %v1479
  %v1564 = vunpack.c.l.b16 %v1480
  %v1565 = vunpack.c.h.b16 %v1480
  %v1566 = vunpack.c.l.b16 %v1481
  %v1567 = vunpack.c.h.b16 %v1481
  %v1568 = vunpack.c.l.b16 %v1482
  %v1569 = vunpack.c.h.b16 %v1482
  %v1570 = vunpack.c.l.b16 %v1483
  %v1571 = vunpack.c.h.b16 %v1483
  %v1572 = vunpack.c.l.b16 %v1484
  %v1573 = vunpack.c.h.b16 %v1484
  %v1574 = vunpack.c.l.b16 %v1485
  %v1575 = vunpack.c.h.b16 %v1485
  %v1576 = vunpack.c.l.b16 %v1486
  %v1577 = vunpack.c.h.b16 %v1486
  %v1578 = vunpack.c.l.b16 %v1487
  %v1579 = vunpack.c.h.b16 %v1487
  %v1580 = vunpack.c.l.b16 %v1488
  %v1581 = vunpack.c.h.b16 %v1488
  %v1582 = vunpack.c.l.b16 %v1489
  %v1583 = vunpack.c.h.b16 %v1489
  %v1584 = vunpack.c.l.b16 %v1490
  %v1585 = vunpack.c.h.b16 %v1490
  %v1586 = vunpack.c.l.b16 %v1491
  %v1587 = vunpack.c.h.b16 %v1491
  %v1588 = vunpack.c.l.b16 %v1492
  %v1589 = vunpack.c.h.b16 %v1492
  %v1590 = vunpack.c.l.b16 %v1493
  %v1591 = vunpack.c.h.b16 %v1493
  %v1592 = vunpack.c.l.b16 %v1494
  %v1593 = vunpack.c.h.b16 %v1494
  %v1594 = vunpack.c.l.b16 %v1495
  %v1595 = vunpack.c.h.b16 %v1495
  %v1596 = vunpack.c.l.b16 %v1496
  %v1597 = vunpack.c.h.b16 %v1496
  %v1598 = vunpack.c.l.b16 %v1497
  %v1599 = vunpack.c.h.b16 %v1497
  %v1600 = vunpack.c.l.b16 %v1498
  %v1601 = vunpack.c.h.b16 %v1498
  %v1602 = vunpack.c.l.b16 %v1499
  %v1603 = vunpack.c.h.b16 %v1499
  %v1604 = vunpack.c.l.b16 %v1500
  %v1605 = vunpack.c.h.b16 %v1500
  %v1606 = vunpack.c.l.b16 %v1501
  %v1607 = vunpack.c.h.b16 %v1501
  %v1608 = vpack.c.b16 %v1548, %v1544
  %v1609 = vpack.c.b16 %v1549, %v1545
  %v1610 = vpack.c.b16 %v1550, %v1546
  %v1611 = vpack.c.b16 %v1551, %v1547
  %v1612 = vpack.c.b16 %v1556, %v1552
  %v1613 = vpack.c.b16 %v1557, %v1553
  %v1614 = vpack.c.b16 %v1558, %v1554
  %v1615 = vpack.c.b16 %v1559, %v1555
  %v1616 = vpack.c.b16 %v1564, %v1560
  %v1617 = vpack.c.b16 %v1565, %v1561
  %v1618 = vpack.c.b16 %v1566, %v1562
  %v1619 = vpack.c.b16 %v1567, %v1563
  %v1620 = vpack.c.b16 %v1572, %v1568
  %v1621 = vpack.c.b16 %v1573, %v1569
  %v1622 = vpack.c.b16 %v1574, %v1570
  %v1623 = vpack.c.b16 %v1575, %v1571
  %v1624 = vpack.c.b16 %v1580, %v1576
  %v1625 = vpack.c.b16 %v1581, %v1577
  %v1626 = vpack.c.b16 %v1582, %v1578
  %v1627 = vpack.c.b16 %v1583, %v1579
  %v1628 = vpack.c.b16 %v1588, %v1584
  %v1629 = vpack.c.b16 %v1589, %v1585
  %v1630 = vpack.c.b16 %v1590, %v1586
  %v1631 = vpack.c.b16 %v1591, %v1587
  %v1632 = vpack.c.b16 %v1596, %v1592
  %v1633 = vpack.c.b16 %v1597, %v1593
  %v1634 = vpack.c.b16 %v1598, %v1594
  %v1635 = vpack.c.b16 %v1599, %v1595
  %v1636 = vpack.c.b16 %v1604, %v1600
  %v1637 = vpack.c.b16 %v1605, %v1601
  %v1638 = vpack.c.b16 %v1606, %v1602
  %v1639 = vpack.c.b16 %v1607, %v1603
  %1672 = vmatpush.bf16.msra.mxu0 %v1636
  %1673 = vmatpush.bf16.msra.mxu0 %v1632
  %1674 = vmatpush.bf16.msra.mxu0 %v1628
  %1675 = vmatpush.bf16.msra.mxu0 %v1624
  %1676 = vmatpush.bf16.msra.mxu0 %v1620
  %1677 = vmatpush.bf16.msra.mxu0 %v1616
  %1678 = vmatpush.bf16.msra.mxu0 %v1612
  %1679 = vmatpush.bf16.msra.mxu0 %v1608
  %1680 = vmatmul.bf16.gmra.mxu0 %v1465
  %v1681 = vpop.f32.mrf.mxu0
  %v1682 = vadd.f32 %v1504, %v1681
  %v1683 = vpop.f32.mrf.mxu0
  %v1684 = vadd.f32 %v1504, %v1683
  %1685 = vmatmul.bf16.gmra.mxu0 %v1466
  %v1686 = vpop.f32.mrf.mxu0
  %v1687 = vadd.f32 %v1504, %v1686
  %v1688 = vpop.f32.mrf.mxu0
  %v1689 = vadd.f32 %v1504, %v1688
  %1690 = vmatmul.bf16.gmra.mxu0 %v1467
  %v1691 = vpop.f32.mrf.mxu0
  %v1692 = vadd.f32 %v1504, %v1691
  %v1693 = vpop.f32.mrf.mxu0
  %v1694 = vadd.f32 %v1504, %v1693
  %1695 = vmatmul.bf16.gmra.mxu0 %v1468
  %v1696 = vpop.f32.mrf.mxu0
  %v1697 = vadd.f32 %v1504, %v1696
  %v1698 = vpop.f32.mrf.mxu0
  %v1699 = vadd.f32 %v1504, %v1698
  %1700 = vmatmul.bf16.gmra.mxu0 %v1469
  %v1701 = vpop.f32.mrf.mxu0
  %v1702 = vadd.f32 %v1504, %v1701
  %v1703 = vpop.f32.mrf.mxu0
  %v1704 = vadd.f32 %v1504, %v1703
  %1705 = vdwg.mxu0
  %1706 = vmatpush.bf16.msra.mxu0 %v1637
  %1707 = vmatpush.bf16.msra.mxu0 %v1633
  %1708 = vmatpush.bf16.msra.mxu0 %v1629
  %1709 = vmatpush.bf16.msra.mxu0 %v1625
  %1710 = vmatpush.bf16.msra.mxu0 %v1621
  %1711 = vmatpush.bf16.msra.mxu0 %v1617
  %1712 = vmatpush.bf16.msra.mxu0 %v1613
  %1713 = vmatpush.bf16.msra.mxu0 %v1609
  %1714 = vmatmul.bf16.gmra.mxu0 %v1465
  %v1715 = vpop.f32.mrf.mxu0
  %v1716 = vadd.f32 %v1505, %v1715
  %v1717 = vpop.f32.mrf.mxu0
  %v1718 = vadd.f32 %v1505, %v1717
  %1719 = vmatmul.bf16.gmra.mxu0 %v1466
  %v1720 = vpop.f32.mrf.mxu0
  %v1721 = vadd.f32 %v1505, %v1720
  %v1722 = vpop.f32.mrf.mxu0
  %v1723 = vadd.f32 %v1505, %v1722
  %1724 = vmatmul.bf16.gmra.mxu0 %v1467
  %v1725 = vpop.f32.mrf.mxu0
  %v1726 = vadd.f32 %v1505, %v1725
  %v1727 = vpop.f32.mrf.mxu0
  %v1728 = vadd.f32 %v1505, %v1727
  %1729 = vmatmul.bf16.gmra.mxu0 %v1468
  %v1730 = vpop.f32.mrf.mxu0
  %v1731 = vadd.f32 %v1505, %v1730
  %v1732 = vpop.f32.mrf.mxu0
  %v1733 = vadd.f32 %v1505, %v1732
  %1734 = vmatmul.bf16.gmra.mxu0 %v1469
  %v1735 = vpop.f32.mrf.mxu0
  %v1736 = vadd.f32 %v1505, %v1735
  %v1737 = vpop.f32.mrf.mxu0
  %v1738 = vadd.f32 %v1505, %v1737
  %1739 = vdwg.mxu0
  %1740 = vmatpush.bf16.msra.mxu0 %v1638
  %1741 = vmatpush.bf16.msra.mxu0 %v1634
  %1742 = vmatpush.bf16.msra.mxu0 %v1630
  %1743 = vmatpush.bf16.msra.mxu0 %v1626
  %1744 = vmatpush.bf16.msra.mxu0 %v1622
  %1745 = vmatpush.bf16.msra.mxu0 %v1618
  %1746 = vmatpush.bf16.msra.mxu0 %v1614
  %1747 = vmatpush.bf16.msra.mxu0 %v1610
  %1748 = vmatmul.bf16.gmra.mxu0 %v1465
  %v1749 = vpop.f32.mrf.mxu0
  %v1750 = vadd.f32 %v1506, %v1749
  %v1751 = vpop.f32.mrf.mxu0
  %v1752 = vadd.f32 %v1506, %v1751
  %1753 = vmatmul.bf16.gmra.mxu0 %v1466
  %v1754 = vpop.f32.mrf.mxu0
  %v1755 = vadd.f32 %v1506, %v1754
  %v1756 = vpop.f32.mrf.mxu0
  %v1757 = vadd.f32 %v1506, %v1756
  %1758 = vmatmul.bf16.gmra.mxu0 %v1467
  %v1759 = vpop.f32.mrf.mxu0
  %v1760 = vadd.f32 %v1506, %v1759
  %v1761 = vpop.f32.mrf.mxu0
  %v1762 = vadd.f32 %v1506, %v1761
  %1763 = vmatmul.bf16.gmra.mxu0 %v1468
  %v1764 = vpop.f32.mrf.mxu0
  %v1765 = vadd.f32 %v1506, %v1764
  %v1766 = vpop.f32.mrf.mxu0
  %v1767 = vadd.f32 %v1506, %v1766
  %1768 = vmatmul.bf16.gmra.mxu0 %v1469
  %v1769 = vpop.f32.mrf.mxu0
  %v1770 = vadd.f32 %v1506, %v1769
  %v1771 = vpop.f32.mrf.mxu0
  %v1772 = vadd.f32 %v1506, %v1771
  %1773 = vdwg.mxu0
  %1774 = vmatpush.bf16.msra.mxu0 %v1639
  %1775 = vmatpush.bf16.msra.mxu0 %v1635
  %1776 = vmatpush.bf16.msra.mxu0 %v1631
  %1777 = vmatpush.bf16.msra.mxu0 %v1627
  %1778 = vmatpush.bf16.msra.mxu0 %v1623
  %1779 = vmatpush.bf16.msra.mxu0 %v1619
  %1780 = vmatpush.bf16.msra.mxu0 %v1615
  %1781 = vmatpush.bf16.msra.mxu0 %v1611
  %1782 = vmatmul.bf16.gmra.mxu0 %v1465
  %v1783 = vpop.f32.mrf.mxu0
  %v1784 = vadd.f32 %v1507, %v1783
  %v1785 = vpop.f32.mrf.mxu0
  %v1786 = vadd.f32 %v1507, %v1785
  %1787 = vmatmul.bf16.gmra.mxu0 %v1466
  %v1788 = vpop.f32.mrf.mxu0
  %v1789 = vadd.f32 %v1507, %v1788
  %v1790 = vpop.f32.mrf.mxu0
  %v1791 = vadd.f32 %v1507, %v1790
  %1792 = vmatmul.bf16.gmra.mxu0 %v1467
  %v1793 = vpop.f32.mrf.mxu0
  %v1794 = vadd.f32 %v1507, %v1793
  %v1795 = vpop.f32.mrf.mxu0
  %v1796 = vadd.f32 %v1507, %v1795
  %1797 = vmatmul.bf16.gmra.mxu0 %v1468
  %v1798 = vpop.f32.mrf.mxu0
  %v1799 = vadd.f32 %v1507, %v1798
  %v1800 = vpop.f32.mrf.mxu0
  %v1801 = vadd.f32 %v1507, %v1800
  %1802 = vmatmul.bf16.gmra.mxu0 %v1469
  %v1803 = vpop.f32.mrf.mxu0
  %v1804 = vadd.f32 %v1507, %v1803
  %v1805 = vpop.f32.mrf.mxu0
  %v1806 = vadd.f32 %v1507, %v1805
  %1807 = vdwg.mxu0
  %v1808 = vmax.f32 %v1682, 0.0
  %v1809 = vmax.f32 %v1716, 0.0
  %v1810 = vmax.f32 %v1750, 0.0
  %v1811 = vmax.f32 %v1784, 0.0
  %v1812 = vmax.f32 %v1684, 0.0
  %v1813 = vmax.f32 %v1718, 0.0
  %v1814 = vmax.f32 %v1752, 0.0
  %v1815 = vmax.f32 %v1786, 0.0
  %v1816 = vmax.f32 %v1687, 0.0
  %v1817 = vmax.f32 %v1721, 0.0
  %v1818 = vmax.f32 %v1755, 0.0
  %v1819 = vmax.f32 %v1789, 0.0
  %v1820 = vmax.f32 %v1689, 0.0
  %v1821 = vmax.f32 %v1723, 0.0
  %v1822 = vmax.f32 %v1757, 0.0
  %v1823 = vmax.f32 %v1791, 0.0
  %v1824 = vmax.f32 %v1692, 0.0
  %v1825 = vmax.f32 %v1726, 0.0
  %v1826 = vmax.f32 %v1760, 0.0
  %v1827 = vmax.f32 %v1794, 0.0
  %v1828 = vmax.f32 %v1694, 0.0
  %v1829 = vmax.f32 %v1728, 0.0
  %v1830 = vmax.f32 %v1762, 0.0
  %v1831 = vmax.f32 %v1796, 0.0
  %v1832 = vmax.f32 %v1697, 0.0
  %v1833 = vmax.f32 %v1731, 0.0
  %v1834 = vmax.f32 %v1765, 0.0
  %v1835 = vmax.f32 %v1799, 0.0
  %v1836 = vmax.f32 %v1699, 0.0
  %v1837 = vmax.f32 %v1733, 0.0
  %v1838 = vmax.f32 %v1767, 0.0
  %v1839 = vmax.f32 %v1801, 0.0
  %v1840 = vmax.f32 %v1702, 0.0
  %v1841 = vmax.f32 %v1736, 0.0
  %v1842 = vmax.f32 %v1770, 0.0
  %v1843 = vmax.f32 %v1804, 0.0
  %v1844 = vmax.f32 %v1704, 0.0
  %v1845 = vmax.f32 %v1738, 0.0
  %v1846 = vmax.f32 %v1772, 0.0
  %v1847 = vmax.f32 %v1806, 0.0
  %v1848 = vpack.c.bf16 %v1812, %v1808
  %v1849 = vpack.c.bf16 %v1813, %v1809
  %v1850 = vpack.c.bf16 %v1814, %v1810
  %v1851 = vpack.c.bf16 %v1815, %v1811
  %v1852 = vpack.c.bf16 %v1820, %v1816
  %v1853 = vpack.c.bf16 %v1821, %v1817
  %v1854 = vpack.c.bf16 %v1822, %v1818
  %v1855 = vpack.c.bf16 %v1823, %v1819
  %v1856 = vpack.c.bf16 %v1828, %v1824
  %v1857 = vpack.c.bf16 %v1829, %v1825
  %v1858 = vpack.c.bf16 %v1830, %v1826
  %v1859 = vpack.c.bf16 %v1831, %v1827
  %v1860 = vpack.c.bf16 %v1836, %v1832
  %v1861 = vpack.c.bf16 %v1837, %v1833
  %v1862 = vpack.c.bf16 %v1838, %v1834
  %v1863 = vpack.c.bf16 %v1839, %v1835
  %v1864 = vpack.c.bf16 %v1844, %v1840
  %v1865 = vpack.c.bf16 %v1845, %v1841
  %v1866 = vpack.c.bf16 %v1846, %v1842
  %v1867 = vpack.c.bf16 %v1847, %v1843
  %v1868 = vld [vmem:[%s8] sm:$0xf]
  %v1869 = vld [vmem:[%s8 + $0x4] sm:$0xf]
  %v1870 = vld [vmem:[%s8 + $0x8] sm:$0xf]
  %v1871 = vld [vmem:[%s8 + $0xc] sm:$0xf]
  %v1872 = vld [vmem:[%s8 + $0x10] sm:$0xf]
  %v1873 = vld [vmem:[%s8 + $0x14] sm:$0xf]
  %v1874 = vld [vmem:[%s8 + $0x18] sm:$0xf]
  %v1875 = vld [vmem:[%s8 + $0x1c] sm:$0xf]
  %v1876 = vld [vmem:[%s8 + $0x20] sm:$0xf]
  %v1877 = vld [vmem:[%s8 + $0x24] sm:$0xf]
  %v1878 = vld [vmem:[%s8 + $0x28] sm:$0xf]
  %v1879 = vld [vmem:[%s8 + $0x2c] sm:$0xf]
  %v1880 = vld [vmem:[%s8 + $0x30] sm:$0xf]
  %v1881 = vld [vmem:[%s8 + $0x34] sm:$0xf]
  %v1882 = vld [vmem:[%s8 + $0x38] sm:$0xf]
  %v1883 = vld [vmem:[%s8 + $0x3c] sm:$0xf]
  %v1884 = vld [vmem:[%s8 + $0x40] sm:$0xf]
  %v1885 = vld [vmem:[%s8 + $0x44] sm:$0xf]
  %v1886 = vld [vmem:[%s8 + $0x48] sm:$0xf]
  %v1887 = vld [vmem:[%s8 + $0x4c] sm:$0xf]
  %v1888 = vld [vmem:[%s8 + $0x50] sm:$0xf]
  %v1889 = vld [vmem:[%s8 + $0x54] sm:$0xf]
  %v1890 = vld [vmem:[%s8 + $0x58] sm:$0xf]
  %v1891 = vld [vmem:[%s8 + $0x5c] sm:$0xf]
  %v1892 = vld [vmem:[%s8 + $0x60] sm:$0xf]
  %v1893 = vld [vmem:[%s8 + $0x64] sm:$0xf]
  %v1894 = vld [vmem:[%s8 + $0x68] sm:$0xf]
  %v1895 = vld [vmem:[%s8 + $0x6c] sm:$0xf]
  %v1896 = vld [vmem:[%s8 + $0x70] sm:$0xf]
  %v1897 = vld [vmem:[%s8 + $0x74] sm:$0xf]
  %v1898 = vld [vmem:[%s8 + $0x78] sm:$0xf]
  %v1899 = vld [vmem:[%s8 + $0x7c] sm:$0xf]
  %v1900 = vld [vmem:[%s8 + $0x80] sm:$0xf]
  %v1901 = vld [vmem:[%s8 + $0x84] sm:$0xf]
  %v1902 = vld [vmem:[%s8 + $0x88] sm:$0xf]
  %v1903 = vld [vmem:[%s8 + $0x8c] sm:$0xf]
  %v1904 = vld [vmem:[%s8 + $0x90] sm:$0xf]
  %v1905 = vld [vmem:[%s8 + $0x94] sm:$0xf]
  %v1906 = vld [vmem:[%s8 + $0x98] sm:$0xf]
  %v1907 = vld [vmem:[%s8 + $0x9c] sm:$0xf]
  %v1908 = vld [vmem:[%s8 + $0xa0] sm:$0xf]
  %v1909 = vld [vmem:[%s8 + $0xa4] sm:$0xf]
  %v1910 = vld [vmem:[%s8 + $0xa8] sm:$0xf]
  %v1911 = vld [vmem:[%s8 + $0xac] sm:$0xf]
  %v1912 = vld [vmem:[%s8 + $0xb0] sm:$0xf]
  %v1913 = vld [vmem:[%s8 + $0xb4] sm:$0xf]
  %v1914 = vld [vmem:[%s8 + $0xb8] sm:$0xf]
  %v1915 = vld [vmem:[%s8 + $0xbc] sm:$0xf]
  %v1916 = vld [vmem:[%s8 + $0xc0] sm:$0xf]
  %v1917 = vld [vmem:[%s8 + $0xc4] sm:$0xf]
  %v1918 = vld [vmem:[%s8 + $0xc8] sm:$0xf]
  %v1919 = vld [vmem:[%s8 + $0xcc] sm:$0xf]
  %v1920 = vld [vmem:[%s8 + $0xd0] sm:$0xf]
  %v1921 = vld [vmem:[%s8 + $0xd4] sm:$0xf]
  %v1922 = vld [vmem:[%s8 + $0xd8] sm:$0xf]
  %v1923 = vld [vmem:[%s8 + $0xdc] sm:$0xf]
  %v1924 = vld [vmem:[%s8 + $0xe0] sm:$0xf]
  %v1925 = vld [vmem:[%s8 + $0xe4] sm:$0xf]
  %v1926 = vld [vmem:[%s8 + $0xe8] sm:$0xf]
  %v1927 = vld [vmem:[%s8 + $0xec] sm:$0xf]
  %v1928 = vld [vmem:[%s8 + $0xf0] sm:$0xf]
  %v1929 = vld [vmem:[%s8 + $0xf4] sm:$0xf]
  %v1930 = vld [vmem:[%s8 + $0xf8] sm:$0xf]
  %v1931 = vld [vmem:[%s8 + $0xfc] sm:$0xf]
  %v1932 = vld [vmem:[%s9] sm:$0x1]
  %v1934 = vperm.slane %v1932, 0
  %v2000 = vunpack.c.l.b16 %v1868
  %v2001 = vunpack.c.l.b16 %v1869
  %v2002 = vunpack.c.l.b16 %v1870
  %v2003 = vunpack.c.l.b16 %v1871
  %v2004 = vunpack.c.l.b16 %v1872
  %v2005 = vunpack.c.l.b16 %v1873
  %v2006 = vunpack.c.l.b16 %v1874
  %v2007 = vunpack.c.l.b16 %v1875
  %v2008 = vunpack.c.l.b16 %v1876
  %v2009 = vunpack.c.l.b16 %v1877
  %v2010 = vunpack.c.l.b16 %v1878
  %v2011 = vunpack.c.l.b16 %v1879
  %v2012 = vunpack.c.l.b16 %v1880
  %v2013 = vunpack.c.l.b16 %v1881
  %v2014 = vunpack.c.l.b16 %v1882
  %v2015 = vunpack.c.l.b16 %v1883
  %v2016 = vunpack.c.l.b16 %v1884
  %v2017 = vunpack.c.l.b16 %v1885
  %v2018 = vunpack.c.l.b16 %v1886
  %v2019 = vunpack.c.l.b16 %v1887
  %v2020 = vunpack.c.l.b16 %v1888
  %v2021 = vunpack.c.l.b16 %v1889
  %v2022 = vunpack.c.l.b16 %v1890
  %v2023 = vunpack.c.l.b16 %v1891
  %v2024 = vunpack.c.l.b16 %v1892
  %v2025 = vunpack.c.l.b16 %v1893
  %v2026 = vunpack.c.l.b16 %v1894
  %v2027 = vunpack.c.l.b16 %v1895
  %v2028 = vunpack.c.l.b16 %v1896
  %v2029 = vunpack.c.l.b16 %v1897
  %v2030 = vunpack.c.l.b16 %v1898
  %v2031 = vunpack.c.l.b16 %v1899
  %v2032 = vunpack.c.l.b16 %v1900
  %v2033 = vunpack.c.l.b16 %v1901
  %v2034 = vunpack.c.l.b16 %v1902
  %v2035 = vunpack.c.l.b16 %v1903
  %v2036 = vunpack.c.l.b16 %v1904
  %v2037 = vunpack.c.l.b16 %v1905
  %v2038 = vunpack.c.l.b16 %v1906
  %v2039 = vunpack.c.l.b16 %v1907
  %v2040 = vunpack.c.l.b16 %v1908
  %v2041 = vunpack.c.l.b16 %v1909
  %v2042 = vunpack.c.l.b16 %v1910
  %v2043 = vunpack.c.l.b16 %v1911
  %v2044 = vunpack.c.l.b16 %v1912
  %v2045 = vunpack.c.l.b16 %v1913
  %v2046 = vunpack.c.l.b16 %v1914
  %v2047 = vunpack.c.l.b16 %v1915
  %v2048 = vunpack.c.l.b16 %v1916
  %v2049 = vunpack.c.l.b16 %v1917
  %v2050 = vunpack.c.l.b16 %v1918
  %v2051 = vunpack.c.l.b16 %v1919
  %v2052 = vunpack.c.l.b16 %v1920
  %v2053 = vunpack.c.l.b16 %v1921
  %v2054 = vunpack.c.l.b16 %v1922
  %v2055 = vunpack.c.l.b16 %v1923
  %v2056 = vunpack.c.l.b16 %v1924
  %v2057 = vunpack.c.l.b16 %v1925
  %v2058 = vunpack.c.l.b16 %v1926
  %v2059 = vunpack.c.l.b16 %v1927
  %v2060 = vunpack.c.l.b16 %v1928
  %v2061 = vunpack.c.l.b16 %v1929
  %v2062 = vunpack.c.l.b16 %v1930
  %v2063 = vunpack.c.l.b16 %v1931
  %v2064 = vpack.c.b16 %v2001, %v2000
  %v2065 = vpack.c.b16 %v2003, %v2002
  %v2066 = vpack.c.b16 %v2005, %v2004
  %v2067 = vpack.c.b16 %v2007, %v2006
  %v2068 = vpack.c.b16 %v2009, %v2008
  %v2069 = vpack.c.b16 %v2011, %v2010
  %v2070 = vpack.c.b16 %v2013, %v2012
  %v2071 = vpack.c.b16 %v2015, %v2014
  %v2072 = vpack.c.b16 %v2017, %v2016
  %v2073 = vpack.c.b16 %v2019, %v2018
  %v2074 = vpack.c.b16 %v2021, %v2020
  %v2075 = vpack.c.b16 %v2023, %v2022
  %v2076 = vpack.c.b16 %v2025, %v2024
  %v2077 = vpack.c.b16 %v2027, %v2026
  %v2078 = vpack.c.b16 %v2029, %v2028
  %v2079 = vpack.c.b16 %v2031, %v2030
  %v2080 = vpack.c.b16 %v2033, %v2032
  %v2081 = vpack.c.b16 %v2035, %v2034
  %v2082 = vpack.c.b16 %v2037, %v2036
  %v2083 = vpack.c.b16 %v2039, %v2038
  %v2084 = vpack.c.b16 %v2041, %v2040
  %v2085 = vpack.c.b16 %v2043, %v2042
  %v2086 = vpack.c.b16 %v2045, %v2044
  %v2087 = vpack.c.b16 %v2047, %v2046
  %v2088 = vpack.c.b16 %v2049, %v2048
  %v2089 = vpack.c.b16 %v2051, %v2050
  %v2090 = vpack.c.b16 %v2053, %v2052
  %v2091 = vpack.c.b16 %v2055, %v2054
  %v2092 = vpack.c.b16 %v2057, %v2056
  %v2093 = vpack.c.b16 %v2059, %v2058
  %v2094 = vpack.c.b16 %v2061, %v2060
  %v2095 = vpack.c.b16 %v2063, %v2062
  %2128 = vmatpush.bf16.msra.mxu0 %v2071
  %2129 = vmatpush.bf16.msra.mxu0 %v2070
  %2130 = vmatpush.bf16.msra.mxu0 %v2069
  %2131 = vmatpush.bf16.msra.mxu0 %v2068
  %2132 = vmatpush.bf16.msra.mxu0 %v2067
  %2133 = vmatpush.bf16.msra.mxu0 %v2066
  %2134 = vmatpush.bf16.msra.mxu0 %v2065
  %2135 = vmatpush.bf16.msra.mxu0 %v2064
  %2136 = vmatmul.bf16.gmra.mxu0 %v1848
  %v2137 = vpop.f32.mrf.mxu0
  %v2138 = vadd.f32 %v1934, %v2137
  %v2139 = vpop.f32.mrf.mxu0
  %v2140 = vadd.f32 %v1934, %v2139
  %2141 = vmatmul.bf16.gmra.mxu0 %v1852
  %v2142 = vpop.f32.mrf.mxu0
  %v2143 = vadd.f32 %v1934, %v2142
  %v2144 = vpop.f32.mrf.mxu0
  %v2145 = vadd.f32 %v1934, %v2144
  %2146 = vmatmul.bf16.gmra.mxu0 %v1856
  %v2147 = vpop.f32.mrf.mxu0
  %v2148 = vadd.f32 %v1934, %v2147
  %v2149 = vpop.f32.mrf.mxu0
  %v2150 = vadd.f32 %v1934, %v2149
  %2151 = vmatmul.bf16.gmra.mxu0 %v1860
  %v2152 = vpop.f32.mrf.mxu0
  %v2153 = vadd.f32 %v1934, %v2152
  %v2154 = vpop.f32.mrf.mxu0
  %v2155 = vadd.f32 %v1934, %v2154
  %2156 = vmatmul.bf16.gmra.mxu0 %v1864
  %v2157 = vpop.f32.mrf.mxu0
  %v2158 = vadd.f32 %v1934, %v2157
  %v2159 = vpop.f32.mrf.mxu0
  %v2160 = vadd.f32 %v1934, %v2159
  %2161 = vdwg.mxu0
  %2162 = vmatpush.bf16.msra.mxu0 %v2079
  %2163 = vmatpush.bf16.msra.mxu0 %v2078
  %2164 = vmatpush.bf16.msra.mxu0 %v2077
  %2165 = vmatpush.bf16.msra.mxu0 %v2076
  %2166 = vmatpush.bf16.msra.mxu0 %v2075
  %2167 = vmatpush.bf16.msra.mxu0 %v2074
  %2168 = vmatpush.bf16.msra.mxu0 %v2073
  %2169 = vmatpush.bf16.msra.mxu0 %v2072
  %2170 = vmatmul.bf16.gmra.mxu0 %v1849
  %v2171 = vpop.f32.mrf.mxu0
  %v2172 = vadd.f32 %v2138, %v2171
  %v2173 = vpop.f32.mrf.mxu0
  %v2174 = vadd.f32 %v2140, %v2173
  %2175 = vmatmul.bf16.gmra.mxu0 %v1853
  %v2176 = vpop.f32.mrf.mxu0
  %v2177 = vadd.f32 %v2143, %v2176
  %v2178 = vpop.f32.mrf.mxu0
  %v2179 = vadd.f32 %v2145, %v2178
  %2180 = vmatmul.bf16.gmra.mxu0 %v1857
  %v2181 = vpop.f32.mrf.mxu0
  %v2182 = vadd.f32 %v2148, %v2181
  %v2183 = vpop.f32.mrf.mxu0
  %v2184 = vadd.f32 %v2150, %v2183
  %2185 = vmatmul.bf16.gmra.mxu0 %v1861
  %v2186 = vpop.f32.mrf.mxu0
  %v2187 = vadd.f32 %v2153, %v2186
  %v2188 = vpop.f32.mrf.mxu0
  %v2189 = vadd.f32 %v2155, %v2188
  %2190 = vmatmul.bf16.gmra.mxu0 %v1865
  %v2191 = vpop.f32.mrf.mxu0
  %v2192 = vadd.f32 %v2158, %v2191
  %v2193 = vpop.f32.mrf.mxu0
  %v2194 = vadd.f32 %v2160, %v2193
  %2195 = vdwg.mxu0
  %2196 = vmatpush.bf16.msra.mxu0 %v2087
  %2197 = vmatpush.bf16.msra.mxu0 %v2086
  %2198 = vmatpush.bf16.msra.mxu0 %v2085
  %2199 = vmatpush.bf16.msra.mxu0 %v2084
  %2200 = vmatpush.bf16.msra.mxu0 %v2083
  %2201 = vmatpush.bf16.msra.mxu0 %v2082
  %2202 = vmatpush.bf16.msra.mxu0 %v2081
  %2203 = vmatpush.bf16.msra.mxu0 %v2080
  %2204 = vmatmul.bf16.gmra.mxu0 %v1850
  %v2205 = vpop.f32.mrf.mxu0
  %v2206 = vadd.f32 %v2172, %v2205
  %v2207 = vpop.f32.mrf.mxu0
  %v2208 = vadd.f32 %v2174, %v2207
  %2209 = vmatmul.bf16.gmra.mxu0 %v1854
  %v2210 = vpop.f32.mrf.mxu0
  %v2211 = vadd.f32 %v2177, %v2210
  %v2212 = vpop.f32.mrf.mxu0
  %v2213 = vadd.f32 %v2179, %v2212
  %2214 = vmatmul.bf16.gmra.mxu0 %v1858
  %v2215 = vpop.f32.mrf.mxu0
  %v2216 = vadd.f32 %v2182, %v2215
  %v2217 = vpop.f32.mrf.mxu0
  %v2218 = vadd.f32 %v2184, %v2217
  %2219 = vmatmul.bf16.gmra.mxu0 %v1862
  %v2220 = vpop.f32.mrf.mxu0
  %v2221 = vadd.f32 %v2187, %v2220
  %v2222 = vpop.f32.mrf.mxu0
  %v2223 = vadd.f32 %v2189, %v2222
  %2224 = vmatmul.bf16.gmra.mxu0 %v1866
  %v2225 = vpop.f32.mrf.mxu0
  %v2226 = vadd.f32 %v2192, %v2225
  %v2227 = vpop.f32.mrf.mxu0
  %v2228 = vadd.f32 %v2194, %v2227
  %2229 = vdwg.mxu0
  %2230 = vmatpush.bf16.msra.mxu0 %v2095
  %2231 = vmatpush.bf16.msra.mxu0 %v2094
  %2232 = vmatpush.bf16.msra.mxu0 %v2093
  %2233 = vmatpush.bf16.msra.mxu0 %v2092
  %2234 = vmatpush.bf16.msra.mxu0 %v2091
  %2235 = vmatpush.bf16.msra.mxu0 %v2090
  %2236 = vmatpush.bf16.msra.mxu0 %v2089
  %2237 = vmatpush.bf16.msra.mxu0 %v2088
  %2238 = vmatmul.bf16.gmra.mxu0 %v1851
  %v2239 = vpop.f32.mrf.mxu0
  %v2240 = vadd.f32 %v2206, %v2239
  %v2241 = vpop.f32.mrf.mxu0
  %v2242 = vadd.f32 %v2208, %v2241
  %2243 = vmatmul.bf16.gmra.mxu0 %v1855
  %v2244 = vpop.f32.mrf.mxu0
  %v2245 = vadd.f32 %v2211, %v2244
  %v2246 = vpop.f32.mrf.mxu0
  %v2247 = vadd.f32 %v2213, %v2246
  %2248 = vmatmul.bf16.gmra.mxu0 %v1859
  %v2249 = vpop.f32.mrf.mxu0
  %v2250 = vadd.f32 %v2216, %v2249
  %v2251 = vpop.f32.mrf.mxu0
  %v2252 = vadd.f32 %v2218, %v2251
  %2253 = vmatmul.bf16.gmra.mxu0 %v1863
  %v2254 = vpop.f32.mrf.mxu0
  %v2255 = vadd.f32 %v2221, %v2254
  %v2256 = vpop.f32.mrf.mxu0
  %v2257 = vadd.f32 %v2223, %v2256
  %2258 = vmatmul.bf16.gmra.mxu0 %v1867
  %v2259 = vpop.f32.mrf.mxu0
  %v2260 = vadd.f32 %v2226, %v2259
  %v2261 = vpop.f32.mrf.mxu0
  %v2262 = vadd.f32 %v2228, %v2261
  %2263 = vdwg.mxu0
  %v2264 = vunpack.c.l.bf16 %v47
  %v2265 = vunpack.c.l.bf16 %v48
  %v2266 = vunpack.c.l.bf16 %v49
  %v2267 = vunpack.c.l.bf16 %v50
  %v2268 = vunpack.c.l.bf16 %v51
  %v2269 = vunpack.c.l.bf16 %v52
  %v2270 = vunpack.c.l.bf16 %v53
  %v2271 = vunpack.c.l.bf16 %v54
  %v2272 = vunpack.c.l.bf16 %v55
  %v2273 = vunpack.c.l.bf16 %v56
  %v2274 = vadd.f32 %v2264, %v2240
  %v2275 = vadd.f32 %v2265, %v2242
  %v2276 = vadd.f32 %v2266, %v2245
  %v2277 = vadd.f32 %v2267, %v2247
  %v2278 = vadd.f32 %v2268, %v2250
  %v2279 = vadd.f32 %v2269, %v2252
  %v2280 = vadd.f32 %v2270, %v2255
  %v2281 = vadd.f32 %v2271, %v2257
  %v2282 = vadd.f32 %v2272, %v2260
  %v2283 = vadd.f32 %v2273, %v2262
  %v2284 = vld [vmem:[%s10] sm:$0x1]
  %v2285 = vld [vmem:[%s11] sm:$0x1]
  %2286 = vadd.xlane.f32.xlu0 %v2274
  %v2287 = vpop.xlane.xlu0 %2286
  %2288 = vadd.xlane.f32.xlu0 %v2275
  %v2289 = vpop.xlane.xlu0 %2288
  %2290 = vadd.xlane.f32.xlu0 %v2276
  %v2291 = vpop.xlane.xlu0 %2290
  %2292 = vadd.xlane.f32.xlu0 %v2277
  %v2293 = vpop.xlane.xlu0 %2292
  %2294 = vadd.xlane.f32.xlu0 %v2278
  %v2295 = vpop.xlane.xlu0 %2294
  %2296 = vadd.xlane.f32.xlu0 %v2279
  %v2297 = vpop.xlane.xlu0 %2296
  %2298 = vadd.xlane.f32.xlu0 %v2280
  %v2299 = vpop.xlane.xlu0 %2298
  %2300 = vadd.xlane.f32.xlu0 %v2281
  %v2301 = vpop.xlane.xlu0 %2300
  %2302 = vadd.xlane.f32.xlu0 %v2282
  %v2303 = vpop.xlane.xlu0 %2302
  %2304 = vadd.xlane.f32.xlu0 %v2283
  %v2305 = vpop.xlane.xlu0 %2304
  %v2306 = vmul.f32 %v2287, %v1258
  %v2307 = vmul.f32 %v2289, %v1258
  %v2308 = vmul.f32 %v2291, %v1258
  %v2309 = vmul.f32 %v2293, %v1258
  %v2310 = vmul.f32 %v2295, %v1258
  %v2311 = vmul.f32 %v2297, %v1258
  %v2312 = vmul.f32 %v2299, %v1258
  %v2313 = vmul.f32 %v2301, %v1258
  %v2314 = vmul.f32 %v2303, %v1258
  %v2315 = vmul.f32 %v2305, %v1258
  %v2316 = vsub.f32 %v2274, %v2306
  %v2317 = vsub.f32 %v2275, %v2307
  %v2318 = vsub.f32 %v2276, %v2308
  %v2319 = vsub.f32 %v2277, %v2309
  %v2320 = vsub.f32 %v2278, %v2310
  %v2321 = vsub.f32 %v2279, %v2311
  %v2322 = vsub.f32 %v2280, %v2312
  %v2323 = vsub.f32 %v2281, %v2313
  %v2324 = vsub.f32 %v2282, %v2314
  %v2325 = vsub.f32 %v2283, %v2315
  %v2326 = vmul.f32 %v2316, %v2316
  %v2327 = vmul.f32 %v2317, %v2317
  %v2328 = vmul.f32 %v2318, %v2318
  %v2329 = vmul.f32 %v2319, %v2319
  %v2330 = vmul.f32 %v2320, %v2320
  %v2331 = vmul.f32 %v2321, %v2321
  %v2332 = vmul.f32 %v2322, %v2322
  %v2333 = vmul.f32 %v2323, %v2323
  %v2334 = vmul.f32 %v2324, %v2324
  %v2335 = vmul.f32 %v2325, %v2325
  %2336 = vadd.xlane.f32.xlu0 %v2326
  %v2337 = vpop.xlane.xlu0 %2336
  %2338 = vadd.xlane.f32.xlu0 %v2327
  %v2339 = vpop.xlane.xlu0 %2338
  %2340 = vadd.xlane.f32.xlu0 %v2328
  %v2341 = vpop.xlane.xlu0 %2340
  %2342 = vadd.xlane.f32.xlu0 %v2329
  %v2343 = vpop.xlane.xlu0 %2342
  %2344 = vadd.xlane.f32.xlu0 %v2330
  %v2345 = vpop.xlane.xlu0 %2344
  %2346 = vadd.xlane.f32.xlu0 %v2331
  %v2347 = vpop.xlane.xlu0 %2346
  %2348 = vadd.xlane.f32.xlu0 %v2332
  %v2349 = vpop.xlane.xlu0 %2348
  %2350 = vadd.xlane.f32.xlu0 %v2333
  %v2351 = vpop.xlane.xlu0 %2350
  %2352 = vadd.xlane.f32.xlu0 %v2334
  %v2353 = vpop.xlane.xlu0 %2352
  %2354 = vadd.xlane.f32.xlu0 %v2335
  %v2355 = vpop.xlane.xlu0 %2354
  %v2356 = vmul.f32 %v2337, %v1258
  %v2357 = vmul.f32 %v2339, %v1258
  %v2358 = vmul.f32 %v2341, %v1258
  %v2359 = vmul.f32 %v2343, %v1258
  %v2360 = vmul.f32 %v2345, %v1258
  %v2361 = vmul.f32 %v2347, %v1258
  %v2362 = vmul.f32 %v2349, %v1258
  %v2363 = vmul.f32 %v2351, %v1258
  %v2364 = vmul.f32 %v2353, %v1258
  %v2365 = vmul.f32 %v2355, %v1258
  %v2366 = vadd.f32 %v2356, 1e-05
  %v2367 = vadd.f32 %v2357, 1e-05
  %v2368 = vadd.f32 %v2358, 1e-05
  %v2369 = vadd.f32 %v2359, 1e-05
  %v2370 = vadd.f32 %v2360, 1e-05
  %v2371 = vadd.f32 %v2361, 1e-05
  %v2372 = vadd.f32 %v2362, 1e-05
  %v2373 = vadd.f32 %v2363, 1e-05
  %v2374 = vadd.f32 %v2364, 1e-05
  %v2375 = vadd.f32 %v2365, 1e-05
  %v2376 = vrsqrt.pop %v2366
  %v2377 = vmul.f32 %v2376, %v2366
  %v2378 = vmul.f32 %v2377, %v2376
  %v2379 = vmul.f32 0.5, %v2378
  %v2380 = vsub.f32 1.5, %v2379
  %v2381 = vmul.f32 %v2376, %v2380
  %vm2382 = vweird.f32 %v2366
  %vm2383 = vweird.f32 %v2376
  %vm2384 = vmor %vm2382, %vm2383
  %v2385 = vsel %vm2384, %v2376, %v2381
  %v2386 = vrsqrt.pop %v2367
  %v2387 = vmul.f32 %v2386, %v2367
  %v2388 = vmul.f32 %v2387, %v2386
  %v2389 = vmul.f32 0.5, %v2388
  %v2390 = vsub.f32 1.5, %v2389
  %v2391 = vmul.f32 %v2386, %v2390
  %vm2392 = vweird.f32 %v2367
  %vm2393 = vweird.f32 %v2386
  %vm2394 = vmor %vm2392, %vm2393
  %v2395 = vsel %vm2394, %v2386, %v2391
  %v2396 = vrsqrt.pop %v2368
  %v2397 = vmul.f32 %v2396, %v2368
  %v2398 = vmul.f32 %v2397, %v2396
  %v2399 = vmul.f32 0.5, %v2398
  %v2400 = vsub.f32 1.5, %v2399
  %v2401 = vmul.f32 %v2396, %v2400
  %vm2402 = vweird.f32 %v2368
  %vm2403 = vweird.f32 %v2396
  %vm2404 = vmor %vm2402, %vm2403
  %v2405 = vsel %vm2404, %v2396, %v2401
  %v2406 = vrsqrt.pop %v2369
  %v2407 = vmul.f32 %v2406, %v2369
  %v2408 = vmul.f32 %v2407, %v2406
  %v2409 = vmul.f32 0.5, %v2408
  %v2410 = vsub.f32 1.5, %v2409
  %v2411 = vmul.f32 %v2406, %v2410
  %vm2412 = vweird.f32 %v2369
  %vm2413 = vweird.f32 %v2406
  %vm2414 = vmor %vm2412, %vm2413
  %v2415 = vsel %vm2414, %v2406, %v2411
  %v2416 = vrsqrt.pop %v2370
  %v2417 = vmul.f32 %v2416, %v2370
  %v2418 = vmul.f32 %v2417, %v2416
  %v2419 = vmul.f32 0.5, %v2418
  %v2420 = vsub.f32 1.5, %v2419
  %v2421 = vmul.f32 %v2416, %v2420
  %vm2422 = vweird.f32 %v2370
  %vm2423 = vweird.f32 %v2416
  %vm2424 = vmor %vm2422, %vm2423
  %v2425 = vsel %vm2424, %v2416, %v2421
  %v2426 = vrsqrt.pop %v2371
  %v2427 = vmul.f32 %v2426, %v2371
  %v2428 = vmul.f32 %v2427, %v2426
  %v2429 = vmul.f32 0.5, %v2428
  %v2430 = vsub.f32 1.5, %v2429
  %v2431 = vmul.f32 %v2426, %v2430
  %vm2432 = vweird.f32 %v2371
  %vm2433 = vweird.f32 %v2426
  %vm2434 = vmor %vm2432, %vm2433
  %v2435 = vsel %vm2434, %v2426, %v2431
  %v2436 = vrsqrt.pop %v2372
  %v2437 = vmul.f32 %v2436, %v2372
  %v2438 = vmul.f32 %v2437, %v2436
  %v2439 = vmul.f32 0.5, %v2438
  %v2440 = vsub.f32 1.5, %v2439
  %v2441 = vmul.f32 %v2436, %v2440
  %vm2442 = vweird.f32 %v2372
  %vm2443 = vweird.f32 %v2436
  %vm2444 = vmor %vm2442, %vm2443
  %v2445 = vsel %vm2444, %v2436, %v2441
  %v2446 = vrsqrt.pop %v2373
  %v2447 = vmul.f32 %v2446, %v2373
  %v2448 = vmul.f32 %v2447, %v2446
  %v2449 = vmul.f32 0.5, %v2448
  %v2450 = vsub.f32 1.5, %v2449
  %v2451 = vmul.f32 %v2446, %v2450
  %vm2452 = vweird.f32 %v2373
  %vm2453 = vweird.f32 %v2446
  %vm2454 = vmor %vm2452, %vm2453
  %v2455 = vsel %vm2454, %v2446, %v2451
  %v2456 = vrsqrt.pop %v2374
  %v2457 = vmul.f32 %v2456, %v2374
  %v2458 = vmul.f32 %v2457, %v2456
  %v2459 = vmul.f32 0.5, %v2458
  %v2460 = vsub.f32 1.5, %v2459
  %v2461 = vmul.f32 %v2456, %v2460
  %vm2462 = vweird.f32 %v2374
  %vm2463 = vweird.f32 %v2456
  %vm2464 = vmor %vm2462, %vm2463
  %v2465 = vsel %vm2464, %v2456, %v2461
  %v2466 = vrsqrt.pop %v2375
  %v2467 = vmul.f32 %v2466, %v2375
  %v2468 = vmul.f32 %v2467, %v2466
  %v2469 = vmul.f32 0.5, %v2468
  %v2470 = vsub.f32 1.5, %v2469
  %v2471 = vmul.f32 %v2466, %v2470
  %vm2472 = vweird.f32 %v2375
  %vm2473 = vweird.f32 %v2466
  %vm2474 = vmor %vm2472, %vm2473
  %v2475 = vsel %vm2474, %v2466, %v2471
  %v2476 = vmul.f32 %v2316, %v2385
  %v2477 = vmul.f32 %v2317, %v2395
  %v2478 = vmul.f32 %v2318, %v2405
  %v2479 = vmul.f32 %v2319, %v2415
  %v2480 = vmul.f32 %v2320, %v2425
  %v2481 = vmul.f32 %v2321, %v2435
  %v2482 = vmul.f32 %v2322, %v2445
  %v2483 = vmul.f32 %v2323, %v2455
  %v2484 = vmul.f32 %v2324, %v2465
  %v2485 = vmul.f32 %v2325, %v2475
  %v2487 = vperm.slane %v2284, 0
  %v2489 = vmul.f32 %v2476, %v2487
  %v2490 = vmul.f32 %v2477, %v2487
  %v2491 = vmul.f32 %v2478, %v2487
  %v2492 = vmul.f32 %v2479, %v2487
  %v2493 = vmul.f32 %v2480, %v2487
  %v2494 = vmul.f32 %v2481, %v2487
  %v2495 = vmul.f32 %v2482, %v2487
  %v2496 = vmul.f32 %v2483, %v2487
  %v2497 = vmul.f32 %v2484, %v2487
  %v2498 = vmul.f32 %v2485, %v2487
  %v2500 = vperm.slane %v2285, 0
  %v2502 = vadd.f32 %v2489, %v2500
  %v2503 = vadd.f32 %v2490, %v2500
  %v2504 = vadd.f32 %v2491, %v2500
  %v2505 = vadd.f32 %v2492, %v2500
  %v2506 = vadd.f32 %v2493, %v2500
  %v2507 = vadd.f32 %v2494, %v2500
  %v2508 = vadd.f32 %v2495, %v2500
  %v2509 = vadd.f32 %v2496, %v2500
  %v2510 = vadd.f32 %v2497, %v2500
  %v2511 = vadd.f32 %v2498, %v2500
  %v2512 = vpack.c.bf16 %v2503, %v2502
  %v2513 = vpack.c.bf16 %v2505, %v2504
  %v2514 = vpack.c.bf16 %v2507, %v2506
  %v2515 = vpack.c.bf16 %v2509, %v2508
  %v2516 = vpack.c.bf16 %v2511, %v2510
  %v2517 = vld [vmem:[%s12] sm:$0xf]
  %v2518 = vld [vmem:[%s12 + $0x4] sm:$0xf]
  %v2519 = vld [vmem:[%s12 + $0x8] sm:$0xf]
  %v2520 = vld [vmem:[%s12 + $0xc] sm:$0xf]
  %v2521 = vld [vmem:[%s12 + $0x10] sm:$0xf]
  %v2522 = vld [vmem:[%s12 + $0x14] sm:$0xf]
  %v2523 = vld [vmem:[%s12 + $0x18] sm:$0xf]
  %v2524 = vld [vmem:[%s12 + $0x1c] sm:$0xf]
  %v2525 = vld [vmem:[%s12 + $0x20] sm:$0xf]
  %v2526 = vld [vmem:[%s12 + $0x24] sm:$0xf]
  %v2527 = vld [vmem:[%s12 + $0x28] sm:$0xf]
  %v2528 = vld [vmem:[%s12 + $0x2c] sm:$0xf]
  %v2529 = vld [vmem:[%s12 + $0x30] sm:$0xf]
  %v2530 = vld [vmem:[%s12 + $0x34] sm:$0xf]
  %v2531 = vld [vmem:[%s12 + $0x38] sm:$0xf]
  %v2532 = vld [vmem:[%s12 + $0x3c] sm:$0xf]
  %v2533 = vld [vmem:[%s13] sm:$0x1]
  %v2535 = vperm.slane %v2533, 0
  %v2553 = vunpack.c.l.b16 %v2517
  %v2554 = vunpack.c.l.b16 %v2518
  %v2555 = vunpack.c.l.b16 %v2519
  %v2556 = vunpack.c.l.b16 %v2520
  %v2557 = vunpack.c.l.b16 %v2521
  %v2558 = vunpack.c.l.b16 %v2522
  %v2559 = vunpack.c.l.b16 %v2523
  %v2560 = vunpack.c.l.b16 %v2524
  %v2561 = vunpack.c.l.b16 %v2525
  %v2562 = vunpack.c.l.b16 %v2526
  %v2563 = vunpack.c.l.b16 %v2527
  %v2564 = vunpack.c.l.b16 %v2528
  %v2565 = vunpack.c.l.b16 %v2529
  %v2566 = vunpack.c.l.b16 %v2530
  %v2567 = vunpack.c.l.b16 %v2531
  %v2568 = vunpack.c.l.b16 %v2532
  %v2569 = vpack.c.b16 %v2554, %v2553
  %v2570 = vpack.c.b16 %v2556, %v2555
  %v2571 = vpack.c.b16 %v2558, %v2557
  %v2572 = vpack.c.b16 %v2560, %v2559
  %v2573 = vpack.c.b16 %v2562, %v2561
  %v2574 = vpack.c.b16 %v2564, %v2563
  %v2575 = vpack.c.b16 %v2566, %v2565
  %v2576 = vpack.c.b16 %v2568, %v2567
  %2585 = vmatpush.bf16.msra.mxu0 %v2576
  %2586 = vmatpush.bf16.msra.mxu0 %v2575
  %2587 = vmatpush.bf16.msra.mxu0 %v2574
  %2588 = vmatpush.bf16.msra.mxu0 %v2573
  %2589 = vmatpush.bf16.msra.mxu0 %v2572
  %2590 = vmatpush.bf16.msra.mxu0 %v2571
  %2591 = vmatpush.bf16.msra.mxu0 %v2570
  %2592 = vmatpush.bf16.msra.mxu0 %v2569
  %2593 = vmatmul.bf16.gmra.mxu0 %v2512
  %v2594 = vpop.f32.mrf.mxu0
  %v2595 = vadd.f32 %v2535, %v2594
  %v2596 = vpop.f32.mrf.mxu0
  %v2597 = vadd.f32 %v2535, %v2596
  %2598 = vmatmul.bf16.gmra.mxu0 %v2513
  %v2599 = vpop.f32.mrf.mxu0
  %v2600 = vadd.f32 %v2535, %v2599
  %v2601 = vpop.f32.mrf.mxu0
  %v2602 = vadd.f32 %v2535, %v2601
  %2603 = vmatmul.bf16.gmra.mxu0 %v2514
  %v2604 = vpop.f32.mrf.mxu0
  %v2605 = vadd.f32 %v2535, %v2604
  %v2606 = vpop.f32.mrf.mxu0
  %v2607 = vadd.f32 %v2535, %v2606
  %2608 = vmatmul.bf16.gmra.mxu0 %v2515
  %v2609 = vpop.f32.mrf.mxu0
  %v2610 = vadd.f32 %v2535, %v2609
  %v2611 = vpop.f32.mrf.mxu0
  %v2612 = vadd.f32 %v2535, %v2611
  %2613 = vmatmul.bf16.gmra.mxu0 %v2516
  %v2614 = vpop.f32.mrf.mxu0
  %v2615 = vadd.f32 %v2535, %v2614
  %v2616 = vpop.f32.mrf.mxu0
  %v2617 = vadd.f32 %v2535, %v2616
  %2618 = vdwg.mxu0
  %2619 = vst [vmem:[%s14] sm:$0xff] %v2595
  %2620 = vst [vmem:[%s14 + $0x8] sm:$0xff] %v2597
  %2621 = vst [vmem:[%s14 + $0x10] sm:$0xff] %v2600
  %2622 = vst [vmem:[%s14 + $0x18] sm:$0xff] %v2602
  %2623 = vst [vmem:[%s14 + $0x20] sm:$0xff] %v2605
  %2624 = vst [vmem:[%s14 + $0x28] sm:$0xff] %v2607
  %2625 = vst [vmem:[%s14 + $0x30] sm:$0xff] %v2610
  %2626 = vst [vmem:[%s14 + $0x38] sm:$0xff] %v2612
  %2627 = vst [vmem:[%s14 + $0x40] sm:$0xff] %v2615
  %2628 = vst [vmem:[%s14 + $0x48] sm:$0xff] %v2617
  // Predicated region
  $region65: #{sliding_window_transformer.3} parent=0 // pred_check
    _
  $region66: #{sliding_window_transformer.3} parent=0 // pred_check_branch
    %2630 = sbr.rel (0) target = $region68
  $region67: #{sliding_window_transformer.3} parent=0 // pred_region
    _
  $region68: #{sliding_window_transformer.3} parent=0 // pred_fallthru
    _
  // Predicated region
  $region69: #{sliding_window_transformer.3} parent=0 // pred_check
    _
  $region70: #{sliding_window_transformer.3} parent=0 // pred_check_branch
    %2632 = sbr.rel (0) target = $region72
  $region71: #{sliding_window_transformer.3} parent=0 // pred_region
    _
  $region72: #{sliding_window_transformer.3} parent=0 // pred_fallthru
    _

// kernel: sliding_window_transformer.2
$region0: #{sliding_window_transformer.2}
  #allocation0 [shape = 'u32[]', space=smem, size = 0x4, offset = 0x4, fixed_abs, tag = 'smem constant byte address 0x4 - core index']
  #allocation1 [shape = 'u32[72,128]{1,0:T(1,128)}', space=vmem, size = 0x9000, scoped, tag = 'internal scratch']
  %s0 = inlined_call_operand.vmem [shape: bf16[16,16,128], index: 0, kind: input, shape index: {}]
  %s1 = inlined_call_operand.vmem [shape: f32[256,128], index: 1, kind: input, shape index: {}]
  %s2 = inlined_call_operand.vmem [shape: bf16[128,384], index: 2, kind: input, shape index: {}]
  %s3 = inlined_call_operand.vmem [shape: f32[1,384], index: 3, kind: input, shape index: {}]
  %s4 = inlined_call_operand.vmem [shape: bf16[128,128], index: 4, kind: input, shape index: {}]
  %s5 = inlined_call_operand.vmem [shape: f32[1,128], index: 5, kind: input, shape index: {}]
  %s6 = inlined_call_operand.vmem [shape: f32[1,128], index: 6, kind: input, shape index: {}]
  %s7 = inlined_call_operand.vmem [shape: f32[1,128], index: 7, kind: input, shape index: {}]
  %s8 = inlined_call_operand.vmem [shape: bf16[128,512], index: 8, kind: input, shape index: {}]
  %s9 = inlined_call_operand.vmem [shape: f32[1,512], index: 9, kind: input, shape index: {}]
  %s10 = inlined_call_operand.vmem [shape: bf16[512,128], index: 10, kind: input, shape index: {}]
  %s11 = inlined_call_operand.vmem [shape: f32[1,128], index: 11, kind: input, shape index: {}]
  %s12 = inlined_call_operand.vmem [shape: f32[1,128], index: 12, kind: input, shape index: {}]
  %s13 = inlined_call_operand.vmem [shape: f32[1,128], index: 13, kind: input, shape index: {}]
  %s14 = inlined_call_operand.vmem [shape: bf16[16,16,128], index: 14, kind: output, shape index: {}]
  %s15 = sld [smem:[#allocation0]]
  $region89: #{sliding_window_transformer.2} parent=0
    _
  %s17 = ssub.s32 1, %s15
  %s18 = scalar_select 0, %s17, %s15
  loop: start=0, step=1, limit=4
  $region2: #{sliding_window_transformer.2} parent=0 // loop_pre_header
    _
  $region3: #{sliding_window_transformer.2} parent=0 // loop_header
    %s20 = sphi 0, %s24
    %p21 = scmp.ge.s32.totalorder %s20, 4
    %s30 = sphi 0, %s32
    %s33 = sphi 0, %s30
    %s34 = sphi 0, %s33
    %s50 = sphi 0, %s34
    %s56 = sphi 0, %s58
    %s59 = sphi 0, %s56
    %s60 = sphi 0, %s59
    %s76 = sphi 0, %s60
    %s80 = sphi 0, %s80
    %s82 = sphi 0, %s80
    %s83 = sphi 0, %s82
    %s97 = sphi 0, %s83
    %s101 = sphi 0, %s101
    %s103 = sphi 0, %s101
    %s104 = sphi 0, %s103
    %s118 = sphi 0, %s104
    %s122 = sphi 0, %s122
    %s124 = sphi 0, %s122
    %s125 = sphi 0, %s124
    %s139 = sphi 0, %s125
    %s143 = sphi 0, %s143
    %s145 = sphi 0, %s143
    %s146 = sphi 0, %s145
    %s160 = sphi 0, %s146
    %s164 = sphi 0, %s164
    %s166 = sphi 0, %s164
    %s167 = sphi 0, %s166
    %s181 = sphi 0, %s167
    %s185 = sphi 0, %s185
    %s187 = sphi 0, %s185
    %s188 = sphi 0, %s187
    %s202 = sphi 0, %s188
    %s206 = sphi 0, %s206
    %s208 = sphi 0, %s206
    %s209 = sphi 0, %s208
    %s223 = sphi 0, %s209
    %s227 = sphi 0, %s227
    %s229 = sphi 0, %s227
    %s230 = sphi 0, %s229
    %s244 = sphi 0, %s230
    %s248 = sphi 0, %s248
    %s250 = sphi 0, %s248
    %s251 = sphi 0, %s250
    %s265 = sphi 0, %s251
    %s269 = sphi 0, %s269
    %s271 = sphi 0, %s269
    %s272 = sphi 0, %s271
    %s286 = sphi 0, %s272
    %s290 = sphi 0, %s290
    %s292 = sphi 0, %s290
    %s293 = sphi 0, %s292
    %s307 = sphi 0, %s293
    %s311 = sphi 0, %s311
    %s313 = sphi 0, %s311
    %s314 = sphi 0, %s313
    %s328 = sphi 0, %s314
    %s334 = sphi 0, %s336
    %s337 = sphi 0, %s334
    %s338 = sphi 0, %s337
    %s354 = sphi 0, %s338
  $region4: #{sliding_window_transformer.2} parent=0 // loop_header_branch
    %23 = sbr.rel (%p21) target = $region8
  $region5: #{sliding_window_transformer.2} parent=0 // loop_body
    %s25 = ssub.s32 %s20, 1
    %s26 = ssub.s32 %s20, 2
    %s27 = sadd.s32 %s20, 1
    %s28 = ssub.s32 %s20, %s27
    %p29 = scmp.eq.s32.totalorder %s28, 0
    %s31 = sadd.s32 %s30, 1
    %s32 = scalar_select %p29, %s30, %s31
    %p35 = pneg %p29
    %p36 = scmp.eq.s32.totalorder %s20, 1
    %p37 = por %p35, %p36
    %p38 = scmp.ne.s32.totalorder %s30, %s33
    %p39 = scmp.eq.s32.totalorder %s20, 0
    %p40 = por %p38, %p39
    %p41 = scmp.ne.s32.totalorder %s30, %s33
    %p42 = scmp.eq.s32.totalorder %s25, 1
    %p43 = por %p41, %p42
    %p44 = scmp.ne.s32.totalorder %s33, %s34
    %p45 = scmp.eq.s32.totalorder %s25, 0
    %p46 = por %p44, %p45
    %p47 = scmp.ne.s32.totalorder %s33, %s34
    %p48 = scmp.eq.s32.totalorder %s26, 1
    %p49 = por %p47, %p48
    %p51 = scmp.ne.s32.totalorder %s34, %s50
    %p52 = scmp.eq.s32.totalorder %s26, 0
    %p53 = por %p51, %p52
    %s54 = ssub.s32 %s20, %s27
    %p55 = scmp.eq.s32.totalorder %s54, 0
    %s57 = sadd.s32 %s56, 1
    %s58 = scalar_select %p55, %s56, %s57
    %p61 = pneg %p55
    %p62 = scmp.eq.s32.totalorder %s20, 1
    %p63 = por %p61, %p62
    %p64 = scmp.ne.s32.totalorder %s56, %s59
    %p65 = scmp.eq.s32.totalorder %s20, 0
    %p66 = por %p64, %p65
    %p67 = scmp.ne.s32.totalorder %s56, %s59
    %p68 = scmp.eq.s32.totalorder %s25, 1
    %p69 = por %p67, %p68
    %p70 = scmp.ne.s32.totalorder %s59, %s60
    %p71 = scmp.eq.s32.totalorder %s25, 0
    %p72 = por %p70, %p71
    %p73 = scmp.ne.s32.totalorder %s59, %s60
    %p74 = scmp.eq.s32.totalorder %s26, 1
    %p75 = por %p73, %p74
    %p77 = scmp.ne.s32.totalorder %s60, %s76
    %p78 = scmp.eq.s32.totalorder %s26, 0
    %p79 = por %p77, %p78
    %s81 = sadd.s32 %s80, 1
    %p84 = scmp.eq.s32.totalorder %s20, 1
    %p85 = scmp.ne.s32.totalorder %s80, %s82
    %p86 = scmp.eq.s32.totalorder %s20, 0
    %p87 = por %p85, %p86
    %p88 = scmp.ne.s32.totalorder %s80, %s82
    %p89 = scmp.eq.s32.totalorder %s25, 1
    %p90 = por %p88, %p89
    %p91 = scmp.ne.s32.totalorder %s82, %s83
    %p92 = scmp.eq.s32.totalorder %s25, 0
    %p93 = por %p91, %p92
    %p94 = scmp.ne.s32.totalorder %s82, %s83
    %p95 = scmp.eq.s32.totalorder %s26, 1
    %p96 = por %p94, %p95
    %p98 = scmp.ne.s32.totalorder %s83, %s97
    %p99 = scmp.eq.s32.totalorder %s26, 0
    %p100 = por %p98, %p99
    %s102 = sadd.s32 %s101, 1
    %p105 = scmp.eq.s32.totalorder %s20, 1
    %p106 = scmp.ne.s32.totalorder %s101, %s103
    %p107 = scmp.eq.s32.totalorder %s20, 0
    %p108 = por %p106, %p107
    %p109 = scmp.ne.s32.totalorder %s101, %s103
    %p110 = scmp.eq.s32.totalorder %s25, 1
    %p111 = por %p109, %p110
    %p112 = scmp.ne.s32.totalorder %s103, %s104
    %p113 = scmp.eq.s32.totalorder %s25, 0
    %p114 = por %p112, %p113
    %p115 = scmp.ne.s32.totalorder %s103, %s104
    %p116 = scmp.eq.s32.totalorder %s26, 1
    %p117 = por %p115, %p116
    %p119 = scmp.ne.s32.totalorder %s104, %s118
    %p120 = scmp.eq.s32.totalorder %s26, 0
    %p121 = por %p119, %p120
    %s123 = sadd.s32 %s122, 1
    %p126 = scmp.eq.s32.totalorder %s20, 1
    %p127 = scmp.ne.s32.totalorder %s122, %s124
    %p128 = scmp.eq.s32.totalorder %s20, 0
    %p129 = por %p127, %p128
    %p130 = scmp.ne.s32.totalorder %s122, %s124
    %p131 = scmp.eq.s32.totalorder %s25, 1
    %p132 = por %p130, %p131
    %p133 = scmp.ne.s32.totalorder %s124, %s125
    %p134 = scmp.eq.s32.totalorder %s25, 0
    %p135 = por %p133, %p134
    %p136 = scmp.ne.s32.totalorder %s124, %s125
    %p137 = scmp.eq.s32.totalorder %s26, 1
    %p138 = por %p136, %p137
    %p140 = scmp.ne.s32.totalorder %s125, %s139
    %p141 = scmp.eq.s32.totalorder %s26, 0
    %p142 = por %p140, %p141
    %s144 = sadd.s32 %s143, 1
    %p147 = scmp.eq.s32.totalorder %s20, 1
    %p148 = scmp.ne.s32.totalorder %s143, %s145
    %p149 = scmp.eq.s32.totalorder %s20, 0
    %p150 = por %p148, %p149
    %p151 = scmp.ne.s32.totalorder %s143, %s145
    %p152 = scmp.eq.s32.totalorder %s25, 1
    %p153 = por %p151, %p152
    %p154 = scmp.ne.s32.totalorder %s145, %s146
    %p155 = scmp.eq.s32.totalorder %s25, 0
    %p156 = por %p154, %p155
    %p157 = scmp.ne.s32.totalorder %s145, %s146
    %p158 = scmp.eq.s32.totalorder %s26, 1
    %p159 = por %p157, %p158
    %p161 = scmp.ne.s32.totalorder %s146, %s160
    %p162 = scmp.eq.s32.totalorder %s26, 0
    %p163 = por %p161, %p162
    %s165 = sadd.s32 %s164, 1
    %p168 = scmp.eq.s32.totalorder %s20, 1
    %p169 = scmp.ne.s32.totalorder %s164, %s166
    %p170 = scmp.eq.s32.totalorder %s20, 0
    %p171 = por %p169, %p170
    %p172 = scmp.ne.s32.totalorder %s164, %s166
    %p173 = scmp.eq.s32.totalorder %s25, 1
    %p174 = por %p172, %p173
    %p175 = scmp.ne.s32.totalorder %s166, %s167
    %p176 = scmp.eq.s32.totalorder %s25, 0
    %p177 = por %p175, %p176
    %p178 = scmp.ne.s32.totalorder %s166, %s167
    %p179 = scmp.eq.s32.totalorder %s26, 1
    %p180 = por %p178, %p179
    %p182 = scmp.ne.s32.totalorder %s167, %s181
    %p183 = scmp.eq.s32.totalorder %s26, 0
    %p184 = por %p182, %p183
    %s186 = sadd.s32 %s185, 1
    %p189 = scmp.eq.s32.totalorder %s20, 1
    %p190 = scmp.ne.s32.totalorder %s185, %s187
    %p191 = scmp.eq.s32.totalorder %s20, 0
    %p192 = por %p190, %p191
    %p193 = scmp.ne.s32.totalorder %s185, %s187
    %p194 = scmp.eq.s32.totalorder %s25, 1
    %p195 = por %p193, %p194
    %p196 = scmp.ne.s32.totalorder %s187, %s188
    %p197 = scmp.eq.s32.totalorder %s25, 0
    %p198 = por %p196, %p197
    %p199 = scmp.ne.s32.totalorder %s187, %s188
    %p200 = scmp.eq.s32.totalorder %s26, 1
    %p201 = por %p199, %p200
    %p203 = scmp.ne.s32.totalorder %s188, %s202
    %p204 = scmp.eq.s32.totalorder %s26, 0
    %p205 = por %p203, %p204
    %s207 = sadd.s32 %s206, 1
    %p210 = scmp.eq.s32.totalorder %s20, 1
    %p211 = scmp.ne.s32.totalorder %s206, %s208
    %p212 = scmp.eq.s32.totalorder %s20, 0
    %p213 = por %p211, %p212
    %p214 = scmp.ne.s32.totalorder %s206, %s208
    %p215 = scmp.eq.s32.totalorder %s25, 1
    %p216 = por %p214, %p215
    %p217 = scmp.ne.s32.totalorder %s208, %s209
    %p218 = scmp.eq.s32.totalorder %s25, 0
    %p219 = por %p217, %p218
    %p220 = scmp.ne.s32.totalorder %s208, %s209
    %p221 = scmp.eq.s32.totalorder %s26, 1
    %p222 = por %p220, %p221
    %p224 = scmp.ne.s32.totalorder %s209, %s223
    %p225 = scmp.eq.s32.totalorder %s26, 0
    %p226 = por %p224, %p225
    %s228 = sadd.s32 %s227, 1
    %p231 = scmp.eq.s32.totalorder %s20, 1
    %p232 = scmp.ne.s32.totalorder %s227, %s229
    %p233 = scmp.eq.s32.totalorder %s20, 0
    %p234 = por %p232, %p233
    %p235 = scmp.ne.s32.totalorder %s227, %s229
    %p236 = scmp.eq.s32.totalorder %s25, 1
    %p237 = por %p235, %p236
    %p238 = scmp.ne.s32.totalorder %s229, %s230
    %p239 = scmp.eq.s32.totalorder %s25, 0
    %p240 = por %p238, %p239
    %p241 = scmp.ne.s32.totalorder %s229, %s230
    %p242 = scmp.eq.s32.totalorder %s26, 1
    %p243 = por %p241, %p242
    %p245 = scmp.ne.s32.totalorder %s230, %s244
    %p246 = scmp.eq.s32.totalorder %s26, 0
    %p247 = por %p245, %p246
    %s249 = sadd.s32 %s248, 1
    %p252 = scmp.eq.s32.totalorder %s20, 1
    %p253 = scmp.ne.s32.totalorder %s248, %s250
    %p254 = scmp.eq.s32.totalorder %s20, 0
    %p255 = por %p253, %p254
    %p256 = scmp.ne.s32.totalorder %s248, %s250
    %p257 = scmp.eq.s32.totalorder %s25, 1
    %p258 = por %p256, %p257
    %p259 = scmp.ne.s32.totalorder %s250, %s251
    %p260 = scmp.eq.s32.totalorder %s25, 0
    %p261 = por %p259, %p260
    %p262 = scmp.ne.s32.totalorder %s250, %s251
    %p263 = scmp.eq.s32.totalorder %s26, 1
    %p264 = por %p262, %p263
    %p266 = scmp.ne.s32.totalorder %s251, %s265
    %p267 = scmp.eq.s32.totalorder %s26, 0
    %p268 = por %p266, %p267
    %s270 = sadd.s32 %s269, 1
    %p273 = scmp.eq.s32.totalorder %s20, 1
    %p274 = scmp.ne.s32.totalorder %s269, %s271
    %p275 = scmp.eq.s32.totalorder %s20, 0
    %p276 = por %p274, %p275
    %p277 = scmp.ne.s32.totalorder %s269, %s271
    %p278 = scmp.eq.s32.totalorder %s25, 1
    %p279 = por %p277, %p278
    %p280 = scmp.ne.s32.totalorder %s271, %s272
    %p281 = scmp.eq.s32.totalorder %s25, 0
    %p282 = por %p280, %p281
    %p283 = scmp.ne.s32.totalorder %s271, %s272
    %p284 = scmp.eq.s32.totalorder %s26, 1
    %p285 = por %p283, %p284
    %p287 = scmp.ne.s32.totalorder %s272, %s286
    %p288 = scmp.eq.s32.totalorder %s26, 0
    %p289 = por %p287, %p288
    %s291 = sadd.s32 %s290, 1
    %p294 = scmp.eq.s32.totalorder %s20, 1
    %p295 = scmp.ne.s32.totalorder %s290, %s292
    %p296 = scmp.eq.s32.totalorder %s20, 0
    %p297 = por %p295, %p296
    %p298 = scmp.ne.s32.totalorder %s290, %s292
    %p299 = scmp.eq.s32.totalorder %s25, 1
    %p300 = por %p298, %p299
    %p301 = scmp.ne.s32.totalorder %s292, %s293
    %p302 = scmp.eq.s32.totalorder %s25, 0
    %p303 = por %p301, %p302
    %p304 = scmp.ne.s32.totalorder %s292, %s293
    %p305 = scmp.eq.s32.totalorder %s26, 1
    %p306 = por %p304, %p305
    %p308 = scmp.ne.s32.totalorder %s293, %s307
    %p309 = scmp.eq.s32.totalorder %s26, 0
    %p310 = por %p308, %p309
    %s312 = sadd.s32 %s311, 1
    %p315 = scmp.eq.s32.totalorder %s20, 1
    %p316 = scmp.ne.s32.totalorder %s311, %s313
    %p317 = scmp.eq.s32.totalorder %s20, 0
    %p318 = por %p316, %p317
    %p319 = scmp.ne.s32.totalorder %s311, %s313
    %p320 = scmp.eq.s32.totalorder %s25, 1
    %p321 = por %p319, %p320
    %p322 = scmp.ne.s32.totalorder %s313, %s314
    %p323 = scmp.eq.s32.totalorder %s25, 0
    %p324 = por %p322, %p323
    %p325 = scmp.ne.s32.totalorder %s313, %s314
    %p326 = scmp.eq.s32.totalorder %s26, 1
    %p327 = por %p325, %p326
    %p329 = scmp.ne.s32.totalorder %s314, %s328
    %p330 = scmp.eq.s32.totalorder %s26, 0
    %p331 = por %p329, %p330
    %s332 = ssub.s32 %s20, %s27
    %p333 = scmp.eq.s32.totalorder %s332, 0
    %s335 = sadd.s32 %s334, 1
    %s336 = scalar_select %p333, %s334, %s335
    %p339 = pneg %p333
    %p340 = scmp.eq.s32.totalorder %s20, 1
    %p341 = por %p339, %p340
    %p342 = scmp.ne.s32.totalorder %s334, %s337
    %p343 = scmp.eq.s32.totalorder %s20, 0
    %p344 = por %p342, %p343
    %p345 = scmp.ne.s32.totalorder %s334, %s337
    %p346 = scmp.eq.s32.totalorder %s25, 1
    %p347 = por %p345, %p346
    %p348 = scmp.ne.s32.totalorder %s337, %s338
    %p349 = scmp.eq.s32.totalorder %s25, 0
    %p350 = por %p348, %p349
    %p351 = scmp.ne.s32.totalorder %s337, %s338
    %p352 = scmp.eq.s32.totalorder %s26, 1
    %p353 = por %p351, %p352
    %p355 = scmp.ne.s32.totalorder %s338, %s354
    %p356 = scmp.eq.s32.totalorder %s26, 0
    %p357 = por %p355, %p356
    %p358 = scmp.le.s32.totalorder 1, %s20
    %p359 = scmp.lt.s32.totalorder %s20, 3
    %p360 = pnand %p358, %p359
    %p361 = pneg %p360
    // Predicated region
    $region9: #{sliding_window_transformer.2} parent=5 // pred_check
      _
    $region10: #{sliding_window_transformer.2} parent=5 // pred_check_branch
      %363 = sbr.rel (%p360) target = $region12
    $region11: #{sliding_window_transformer.2} parent=5 // pred_region
      %s364 = ssub.s32 %s20, 1
      // Predicated region
      $region13: #{sliding_window_transformer.2} parent=11 // pred_check
        %p365 = pneg %p93
      $region14: #{sliding_window_transformer.2} parent=11 // pred_check_branch
        %367 = sbr.rel (%p365) target = $region16
      $region15: #{sliding_window_transformer.2} parent=11 // pred_region
        _
      $region16: #{sliding_window_transformer.2} parent=11 // pred_fallthru
        _
      // Predicated region
      $region17: #{sliding_window_transformer.2} parent=11 // pred_check
        %p368 = pneg %p114
      $region18: #{sliding_window_transformer.2} parent=11 // pred_check_branch
        %370 = sbr.rel (%p368) target = $region20
      $region19: #{sliding_window_transformer.2} parent=11 // pred_region
        _
      $region20: #{sliding_window_transformer.2} parent=11 // pred_fallthru
        _
      // Predicated region
      $region21: #{sliding_window_transformer.2} parent=11 // pred_check
        %p371 = pneg %p135
      $region22: #{sliding_window_transformer.2} parent=11 // pred_check_branch
        %373 = sbr.rel (%p371) target = $region24
      $region23: #{sliding_window_transformer.2} parent=11 // pred_region
        _
      $region24: #{sliding_window_transformer.2} parent=11 // pred_fallthru
        _
      // Predicated region
      $region25: #{sliding_window_transformer.2} parent=11 // pred_check
        %p374 = pneg %p156
      $region26: #{sliding_window_transformer.2} parent=11 // pred_check_branch
        %376 = sbr.rel (%p374) target = $region28
      $region27: #{sliding_window_transformer.2} parent=11 // pred_region
        _
      $region28: #{sliding_window_transformer.2} parent=11 // pred_fallthru
        _
      // Predicated region
      $region29: #{sliding_window_transformer.2} parent=11 // pred_check
        %p377 = pneg %p177
      $region30: #{sliding_window_transformer.2} parent=11 // pred_check_branch
        %379 = sbr.rel (%p377) target = $region32
      $region31: #{sliding_window_transformer.2} parent=11 // pred_region
        _
      $region32: #{sliding_window_transformer.2} parent=11 // pred_fallthru
        _
      // Predicated region
      $region33: #{sliding_window_transformer.2} parent=11 // pred_check
        %p380 = pneg %p198
      $region34: #{sliding_window_transformer.2} parent=11 // pred_check_branch
        %382 = sbr.rel (%p380) target = $region36
      $region35: #{sliding_window_transformer.2} parent=11 // pred_region
        _
      $region36: #{sliding_window_transformer.2} parent=11 // pred_fallthru
        _
      // Predicated region
      $region37: #{sliding_window_transformer.2} parent=11 // pred_check
        %p383 = pneg %p219
      $region38: #{sliding_window_transformer.2} parent=11 // pred_check_branch
        %385 = sbr.rel (%p383) target = $region40
      $region39: #{sliding_window_transformer.2} parent=11 // pred_region
        _
      $region40: #{sliding_window_transformer.2} parent=11 // pred_fallthru
        _
      // Predicated region
      $region41: #{sliding_window_transformer.2} parent=11 // pred_check
        %p386 = pneg %p240
      $region42: #{sliding_window_transformer.2} parent=11 // pred_check_branch
        %388 = sbr.rel (%p386) target = $region44
      $region43: #{sliding_window_transformer.2} parent=11 // pred_region
        _
      $region44: #{sliding_window_transformer.2} parent=11 // pred_fallthru
        _
      // Predicated region
      $region45: #{sliding_window_transformer.2} parent=11 // pred_check
        %p389 = pneg %p261
      $region46: #{sliding_window_transformer.2} parent=11 // pred_check_branch
        %391 = sbr.rel (%p389) target = $region48
      $region47: #{sliding_window_transformer.2} parent=11 // pred_region
        _
      $region48: #{sliding_window_transformer.2} parent=11 // pred_fallthru
        _
      // Predicated region
      $region49: #{sliding_window_transformer.2} parent=11 // pred_check
        %p392 = pneg %p282
      $region50: #{sliding_window_transformer.2} parent=11 // pred_check_branch
        %394 = sbr.rel (%p392) target = $region52
      $region51: #{sliding_window_transformer.2} parent=11 // pred_region
        _
      $region52: #{sliding_window_transformer.2} parent=11 // pred_fallthru
        _
      // Predicated region
      $region53: #{sliding_window_transformer.2} parent=11 // pred_check
        %p395 = pneg %p303
      $region54: #{sliding_window_transformer.2} parent=11 // pred_check_branch
        %397 = sbr.rel (%p395) target = $region56
      $region55: #{sliding_window_transformer.2} parent=11 // pred_region
        _
      $region56: #{sliding_window_transformer.2} parent=11 // pred_fallthru
        _
      // Predicated region
      $region57: #{sliding_window_transformer.2} parent=11 // pred_check
        %p398 = pneg %p324
      $region58: #{sliding_window_transformer.2} parent=11 // pred_check_branch
        %400 = sbr.rel (%p398) target = $region60
      $region59: #{sliding_window_transformer.2} parent=11 // pred_region
        _
      $region60: #{sliding_window_transformer.2} parent=11 // pred_fallthru
        _
    $region12: #{sliding_window_transformer.2} parent=5 // pred_fallthru
      _
    %p401 = scmp.lt.s32.totalorder %s20, 2
    // Predicated region
    $region61: #{sliding_window_transformer.2} parent=5 // pred_check
      %p402 = pneg %p401
    $region62: #{sliding_window_transformer.2} parent=5 // pred_check_branch
      %404 = sbr.rel (%p402) target = $region64
    $region63: #{sliding_window_transformer.2} parent=5 // pred_region
      // Predicated region
      $region65: #{sliding_window_transformer.2} parent=63 // pred_check
        %p405 = pneg %p40
      $region66: #{sliding_window_transformer.2} parent=63 // pred_check_branch
        %407 = sbr.rel (%p405) target = $region68
      $region67: #{sliding_window_transformer.2} parent=63 // pred_region
        %s408 = smul.u32 8, %s20
        %p409 = scmp.lt.s32.totalorder %s408, 15
        %s410 = scalar_select %p409, %s408, 15
        %s411 = smul.addr %s410, 2
        %s412 = smul.addr %s411, 4
        %s413 = scalar_lea.vmem %s0, %s412
        %s414 = smul.u32 8, %s20
      $region68: #{sliding_window_transformer.2} parent=63 // pred_fallthru
        _
      // Predicated region
      $region69: #{sliding_window_transformer.2} parent=63 // pred_check
        %p415 = pneg %p66
      $region70: #{sliding_window_transformer.2} parent=63 // pred_check_branch
        %417 = sbr.rel (%p415) target = $region72
      $region71: #{sliding_window_transformer.2} parent=63 // pred_region
        %s418 = smul.u32 16, %s20
        %p419 = scmp.lt.s32.totalorder %s418, 31
        %s420 = scalar_select %p419, %s418, 31
        %s421 = smul.addr %s420, 8
        %s422 = scalar_lea.vmem %s1, %s421
        %s423 = smul.u32 16, %s20
      $region72: #{sliding_window_transformer.2} parent=63 // pred_fallthru
        _
    $region64: #{sliding_window_transformer.2} parent=5 // pred_fallthru
      _
    %p424 = scmp.le.s32.totalorder 1, %s20
    %p425 = scmp.lt.s32.totalorder %s20, 3
    %p426 = pnand %p424, %p425
    %p427 = pneg %p426
    // Predicated region
    $region73: #{sliding_window_transformer.2} parent=5 // pred_check
      _
    $region74: #{sliding_window_transformer.2} parent=5 // pred_check_branch
      %429 = sbr.rel (%p426) target = $region76
    $region75: #{sliding_window_transformer.2} parent=5 // pred_region
      %s430 = ssub.s32 %s20, 1
      %s431 = smul.u32 8, %s25
      %p432 = scmp.lt.s32.totalorder %s431, 15
      %s433 = scalar_select %p432, %s431, 15
      %s434 = smul.addr %s433, 2
      %s435 = smul.addr %s434, 4
      %s436 = scalar_lea.vmem %s0, %s435
      %p437 = pneg %p46
      %p438 = pneg %p43
      %s439 = smul.u32 16, %s25
      %p440 = scmp.lt.s32.totalorder %s439, 31
      %s441 = scalar_select %p440, %s439, 31
      %s442 = smul.addr %s441, 8
      %s443 = scalar_lea.vmem %s1, %s442
      %p444 = pneg %p72
      %p445 = pneg %p69
      %p446 = pneg %p93
      %p447 = pneg %p90
      %p448 = pneg %p114
      %p449 = pneg %p111
      %p450 = pneg %p135
      %p451 = pneg %p132
      %p452 = pneg %p156
      %p453 = pneg %p153
      %p454 = pneg %p177
      %p455 = pneg %p174
      %p456 = pneg %p198
      %p457 = pneg %p195
      %p458 = pneg %p219
      %p459 = pneg %p216
      %p460 = pneg %p240
      %p461 = pneg %p237
      %p462 = pneg %p261
      %p463 = pneg %p258
      %p464 = pneg %p282
      %p465 = pneg %p279
      %p466 = pneg %p303
      %p467 = pneg %p300
      %p468 = pneg %p324
      %p469 = pneg %p321
      %p470 = pneg %p350
      %p471 = pneg %p347
      %s472 = smul.u32 8, %s25
      %p473 = scmp.lt.s32.totalorder %s472, 15
      %s474 = scalar_select %p473, %s472, 15
      %s475 = smul.addr %s474, 2
      %s476 = smul.addr %s475, 4
      %s477 = scalar_lea.vmem %s14, %s476
      %s478 = smul.u32 8, %s25
      %p479 = scmp.lt.s32.totalorder %s478, 15
      %s480 = scalar_select %p479, %s478, 15
      %s481 = smul.addr %s480, 2
      %s482 = smul.addr %s481, 4
      %s483 = scalar_lea.vmem %s0, %s482
      %s484 = smul.u32 8, %s25
      %s485 = smul.u32 16, %s25
      %p486 = scmp.lt.s32.totalorder %s485, 31
      %s487 = scalar_select %p486, %s485, 31
      %s488 = smul.addr %s487, 8
      %s489 = scalar_lea.vmem %s1, %s488
      %s490 = smul.u32 16, %s25
      %s491 = smul.u32 8, %s25
      %p492 = scmp.lt.s32.totalorder %s491, 15
      %s493 = scalar_select %p492, %s491, 15
      %s494 = smul.addr %s493, 2
      %s495 = smul.addr %s494, 4
      %s496 = scalar_lea.vmem %s14, %s495
      %s497 = smul.u32 8, %s25
      %v498 = vld [vmem:[%s483] sm:$0xf]
      %v499 = vld [vmem:[%s483 + $0x4] sm:$0xf]
      %v500 = vld [vmem:[%s483 + $0x8] sm:$0xf]
      %v501 = vld [vmem:[%s483 + $0xc] sm:$0xf]
      %v502 = vld [vmem:[%s483 + $0x10] sm:$0xf]
      %v503 = vld [vmem:[%s483 + $0x14] sm:$0xf]
      %v504 = vld [vmem:[%s483 + $0x18] sm:$0xf]
      %v505 = vld [vmem:[%s483 + $0x1c] sm:$0xf]
      %v506 = vld [vmem:[%s483 + $0x20] sm:$0xf]
      %v507 = vld [vmem:[%s483 + $0x24] sm:$0xf]
      %v508 = vld [vmem:[%s483 + $0x28] sm:$0xf]
      %v509 = vld [vmem:[%s483 + $0x2c] sm:$0xf]
      %v510 = vld [vmem:[%s483 + $0x30] sm:$0xf]
      %v511 = vld [vmem:[%s483 + $0x34] sm:$0xf]
      %v512 = vld [vmem:[%s483 + $0x38] sm:$0xf]
      %v513 = vld [vmem:[%s483 + $0x3c] sm:$0xf]
      %v514 = vld [vmem:[%s2] sm:$0xff]
      %v515 = vld [vmem:[%s2 + $0x8] sm:$0xf]
      %v516 = vld [vmem:[%s2 + $0xc] sm:$0xff]
      %v517 = vld [vmem:[%s2 + $0x14] sm:$0xf]
      %v518 = vld [vmem:[%s2 + $0x18] sm:$0xff]
      %v519 = vld [vmem:[%s2 + $0x20] sm:$0xf]
      %v520 = vld [vmem:[%s2 + $0x24] sm:$0xff]
      %v521 = vld [vmem:[%s2 + $0x2c] sm:$0xf]
      %v522 = vld [vmem:[%s2 + $0x30] sm:$0xff]
      %v523 = vld [vmem:[%s2 + $0x38] sm:$0xf]
      %v524 = vld [vmem:[%s2 + $0x3c] sm:$0xff]
      %v525 = vld [vmem:[%s2 + $0x44] sm:$0xf]
      %v526 = vld [vmem:[%s2 + $0x48] sm:$0xff]
      %v527 = vld [vmem:[%s2 + $0x50] sm:$0xf]
      %v528 = vld [vmem:[%s2 + $0x54] sm:$0xff]
      %v529 = vld [vmem:[%s2 + $0x5c] sm:$0xf]
      %v530 = vld [vmem:[%s2 + $0x60] sm:$0xff]
      %v531 = vld [vmem:[%s2 + $0x68] sm:$0xf]
      %v532 = vld [vmem:[%s2 + $0x6c] sm:$0xff]
      %v533 = vld [vmem:[%s2 + $0x74] sm:$0xf]
      %v534 = vld [vmem:[%s2 + $0x78] sm:$0xff]
      %v535 = vld [vmem:[%s2 + $0x80] sm:$0xf]
      %v536 = vld [vmem:[%s2 + $0x84] sm:$0xff]
      %v537 = vld [vmem:[%s2 + $0x8c] sm:$0xf]
      %v538 = vld [vmem:[%s2 + $0x90] sm:$0xff]
      %v539 = vld [vmem:[%s2 + $0x98] sm:$0xf]
      %v540 = vld [vmem:[%s2 + $0x9c] sm:$0xff]
      %v541 = vld [vmem:[%s2 + $0xa4] sm:$0xf]
      %v542 = vld [vmem:[%s2 + $0xa8] sm:$0xff]
      %v543 = vld [vmem:[%s2 + $0xb0] sm:$0xf]
      %v544 = vld [vmem:[%s2 + $0xb4] sm:$0xff]
      %v545 = vld [vmem:[%s2 + $0xbc] sm:$0xf]
      %v546 = vld [vmem:[%s3] sm:$0x7]
      %v548 = vperm.slane %v546, 0
      %v549 = vperm.slane %v546, 1
      %v550 = vperm.slane %v546, 2
      %v570 = vunpack.c.l.b16 %v498
      %v571 = vunpack.c.l.b16 %v499
      %v572 = vunpack.c.l.b16 %v500
      %v573 = vunpack.c.l.b16 %v501
      %v574 = vunpack.c.l.b16 %v502
      %v575 = vunpack.c.l.b16 %v503
      %v576 = vunpack.c.l.b16 %v504
      %v577 = vunpack.c.l.b16 %v505
      %v578 = vunpack.c.l.b16 %v506
      %v579 = vunpack.c.l.b16 %v507
      %v580 = vunpack.c.l.b16 %v508
      %v581 = vunpack.c.l.b16 %v509
      %v582 = vunpack.c.l.b16 %v510
      %v583 = vunpack.c.l.b16 %v511
      %v584 = vunpack.c.l.b16 %v512
      %v585 = vunpack.c.l.b16 %v513
      %v586 = vpack.c.b16 %v571, %v570
      %v587 = vpack.c.b16 %v573, %v572
      %v588 = vpack.c.b16 %v575, %v574
      %v589 = vpack.c.b16 %v577, %v576
      %v590 = vpack.c.b16 %v579, %v578
      %v591 = vpack.c.b16 %v581, %v580
      %v592 = vpack.c.b16 %v583, %v582
      %v593 = vpack.c.b16 %v585, %v584
      %v634 = vunpack.c.l.b16 %v514
      %v635 = vunpack.c.h.b16 %v514
      %v636 = vunpack.c.l.b16 %v515
      %v637 = vunpack.c.l.b16 %v516
      %v638 = vunpack.c.h.b16 %v516
      %v639 = vunpack.c.l.b16 %v517
      %v640 = vunpack.c.l.b16 %v518
      %v641 = vunpack.c.h.b16 %v518
      %v642 = vunpack.c.l.b16 %v519
      %v643 = vunpack.c.l.b16 %v520
      %v644 = vunpack.c.h.b16 %v520
      %v645 = vunpack.c.l.b16 %v521
      %v646 = vunpack.c.l.b16 %v522
      %v647 = vunpack.c.h.b16 %v522
      %v648 = vunpack.c.l.b16 %v523
      %v649 = vunpack.c.l.b16 %v524
      %v650 = vunpack.c.h.b16 %v524
      %v651 = vunpack.c.l.b16 %v525
      %v652 = vunpack.c.l.b16 %v526
      %v653 = vunpack.c.h.b16 %v526
      %v654 = vunpack.c.l.b16 %v527
      %v655 = vunpack.c.l.b16 %v528
      %v656 = vunpack.c.h.b16 %v528
      %v657 = vunpack.c.l.b16 %v529
      %v658 = vunpack.c.l.b16 %v530
      %v659 = vunpack.c.h.b16 %v530
      %v660 = vunpack.c.l.b16 %v531
      %v661 = vunpack.c.l.b16 %v532
      %v662 = vunpack.c.h.b16 %v532
      %v663 = vunpack.c.l.b16 %v533
      %v664 = vunpack.c.l.b16 %v534
      %v665 = vunpack.c.h.b16 %v534
      %v666 = vunpack.c.l.b16 %v535
      %v667 = vunpack.c.l.b16 %v536
      %v668 = vunpack.c.h.b16 %v536
      %v669 = vunpack.c.l.b16 %v537
      %v670 = vunpack.c.l.b16 %v538
      %v671 = vunpack.c.h.b16 %v538
      %v672 = vunpack.c.l.b16 %v539
      %v673 = vunpack.c.l.b16 %v540
      %v674 = vunpack.c.h.b16 %v540
      %v675 = vunpack.c.l.b16 %v541
      %v676 = vunpack.c.l.b16 %v542
      %v677 = vunpack.c.h.b16 %v542
      %v678 = vunpack.c.l.b16 %v543
      %v679 = vunpack.c.l.b16 %v544
      %v680 = vunpack.c.h.b16 %v544
      %v681 = vunpack.c.l.b16 %v545
      %v682 = vpack.c.b16 %v637, %v634
      %v683 = vpack.c.b16 %v638, %v635
      %v684 = vpack.c.b16 %v639, %v636
      %v685 = vpack.c.b16 %v643, %v640
      %v686 = vpack.c.b16 %v644, %v641
      %v687 = vpack.c.b16 %v645, %v642
      %v688 = vpack.c.b16 %v649, %v646
      %v689 = vpack.c.b16 %v650, %v647
      %v690 = vpack.c.b16 %v651, %v648
      %v691 = vpack.c.b16 %v655, %v652
      %v692 = vpack.c.b16 %v656, %v653
      %v693 = vpack.c.b16 %v657, %v654
      %v694 = vpack.c.b16 %v661, %v658
      %v695 = vpack.c.b16 %v662, %v659
      %v696 = vpack.c.b16 %v663, %v660
      %v697 = vpack.c.b16 %v667, %v664
      %v698 = vpack.c.b16 %v668, %v665
      %v699 = vpack.c.b16 %v669, %v666
      %v700 = vpack.c.b16 %v673, %v670
      %v701 = vpack.c.b16 %v674, %v671
      %v702 = vpack.c.b16 %v675, %v672
      %v703 = vpack.c.b16 %v679, %v676
      %v704 = vpack.c.b16 %v680, %v677
      %v705 = vpack.c.b16 %v681, %v678
      %730 = vmatpush.bf16.msra.mxu0 %v703
      %731 = vmatpush.bf16.msra.mxu0 %v700
      %732 = vmatpush.bf16.msra.mxu0 %v697
      %733 = vmatpush.bf16.msra.mxu0 %v694
      %734 = vmatpush.bf16.msra.mxu0 %v691
      %735 = vmatpush.bf16.msra.mxu0 %v688
      %736 = vmatpush.bf16.msra.mxu0 %v685
      %737 = vmatpush.bf16.msra.mxu0 %v682
      %738 = vmatmul.bf16.gmra.mxu0 %v586
      %v739 = vpop.f32.mrf.mxu0
      %v740 = vadd.f32 %v548, %v739
      %v741 = vpop.f32.mrf.mxu0
      %v742 = vadd.f32 %v548, %v741
      %743 = vmatmul.bf16.gmra.mxu0 %v587
      %v744 = vpop.f32.mrf.mxu0
      %v745 = vadd.f32 %v548, %v744
      %v746 = vpop.f32.mrf.mxu0
      %v747 = vadd.f32 %v548, %v746
      %748 = vmatmul.bf16.gmra.mxu0 %v588
      %v749 = vpop.f32.mrf.mxu0
      %v750 = vadd.f32 %v548, %v749
      %v751 = vpop.f32.mrf.mxu0
      %v752 = vadd.f32 %v548, %v751
      %753 = vmatmul.bf16.gmra.mxu0 %v589
      %v754 = vpop.f32.mrf.mxu0
      %v755 = vadd.f32 %v548, %v754
      %v756 = vpop.f32.mrf.mxu0
      %v757 = vadd.f32 %v548, %v756
      %758 = vmatmul.bf16.gmra.mxu0 %v590
      %v759 = vpop.f32.mrf.mxu0
      %v760 = vadd.f32 %v548, %v759
      %v761 = vpop.f32.mrf.mxu0
      %v762 = vadd.f32 %v548, %v761
      %763 = vmatmul.bf16.gmra.mxu0 %v591
      %v764 = vpop.f32.mrf.mxu0
      %v765 = vadd.f32 %v548, %v764
      %v766 = vpop.f32.mrf.mxu0
      %v767 = vadd.f32 %v548, %v766
      %768 = vmatmul.bf16.gmra.mxu0 %v592
      %v769 = vpop.f32.mrf.mxu0
      %v770 = vadd.f32 %v548, %v769
      %v771 = vpop.f32.mrf.mxu0
      %v772 = vadd.f32 %v548, %v771
      %773 = vmatmul.bf16.gmra.mxu0 %v593
      %v774 = vpop.f32.mrf.mxu0
      %v775 = vadd.f32 %v548, %v774
      %v776 = vpop.f32.mrf.mxu0
      %v777 = vadd.f32 %v548, %v776
      %778 = vdwg.mxu0
      %779 = vmatpush.bf16.msra.mxu0 %v704
      %780 = vmatpush.bf16.msra.mxu0 %v701
      %781 = vmatpush.bf16.msra.mxu0 %v698
      %782 = vmatpush.bf16.msra.mxu0 %v695
      %783 = vmatpush.bf16.msra.mxu0 %v692
      %784 = vmatpush.bf16.msra.mxu0 %v689
      %785 = vmatpush.bf16.msra.mxu0 %v686
      %786 = vmatpush.bf16.msra.mxu0 %v683
      %787 = vmatmul.bf16.gmra.mxu0 %v586
      %v788 = vpop.f32.mrf.mxu0
      %v789 = vadd.f32 %v549, %v788
      %v790 = vpop.f32.mrf.mxu0
      %v791 = vadd.f32 %v549, %v790
      %792 = vmatmul.bf16.gmra.mxu0 %v587
      %v793 = vpop.f32.mrf.mxu0
      %v794 = vadd.f32 %v549, %v793
      %v795 = vpop.f32.mrf.mxu0
      %v796 = vadd.f32 %v549, %v795
      %797 = vmatmul.bf16.gmra.mxu0 %v588
      %v798 = vpop.f32.mrf.mxu0
      %v799 = vadd.f32 %v549, %v798
      %v800 = vpop.f32.mrf.mxu0
      %v801 = vadd.f32 %v549, %v800
      %802 = vmatmul.bf16.gmra.mxu0 %v589
      %v803 = vpop.f32.mrf.mxu0
      %v804 = vadd.f32 %v549, %v803
      %v805 = vpop.f32.mrf.mxu0
      %v806 = vadd.f32 %v549, %v805
      %807 = vmatmul.bf16.gmra.mxu0 %v590
      %v808 = vpop.f32.mrf.mxu0
      %v809 = vadd.f32 %v549, %v808
      %v810 = vpop.f32.mrf.mxu0
      %v811 = vadd.f32 %v549, %v810
      %812 = vmatmul.bf16.gmra.mxu0 %v591
      %v813 = vpop.f32.mrf.mxu0
      %v814 = vadd.f32 %v549, %v813
      %v815 = vpop.f32.mrf.mxu0
      %v816 = vadd.f32 %v549, %v815
      %817 = vmatmul.bf16.gmra.mxu0 %v592
      %v818 = vpop.f32.mrf.mxu0
      %v819 = vadd.f32 %v549, %v818
      %v820 = vpop.f32.mrf.mxu0
      %v821 = vadd.f32 %v549, %v820
      %822 = vmatmul.bf16.gmra.mxu0 %v593
      %v823 = vpop.f32.mrf.mxu0
      %v824 = vadd.f32 %v549, %v823
      %v825 = vpop.f32.mrf.mxu0
      %v826 = vadd.f32 %v549, %v825
      %827 = vdwg.mxu0
      %828 = vmatpush.bf16.msra.mxu0 %v705
      %829 = vmatpush.bf16.msra.mxu0 %v702
      %830 = vmatpush.bf16.msra.mxu0 %v699
      %831 = vmatpush.bf16.msra.mxu0 %v696
      %832 = vmatpush.bf16.msra.mxu0 %v693
      %833 = vmatpush.bf16.msra.mxu0 %v690
      %834 = vmatpush.bf16.msra.mxu0 %v687
      %835 = vmatpush.bf16.msra.mxu0 %v684
      %836 = vmatmul.bf16.gmra.mxu0 %v586
      %v837 = vpop.f32.mrf.mxu0
      %v838 = vadd.f32 %v550, %v837
      %v839 = vpop.f32.mrf.mxu0
      %v840 = vadd.f32 %v550, %v839
      %841 = vmatmul.bf16.gmra.mxu0 %v587
      %v842 = vpop.f32.mrf.mxu0
      %v843 = vadd.f32 %v550, %v842
      %v844 = vpop.f32.mrf.mxu0
      %v845 = vadd.f32 %v550, %v844
      %846 = vmatmul.bf16.gmra.mxu0 %v588
      %v847 = vpop.f32.mrf.mxu0
      %v848 = vadd.f32 %v550, %v847
      %v849 = vpop.f32.mrf.mxu0
      %v850 = vadd.f32 %v550, %v849
      %851 = vmatmul.bf16.gmra.mxu0 %v589
      %v852 = vpop.f32.mrf.mxu0
      %v853 = vadd.f32 %v550, %v852
      %v854 = vpop.f32.mrf.mxu0
      %v855 = vadd.f32 %v550, %v854
      %856 = vmatmul.bf16.gmra.mxu0 %v590
      %v857 = vpop.f32.mrf.mxu0
      %v858 = vadd.f32 %v550, %v857
      %v859 = vpop.f32.mrf.mxu0
      %v860 = vadd.f32 %v550, %v859
      %861 = vmatmul.bf16.gmra.mxu0 %v591
      %v862 = vpop.f32.mrf.mxu0
      %v863 = vadd.f32 %v550, %v862
      %v864 = vpop.f32.mrf.mxu0
      %v865 = vadd.f32 %v550, %v864
      %866 = vmatmul.bf16.gmra.mxu0 %v592
      %v867 = vpop.f32.mrf.mxu0
      %v868 = vadd.f32 %v550, %v867
      %v869 = vpop.f32.mrf.mxu0
      %v870 = vadd.f32 %v550, %v869
      %871 = vmatmul.bf16.gmra.mxu0 %v593
      %v872 = vpop.f32.mrf.mxu0
      %v873 = vadd.f32 %v550, %v872
      %v874 = vpop.f32.mrf.mxu0
      %v875 = vadd.f32 %v550, %v874
      %876 = vdwg.mxu0
      %v877 = vpack.c.bf16 %v742, %v740
      %v878 = vpack.c.bf16 %v747, %v745
      %v879 = vpack.c.bf16 %v752, %v750
      %v880 = vpack.c.bf16 %v757, %v755
      %v881 = vpack.c.bf16 %v762, %v760
      %v882 = vpack.c.bf16 %v767, %v765
      %v883 = vpack.c.bf16 %v772, %v770
      %v884 = vpack.c.bf16 %v777, %v775
      %v885 = vpack.c.bf16 %v791, %v789
      %v886 = vpack.c.bf16 %v796, %v794
      %v887 = vpack.c.bf16 %v801, %v799
      %v888 = vpack.c.bf16 %v806, %v804
      %v889 = vpack.c.bf16 %v811, %v809
      %v890 = vpack.c.bf16 %v816, %v814
      %v891 = vpack.c.bf16 %v821, %v819
      %v892 = vpack.c.bf16 %v826, %v824
      %893 = vmatpush.bf16.xpose.msra.mxu0 %v892
      %894 = vmatpush.bf16.xpose.msra.mxu0 %v891
      %895 = vmatpush.bf16.xpose.msra.mxu0 %v890
      %896 = vmatpush.bf16.xpose.msra.mxu0 %v889
      %897 = vmatpush.bf16.xpose.msra.mxu0 %v888
      %898 = vmatpush.bf16.xpose.msra.mxu0 %v887
      %899 = vmatpush.bf16.xpose.msra.mxu0 %v886
      %900 = vmatpush.bf16.xpose.msra.mxu0 %v885
      %901 = vmatmul.bf16.gmra.mxu0 %v877
      %v902 = vpop.f32.mrf.mxu0
      %v903 = vadd.f32 0.0, %v902
      %v904 = vpop.f32.mrf.mxu0
      %v905 = vadd.f32 0.0, %v904
      %906 = vmatmul.bf16.gmra.mxu0 %v878
      %v907 = vpop.f32.mrf.mxu0
      %v908 = vadd.f32 0.0, %v907
      %v909 = vpop.f32.mrf.mxu0
      %v910 = vadd.f32 0.0, %v909
      %911 = vmatmul.bf16.gmra.mxu0 %v879
      %v912 = vpop.f32.mrf.mxu0
      %v913 = vadd.f32 0.0, %v912
      %v914 = vpop.f32.mrf.mxu0
      %v915 = vadd.f32 0.0, %v914
      %916 = vmatmul.bf16.gmra.mxu0 %v880
      %v917 = vpop.f32.mrf.mxu0
      %v918 = vadd.f32 0.0, %v917
      %v919 = vpop.f32.mrf.mxu0
      %v920 = vadd.f32 0.0, %v919
      %921 = vmatmul.bf16.gmra.mxu0 %v881
      %v922 = vpop.f32.mrf.mxu0
      %v923 = vadd.f32 0.0, %v922
      %v924 = vpop.f32.mrf.mxu0
      %v925 = vadd.f32 0.0, %v924
      %926 = vmatmul.bf16.gmra.mxu0 %v882
      %v927 = vpop.f32.mrf.mxu0
      %v928 = vadd.f32 0.0, %v927
      %v929 = vpop.f32.mrf.mxu0
      %v930 = vadd.f32 0.0, %v929
      %931 = vmatmul.bf16.gmra.mxu0 %v883
      %v932 = vpop.f32.mrf.mxu0
      %v933 = vadd.f32 0.0, %v932
      %v934 = vpop.f32.mrf.mxu0
      %v935 = vadd.f32 0.0, %v934
      %936 = vmatmul.bf16.gmra.mxu0 %v884
      %v937 = vpop.f32.mrf.mxu0
      %v938 = vadd.f32 0.0, %v937
      %v939 = vpop.f32.mrf.mxu0
      %v940 = vadd.f32 0.0, %v939
      %941 = vdwg.mxu0
      %v942 = vmul.f32 %v903, 0.088388346
      %v943 = vmul.f32 %v905, 0.088388346
      %v944 = vmul.f32 %v908, 0.088388346
      %v945 = vmul.f32 %v910, 0.088388346
      %v946 = vmul.f32 %v913, 0.088388346
      %v947 = vmul.f32 %v915, 0.088388346
      %v948 = vmul.f32 %v918, 0.088388346
      %v949 = vmul.f32 %v920, 0.088388346
      %v950 = vmul.f32 %v923, 0.088388346
      %v951 = vmul.f32 %v925, 0.088388346
      %v952 = vmul.f32 %v928, 0.088388346
      %v953 = vmul.f32 %v930, 0.088388346
      %v954 = vmul.f32 %v933, 0.088388346
      %v955 = vmul.f32 %v935, 0.088388346
      %v956 = vmul.f32 %v938, 0.088388346
      %v957 = vmul.f32 %v940, 0.088388346
      %v958 = vld [vmem:[%s489] sm:$0xff]
      %v959 = vld [vmem:[%s489 + $0x8] sm:$0xff]
      %v960 = vld [vmem:[%s489 + $0x10] sm:$0xff]
      %v961 = vld [vmem:[%s489 + $0x18] sm:$0xff]
      %v962 = vld [vmem:[%s489 + $0x20] sm:$0xff]
      %v963 = vld [vmem:[%s489 + $0x28] sm:$0xff]
      %v964 = vld [vmem:[%s489 + $0x30] sm:$0xff]
      %v965 = vld [vmem:[%s489 + $0x38] sm:$0xff]
      %v966 = vld [vmem:[%s489 + $0x40] sm:$0xff]
      %v967 = vld [vmem:[%s489 + $0x48] sm:$0xff]
      %v968 = vld [vmem:[%s489 + $0x50] sm:$0xff]
      %v969 = vld [vmem:[%s489 + $0x58] sm:$0xff]
      %v970 = vld [vmem:[%s489 + $0x60] sm:$0xff]
      %v971 = vld [vmem:[%s489 + $0x68] sm:$0xff]
      %v972 = vld [vmem:[%s489 + $0x70] sm:$0xff]
      %v973 = vld [vmem:[%s489 + $0x78] sm:$0xff]
      %v974 = vadd.f32 %v942, %v958
      %v975 = vadd.f32 %v943, %v959
      %v976 = vadd.f32 %v944, %v960
      %v977 = vadd.f32 %v945, %v961
      %v978 = vadd.f32 %v946, %v962
      %v979 = vadd.f32 %v947, %v963
      %v980 = vadd.f32 %v948, %v964
      %v981 = vadd.f32 %v949, %v965
      %v982 = vadd.f32 %v950, %v966
      %v983 = vadd.f32 %v951, %v967
      %v984 = vadd.f32 %v952, %v968
      %v985 = vadd.f32 %v953, %v969
      %v986 = vadd.f32 %v954, %v970
      %v987 = vadd.f32 %v955, %v971
      %v988 = vadd.f32 %v956, %v972
      %v989 = vadd.f32 %v957, %v973
      %990 = vmax.xlane.f32.xlu0 %v974
      %v991 = vpop.xlane.xlu0 %990
      %992 = vmax.xlane.f32.xlu0 %v975
      %v993 = vpop.xlane.xlu0 %992
      %994 = vmax.xlane.f32.xlu0 %v976
      %v995 = vpop.xlane.xlu0 %994
      %996 = vmax.xlane.f32.xlu0 %v977
      %v997 = vpop.xlane.xlu0 %996
      %998 = vmax.xlane.f32.xlu0 %v978
      %v999 = vpop.xlane.xlu0 %998
      %1000 = vmax.xlane.f32.xlu0 %v979
      %v1001 = vpop.xlane.xlu0 %1000
      %1002 = vmax.xlane.f32.xlu0 %v980
      %v1003 = vpop.xlane.xlu0 %1002
      %1004 = vmax.xlane.f32.xlu0 %v981
      %v1005 = vpop.xlane.xlu0 %1004
      %1006 = vmax.xlane.f32.xlu0 %v982
      %v1007 = vpop.xlane.xlu0 %1006
      %1008 = vmax.xlane.f32.xlu0 %v983
      %v1009 = vpop.xlane.xlu0 %1008
      %1010 = vmax.xlane.f32.xlu0 %v984
      %v1011 = vpop.xlane.xlu0 %1010
      %1012 = vmax.xlane.f32.xlu0 %v985
      %v1013 = vpop.xlane.xlu0 %1012
      %1014 = vmax.xlane.f32.xlu0 %v986
      %v1015 = vpop.xlane.xlu0 %1014
      %1016 = vmax.xlane.f32.xlu0 %v987
      %v1017 = vpop.xlane.xlu0 %1016
      %1018 = vmax.xlane.f32.xlu0 %v988
      %v1019 = vpop.xlane.xlu0 %1018
      %1020 = vmax.xlane.f32.xlu0 %v989
      %v1021 = vpop.xlane.xlu0 %1020
      %v1022 = vsub.f32 %v974, %v991
      %v1023 = vsub.f32 %v975, %v993
      %v1024 = vsub.f32 %v976, %v995
      %v1025 = vsub.f32 %v977, %v997
      %v1026 = vsub.f32 %v978, %v999
      %v1027 = vsub.f32 %v979, %v1001
      %v1028 = vsub.f32 %v980, %v1003
      %v1029 = vsub.f32 %v981, %v1005
      %v1030 = vsub.f32 %v982, %v1007
      %v1031 = vsub.f32 %v983, %v1009
      %v1032 = vsub.f32 %v984, %v1011
      %v1033 = vsub.f32 %v985, %v1013
      %v1034 = vsub.f32 %v986, %v1015
      %v1035 = vsub.f32 %v987, %v1017
      %v1036 = vsub.f32 %v988, %v1019
      %v1037 = vsub.f32 %v989, %v1021
      %v1038 = vmul.f32 %v1022, 1.442695
      %v1039 = vpow.pop %v1038
      %v1040 = vmul.f32 %v1023, 1.442695
      %v1041 = vpow.pop %v1040
      %v1042 = vmul.f32 %v1024, 1.442695
      %v1043 = vpow.pop %v1042
      %v1044 = vmul.f32 %v1025, 1.442695
      %v1045 = vpow.pop %v1044
      %v1046 = vmul.f32 %v1026, 1.442695
      %v1047 = vpow.pop %v1046
      %v1048 = vmul.f32 %v1027, 1.442695
      %v1049 = vpow.pop %v1048
      %v1050 = vmul.f32 %v1028, 1.442695
      %v1051 = vpow.pop %v1050
      %v1052 = vmul.f32 %v1029, 1.442695
      %v1053 = vpow.pop %v1052
      %v1054 = vmul.f32 %v1030, 1.442695
      %v1055 = vpow.pop %v1054
      %v1056 = vmul.f32 %v1031, 1.442695
      %v1057 = vpow.pop %v1056
      %v1058 = vmul.f32 %v1032, 1.442695
      %v1059 = vpow.pop %v1058
      %v1060 = vmul.f32 %v1033, 1.442695
      %v1061 = vpow.pop %v1060
      %v1062 = vmul.f32 %v1034, 1.442695
      %v1063 = vpow.pop %v1062
      %v1064 = vmul.f32 %v1035, 1.442695
      %v1065 = vpow.pop %v1064
      %v1066 = vmul.f32 %v1036, 1.442695
      %v1067 = vpow.pop %v1066
      %v1068 = vmul.f32 %v1037, 1.442695
      %v1069 = vpow.pop %v1068
      %1070 = vadd.xlane.f32.xlu0 %v1039
      %v1071 = vpop.xlane.xlu0 %1070
      %1072 = vadd.xlane.f32.xlu0 %v1041
      %v1073 = vpop.xlane.xlu0 %1072
      %1074 = vadd.xlane.f32.xlu0 %v1043
      %v1075 = vpop.xlane.xlu0 %1074
      %1076 = vadd.xlane.f32.xlu0 %v1045
      %v1077 = vpop.xlane.xlu0 %1076
      %1078 = vadd.xlane.f32.xlu0 %v1047
      %v1079 = vpop.xlane.xlu0 %1078
      %1080 = vadd.xlane.f32.xlu0 %v1049
      %v1081 = vpop.xlane.xlu0 %1080
      %1082 = vadd.xlane.f32.xlu0 %v1051
      %v1083 = vpop.xlane.xlu0 %1082
      %1084 = vadd.xlane.f32.xlu0 %v1053
      %v1085 = vpop.xlane.xlu0 %1084
      %1086 = vadd.xlane.f32.xlu0 %v1055
      %v1087 = vpop.xlane.xlu0 %1086
      %1088 = vadd.xlane.f32.xlu0 %v1057
      %v1089 = vpop.xlane.xlu0 %1088
      %1090 = vadd.xlane.f32.xlu0 %v1059
      %v1091 = vpop.xlane.xlu0 %1090
      %1092 = vadd.xlane.f32.xlu0 %v1061
      %v1093 = vpop.xlane.xlu0 %1092
      %1094 = vadd.xlane.f32.xlu0 %v1063
      %v1095 = vpop.xlane.xlu0 %1094
      %1096 = vadd.xlane.f32.xlu0 %v1065
      %v1097 = vpop.xlane.xlu0 %1096
      %1098 = vadd.xlane.f32.xlu0 %v1067
      %v1099 = vpop.xlane.xlu0 %1098
      %1100 = vadd.xlane.f32.xlu0 %v1069
      %v1101 = vpop.xlane.xlu0 %1100
      %v1102 = vrcp.pop %v1071
      %v1103 = vrcp.pop %v1073
      %v1104 = vrcp.pop %v1075
      %v1105 = vrcp.pop %v1077
      %v1106 = vrcp.pop %v1079
      %v1107 = vrcp.pop %v1081
      %v1108 = vrcp.pop %v1083
      %v1109 = vrcp.pop %v1085
      %v1110 = vrcp.pop %v1087
      %v1111 = vrcp.pop %v1089
      %v1112 = vrcp.pop %v1091
      %v1113 = vrcp.pop %v1093
      %v1114 = vrcp.pop %v1095
      %v1115 = vrcp.pop %v1097
      %v1116 = vrcp.pop %v1099
      %v1117 = vrcp.pop %v1101
      %v1118 = vmul.f32 %v1039, %v1102
      %v1119 = vmul.f32 %v1041, %v1103
      %v1120 = vmul.f32 %v1043, %v1104
      %v1121 = vmul.f32 %v1045, %v1105
      %v1122 = vmul.f32 %v1047, %v1106
      %v1123 = vmul.f32 %v1049, %v1107
      %v1124 = vmul.f32 %v1051, %v1108
      %v1125 = vmul.f32 %v1053, %v1109
      %v1126 = vmul.f32 %v1055, %v1110
      %v1127 = vmul.f32 %v1057, %v1111
      %v1128 = vmul.f32 %v1059, %v1112
      %v1129 = vmul.f32 %v1061, %v1113
      %v1130 = vmul.f32 %v1063, %v1114
      %v1131 = vmul.f32 %v1065, %v1115
      %v1132 = vmul.f32 %v1067, %v1116
      %v1133 = vmul.f32 %v1069, %v1117
      %v1134 = vpack.c.bf16 %v1119, %v1118
      %v1135 = vpack.c.bf16 %v1121, %v1120
      %v1136 = vpack.c.bf16 %v1123, %v1122
      %v1137 = vpack.c.bf16 %v1125, %v1124
      %v1138 = vpack.c.bf16 %v1127, %v1126
      %v1139 = vpack.c.bf16 %v1129, %v1128
      %v1140 = vpack.c.bf16 %v1131, %v1130
      %v1141 = vpack.c.bf16 %v1133, %v1132
      %v1142 = vpack.c.bf16 %v840, %v838
      %v1143 = vpack.c.bf16 %v845, %v843
      %v1144 = vpack.c.bf16 %v850, %v848
      %v1145 = vpack.c.bf16 %v855, %v853
      %v1146 = vpack.c.bf16 %v860, %v858
      %v1147 = vpack.c.bf16 %v865, %v863
      %v1148 = vpack.c.bf16 %v870, %v868
      %v1149 = vpack.c.bf16 %v875, %v873
      %1150 = vmatpush.bf16.msra.mxu0 %v1149
      %1151 = vmatpush.bf16.msra.mxu0 %v1148
      %1152 = vmatpush.bf16.msra.mxu0 %v1147
      %1153 = vmatpush.bf16.msra.mxu0 %v1146
      %1154 = vmatpush.bf16.msra.mxu0 %v1145
      %1155 = vmatpush.bf16.msra.mxu0 %v1144
      %1156 = vmatpush.bf16.msra.mxu0 %v1143
      %1157 = vmatpush.bf16.msra.mxu0 %v1142
      %1158 = vmatmul.bf16.gmra.mxu0 %v1134
      %v1159 = vpop.f32.mrf.mxu0
      %v1160 = vadd.f32 0.0, %v1159
      %v1161 = vpop.f32.mrf.mxu0
      %v1162 = vadd.f32 0.0, %v1161
      %1163 = vmatmul.bf16.gmra.mxu0 %v1135
      %v1164 = vpop.f32.mrf.mxu0
      %v1165 = vadd.f32 0.0, %v1164
      %v1166 = vpop.f32.mrf.mxu0
      %v1167 = vadd.f32 0.0, %v1166
      %1168 = vmatmul.bf16.gmra.mxu0 %v1136
      %v1169 = vpop.f32.mrf.mxu0
      %v1170 = vadd.f32 0.0, %v1169
      %v1171 = vpop.f32.mrf.mxu0
      %v1172 = vadd.f32 0.0, %v1171
      %1173 = vmatmul.bf16.gmra.mxu0 %v1137
      %v1174 = vpop.f32.mrf.mxu0
      %v1175 = vadd.f32 0.0, %v1174
      %v1176 = vpop.f32.mrf.mxu0
      %v1177 = vadd.f32 0.0, %v1176
      %1178 = vmatmul.bf16.gmra.mxu0 %v1138
      %v1179 = vpop.f32.mrf.mxu0
      %v1180 = vadd.f32 0.0, %v1179
      %v1181 = vpop.f32.mrf.mxu0
      %v1182 = vadd.f32 0.0, %v1181
      %1183 = vmatmul.bf16.gmra.mxu0 %v1139
      %v1184 = vpop.f32.mrf.mxu0
      %v1185 = vadd.f32 0.0, %v1184
      %v1186 = vpop.f32.mrf.mxu0
      %v1187 = vadd.f32 0.0, %v1186
      %1188 = vmatmul.bf16.gmra.mxu0 %v1140
      %v1189 = vpop.f32.mrf.mxu0
      %v1190 = vadd.f32 0.0, %v1189
      %v1191 = vpop.f32.mrf.mxu0
      %v1192 = vadd.f32 0.0, %v1191
      %1193 = vmatmul.bf16.gmra.mxu0 %v1141
      %v1194 = vpop.f32.mrf.mxu0
      %v1195 = vadd.f32 0.0, %v1194
      %v1196 = vpop.f32.mrf.mxu0
      %v1197 = vadd.f32 0.0, %v1196
      %1198 = vdwg.mxu0
      %v1199 = vpack.c.bf16 %v1162, %v1160
      %v1200 = vpack.c.bf16 %v1167, %v1165
      %v1201 = vpack.c.bf16 %v1172, %v1170
      %v1202 = vpack.c.bf16 %v1177, %v1175
      %v1203 = vpack.c.bf16 %v1182, %v1180
      %v1204 = vpack.c.bf16 %v1187, %v1185
      %v1205 = vpack.c.bf16 %v1192, %v1190
      %v1206 = vpack.c.bf16 %v1197, %v1195
      %v1207 = vld [vmem:[%s4] sm:$0xf]
      %v1208 = vld [vmem:[%s4 + $0x4] sm:$0xf]
      %v1209 = vld [vmem:[%s4 + $0x8] sm:$0xf]
      %v1210 = vld [vmem:[%s4 + $0xc] sm:$0xf]
      %v1211 = vld [vmem:[%s4 + $0x10] sm:$0xf]
      %v1212 = vld [vmem:[%s4 + $0x14] sm:$0xf]
      %v1213 = vld [vmem:[%s4 + $0x18] sm:$0xf]
      %v1214 = vld [vmem:[%s4 + $0x1c] sm:$0xf]
      %v1215 = vld [vmem:[%s4 + $0x20] sm:$0xf]
      %v1216 = vld [vmem:[%s4 + $0x24] sm:$0xf]
      %v1217 = vld [vmem:[%s4 + $0x28] sm:$0xf]
      %v1218 = vld [vmem:[%s4 + $0x2c] sm:$0xf]
      %v1219 = vld [vmem:[%s4 + $0x30] sm:$0xf]
      %v1220 = vld [vmem:[%s4 + $0x34] sm:$0xf]
      %v1221 = vld [vmem:[%s4 + $0x38] sm:$0xf]
      %v1222 = vld [vmem:[%s4 + $0x3c] sm:$0xf]
      %v1223 = vld [vmem:[%s5] sm:$0x1]
      %v1225 = vperm.slane %v1223, 0
      %v1243 = vunpack.c.l.b16 %v1207
      %v1244 = vunpack.c.l.b16 %v1208
      %v1245 = vunpack.c.l.b16 %v1209
      %v1246 = vunpack.c.l.b16 %v1210
      %v1247 = vunpack.c.l.b16 %v1211
      %v1248 = vunpack.c.l.b16 %v1212
      %v1249 = vunpack.c.l.b16 %v1213
      %v1250 = vunpack.c.l.b16 %v1214
      %v1251 = vunpack.c.l.b16 %v1215
      %v1252 = vunpack.c.l.b16 %v1216
      %v1253 = vunpack.c.l.b16 %v1217
      %v1254 = vunpack.c.l.b16 %v1218
      %v1255 = vunpack.c.l.b16 %v1219
      %v1256 = vunpack.c.l.b16 %v1220
      %v1257 = vunpack.c.l.b16 %v1221
      %v1258 = vunpack.c.l.b16 %v1222
      %v1259 = vpack.c.b16 %v1244, %v1243
      %v1260 = vpack.c.b16 %v1246, %v1245
      %v1261 = vpack.c.b16 %v1248, %v1247
      %v1262 = vpack.c.b16 %v1250, %v1249
      %v1263 = vpack.c.b16 %v1252, %v1251
      %v1264 = vpack.c.b16 %v1254, %v1253
      %v1265 = vpack.c.b16 %v1256, %v1255
      %v1266 = vpack.c.b16 %v1258, %v1257
      %1275 = vmatpush.bf16.msra.mxu0 %v1266
      %1276 = vmatpush.bf16.msra.mxu0 %v1265
      %1277 = vmatpush.bf16.msra.mxu0 %v1264
      %1278 = vmatpush.bf16.msra.mxu0 %v1263
      %1279 = vmatpush.bf16.msra.mxu0 %v1262
      %1280 = vmatpush.bf16.msra.mxu0 %v1261
      %1281 = vmatpush.bf16.msra.mxu0 %v1260
      %1282 = vmatpush.bf16.msra.mxu0 %v1259
      %1283 = vmatmul.bf16.gmra.mxu0 %v1199
      %v1284 = vpop.f32.mrf.mxu0
      %v1285 = vadd.f32 %v1225, %v1284
      %v1286 = vpop.f32.mrf.mxu0
      %v1287 = vadd.f32 %v1225, %v1286
      %1288 = vmatmul.bf16.gmra.mxu0 %v1200
      %v1289 = vpop.f32.mrf.mxu0
      %v1290 = vadd.f32 %v1225, %v1289
      %v1291 = vpop.f32.mrf.mxu0
      %v1292 = vadd.f32 %v1225, %v1291
      %1293 = vmatmul.bf16.gmra.mxu0 %v1201
      %v1294 = vpop.f32.mrf.mxu0
      %v1295 = vadd.f32 %v1225, %v1294
      %v1296 = vpop.f32.mrf.mxu0
      %v1297 = vadd.f32 %v1225, %v1296
      %1298 = vmatmul.bf16.gmra.mxu0 %v1202
      %v1299 = vpop.f32.mrf.mxu0
      %v1300 = vadd.f32 %v1225, %v1299
      %v1301 = vpop.f32.mrf.mxu0
      %v1302 = vadd.f32 %v1225, %v1301
      %1303 = vmatmul.bf16.gmra.mxu0 %v1203
      %v1304 = vpop.f32.mrf.mxu0
      %v1305 = vadd.f32 %v1225, %v1304
      %v1306 = vpop.f32.mrf.mxu0
      %v1307 = vadd.f32 %v1225, %v1306
      %1308 = vmatmul.bf16.gmra.mxu0 %v1204
      %v1309 = vpop.f32.mrf.mxu0
      %v1310 = vadd.f32 %v1225, %v1309
      %v1311 = vpop.f32.mrf.mxu0
      %v1312 = vadd.f32 %v1225, %v1311
      %1313 = vmatmul.bf16.gmra.mxu0 %v1205
      %v1314 = vpop.f32.mrf.mxu0
      %v1315 = vadd.f32 %v1225, %v1314
      %v1316 = vpop.f32.mrf.mxu0
      %v1317 = vadd.f32 %v1225, %v1316
      %1318 = vmatmul.bf16.gmra.mxu0 %v1206
      %v1319 = vpop.f32.mrf.mxu0
      %v1320 = vadd.f32 %v1225, %v1319
      %v1321 = vpop.f32.mrf.mxu0
      %v1322 = vadd.f32 %v1225, %v1321
      %1323 = vdwg.mxu0
      %v1324 = vunpack.c.l.bf16 %v498
      %v1325 = vunpack.c.l.bf16 %v499
      %v1326 = vunpack.c.l.bf16 %v500
      %v1327 = vunpack.c.l.bf16 %v501
      %v1328 = vunpack.c.l.bf16 %v502
      %v1329 = vunpack.c.l.bf16 %v503
      %v1330 = vunpack.c.l.bf16 %v504
      %v1331 = vunpack.c.l.bf16 %v505
      %v1332 = vunpack.c.l.bf16 %v506
      %v1333 = vunpack.c.l.bf16 %v507
      %v1334 = vunpack.c.l.bf16 %v508
      %v1335 = vunpack.c.l.bf16 %v509
      %v1336 = vunpack.c.l.bf16 %v510
      %v1337 = vunpack.c.l.bf16 %v511
      %v1338 = vunpack.c.l.bf16 %v512
      %v1339 = vunpack.c.l.bf16 %v513
      %v1340 = vadd.f32 %v1324, %v1285
      %v1341 = vadd.f32 %v1325, %v1287
      %v1342 = vadd.f32 %v1326, %v1290
      %v1343 = vadd.f32 %v1327, %v1292
      %v1344 = vadd.f32 %v1328, %v1295
      %v1345 = vadd.f32 %v1329, %v1297
      %v1346 = vadd.f32 %v1330, %v1300
      %v1347 = vadd.f32 %v1331, %v1302
      %v1348 = vadd.f32 %v1332, %v1305
      %v1349 = vadd.f32 %v1333, %v1307
      %v1350 = vadd.f32 %v1334, %v1310
      %v1351 = vadd.f32 %v1335, %v1312
      %v1352 = vadd.f32 %v1336, %v1315
      %v1353 = vadd.f32 %v1337, %v1317
      %v1354 = vadd.f32 %v1338, %v1320
      %v1355 = vadd.f32 %v1339, %v1322
      %v1356 = vld [vmem:[%s6] sm:$0x1]
      %v1357 = vld [vmem:[%s7] sm:$0x1]
      %1358 = vadd.xlane.f32.xlu0 %v1340
      %v1359 = vpop.xlane.xlu0 %1358
      %1360 = vadd.xlane.f32.xlu0 %v1341
      %v1361 = vpop.xlane.xlu0 %1360
      %1362 = vadd.xlane.f32.xlu0 %v1342
      %v1363 = vpop.xlane.xlu0 %1362
      %1364 = vadd.xlane.f32.xlu0 %v1343
      %v1365 = vpop.xlane.xlu0 %1364
      %1366 = vadd.xlane.f32.xlu0 %v1344
      %v1367 = vpop.xlane.xlu0 %1366
      %1368 = vadd.xlane.f32.xlu0 %v1345
      %v1369 = vpop.xlane.xlu0 %1368
      %1370 = vadd.xlane.f32.xlu0 %v1346
      %v1371 = vpop.xlane.xlu0 %1370
      %1372 = vadd.xlane.f32.xlu0 %v1347
      %v1373 = vpop.xlane.xlu0 %1372
      %1374 = vadd.xlane.f32.xlu0 %v1348
      %v1375 = vpop.xlane.xlu0 %1374
      %1376 = vadd.xlane.f32.xlu0 %v1349
      %v1377 = vpop.xlane.xlu0 %1376
      %1378 = vadd.xlane.f32.xlu0 %v1350
      %v1379 = vpop.xlane.xlu0 %1378
      %1380 = vadd.xlane.f32.xlu0 %v1351
      %v1381 = vpop.xlane.xlu0 %1380
      %1382 = vadd.xlane.f32.xlu0 %v1352
      %v1383 = vpop.xlane.xlu0 %1382
      %1384 = vadd.xlane.f32.xlu0 %v1353
      %v1385 = vpop.xlane.xlu0 %1384
      %1386 = vadd.xlane.f32.xlu0 %v1354
      %v1387 = vpop.xlane.xlu0 %1386
      %1388 = vadd.xlane.f32.xlu0 %v1355
      %v1389 = vpop.xlane.xlu0 %1388
      %v1390 = vrcp.pop 128.0
      %v1391 = vmul.f32 128.0, %v1390
      %v1392 = vsub.f32 1.0, %v1391
      %v1393 = vmul.f32 %v1390, %v1392
      %v1394 = vadd.f32 %v1390, %v1393
      %vm1395 = vweird.f32 %v1390
      %v1396 = vsel %vm1395, %v1390, %v1394
      %v1397 = vmul.f32 %v1359, %v1396
      %v1398 = vmul.f32 %v1361, %v1396
      %v1399 = vmul.f32 %v1363, %v1396
      %v1400 = vmul.f32 %v1365, %v1396
      %v1401 = vmul.f32 %v1367, %v1396
      %v1402 = vmul.f32 %v1369, %v1396
      %v1403 = vmul.f32 %v1371, %v1396
      %v1404 = vmul.f32 %v1373, %v1396
      %v1405 = vmul.f32 %v1375, %v1396
      %v1406 = vmul.f32 %v1377, %v1396
      %v1407 = vmul.f32 %v1379, %v1396
      %v1408 = vmul.f32 %v1381, %v1396
      %v1409 = vmul.f32 %v1383, %v1396
      %v1410 = vmul.f32 %v1385, %v1396
      %v1411 = vmul.f32 %v1387, %v1396
      %v1412 = vmul.f32 %v1389, %v1396
      %v1413 = vsub.f32 %v1340, %v1397
      %v1414 = vsub.f32 %v1341, %v1398
      %v1415 = vsub.f32 %v1342, %v1399
      %v1416 = vsub.f32 %v1343, %v1400
      %v1417 = vsub.f32 %v1344, %v1401
      %v1418 = vsub.f32 %v1345, %v1402
      %v1419 = vsub.f32 %v1346, %v1403
      %v1420 = vsub.f32 %v1347, %v1404
      %v1421 = vsub.f32 %v1348, %v1405
      %v1422 = vsub.f32 %v1349, %v1406
      %v1423 = vsub.f32 %v1350, %v1407
      %v1424 = vsub.f32 %v1351, %v1408
      %v1425 = vsub.f32 %v1352, %v1409
      %v1426 = vsub.f32 %v1353, %v1410
      %v1427 = vsub.f32 %v1354, %v1411
      %v1428 = vsub.f32 %v1355, %v1412
      %v1429 = vmul.f32 %v1413, %v1413
      %v1430 = vmul.f32 %v1414, %v1414
      %v1431 = vmul.f32 %v1415, %v1415
      %v1432 = vmul.f32 %v1416, %v1416
      %v1433 = vmul.f32 %v1417, %v1417
      %v1434 = vmul.f32 %v1418, %v1418
      %v1435 = vmul.f32 %v1419, %v1419
      %v1436 = vmul.f32 %v1420, %v1420
      %v1437 = vmul.f32 %v1421, %v1421
      %v1438 = vmul.f32 %v1422, %v1422
      %v1439 = vmul.f32 %v1423, %v1423
      %v1440 = vmul.f32 %v1424, %v1424
      %v1441 = vmul.f32 %v1425, %v1425
      %v1442 = vmul.f32 %v1426, %v1426
      %v1443 = vmul.f32 %v1427, %v1427
      %v1444 = vmul.f32 %v1428, %v1428
      %1445 = vadd.xlane.f32.xlu0 %v1429
      %v1446 = vpop.xlane.xlu0 %1445
      %1447 = vadd.xlane.f32.xlu0 %v1430
      %v1448 = vpop.xlane.xlu0 %1447
      %1449 = vadd.xlane.f32.xlu0 %v1431
      %v1450 = vpop.xlane.xlu0 %1449
      %1451 = vadd.xlane.f32.xlu0 %v1432
      %v1452 = vpop.xlane.xlu0 %1451
      %1453 = vadd.xlane.f32.xlu0 %v1433
      %v1454 = vpop.xlane.xlu0 %1453
      %1455 = vadd.xlane.f32.xlu0 %v1434
      %v1456 = vpop.xlane.xlu0 %1455
      %1457 = vadd.xlane.f32.xlu0 %v1435
      %v1458 = vpop.xlane.xlu0 %1457
      %1459 = vadd.xlane.f32.xlu0 %v1436
      %v1460 = vpop.xlane.xlu0 %1459
      %1461 = vadd.xlane.f32.xlu0 %v1437
      %v1462 = vpop.xlane.xlu0 %1461
      %1463 = vadd.xlane.f32.xlu0 %v1438
      %v1464 = vpop.xlane.xlu0 %1463
      %1465 = vadd.xlane.f32.xlu0 %v1439
      %v1466 = vpop.xlane.xlu0 %1465
      %1467 = vadd.xlane.f32.xlu0 %v1440
      %v1468 = vpop.xlane.xlu0 %1467
      %1469 = vadd.xlane.f32.xlu0 %v1441
      %v1470 = vpop.xlane.xlu0 %1469
      %1471 = vadd.xlane.f32.xlu0 %v1442
      %v1472 = vpop.xlane.xlu0 %1471
      %1473 = vadd.xlane.f32.xlu0 %v1443
      %v1474 = vpop.xlane.xlu0 %1473
      %1475 = vadd.xlane.f32.xlu0 %v1444
      %v1476 = vpop.xlane.xlu0 %1475
      %v1477 = vmul.f32 %v1446, %v1396
      %v1478 = vmul.f32 %v1448, %v1396
      %v1479 = vmul.f32 %v1450, %v1396
      %v1480 = vmul.f32 %v1452, %v1396
      %v1481 = vmul.f32 %v1454, %v1396
      %v1482 = vmul.f32 %v1456, %v1396
      %v1483 = vmul.f32 %v1458, %v1396
      %v1484 = vmul.f32 %v1460, %v1396
      %v1485 = vmul.f32 %v1462, %v1396
      %v1486 = vmul.f32 %v1464, %v1396
      %v1487 = vmul.f32 %v1466, %v1396
      %v1488 = vmul.f32 %v1468, %v1396
      %v1489 = vmul.f32 %v1470, %v1396
      %v1490 = vmul.f32 %v1472, %v1396
      %v1491 = vmul.f32 %v1474, %v1396
      %v1492 = vmul.f32 %v1476, %v1396
      %v1493 = vadd.f32 %v1477, 1e-05
      %v1494 = vadd.f32 %v1478, 1e-05
      %v1495 = vadd.f32 %v1479, 1e-05
      %v1496 = vadd.f32 %v1480, 1e-05
      %v1497 = vadd.f32 %v1481, 1e-05
      %v1498 = vadd.f32 %v1482, 1e-05
      %v1499 = vadd.f32 %v1483, 1e-05
      %v1500 = vadd.f32 %v1484, 1e-05
      %v1501 = vadd.f32 %v1485, 1e-05
      %v1502 = vadd.f32 %v1486, 1e-05
      %v1503 = vadd.f32 %v1487, 1e-05
      %v1504 = vadd.f32 %v1488, 1e-05
      %v1505 = vadd.f32 %v1489, 1e-05
      %v1506 = vadd.f32 %v1490, 1e-05
      %v1507 = vadd.f32 %v1491, 1e-05
      %v1508 = vadd.f32 %v1492, 1e-05
      %v1509 = vrsqrt.pop %v1493
      %v1510 = vmul.f32 %v1509, %v1493
      %v1511 = vmul.f32 %v1510, %v1509
      %v1512 = vmul.f32 0.5, %v1511
      %v1513 = vsub.f32 1.5, %v1512
      %v1514 = vmul.f32 %v1509, %v1513
      %vm1515 = vweird.f32 %v1493
      %vm1516 = vweird.f32 %v1509
      %vm1517 = vmor %vm1515, %vm1516
      %v1518 = vsel %vm1517, %v1509, %v1514
      %v1519 = vrsqrt.pop %v1494
      %v1520 = vmul.f32 %v1519, %v1494
      %v1521 = vmul.f32 %v1520, %v1519
      %v1522 = vmul.f32 0.5, %v1521
      %v1523 = vsub.f32 1.5, %v1522
      %v1524 = vmul.f32 %v1519, %v1523
      %vm1525 = vweird.f32 %v1494
      %vm1526 = vweird.f32 %v1519
      %vm1527 = vmor %vm1525, %vm1526
      %v1528 = vsel %vm1527, %v1519, %v1524
      %v1529 = vrsqrt.pop %v1495
      %v1530 = vmul.f32 %v1529, %v1495
      %v1531 = vmul.f32 %v1530, %v1529
      %v1532 = vmul.f32 0.5, %v1531
      %v1533 = vsub.f32 1.5, %v1532
      %v1534 = vmul.f32 %v1529, %v1533
      %vm1535 = vweird.f32 %v1495
      %vm1536 = vweird.f32 %v1529
      %vm1537 = vmor %vm1535, %vm1536
      %v1538 = vsel %vm1537, %v1529, %v1534
      %v1539 = vrsqrt.pop %v1496
      %v1540 = vmul.f32 %v1539, %v1496
      %v1541 = vmul.f32 %v1540, %v1539
      %v1542 = vmul.f32 0.5, %v1541
      %v1543 = vsub.f32 1.5, %v1542
      %v1544 = vmul.f32 %v1539, %v1543
      %vm1545 = vweird.f32 %v1496
      %vm1546 = vweird.f32 %v1539
      %vm1547 = vmor %vm1545, %vm1546
      %v1548 = vsel %vm1547, %v1539, %v1544
      %v1549 = vrsqrt.pop %v1497
      %v1550 = vmul.f32 %v1549, %v1497
      %v1551 = vmul.f32 %v1550, %v1549
      %v1552 = vmul.f32 0.5, %v1551
      %v1553 = vsub.f32 1.5, %v1552
      %v1554 = vmul.f32 %v1549, %v1553
      %vm1555 = vweird.f32 %v1497
      %vm1556 = vweird.f32 %v1549
      %vm1557 = vmor %vm1555, %vm1556
      %v1558 = vsel %vm1557, %v1549, %v1554
      %v1559 = vrsqrt.pop %v1498
      %v1560 = vmul.f32 %v1559, %v1498
      %v1561 = vmul.f32 %v1560, %v1559
      %v1562 = vmul.f32 0.5, %v1561
      %v1563 = vsub.f32 1.5, %v1562
      %v1564 = vmul.f32 %v1559, %v1563
      %vm1565 = vweird.f32 %v1498
      %vm1566 = vweird.f32 %v1559
      %vm1567 = vmor %vm1565, %vm1566
      %v1568 = vsel %vm1567, %v1559, %v1564
      %v1569 = vrsqrt.pop %v1499
      %v1570 = vmul.f32 %v1569, %v1499
      %v1571 = vmul.f32 %v1570, %v1569
      %v1572 = vmul.f32 0.5, %v1571
      %v1573 = vsub.f32 1.5, %v1572
      %v1574 = vmul.f32 %v1569, %v1573
      %vm1575 = vweird.f32 %v1499
      %vm1576 = vweird.f32 %v1569
      %vm1577 = vmor %vm1575, %vm1576
      %v1578 = vsel %vm1577, %v1569, %v1574
      %v1579 = vrsqrt.pop %v1500
      %v1580 = vmul.f32 %v1579, %v1500
      %v1581 = vmul.f32 %v1580, %v1579
      %v1582 = vmul.f32 0.5, %v1581
      %v1583 = vsub.f32 1.5, %v1582
      %v1584 = vmul.f32 %v1579, %v1583
      %vm1585 = vweird.f32 %v1500
      %vm1586 = vweird.f32 %v1579
      %vm1587 = vmor %vm1585, %vm1586
      %v1588 = vsel %vm1587, %v1579, %v1584
      %v1589 = vrsqrt.pop %v1501
      %v1590 = vmul.f32 %v1589, %v1501
      %v1591 = vmul.f32 %v1590, %v1589
      %v1592 = vmul.f32 0.5, %v1591
      %v1593 = vsub.f32 1.5, %v1592
      %v1594 = vmul.f32 %v1589, %v1593
      %vm1595 = vweird.f32 %v1501
      %vm1596 = vweird.f32 %v1589
      %vm1597 = vmor %vm1595, %vm1596
      %v1598 = vsel %vm1597, %v1589, %v1594
      %v1599 = vrsqrt.pop %v1502
      %v1600 = vmul.f32 %v1599, %v1502
      %v1601 = vmul.f32 %v1600, %v1599
      %v1602 = vmul.f32 0.5, %v1601
      %v1603 = vsub.f32 1.5, %v1602
      %v1604 = vmul.f32 %v1599, %v1603
      %vm1605 = vweird.f32 %v1502
      %vm1606 = vweird.f32 %v1599
      %vm1607 = vmor %vm1605, %vm1606
      %v1608 = vsel %vm1607, %v1599, %v1604
      %v1609 = vrsqrt.pop %v1503
      %v1610 = vmul.f32 %v1609, %v1503
      %v1611 = vmul.f32 %v1610, %v1609
      %v1612 = vmul.f32 0.5, %v1611
      %v1613 = vsub.f32 1.5, %v1612
      %v1614 = vmul.f32 %v1609, %v1613
      %vm1615 = vweird.f32 %v1503
      %vm1616 = vweird.f32 %v1609
      %vm1617 = vmor %vm1615, %vm1616
      %v1618 = vsel %vm1617, %v1609, %v1614
      %v1619 = vrsqrt.pop %v1504
      %v1620 = vmul.f32 %v1619, %v1504
      %v1621 = vmul.f32 %v1620, %v1619
      %v1622 = vmul.f32 0.5, %v1621
      %v1623 = vsub.f32 1.5, %v1622
      %v1624 = vmul.f32 %v1619, %v1623
      %vm1625 = vweird.f32 %v1504
      %vm1626 = vweird.f32 %v1619
      %vm1627 = vmor %vm1625, %vm1626
      %v1628 = vsel %vm1627, %v1619, %v1624
      %v1629 = vrsqrt.pop %v1505
      %v1630 = vmul.f32 %v1629, %v1505
      %v1631 = vmul.f32 %v1630, %v1629
      %v1632 = vmul.f32 0.5, %v1631
      %v1633 = vsub.f32 1.5, %v1632
      %v1634 = vmul.f32 %v1629, %v1633
      %vm1635 = vweird.f32 %v1505
      %vm1636 = vweird.f32 %v1629
      %vm1637 = vmor %vm1635, %vm1636
      %v1638 = vsel %vm1637, %v1629, %v1634
      %v1639 = vrsqrt.pop %v1506
      %v1640 = vmul.f32 %v1639, %v1506
      %v1641 = vmul.f32 %v1640, %v1639
      %v1642 = vmul.f32 0.5, %v1641
      %v1643 = vsub.f32 1.5, %v1642
      %v1644 = vmul.f32 %v1639, %v1643
      %vm1645 = vweird.f32 %v1506
      %vm1646 = vweird.f32 %v1639
      %vm1647 = vmor %vm1645, %vm1646
      %v1648 = vsel %vm1647, %v1639, %v1644
      %v1649 = vrsqrt.pop %v1507
      %v1650 = vmul.f32 %v1649, %v1507
      %v1651 = vmul.f32 %v1650, %v1649
      %v1652 = vmul.f32 0.5, %v1651
      %v1653 = vsub.f32 1.5, %v1652
      %v1654 = vmul.f32 %v1649, %v1653
      %vm1655 = vweird.f32 %v1507
      %vm1656 = vweird.f32 %v1649
      %vm1657 = vmor %vm1655, %vm1656
      %v1658 = vsel %vm1657, %v1649, %v1654
      %v1659 = vrsqrt.pop %v1508
      %v1660 = vmul.f32 %v1659, %v1508
      %v1661 = vmul.f32 %v1660, %v1659
      %v1662 = vmul.f32 0.5, %v1661
      %v1663 = vsub.f32 1.5, %v1662
      %v1664 = vmul.f32 %v1659, %v1663
      %vm1665 = vweird.f32 %v1508
      %vm1666 = vweird.f32 %v1659
      %vm1667 = vmor %vm1665, %vm1666
      %v1668 = vsel %vm1667, %v1659, %v1664
      %v1669 = vmul.f32 %v1413, %v1518
      %v1670 = vmul.f32 %v1414, %v1528
      %v1671 = vmul.f32 %v1415, %v1538
      %v1672 = vmul.f32 %v1416, %v1548
      %v1673 = vmul.f32 %v1417, %v1558
      %v1674 = vmul.f32 %v1418, %v1568
      %v1675 = vmul.f32 %v1419, %v1578
      %v1676 = vmul.f32 %v1420, %v1588
      %v1677 = vmul.f32 %v1421, %v1598
      %v1678 = vmul.f32 %v1422, %v1608
      %v1679 = vmul.f32 %v1423, %v1618
      %v1680 = vmul.f32 %v1424, %v1628
      %v1681 = vmul.f32 %v1425, %v1638
      %v1682 = vmul.f32 %v1426, %v1648
      %v1683 = vmul.f32 %v1427, %v1658
      %v1684 = vmul.f32 %v1428, %v1668
      %v1686 = vperm.slane %v1356, 0
      %v1688 = vmul.f32 %v1669, %v1686
      %v1689 = vmul.f32 %v1670, %v1686
      %v1690 = vmul.f32 %v1671, %v1686
      %v1691 = vmul.f32 %v1672, %v1686
      %v1692 = vmul.f32 %v1673, %v1686
      %v1693 = vmul.f32 %v1674, %v1686
      %v1694 = vmul.f32 %v1675, %v1686
      %v1695 = vmul.f32 %v1676, %v1686
      %v1696 = vmul.f32 %v1677, %v1686
      %v1697 = vmul.f32 %v1678, %v1686
      %v1698 = vmul.f32 %v1679, %v1686
      %v1699 = vmul.f32 %v1680, %v1686
      %v1700 = vmul.f32 %v1681, %v1686
      %v1701 = vmul.f32 %v1682, %v1686
      %v1702 = vmul.f32 %v1683, %v1686
      %v1703 = vmul.f32 %v1684, %v1686
      %v1705 = vperm.slane %v1357, 0
      %v1707 = vadd.f32 %v1688, %v1705
      %v1708 = vadd.f32 %v1689, %v1705
      %v1709 = vadd.f32 %v1690, %v1705
      %v1710 = vadd.f32 %v1691, %v1705
      %v1711 = vadd.f32 %v1692, %v1705
      %v1712 = vadd.f32 %v1693, %v1705
      %v1713 = vadd.f32 %v1694, %v1705
      %v1714 = vadd.f32 %v1695, %v1705
      %v1715 = vadd.f32 %v1696, %v1705
      %v1716 = vadd.f32 %v1697, %v1705
      %v1717 = vadd.f32 %v1698, %v1705
      %v1718 = vadd.f32 %v1699, %v1705
      %v1719 = vadd.f32 %v1700, %v1705
      %v1720 = vadd.f32 %v1701, %v1705
      %v1721 = vadd.f32 %v1702, %v1705
      %v1722 = vadd.f32 %v1703, %v1705
      %v1723 = vpack.c.bf16 %v1708, %v1707
      %v1724 = vpack.c.bf16 %v1710, %v1709
      %v1725 = vpack.c.bf16 %v1712, %v1711
      %v1726 = vpack.c.bf16 %v1714, %v1713
      %v1727 = vpack.c.bf16 %v1716, %v1715
      %v1728 = vpack.c.bf16 %v1718, %v1717
      %v1729 = vpack.c.bf16 %v1720, %v1719
      %v1730 = vpack.c.bf16 %v1722, %v1721
      %v1731 = vld [vmem:[%s8] sm:$0xff]
      %v1732 = vld [vmem:[%s8 + $0x8] sm:$0xff]
      %v1733 = vld [vmem:[%s8 + $0x10] sm:$0xff]
      %v1734 = vld [vmem:[%s8 + $0x18] sm:$0xff]
      %v1735 = vld [vmem:[%s8 + $0x20] sm:$0xff]
      %v1736 = vld [vmem:[%s8 + $0x28] sm:$0xff]
      %v1737 = vld [vmem:[%s8 + $0x30] sm:$0xff]
      %v1738 = vld [vmem:[%s8 + $0x38] sm:$0xff]
      %v1739 = vld [vmem:[%s8 + $0x40] sm:$0xff]
      %v1740 = vld [vmem:[%s8 + $0x48] sm:$0xff]
      %v1741 = vld [vmem:[%s8 + $0x50] sm:$0xff]
      %v1742 = vld [vmem:[%s8 + $0x58] sm:$0xff]
      %v1743 = vld [vmem:[%s8 + $0x60] sm:$0xff]
      %v1744 = vld [vmem:[%s8 + $0x68] sm:$0xff]
      %v1745 = vld [vmem:[%s8 + $0x70] sm:$0xff]
      %v1746 = vld [vmem:[%s8 + $0x78] sm:$0xff]
      %v1747 = vld [vmem:[%s8 + $0x80] sm:$0xff]
      %v1748 = vld [vmem:[%s8 + $0x88] sm:$0xff]
      %v1749 = vld [vmem:[%s8 + $0x90] sm:$0xff]
      %v1750 = vld [vmem:[%s8 + $0x98] sm:$0xff]
      %v1751 = vld [vmem:[%s8 + $0xa0] sm:$0xff]
      %v1752 = vld [vmem:[%s8 + $0xa8] sm:$0xff]
      %v1753 = vld [vmem:[%s8 + $0xb0] sm:$0xff]
      %v1754 = vld [vmem:[%s8 + $0xb8] sm:$0xff]
      %v1755 = vld [vmem:[%s8 + $0xc0] sm:$0xff]
      %v1756 = vld [vmem:[%s8 + $0xc8] sm:$0xff]
      %v1757 = vld [vmem:[%s8 + $0xd0] sm:$0xff]
      %v1758 = vld [vmem:[%s8 + $0xd8] sm:$0xff]
      %v1759 = vld [vmem:[%s8 + $0xe0] sm:$0xff]
      %v1760 = vld [vmem:[%s8 + $0xe8] sm:$0xff]
      %v1761 = vld [vmem:[%s8 + $0xf0] sm:$0xff]
      %v1762 = vld [vmem:[%s8 + $0xf8] sm:$0xff]
      %v1763 = vld [vmem:[%s9] sm:$0xf]
      %v1765 = vperm.slane %v1763, 0
      %v1766 = vperm.slane %v1763, 1
      %v1767 = vperm.slane %v1763, 2
      %v1768 = vperm.slane %v1763, 3
      %v1805 = vunpack.c.l.b16 %v1731
      %v1806 = vunpack.c.h.b16 %v1731
      %v1807 = vunpack.c.l.b16 %v1732
      %v1808 = vunpack.c.h.b16 %v1732
      %v1809 = vunpack.c.l.b16 %v1733
      %v1810 = vunpack.c.h.b16 %v1733
      %v1811 = vunpack.c.l.b16 %v1734
      %v1812 = vunpack.c.h.b16 %v1734
      %v1813 = vunpack.c.l.b16 %v1735
      %v1814 = vunpack.c.h.b16 %v1735
      %v1815 = vunpack.c.l.b16 %v1736
      %v1816 = vunpack.c.h.b16 %v1736
      %v1817 = vunpack.c.l.b16 %v1737
      %v1818 = vunpack.c.h.b16 %v1737
      %v1819 = vunpack.c.l.b16 %v1738
      %v1820 = vunpack.c.h.b16 %v1738
      %v1821 = vunpack.c.l.b16 %v1739
      %v1822 = vunpack.c.h.b16 %v1739
      %v1823 = vunpack.c.l.b16 %v1740
      %v1824 = vunpack.c.h.b16 %v1740
      %v1825 = vunpack.c.l.b16 %v1741
      %v1826 = vunpack.c.h.b16 %v1741
      %v1827 = vunpack.c.l.b16 %v1742
      %v1828 = vunpack.c.h.b16 %v1742
      %v1829 = vunpack.c.l.b16 %v1743
      %v1830 = vunpack.c.h.b16 %v1743
      %v1831 = vunpack.c.l.b16 %v1744
      %v1832 = vunpack.c.h.b16 %v1744
      %v1833 = vunpack.c.l.b16 %v1745
      %v1834 = vunpack.c.h.b16 %v1745
      %v1835 = vunpack.c.l.b16 %v1746
      %v1836 = vunpack.c.h.b16 %v1746
      %v1837 = vunpack.c.l.b16 %v1747
      %v1838 = vunpack.c.h.b16 %v1747
      %v1839 = vunpack.c.l.b16 %v1748
      %v1840 = vunpack.c.h.b16 %v1748
      %v1841 = vunpack.c.l.b16 %v1749
      %v1842 = vunpack.c.h.b16 %v1749
      %v1843 = vunpack.c.l.b16 %v1750
      %v1844 = vunpack.c.h.b16 %v1750
      %v1845 = vunpack.c.l.b16 %v1751
      %v1846 = vunpack.c.h.b16 %v1751
      %v1847 = vunpack.c.l.b16 %v1752
      %v1848 = vunpack.c.h.b16 %v1752
      %v1849 = vunpack.c.l.b16 %v1753
      %v1850 = vunpack.c.h.b16 %v1753
      %v1851 = vunpack.c.l.b16 %v1754
      %v1852 = vunpack.c.h.b16 %v1754
      %v1853 = vunpack.c.l.b16 %v1755
      %v1854 = vunpack.c.h.b16 %v1755
      %v1855 = vunpack.c.l.b16 %v1756
      %v1856 = vunpack.c.h.b16 %v1756
      %v1857 = vunpack.c.l.b16 %v1757
      %v1858 = vunpack.c.h.b16 %v1757
      %v1859 = vunpack.c.l.b16 %v1758
      %v1860 = vunpack.c.h.b16 %v1758
      %v1861 = vunpack.c.l.b16 %v1759
      %v1862 = vunpack.c.h.b16 %v1759
      %v1863 = vunpack.c.l.b16 %v1760
      %v1864 = vunpack.c.h.b16 %v1760
      %v1865 = vunpack.c.l.b16 %v1761
      %v1866 = vunpack.c.h.b16 %v1761
      %v1867 = vunpack.c.l.b16 %v1762
      %v1868 = vunpack.c.h.b16 %v1762
      %v1869 = vpack.c.b16 %v1809, %v1805
      %v1870 = vpack.c.b16 %v1810, %v1806
      %v1871 = vpack.c.b16 %v1811, %v1807
      %v1872 = vpack.c.b16 %v1812, %v1808
      %v1873 = vpack.c.b16 %v1817, %v1813
      %v1874 = vpack.c.b16 %v1818, %v1814
      %v1875 = vpack.c.b16 %v1819, %v1815
      %v1876 = vpack.c.b16 %v1820, %v1816
      %v1877 = vpack.c.b16 %v1825, %v1821
      %v1878 = vpack.c.b16 %v1826, %v1822
      %v1879 = vpack.c.b16 %v1827, %v1823
      %v1880 = vpack.c.b16 %v1828, %v1824
      %v1881 = vpack.c.b16 %v1833, %v1829
      %v1882 = vpack.c.b16 %v1834, %v1830
      %v1883 = vpack.c.b16 %v1835, %v1831
      %v1884 = vpack.c.b16 %v1836, %v1832
      %v1885 = vpack.c.b16 %v1841, %v1837
      %v1886 = vpack.c.b16 %v1842, %v1838
      %v1887 = vpack.c.b16 %v1843, %v1839
      %v1888 = vpack.c.b16 %v1844, %v1840
      %v1889 = vpack.c.b16 %v1849, %v1845
      %v1890 = vpack.c.b16 %v1850, %v1846
      %v1891 = vpack.c.b16 %v1851, %v1847
      %v1892 = vpack.c.b16 %v1852, %v1848
      %v1893 = vpack.c.b16 %v1857, %v1853
      %v1894 = vpack.c.b16 %v1858, %v1854
      %v1895 = vpack.c.b16 %v1859, %v1855
      %v1896 = vpack.c.b16 %v1860, %v1856
      %v1897 = vpack.c.b16 %v1865, %v1861
      %v1898 = vpack.c.b16 %v1866, %v1862
      %v1899 = vpack.c.b16 %v1867, %v1863
      %v1900 = vpack.c.b16 %v1868, %v1864
      %1933 = vmatpush.bf16.msra.mxu0 %v1897
      %1934 = vmatpush.bf16.msra.mxu0 %v1893
      %1935 = vmatpush.bf16.msra.mxu0 %v1889
      %1936 = vmatpush.bf16.msra.mxu0 %v1885
      %1937 = vmatpush.bf16.msra.mxu0 %v1881
      %1938 = vmatpush.bf16.msra.mxu0 %v1877
      %1939 = vmatpush.bf16.msra.mxu0 %v1873
      %1940 = vmatpush.bf16.msra.mxu0 %v1869
      %1941 = vmatmul.bf16.gmra.mxu0 %v1723
      %v1942 = vpop.f32.mrf.mxu0
      %v1943 = vadd.f32 %v1765, %v1942
      %v1944 = vpop.f32.mrf.mxu0
      %v1945 = vadd.f32 %v1765, %v1944
      %1946 = vmatmul.bf16.gmra.mxu0 %v1724
      %v1947 = vpop.f32.mrf.mxu0
      %v1948 = vadd.f32 %v1765, %v1947
      %v1949 = vpop.f32.mrf.mxu0
      %v1950 = vadd.f32 %v1765, %v1949
      %1951 = vmatmul.bf16.gmra.mxu0 %v1725
      %v1952 = vpop.f32.mrf.mxu0
      %v1953 = vadd.f32 %v1765, %v1952
      %v1954 = vpop.f32.mrf.mxu0
      %v1955 = vadd.f32 %v1765, %v1954
      %1956 = vmatmul.bf16.gmra.mxu0 %v1726
      %v1957 = vpop.f32.mrf.mxu0
      %v1958 = vadd.f32 %v1765, %v1957
      %v1959 = vpop.f32.mrf.mxu0
      %v1960 = vadd.f32 %v1765, %v1959
      %1961 = vmatmul.bf16.gmra.mxu0 %v1727
      %v1962 = vpop.f32.mrf.mxu0
      %v1963 = vadd.f32 %v1765, %v1962
      %v1964 = vpop.f32.mrf.mxu0
      %v1965 = vadd.f32 %v1765, %v1964
      %1966 = vmatmul.bf16.gmra.mxu0 %v1728
      %v1967 = vpop.f32.mrf.mxu0
      %v1968 = vadd.f32 %v1765, %v1967
      %v1969 = vpop.f32.mrf.mxu0
      %v1970 = vadd.f32 %v1765, %v1969
      %1971 = vmatmul.bf16.gmra.mxu0 %v1729
      %v1972 = vpop.f32.mrf.mxu0
      %v1973 = vadd.f32 %v1765, %v1972
      %v1974 = vpop.f32.mrf.mxu0
      %v1975 = vadd.f32 %v1765, %v1974
      %1976 = vmatmul.bf16.gmra.mxu0 %v1730
      %v1977 = vpop.f32.mrf.mxu0
      %v1978 = vadd.f32 %v1765, %v1977
      %v1979 = vpop.f32.mrf.mxu0
      %v1980 = vadd.f32 %v1765, %v1979
      %1981 = vdwg.mxu0
      %1982 = vmatpush.bf16.msra.mxu0 %v1898
      %1983 = vmatpush.bf16.msra.mxu0 %v1894
      %1984 = vmatpush.bf16.msra.mxu0 %v1890
      %1985 = vmatpush.bf16.msra.mxu0 %v1886
      %1986 = vmatpush.bf16.msra.mxu0 %v1882
      %1987 = vmatpush.bf16.msra.mxu0 %v1878
      %1988 = vmatpush.bf16.msra.mxu0 %v1874
      %1989 = vmatpush.bf16.msra.mxu0 %v1870
      %1990 = vmatmul.bf16.gmra.mxu0 %v1723
      %v1991 = vpop.f32.mrf.mxu0
      %v1992 = vadd.f32 %v1766, %v1991
      %v1993 = vpop.f32.mrf.mxu0
      %v1994 = vadd.f32 %v1766, %v1993
      %1995 = vmatmul.bf16.gmra.mxu0 %v1724
      %v1996 = vpop.f32.mrf.mxu0
      %v1997 = vadd.f32 %v1766, %v1996
      %v1998 = vpop.f32.mrf.mxu0
      %v1999 = vadd.f32 %v1766, %v1998
      %2000 = vmatmul.bf16.gmra.mxu0 %v1725
      %v2001 = vpop.f32.mrf.mxu0
      %v2002 = vadd.f32 %v1766, %v2001
      %v2003 = vpop.f32.mrf.mxu0
      %v2004 = vadd.f32 %v1766, %v2003
      %2005 = vmatmul.bf16.gmra.mxu0 %v1726
      %v2006 = vpop.f32.mrf.mxu0
      %v2007 = vadd.f32 %v1766, %v2006
      %v2008 = vpop.f32.mrf.mxu0
      %v2009 = vadd.f32 %v1766, %v2008
      %2010 = vmatmul.bf16.gmra.mxu0 %v1727
      %v2011 = vpop.f32.mrf.mxu0
      %v2012 = vadd.f32 %v1766, %v2011
      %v2013 = vpop.f32.mrf.mxu0
      %v2014 = vadd.f32 %v1766, %v2013
      %2015 = vmatmul.bf16.gmra.mxu0 %v1728
      %v2016 = vpop.f32.mrf.mxu0
      %v2017 = vadd.f32 %v1766, %v2016
      %v2018 = vpop.f32.mrf.mxu0
      %v2019 = vadd.f32 %v1766, %v2018
      %2020 = vmatmul.bf16.gmra.mxu0 %v1729
      %v2021 = vpop.f32.mrf.mxu0
      %v2022 = vadd.f32 %v1766, %v2021
      %v2023 = vpop.f32.mrf.mxu0
      %v2024 = vadd.f32 %v1766, %v2023
      %2025 = vmatmul.bf16.gmra.mxu0 %v1730
      %v2026 = vpop.f32.mrf.mxu0
      %v2027 = vadd.f32 %v1766, %v2026
      %v2028 = vpop.f32.mrf.mxu0
      %v2029 = vadd.f32 %v1766, %v2028
      %2030 = vdwg.mxu0
      %2031 = vmatpush.bf16.msra.mxu0 %v1899
      %2032 = vmatpush.bf16.msra.mxu0 %v1895
      %2033 = vmatpush.bf16.msra.mxu0 %v1891
      %2034 = vmatpush.bf16.msra.mxu0 %v1887
      %2035 = vmatpush.bf16.msra.mxu0 %v1883
      %2036 = vmatpush.bf16.msra.mxu0 %v1879
      %2037 = vmatpush.bf16.msra.mxu0 %v1875
      %2038 = vmatpush.bf16.msra.mxu0 %v1871
      %2039 = vmatmul.bf16.gmra.mxu0 %v1723
      %v2040 = vpop.f32.mrf.mxu0
      %v2041 = vadd.f32 %v1767, %v2040
      %v2042 = vpop.f32.mrf.mxu0
      %v2043 = vadd.f32 %v1767, %v2042
      %2044 = vmatmul.bf16.gmra.mxu0 %v1724
      %v2045 = vpop.f32.mrf.mxu0
      %v2046 = vadd.f32 %v1767, %v2045
      %v2047 = vpop.f32.mrf.mxu0
      %v2048 = vadd.f32 %v1767, %v2047
      %2049 = vmatmul.bf16.gmra.mxu0 %v1725
      %v2050 = vpop.f32.mrf.mxu0
      %v2051 = vadd.f32 %v1767, %v2050
      %v2052 = vpop.f32.mrf.mxu0
      %v2053 = vadd.f32 %v1767, %v2052
      %2054 = vmatmul.bf16.gmra.mxu0 %v1726
      %v2055 = vpop.f32.mrf.mxu0
      %v2056 = vadd.f32 %v1767, %v2055
      %v2057 = vpop.f32.mrf.mxu0
      %v2058 = vadd.f32 %v1767, %v2057
      %2059 = vmatmul.bf16.gmra.mxu0 %v1727
      %v2060 = vpop.f32.mrf.mxu0
      %v2061 = vadd.f32 %v1767, %v2060
      %v2062 = vpop.f32.mrf.mxu0
      %v2063 = vadd.f32 %v1767, %v2062
      %2064 = vmatmul.bf16.gmra.mxu0 %v1728
      %v2065 = vpop.f32.mrf.mxu0
      %v2066 = vadd.f32 %v1767, %v2065
      %v2067 = vpop.f32.mrf.mxu0
      %v2068 = vadd.f32 %v1767, %v2067
      %2069 = vmatmul.bf16.gmra.mxu0 %v1729
      %v2070 = vpop.f32.mrf.mxu0
      %v2071 = vadd.f32 %v1767, %v2070
      %v2072 = vpop.f32.mrf.mxu0
      %v2073 = vadd.f32 %v1767, %v2072
      %2074 = vmatmul.bf16.gmra.mxu0 %v1730
      %v2075 = vpop.f32.mrf.mxu0
      %v2076 = vadd.f32 %v1767, %v2075
      %v2077 = vpop.f32.mrf.mxu0
      %v2078 = vadd.f32 %v1767, %v2077
      %2079 = vdwg.mxu0
      %2080 = vmatpush.bf16.msra.mxu0 %v1900
      %2081 = vmatpush.bf16.msra.mxu0 %v1896
      %2082 = vmatpush.bf16.msra.mxu0 %v1892
      %2083 = vmatpush.bf16.msra.mxu0 %v1888
      %2084 = vmatpush.bf16.msra.mxu0 %v1884
      %2085 = vmatpush.bf16.msra.mxu0 %v1880
      %2086 = vmatpush.bf16.msra.mxu0 %v1876
      %2087 = vmatpush.bf16.msra.mxu0 %v1872
      %2088 = vmatmul.bf16.gmra.mxu0 %v1723
      %v2089 = vpop.f32.mrf.mxu0
      %v2090 = vadd.f32 %v1768, %v2089
      %v2091 = vpop.f32.mrf.mxu0
      %v2092 = vadd.f32 %v1768, %v2091
      %2093 = vmatmul.bf16.gmra.mxu0 %v1724
      %v2094 = vpop.f32.mrf.mxu0
      %v2095 = vadd.f32 %v1768, %v2094
      %v2096 = vpop.f32.mrf.mxu0
      %v2097 = vadd.f32 %v1768, %v2096
      %2098 = vmatmul.bf16.gmra.mxu0 %v1725
      %v2099 = vpop.f32.mrf.mxu0
      %v2100 = vadd.f32 %v1768, %v2099
      %v2101 = vpop.f32.mrf.mxu0
      %v2102 = vadd.f32 %v1768, %v2101
      %2103 = vmatmul.bf16.gmra.mxu0 %v1726
      %v2104 = vpop.f32.mrf.mxu0
      %v2105 = vadd.f32 %v1768, %v2104
      %v2106 = vpop.f32.mrf.mxu0
      %v2107 = vadd.f32 %v1768, %v2106
      %2108 = vmatmul.bf16.gmra.mxu0 %v1727
      %v2109 = vpop.f32.mrf.mxu0
      %v2110 = vadd.f32 %v1768, %v2109
      %v2111 = vpop.f32.mrf.mxu0
      %v2112 = vadd.f32 %v1768, %v2111
      %2113 = vmatmul.bf16.gmra.mxu0 %v1728
      %v2114 = vpop.f32.mrf.mxu0
      %v2115 = vadd.f32 %v1768, %v2114
      %v2116 = vpop.f32.mrf.mxu0
      %v2117 = vadd.f32 %v1768, %v2116
      %2118 = vmatmul.bf16.gmra.mxu0 %v1729
      %v2119 = vpop.f32.mrf.mxu0
      %v2120 = vadd.f32 %v1768, %v2119
      %v2121 = vpop.f32.mrf.mxu0
      %v2122 = vadd.f32 %v1768, %v2121
      %2123 = vmatmul.bf16.gmra.mxu0 %v1730
      %v2124 = vpop.f32.mrf.mxu0
      %v2125 = vadd.f32 %v1768, %v2124
      %v2126 = vpop.f32.mrf.mxu0
      %v2127 = vadd.f32 %v1768, %v2126
      %2128 = vdwg.mxu0
      %v2129 = vmul.f32 %v1943, %v1943
      %v2130 = vmul.f32 %v1992, %v1992
      %v2131 = vmul.f32 %v2041, %v2041
      %v2132 = vmul.f32 %v2090, %v2090
      %v2133 = vmul.f32 %v1945, %v1945
      %v2134 = vmul.f32 %v1994, %v1994
      %v2135 = vmul.f32 %v2043, %v2043
      %v2136 = vmul.f32 %v2092, %v2092
      %v2137 = vmul.f32 %v1948, %v1948
      %v2138 = vmul.f32 %v1997, %v1997
      %v2139 = vmul.f32 %v2046, %v2046
      %v2140 = vmul.f32 %v2095, %v2095
      %v2141 = vmul.f32 %v1950, %v1950
      %v2142 = vmul.f32 %v1999, %v1999
      %v2143 = vmul.f32 %v2048, %v2048
      %v2144 = vmul.f32 %v2097, %v2097
      %v2145 = vmul.f32 %v1953, %v1953
      %v2146 = vmul.f32 %v2002, %v2002
      %v2147 = vmul.f32 %v2051, %v2051
      %v2148 = vmul.f32 %v2100, %v2100
      %v2149 = vmul.f32 %v1955, %v1955
      %v2150 = vmul.f32 %v2004, %v2004
      %v2151 = vmul.f32 %v2053, %v2053
      %v2152 = vmul.f32 %v2102, %v2102
      %v2153 = vmul.f32 %v1958, %v1958
      %v2154 = vmul.f32 %v2007, %v2007
      %v2155 = vmul.f32 %v2056, %v2056
      %v2156 = vmul.f32 %v2105, %v2105
      %v2157 = vmul.f32 %v1960, %v1960
      %v2158 = vmul.f32 %v2009, %v2009
      %v2159 = vmul.f32 %v2058, %v2058
      %v2160 = vmul.f32 %v2107, %v2107
      %v2161 = vmul.f32 %v1963, %v1963
      %v2162 = vmul.f32 %v2012, %v2012
      %v2163 = vmul.f32 %v2061, %v2061
      %v2164 = vmul.f32 %v2110, %v2110
      %v2165 = vmul.f32 %v1965, %v1965
      %v2166 = vmul.f32 %v2014, %v2014
      %v2167 = vmul.f32 %v2063, %v2063
      %v2168 = vmul.f32 %v2112, %v2112
      %v2169 = vmul.f32 %v1968, %v1968
      %v2170 = vmul.f32 %v2017, %v2017
      %v2171 = vmul.f32 %v2066, %v2066
      %v2172 = vmul.f32 %v2115, %v2115
      %v2173 = vmul.f32 %v1970, %v1970
      %v2174 = vmul.f32 %v2019, %v2019
      %v2175 = vmul.f32 %v2068, %v2068
      %v2176 = vmul.f32 %v2117, %v2117
      %v2177 = vmul.f32 %v1973, %v1973
      %v2178 = vmul.f32 %v2022, %v2022
      %v2179 = vmul.f32 %v2071, %v2071
      %v2180 = vmul.f32 %v2120, %v2120
      %v2181 = vmul.f32 %v1975, %v1975
      %v2182 = vmul.f32 %v2024, %v2024
      %v2183 = vmul.f32 %v2073, %v2073
      %v2184 = vmul.f32 %v2122, %v2122
      %v2185 = vmul.f32 %v1978, %v1978
      %v2186 = vmul.f32 %v2027, %v2027
      %v2187 = vmul.f32 %v2076, %v2076
      %v2188 = vmul.f32 %v2125, %v2125
      %v2189 = vmul.f32 %v1980, %v1980
      %v2190 = vmul.f32 %v2029, %v2029
      %v2191 = vmul.f32 %v2078, %v2078
      %v2192 = vmul.f32 %v2127, %v2127
      %v2193 = vmul.f32 %v1943, %v2129
      %v2194 = vmul.f32 %v1992, %v2130
      %v2195 = vmul.f32 %v2041, %v2131
      %v2196 = vmul.f32 %v2090, %v2132
      %v2197 = vmul.f32 %v1945, %v2133
      %v2198 = vmul.f32 %v1994, %v2134
      %v2199 = vmul.f32 %v2043, %v2135
      %v2200 = vmul.f32 %v2092, %v2136
      %v2201 = vmul.f32 %v1948, %v2137
      %v2202 = vmul.f32 %v1997, %v2138
      %v2203 = vmul.f32 %v2046, %v2139
      %v2204 = vmul.f32 %v2095, %v2140
      %v2205 = vmul.f32 %v1950, %v2141
      %v2206 = vmul.f32 %v1999, %v2142
      %v2207 = vmul.f32 %v2048, %v2143
      %v2208 = vmul.f32 %v2097, %v2144
      %v2209 = vmul.f32 %v1953, %v2145
      %v2210 = vmul.f32 %v2002, %v2146
      %v2211 = vmul.f32 %v2051, %v2147
      %v2212 = vmul.f32 %v2100, %v2148
      %v2213 = vmul.f32 %v1955, %v2149
      %v2214 = vmul.f32 %v2004, %v2150
      %v2215 = vmul.f32 %v2053, %v2151
      %v2216 = vmul.f32 %v2102, %v2152
      %v2217 = vmul.f32 %v1958, %v2153
      %v2218 = vmul.f32 %v2007, %v2154
      %v2219 = vmul.f32 %v2056, %v2155
      %v2220 = vmul.f32 %v2105, %v2156
      %v2221 = vmul.f32 %v1960, %v2157
      %v2222 = vmul.f32 %v2009, %v2158
      %v2223 = vmul.f32 %v2058, %v2159
      %v2224 = vmul.f32 %v2107, %v2160
      %v2225 = vmul.f32 %v1963, %v2161
      %v2226 = vmul.f32 %v2012, %v2162
      %v2227 = vmul.f32 %v2061, %v2163
      %v2228 = vmul.f32 %v2110, %v2164
      %v2229 = vmul.f32 %v1965, %v2165
      %v2230 = vmul.f32 %v2014, %v2166
      %v2231 = vmul.f32 %v2063, %v2167
      %v2232 = vmul.f32 %v2112, %v2168
      %v2233 = vmul.f32 %v1968, %v2169
      %v2234 = vmul.f32 %v2017, %v2170
      %v2235 = vmul.f32 %v2066, %v2171
      %v2236 = vmul.f32 %v2115, %v2172
      %v2237 = vmul.f32 %v1970, %v2173
      %v2238 = vmul.f32 %v2019, %v2174
      %v2239 = vmul.f32 %v2068, %v2175
      %v2240 = vmul.f32 %v2117, %v2176
      %v2241 = vmul.f32 %v1973, %v2177
      %v2242 = vmul.f32 %v2022, %v2178
      %v2243 = vmul.f32 %v2071, %v2179
      %v2244 = vmul.f32 %v2120, %v2180
      %v2245 = vmul.f32 %v1975, %v2181
      %v2246 = vmul.f32 %v2024, %v2182
      %v2247 = vmul.f32 %v2073, %v2183
      %v2248 = vmul.f32 %v2122, %v2184
      %v2249 = vmul.f32 %v1978, %v2185
      %v2250 = vmul.f32 %v2027, %v2186
      %v2251 = vmul.f32 %v2076, %v2187
      %v2252 = vmul.f32 %v2125, %v2188
      %v2253 = vmul.f32 %v1980, %v2189
      %v2254 = vmul.f32 %v2029, %v2190
      %v2255 = vmul.f32 %v2078, %v2191
      %v2256 = vmul.f32 %v2127, %v2192
      %v2257 = vmul.f32 %v2193, 0.044715
      %v2258 = vmul.f32 %v2194, 0.044715
      %v2259 = vmul.f32 %v2195, 0.044715
      %v2260 = vmul.f32 %v2196, 0.044715
      %v2261 = vmul.f32 %v2197, 0.044715
      %v2262 = vmul.f32 %v2198, 0.044715
      %v2263 = vmul.f32 %v2199, 0.044715
      %v2264 = vmul.f32 %v2200, 0.044715
      %v2265 = vmul.f32 %v2201, 0.044715
      %v2266 = vmul.f32 %v2202, 0.044715
      %v2267 = vmul.f32 %v2203, 0.044715
      %v2268 = vmul.f32 %v2204, 0.044715
      %v2269 = vmul.f32 %v2205, 0.044715
      %v2270 = vmul.f32 %v2206, 0.044715
      %v2271 = vmul.f32 %v2207, 0.044715
      %v2272 = vmul.f32 %v2208, 0.044715
      %v2273 = vmul.f32 %v2209, 0.044715
      %v2274 = vmul.f32 %v2210, 0.044715
      %v2275 = vmul.f32 %v2211, 0.044715
      %v2276 = vmul.f32 %v2212, 0.044715
      %v2277 = vmul.f32 %v2213, 0.044715
      %v2278 = vmul.f32 %v2214, 0.044715
      %v2279 = vmul.f32 %v2215, 0.044715
      %v2280 = vmul.f32 %v2216, 0.044715
      %v2281 = vmul.f32 %v2217, 0.044715
      %v2282 = vmul.f32 %v2218, 0.044715
      %v2283 = vmul.f32 %v2219, 0.044715
      %v2284 = vmul.f32 %v2220, 0.044715
      %v2285 = vmul.f32 %v2221, 0.044715
      %v2286 = vmul.f32 %v2222, 0.044715
      %v2287 = vmul.f32 %v2223, 0.044715
      %v2288 = vmul.f32 %v2224, 0.044715
      %v2289 = vmul.f32 %v2225, 0.044715
      %v2290 = vmul.f32 %v2226, 0.044715
      %v2291 = vmul.f32 %v2227, 0.044715
      %v2292 = vmul.f32 %v2228, 0.044715
      %v2293 = vmul.f32 %v2229, 0.044715
      %v2294 = vmul.f32 %v2230, 0.044715
      %v2295 = vmul.f32 %v2231, 0.044715
      %v2296 = vmul.f32 %v2232, 0.044715
      %v2297 = vmul.f32 %v2233, 0.044715
      %v2298 = vmul.f32 %v2234, 0.044715
      %v2299 = vmul.f32 %v2235, 0.044715
      %v2300 = vmul.f32 %v2236, 0.044715
      %v2301 = vmul.f32 %v2237, 0.044715
      %v2302 = vmul.f32 %v2238, 0.044715
      %v2303 = vmul.f32 %v2239, 0.044715
      %v2304 = vmul.f32 %v2240, 0.044715
      %v2305 = vmul.f32 %v2241, 0.044715
      %v2306 = vmul.f32 %v2242, 0.044715
      %v2307 = vmul.f32 %v2243, 0.044715
      %v2308 = vmul.f32 %v2244, 0.044715
      %v2309 = vmul.f32 %v2245, 0.044715
      %v2310 = vmul.f32 %v2246, 0.044715
      %v2311 = vmul.f32 %v2247, 0.044715
      %v2312 = vmul.f32 %v2248, 0.044715
      %v2313 = vmul.f32 %v2249, 0.044715
      %v2314 = vmul.f32 %v2250, 0.044715
      %v2315 = vmul.f32 %v2251, 0.044715
      %v2316 = vmul.f32 %v2252, 0.044715
      %v2317 = vmul.f32 %v2253, 0.044715
      %v2318 = vmul.f32 %v2254, 0.044715
      %v2319 = vmul.f32 %v2255, 0.044715
      %v2320 = vmul.f32 %v2256, 0.044715
      %v2321 = vadd.f32 %v1943, %v2257
      %v2322 = vadd.f32 %v1992, %v2258
      %v2323 = vadd.f32 %v2041, %v2259
      %v2324 = vadd.f32 %v2090, %v2260
      %v2325 = vadd.f32 %v1945, %v2261
      %v2326 = vadd.f32 %v1994, %v2262
      %v2327 = vadd.f32 %v2043, %v2263
      %v2328 = vadd.f32 %v2092, %v2264
      %v2329 = vadd.f32 %v1948, %v2265
      %v2330 = vadd.f32 %v1997, %v2266
      %v2331 = vadd.f32 %v2046, %v2267
      %v2332 = vadd.f32 %v2095, %v2268
      %v2333 = vadd.f32 %v1950, %v2269
      %v2334 = vadd.f32 %v1999, %v2270
      %v2335 = vadd.f32 %v2048, %v2271
      %v2336 = vadd.f32 %v2097, %v2272
      %v2337 = vadd.f32 %v1953, %v2273
      %v2338 = vadd.f32 %v2002, %v2274
      %v2339 = vadd.f32 %v2051, %v2275
      %v2340 = vadd.f32 %v2100, %v2276
      %v2341 = vadd.f32 %v1955, %v2277
      %v2342 = vadd.f32 %v2004, %v2278
      %v2343 = vadd.f32 %v2053, %v2279
      %v2344 = vadd.f32 %v2102, %v2280
      %v2345 = vadd.f32 %v1958, %v2281
      %v2346 = vadd.f32 %v2007, %v2282
      %v2347 = vadd.f32 %v2056, %v2283
      %v2348 = vadd.f32 %v2105, %v2284
      %v2349 = vadd.f32 %v1960, %v2285
      %v2350 = vadd.f32 %v2009, %v2286
      %v2351 = vadd.f32 %v2058, %v2287
      %v2352 = vadd.f32 %v2107, %v2288
      %v2353 = vadd.f32 %v1963, %v2289
      %v2354 = vadd.f32 %v2012, %v2290
      %v2355 = vadd.f32 %v2061, %v2291
      %v2356 = vadd.f32 %v2110, %v2292
      %v2357 = vadd.f32 %v1965, %v2293
      %v2358 = vadd.f32 %v2014, %v2294
      %v2359 = vadd.f32 %v2063, %v2295
      %v2360 = vadd.f32 %v2112, %v2296
      %v2361 = vadd.f32 %v1968, %v2297
      %v2362 = vadd.f32 %v2017, %v2298
      %v2363 = vadd.f32 %v2066, %v2299
      %v2364 = vadd.f32 %v2115, %v2300
      %v2365 = vadd.f32 %v1970, %v2301
      %v2366 = vadd.f32 %v2019, %v2302
      %v2367 = vadd.f32 %v2068, %v2303
      %v2368 = vadd.f32 %v2117, %v2304
      %v2369 = vadd.f32 %v1973, %v2305
      %v2370 = vadd.f32 %v2022, %v2306
      %v2371 = vadd.f32 %v2071, %v2307
      %v2372 = vadd.f32 %v2120, %v2308
      %v2373 = vadd.f32 %v1975, %v2309
      %v2374 = vadd.f32 %v2024, %v2310
      %v2375 = vadd.f32 %v2073, %v2311
      %v2376 = vadd.f32 %v2122, %v2312
      %v2377 = vadd.f32 %v1978, %v2313
      %v2378 = vadd.f32 %v2027, %v2314
      %v2379 = vadd.f32 %v2076, %v2315
      %v2380 = vadd.f32 %v2125, %v2316
      %v2381 = vadd.f32 %v1980, %v2317
      %v2382 = vadd.f32 %v2029, %v2318
      %v2383 = vadd.f32 %v2078, %v2319
      %v2384 = vadd.f32 %v2127, %v2320
      %v2385 = vmul.f32 %v2321, 0.7978846
      %v2386 = vmul.f32 %v2322, 0.7978846
      %v2387 = vmul.f32 %v2323, 0.7978846
      %v2388 = vmul.f32 %v2324, 0.7978846
      %v2389 = vmul.f32 %v2325, 0.7978846
      %v2390 = vmul.f32 %v2326, 0.7978846
      %v2391 = vmul.f32 %v2327, 0.7978846
      %v2392 = vmul.f32 %v2328, 0.7978846
      %v2393 = vmul.f32 %v2329, 0.7978846
      %v2394 = vmul.f32 %v2330, 0.7978846
      %v2395 = vmul.f32 %v2331, 0.7978846
      %v2396 = vmul.f32 %v2332, 0.7978846
      %v2397 = vmul.f32 %v2333, 0.7978846
      %v2398 = vmul.f32 %v2334, 0.7978846
      %v2399 = vmul.f32 %v2335, 0.7978846
      %v2400 = vmul.f32 %v2336, 0.7978846
      %v2401 = vmul.f32 %v2337, 0.7978846
      %v2402 = vmul.f32 %v2338, 0.7978846
      %v2403 = vmul.f32 %v2339, 0.7978846
      %v2404 = vmul.f32 %v2340, 0.7978846
      %v2405 = vmul.f32 %v2341, 0.7978846
      %v2406 = vmul.f32 %v2342, 0.7978846
      %v2407 = vmul.f32 %v2343, 0.7978846
      %v2408 = vmul.f32 %v2344, 0.7978846
      %v2409 = vmul.f32 %v2345, 0.7978846
      %v2410 = vmul.f32 %v2346, 0.7978846
      %v2411 = vmul.f32 %v2347, 0.7978846
      %v2412 = vmul.f32 %v2348, 0.7978846
      %v2413 = vmul.f32 %v2349, 0.7978846
      %v2414 = vmul.f32 %v2350, 0.7978846
      %v2415 = vmul.f32 %v2351, 0.7978846
      %v2416 = vmul.f32 %v2352, 0.7978846
      %v2417 = vmul.f32 %v2353, 0.7978846
      %v2418 = vmul.f32 %v2354, 0.7978846
      %v2419 = vmul.f32 %v2355, 0.7978846
      %v2420 = vmul.f32 %v2356, 0.7978846
      %v2421 = vmul.f32 %v2357, 0.7978846
      %v2422 = vmul.f32 %v2358, 0.7978846
      %v2423 = vmul.f32 %v2359, 0.7978846
      %v2424 = vmul.f32 %v2360, 0.7978846
      %v2425 = vmul.f32 %v2361, 0.7978846
      %v2426 = vmul.f32 %v2362, 0.7978846
      %v2427 = vmul.f32 %v2363, 0.7978846
      %v2428 = vmul.f32 %v2364, 0.7978846
      %v2429 = vmul.f32 %v2365, 0.7978846
      %v2430 = vmul.f32 %v2366, 0.7978846
      %v2431 = vmul.f32 %v2367, 0.7978846
      %v2432 = vmul.f32 %v2368, 0.7978846
      %v2433 = vmul.f32 %v2369, 0.7978846
      %v2434 = vmul.f32 %v2370, 0.7978846
      %v2435 = vmul.f32 %v2371, 0.7978846
      %v2436 = vmul.f32 %v2372, 0.7978846
      %v2437 = vmul.f32 %v2373, 0.7978846
      %v2438 = vmul.f32 %v2374, 0.7978846
      %v2439 = vmul.f32 %v2375, 0.7978846
      %v2440 = vmul.f32 %v2376, 0.7978846
      %v2441 = vmul.f32 %v2377, 0.7978846
      %v2442 = vmul.f32 %v2378, 0.7978846
      %v2443 = vmul.f32 %v2379, 0.7978846
      %v2444 = vmul.f32 %v2380, 0.7978846
      %v2445 = vmul.f32 %v2381, 0.7978846
      %v2446 = vmul.f32 %v2382, 0.7978846
      %v2447 = vmul.f32 %v2383, 0.7978846
      %v2448 = vmul.f32 %v2384, 0.7978846
      %v2449 = vtanh.pop %v2385
      %v2450 = vtanh.pop %v2386
      %v2451 = vtanh.pop %v2387
      %v2452 = vtanh.pop %v2388
      %v2453 = vtanh.pop %v2389
      %v2454 = vtanh.pop %v2390
      %v2455 = vtanh.pop %v2391
      %v2456 = vtanh.pop %v2392
      %v2457 = vtanh.pop %v2393
      %v2458 = vtanh.pop %v2394
      %v2459 = vtanh.pop %v2395
      %v2460 = vtanh.pop %v2396
      %v2461 = vtanh.pop %v2397
      %v2462 = vtanh.pop %v2398
      %v2463 = vtanh.pop %v2399
      %v2464 = vtanh.pop %v2400
      %v2465 = vtanh.pop %v2401
      %v2466 = vtanh.pop %v2402
      %v2467 = vtanh.pop %v2403
      %v2468 = vtanh.pop %v2404
      %v2469 = vtanh.pop %v2405
      %v2470 = vtanh.pop %v2406
      %v2471 = vtanh.pop %v2407
      %v2472 = vtanh.pop %v2408
      %v2473 = vtanh.pop %v2409
      %v2474 = vtanh.pop %v2410
      %v2475 = vtanh.pop %v2411
      %v2476 = vtanh.pop %v2412
      %v2477 = vtanh.pop %v2413
      %v2478 = vtanh.pop %v2414
      %v2479 = vtanh.pop %v2415
      %v2480 = vtanh.pop %v2416
      %v2481 = vtanh.pop %v2417
      %v2482 = vtanh.pop %v2418
      %v2483 = vtanh.pop %v2419
      %v2484 = vtanh.pop %v2420
      %v2485 = vtanh.pop %v2421
      %v2486 = vtanh.pop %v2422
      %v2487 = vtanh.pop %v2423
      %v2488 = vtanh.pop %v2424
      %v2489 = vtanh.pop %v2425
      %v2490 = vtanh.pop %v2426
      %v2491 = vtanh.pop %v2427
      %v2492 = vtanh.pop %v2428
      %v2493 = vtanh.pop %v2429
      %v2494 = vtanh.pop %v2430
      %v2495 = vtanh.pop %v2431
      %v2496 = vtanh.pop %v2432
      %v2497 = vtanh.pop %v2433
      %v2498 = vtanh.pop %v2434
      %v2499 = vtanh.pop %v2435
      %v2500 = vtanh.pop %v2436
      %v2501 = vtanh.pop %v2437
      %v2502 = vtanh.pop %v2438
      %v2503 = vtanh.pop %v2439
      %v2504 = vtanh.pop %v2440
      %v2505 = vtanh.pop %v2441
      %v2506 = vtanh.pop %v2442
      %v2507 = vtanh.pop %v2443
      %v2508 = vtanh.pop %v2444
      %v2509 = vtanh.pop %v2445
      %v2510 = vtanh.pop %v2446
      %v2511 = vtanh.pop %v2447
      %v2512 = vtanh.pop %v2448
      %v2513 = vadd.f32 %v2449, 1.0
      %v2514 = vadd.f32 %v2450, 1.0
      %v2515 = vadd.f32 %v2451, 1.0
      %v2516 = vadd.f32 %v2452, 1.0
      %v2517 = vadd.f32 %v2453, 1.0
      %v2518 = vadd.f32 %v2454, 1.0
      %v2519 = vadd.f32 %v2455, 1.0
      %v2520 = vadd.f32 %v2456, 1.0
      %v2521 = vadd.f32 %v2457, 1.0
      %v2522 = vadd.f32 %v2458, 1.0
      %v2523 = vadd.f32 %v2459, 1.0
      %v2524 = vadd.f32 %v2460, 1.0
      %v2525 = vadd.f32 %v2461, 1.0
      %v2526 = vadd.f32 %v2462, 1.0
      %v2527 = vadd.f32 %v2463, 1.0
      %v2528 = vadd.f32 %v2464, 1.0
      %v2529 = vadd.f32 %v2465, 1.0
      %v2530 = vadd.f32 %v2466, 1.0
      %v2531 = vadd.f32 %v2467, 1.0
      %v2532 = vadd.f32 %v2468, 1.0
      %v2533 = vadd.f32 %v2469, 1.0
      %v2534 = vadd.f32 %v2470, 1.0
      %v2535 = vadd.f32 %v2471, 1.0
      %v2536 = vadd.f32 %v2472, 1.0
      %v2537 = vadd.f32 %v2473, 1.0
      %v2538 = vadd.f32 %v2474, 1.0
      %v2539 = vadd.f32 %v2475, 1.0
      %v2540 = vadd.f32 %v2476, 1.0
      %v2541 = vadd.f32 %v2477, 1.0
      %v2542 = vadd.f32 %v2478, 1.0
      %v2543 = vadd.f32 %v2479, 1.0
      %v2544 = vadd.f32 %v2480, 1.0
      %v2545 = vadd.f32 %v2481, 1.0
      %v2546 = vadd.f32 %v2482, 1.0
      %v2547 = vadd.f32 %v2483, 1.0
      %v2548 = vadd.f32 %v2484, 1.0
      %v2549 = vadd.f32 %v2485, 1.0
      %v2550 = vadd.f32 %v2486, 1.0
      %v2551 = vadd.f32 %v2487, 1.0
      %v2552 = vadd.f32 %v2488, 1.0
      %v2553 = vadd.f32 %v2489, 1.0
      %v2554 = vadd.f32 %v2490, 1.0
      %v2555 = vadd.f32 %v2491, 1.0
      %v2556 = vadd.f32 %v2492, 1.0
      %v2557 = vadd.f32 %v2493, 1.0
      %v2558 = vadd.f32 %v2494, 1.0
      %v2559 = vadd.f32 %v2495, 1.0
      %v2560 = vadd.f32 %v2496, 1.0
      %v2561 = vadd.f32 %v2497, 1.0
      %v2562 = vadd.f32 %v2498, 1.0
      %v2563 = vadd.f32 %v2499, 1.0
      %v2564 = vadd.f32 %v2500, 1.0
      %v2565 = vadd.f32 %v2501, 1.0
      %v2566 = vadd.f32 %v2502, 1.0
      %v2567 = vadd.f32 %v2503, 1.0
      %v2568 = vadd.f32 %v2504, 1.0
      %v2569 = vadd.f32 %v2505, 1.0
      %v2570 = vadd.f32 %v2506, 1.0
      %v2571 = vadd.f32 %v2507, 1.0
      %v2572 = vadd.f32 %v2508, 1.0
      %v2573 = vadd.f32 %v2509, 1.0
      %v2574 = vadd.f32 %v2510, 1.0
      %v2575 = vadd.f32 %v2511, 1.0
      %v2576 = vadd.f32 %v2512, 1.0
      %v2577 = vmul.f32 %v2513, 0.5
      %v2578 = vmul.f32 %v2514, 0.5
      %v2579 = vmul.f32 %v2515, 0.5
      %v2580 = vmul.f32 %v2516, 0.5
      %v2581 = vmul.f32 %v2517, 0.5
      %v2582 = vmul.f32 %v2518, 0.5
      %v2583 = vmul.f32 %v2519, 0.5
      %v2584 = vmul.f32 %v2520, 0.5
      %v2585 = vmul.f32 %v2521, 0.5
      %v2586 = vmul.f32 %v2522, 0.5
      %v2587 = vmul.f32 %v2523, 0.5
      %v2588 = vmul.f32 %v2524, 0.5
      %v2589 = vmul.f32 %v2525, 0.5
      %v2590 = vmul.f32 %v2526, 0.5
      %v2591 = vmul.f32 %v2527, 0.5
      %v2592 = vmul.f32 %v2528, 0.5
      %v2593 = vmul.f32 %v2529, 0.5
      %v2594 = vmul.f32 %v2530, 0.5
      %v2595 = vmul.f32 %v2531, 0.5
      %v2596 = vmul.f32 %v2532, 0.5
      %v2597 = vmul.f32 %v2533, 0.5
      %v2598 = vmul.f32 %v2534, 0.5
      %v2599 = vmul.f32 %v2535, 0.5
      %v2600 = vmul.f32 %v2536, 0.5
      %v2601 = vmul.f32 %v2537, 0.5
      %v2602 = vmul.f32 %v2538, 0.5
      %v2603 = vmul.f32 %v2539, 0.5
      %v2604 = vmul.f32 %v2540, 0.5
      %v2605 = vmul.f32 %v2541, 0.5
      %v2606 = vmul.f32 %v2542, 0.5
      %v2607 = vmul.f32 %v2543, 0.5
      %v2608 = vmul.f32 %v2544, 0.5
      %v2609 = vmul.f32 %v2545, 0.5
      %v2610 = vmul.f32 %v2546, 0.5
      %v2611 = vmul.f32 %v2547, 0.5
      %v2612 = vmul.f32 %v2548, 0.5
      %v2613 = vmul.f32 %v2549, 0.5
      %v2614 = vmul.f32 %v2550, 0.5
      %v2615 = vmul.f32 %v2551, 0.5
      %v2616 = vmul.f32 %v2552, 0.5
      %v2617 = vmul.f32 %v2553, 0.5
      %v2618 = vmul.f32 %v2554, 0.5
      %v2619 = vmul.f32 %v2555, 0.5
      %v2620 = vmul.f32 %v2556, 0.5
      %v2621 = vmul.f32 %v2557, 0.5
      %v2622 = vmul.f32 %v2558, 0.5
      %v2623 = vmul.f32 %v2559, 0.5
      %v2624 = vmul.f32 %v2560, 0.5
      %v2625 = vmul.f32 %v2561, 0.5
      %v2626 = vmul.f32 %v2562, 0.5
      %v2627 = vmul.f32 %v2563, 0.5
      %v2628 = vmul.f32 %v2564, 0.5
      %v2629 = vmul.f32 %v2565, 0.5
      %v2630 = vmul.f32 %v2566, 0.5
      %v2631 = vmul.f32 %v2567, 0.5
      %v2632 = vmul.f32 %v2568, 0.5
      %v2633 = vmul.f32 %v2569, 0.5
      %v2634 = vmul.f32 %v2570, 0.5
      %v2635 = vmul.f32 %v2571, 0.5
      %v2636 = vmul.f32 %v2572, 0.5
      %v2637 = vmul.f32 %v2573, 0.5
      %v2638 = vmul.f32 %v2574, 0.5
      %v2639 = vmul.f32 %v2575, 0.5
      %v2640 = vmul.f32 %v2576, 0.5
      %v2641 = vmul.f32 %v1943, %v2577
      %v2642 = vmul.f32 %v1992, %v2578
      %v2643 = vmul.f32 %v2041, %v2579
      %v2644 = vmul.f32 %v2090, %v2580
      %v2645 = vmul.f32 %v1945, %v2581
      %v2646 = vmul.f32 %v1994, %v2582
      %v2647 = vmul.f32 %v2043, %v2583
      %v2648 = vmul.f32 %v2092, %v2584
      %v2649 = vmul.f32 %v1948, %v2585
      %v2650 = vmul.f32 %v1997, %v2586
      %v2651 = vmul.f32 %v2046, %v2587
      %v2652 = vmul.f32 %v2095, %v2588
      %v2653 = vmul.f32 %v1950, %v2589
      %v2654 = vmul.f32 %v1999, %v2590
      %v2655 = vmul.f32 %v2048, %v2591
      %v2656 = vmul.f32 %v2097, %v2592
      %v2657 = vmul.f32 %v1953, %v2593
      %v2658 = vmul.f32 %v2002, %v2594
      %v2659 = vmul.f32 %v2051, %v2595
      %v2660 = vmul.f32 %v2100, %v2596
      %v2661 = vmul.f32 %v1955, %v2597
      %v2662 = vmul.f32 %v2004, %v2598
      %v2663 = vmul.f32 %v2053, %v2599
      %v2664 = vmul.f32 %v2102, %v2600
      %v2665 = vmul.f32 %v1958, %v2601
      %v2666 = vmul.f32 %v2007, %v2602
      %v2667 = vmul.f32 %v2056, %v2603
      %v2668 = vmul.f32 %v2105, %v2604
      %v2669 = vmul.f32 %v1960, %v2605
      %v2670 = vmul.f32 %v2009, %v2606
      %v2671 = vmul.f32 %v2058, %v2607
      %v2672 = vmul.f32 %v2107, %v2608
      %v2673 = vmul.f32 %v1963, %v2609
      %v2674 = vmul.f32 %v2012, %v2610
      %v2675 = vmul.f32 %v2061, %v2611
      %v2676 = vmul.f32 %v2110, %v2612
      %v2677 = vmul.f32 %v1965, %v2613
      %v2678 = vmul.f32 %v2014, %v2614
      %v2679 = vmul.f32 %v2063, %v2615
      %v2680 = vmul.f32 %v2112, %v2616
      %v2681 = vmul.f32 %v1968, %v2617
      %v2682 = vmul.f32 %v2017, %v2618
      %v2683 = vmul.f32 %v2066, %v2619
      %v2684 = vmul.f32 %v2115, %v2620
      %v2685 = vmul.f32 %v1970, %v2621
      %v2686 = vmul.f32 %v2019, %v2622
      %v2687 = vmul.f32 %v2068, %v2623
      %v2688 = vmul.f32 %v2117, %v2624
      %v2689 = vmul.f32 %v1973, %v2625
      %v2690 = vmul.f32 %v2022, %v2626
      %v2691 = vmul.f32 %v2071, %v2627
      %v2692 = vmul.f32 %v2120, %v2628
      %v2693 = vmul.f32 %v1975, %v2629
      %v2694 = vmul.f32 %v2024, %v2630
      %v2695 = vmul.f32 %v2073, %v2631
      %v2696 = vmul.f32 %v2122, %v2632
      %v2697 = vmul.f32 %v1978, %v2633
      %v2698 = vmul.f32 %v2027, %v2634
      %v2699 = vmul.f32 %v2076, %v2635
      %v2700 = vmul.f32 %v2125, %v2636
      %v2701 = vmul.f32 %v1980, %v2637
      %v2702 = vmul.f32 %v2029, %v2638
      %v2703 = vmul.f32 %v2078, %v2639
      %v2704 = vmul.f32 %v2127, %v2640
      %v2705 = vpack.c.bf16 %v2645, %v2641
      %v2706 = vpack.c.bf16 %v2646, %v2642
      %v2707 = vpack.c.bf16 %v2647, %v2643
      %v2708 = vpack.c.bf16 %v2648, %v2644
      %v2709 = vpack.c.bf16 %v2653, %v2649
      %v2710 = vpack.c.bf16 %v2654, %v2650
      %v2711 = vpack.c.bf16 %v2655, %v2651
      %v2712 = vpack.c.bf16 %v2656, %v2652
      %v2713 = vpack.c.bf16 %v2661, %v2657
      %v2714 = vpack.c.bf16 %v2662, %v2658
      %v2715 = vpack.c.bf16 %v2663, %v2659
      %v2716 = vpack.c.bf16 %v2664, %v2660
      %v2717 = vpack.c.bf16 %v2669, %v2665
      %v2718 = vpack.c.bf16 %v2670, %v2666
      %v2719 = vpack.c.bf16 %v2671, %v2667
      %v2720 = vpack.c.bf16 %v2672, %v2668
      %v2721 = vpack.c.bf16 %v2677, %v2673
      %v2722 = vpack.c.bf16 %v2678, %v2674
      %v2723 = vpack.c.bf16 %v2679, %v2675
      %v2724 = vpack.c.bf16 %v2680, %v2676
      %v2725 = vpack.c.bf16 %v2685, %v2681
      %v2726 = vpack.c.bf16 %v2686, %v2682
      %v2727 = vpack.c.bf16 %v2687, %v2683
      %v2728 = vpack.c.bf16 %v2688, %v2684
      %v2729 = vpack.c.bf16 %v2693, %v2689
      %v2730 = vpack.c.bf16 %v2694, %v2690
      %v2731 = vpack.c.bf16 %v2695, %v2691
      %v2732 = vpack.c.bf16 %v2696, %v2692
      %v2733 = vpack.c.bf16 %v2701, %v2697
      %v2734 = vpack.c.bf16 %v2702, %v2698
      %v2735 = vpack.c.bf16 %v2703, %v2699
      %v2736 = vpack.c.bf16 %v2704, %v2700
      %v2737 = vld [vmem:[%s10] sm:$0xf]
      %v2738 = vld [vmem:[%s10 + $0x4] sm:$0xf]
      %v2739 = vld [vmem:[%s10 + $0x8] sm:$0xf]
      %v2740 = vld [vmem:[%s10 + $0xc] sm:$0xf]
      %v2741 = vld [vmem:[%s10 + $0x10] sm:$0xf]
      %v2742 = vld [vmem:[%s10 + $0x14] sm:$0xf]
      %v2743 = vld [vmem:[%s10 + $0x18] sm:$0xf]
      %v2744 = vld [vmem:[%s10 + $0x1c] sm:$0xf]
      %v2745 = vld [vmem:[%s10 + $0x20] sm:$0xf]
      %v2746 = vld [vmem:[%s10 + $0x24] sm:$0xf]
      %v2747 = vld [vmem:[%s10 + $0x28] sm:$0xf]
      %v2748 = vld [vmem:[%s10 + $0x2c] sm:$0xf]
      %v2749 = vld [vmem:[%s10 + $0x30] sm:$0xf]
      %v2750 = vld [vmem:[%s10 + $0x34] sm:$0xf]
      %v2751 = vld [vmem:[%s10 + $0x38] sm:$0xf]
      %v2752 = vld [vmem:[%s10 + $0x3c] sm:$0xf]
      %v2753 = vld [vmem:[%s10 + $0x40] sm:$0xf]
      %v2754 = vld [vmem:[%s10 + $0x44] sm:$0xf]
      %v2755 = vld [vmem:[%s10 + $0x48] sm:$0xf]
      %v2756 = vld [vmem:[%s10 + $0x4c] sm:$0xf]
      %v2757 = vld [vmem:[%s10 + $0x50] sm:$0xf]
      %v2758 = vld [vmem:[%s10 + $0x54] sm:$0xf]
      %v2759 = vld [vmem:[%s10 + $0x58] sm:$0xf]
      %v2760 = vld [vmem:[%s10 + $0x5c] sm:$0xf]
      %v2761 = vld [vmem:[%s10 + $0x60] sm:$0xf]
      %v2762 = vld [vmem:[%s10 + $0x64] sm:$0xf]
      %v2763 = vld [vmem:[%s10 + $0x68] sm:$0xf]
      %v2764 = vld [vmem:[%s10 + $0x6c] sm:$0xf]
      %v2765 = vld [vmem:[%s10 + $0x70] sm:$0xf]
      %v2766 = vld [vmem:[%s10 + $0x74] sm:$0xf]
      %v2767 = vld [vmem:[%s10 + $0x78] sm:$0xf]
      %v2768 = vld [vmem:[%s10 + $0x7c] sm:$0xf]
      %v2769 = vld [vmem:[%s10 + $0x80] sm:$0xf]
      %v2770 = vld [vmem:[%s10 + $0x84] sm:$0xf]
      %v2771 = vld [vmem:[%s10 + $0x88] sm:$0xf]
      %v2772 = vld [vmem:[%s10 + $0x8c] sm:$0xf]
      %v2773 = vld [vmem:[%s10 + $0x90] sm:$0xf]
      %v2774 = vld [vmem:[%s10 + $0x94] sm:$0xf]
      %v2775 = vld [vmem:[%s10 + $0x98] sm:$0xf]
      %v2776 = vld [vmem:[%s10 + $0x9c] sm:$0xf]
      %v2777 = vld [vmem:[%s10 + $0xa0] sm:$0xf]
      %v2778 = vld [vmem:[%s10 + $0xa4] sm:$0xf]
      %v2779 = vld [vmem:[%s10 + $0xa8] sm:$0xf]
      %v2780 = vld [vmem:[%s10 + $0xac] sm:$0xf]
      %v2781 = vld [vmem:[%s10 + $0xb0] sm:$0xf]
      %v2782 = vld [vmem:[%s10 + $0xb4] sm:$0xf]
      %v2783 = vld [vmem:[%s10 + $0xb8] sm:$0xf]
      %v2784 = vld [vmem:[%s10 + $0xbc] sm:$0xf]
      %v2785 = vld [vmem:[%s10 + $0xc0] sm:$0xf]
      %v2786 = vld [vmem:[%s10 + $0xc4] sm:$0xf]
      %v2787 = vld [vmem:[%s10 + $0xc8] sm:$0xf]
      %v2788 = vld [vmem:[%s10 + $0xcc] sm:$0xf]
      %v2789 = vld [vmem:[%s10 + $0xd0] sm:$0xf]
      %v2790 = vld [vmem:[%s10 + $0xd4] sm:$0xf]
      %v2791 = vld [vmem:[%s10 + $0xd8] sm:$0xf]
      %v2792 = vld [vmem:[%s10 + $0xdc] sm:$0xf]
      %v2793 = vld [vmem:[%s10 + $0xe0] sm:$0xf]
      %v2794 = vld [vmem:[%s10 + $0xe4] sm:$0xf]
      %v2795 = vld [vmem:[%s10 + $0xe8] sm:$0xf]
      %v2796 = vld [vmem:[%s10 + $0xec] sm:$0xf]
      %v2797 = vld [vmem:[%s10 + $0xf0] sm:$0xf]
      %v2798 = vld [vmem:[%s10 + $0xf4] sm:$0xf]
      %v2799 = vld [vmem:[%s10 + $0xf8] sm:$0xf]
      %v2800 = vld [vmem:[%s10 + $0xfc] sm:$0xf]
      %v2801 = vld [vmem:[%s11] sm:$0x1]
      %v2803 = vperm.slane %v2801, 0
      %v2869 = vunpack.c.l.b16 %v2737
      %v2870 = vunpack.c.l.b16 %v2738
      %v2871 = vunpack.c.l.b16 %v2739
      %v2872 = vunpack.c.l.b16 %v2740
      %v2873 = vunpack.c.l.b16 %v2741
      %v2874 = vunpack.c.l.b16 %v2742
      %v2875 = vunpack.c.l.b16 %v2743
      %v2876 = vunpack.c.l.b16 %v2744
      %v2877 = vunpack.c.l.b16 %v2745
      %v2878 = vunpack.c.l.b16 %v2746
      %v2879 = vunpack.c.l.b16 %v2747
      %v2880 = vunpack.c.l.b16 %v2748
      %v2881 = vunpack.c.l.b16 %v2749
      %v2882 = vunpack.c.l.b16 %v2750
      %v2883 = vunpack.c.l.b16 %v2751
      %v2884 = vunpack.c.l.b16 %v2752
      %v2885 = vunpack.c.l.b16 %v2753
      %v2886 = vunpack.c.l.b16 %v2754
      %v2887 = vunpack.c.l.b16 %v2755
      %v2888 = vunpack.c.l.b16 %v2756
      %v2889 = vunpack.c.l.b16 %v2757
      %v2890 = vunpack.c.l.b16 %v2758
      %v2891 = vunpack.c.l.b16 %v2759
      %v2892 = vunpack.c.l.b16 %v2760
      %v2893 = vunpack.c.l.b16 %v2761
      %v2894 = vunpack.c.l.b16 %v2762
      %v2895 = vunpack.c.l.b16 %v2763
      %v2896 = vunpack.c.l.b16 %v2764
      %v2897 = vunpack.c.l.b16 %v2765
      %v2898 = vunpack.c.l.b16 %v2766
      %v2899 = vunpack.c.l.b16 %v2767
      %v2900 = vunpack.c.l.b16 %v2768
      %v2901 = vunpack.c.l.b16 %v2769
      %v2902 = vunpack.c.l.b16 %v2770
      %v2903 = vunpack.c.l.b16 %v2771
      %v2904 = vunpack.c.l.b16 %v2772
      %v2905 = vunpack.c.l.b16 %v2773
      %v2906 = vunpack.c.l.b16 %v2774
      %v2907 = vunpack.c.l.b16 %v2775
      %v2908 = vunpack.c.l.b16 %v2776
      %v2909 = vunpack.c.l.b16 %v2777
      %v2910 = vunpack.c.l.b16 %v2778
      %v2911 = vunpack.c.l.b16 %v2779
      %v2912 = vunpack.c.l.b16 %v2780
      %v2913 = vunpack.c.l.b16 %v2781
      %v2914 = vunpack.c.l.b16 %v2782
      %v2915 = vunpack.c.l.b16 %v2783
      %v2916 = vunpack.c.l.b16 %v2784
      %v2917 = vunpack.c.l.b16 %v2785
      %v2918 = vunpack.c.l.b16 %v2786
      %v2919 = vunpack.c.l.b16 %v2787
      %v2920 = vunpack.c.l.b16 %v2788
      %v2921 = vunpack.c.l.b16 %v2789
      %v2922 = vunpack.c.l.b16 %v2790
      %v2923 = vunpack.c.l.b16 %v2791
      %v2924 = vunpack.c.l.b16 %v2792
      %v2925 = vunpack.c.l.b16 %v2793
      %v2926 = vunpack.c.l.b16 %v2794
      %v2927 = vunpack.c.l.b16 %v2795
      %v2928 = vunpack.c.l.b16 %v2796
      %v2929 = vunpack.c.l.b16 %v2797
      %v2930 = vunpack.c.l.b16 %v2798
      %v2931 = vunpack.c.l.b16 %v2799
      %v2932 = vunpack.c.l.b16 %v2800
      %v2933 = vpack.c.b16 %v2870, %v2869
      %v2934 = vpack.c.b16 %v2872, %v2871
      %v2935 = vpack.c.b16 %v2874, %v2873
      %v2936 = vpack.c.b16 %v2876, %v2875
      %v2937 = vpack.c.b16 %v2878, %v2877
      %v2938 = vpack.c.b16 %v2880, %v2879
      %v2939 = vpack.c.b16 %v2882, %v2881
      %v2940 = vpack.c.b16 %v2884, %v2883
      %v2941 = vpack.c.b16 %v2886, %v2885
      %v2942 = vpack.c.b16 %v2888, %v2887
      %v2943 = vpack.c.b16 %v2890, %v2889
      %v2944 = vpack.c.b16 %v2892, %v2891
      %v2945 = vpack.c.b16 %v2894, %v2893
      %v2946 = vpack.c.b16 %v2896, %v2895
      %v2947 = vpack.c.b16 %v2898, %v2897
      %v2948 = vpack.c.b16 %v2900, %v2899
      %v2949 = vpack.c.b16 %v2902, %v2901
      %v2950 = vpack.c.b16 %v2904, %v2903
      %v2951 = vpack.c.b16 %v2906, %v2905
      %v2952 = vpack.c.b16 %v2908, %v2907
      %v2953 = vpack.c.b16 %v2910, %v2909
      %v2954 = vpack.c.b16 %v2912, %v2911
      %v2955 = vpack.c.b16 %v2914, %v2913
      %v2956 = vpack.c.b16 %v2916, %v2915
      %v2957 = vpack.c.b16 %v2918, %v2917
      %v2958 = vpack.c.b16 %v2920, %v2919
      %v2959 = vpack.c.b16 %v2922, %v2921
      %v2960 = vpack.c.b16 %v2924, %v2923
      %v2961 = vpack.c.b16 %v2926, %v2925
      %v2962 = vpack.c.b16 %v2928, %v2927
      %v2963 = vpack.c.b16 %v2930, %v2929
      %v2964 = vpack.c.b16 %v2932, %v2931
      %2997 = vmatpush.bf16.msra.mxu0 %v2940
      %2998 = vmatpush.bf16.msra.mxu0 %v2939
      %2999 = vmatpush.bf16.msra.mxu0 %v2938
      %3000 = vmatpush.bf16.msra.mxu0 %v2937
      %3001 = vmatpush.bf16.msra.mxu0 %v2936
      %3002 = vmatpush.bf16.msra.mxu0 %v2935
      %3003 = vmatpush.bf16.msra.mxu0 %v2934
      %3004 = vmatpush.bf16.msra.mxu0 %v2933
      %3005 = vmatmul.bf16.gmra.mxu0 %v2705
      %v3006 = vpop.f32.mrf.mxu0
      %v3007 = vadd.f32 %v2803, %v3006
      %v3008 = vpop.f32.mrf.mxu0
      %v3009 = vadd.f32 %v2803, %v3008
      %3010 = vmatmul.bf16.gmra.mxu0 %v2709
      %v3011 = vpop.f32.mrf.mxu0
      %v3012 = vadd.f32 %v2803, %v3011
      %v3013 = vpop.f32.mrf.mxu0
      %v3014 = vadd.f32 %v2803, %v3013
      %3015 = vmatmul.bf16.gmra.mxu0 %v2713
      %v3016 = vpop.f32.mrf.mxu0
      %v3017 = vadd.f32 %v2803, %v3016
      %v3018 = vpop.f32.mrf.mxu0
      %v3019 = vadd.f32 %v2803, %v3018
      %3020 = vmatmul.bf16.gmra.mxu0 %v2717
      %v3021 = vpop.f32.mrf.mxu0
      %v3022 = vadd.f32 %v2803, %v3021
      %v3023 = vpop.f32.mrf.mxu0
      %v3024 = vadd.f32 %v2803, %v3023
      %3025 = vmatmul.bf16.gmra.mxu0 %v2721
      %v3026 = vpop.f32.mrf.mxu0
      %v3027 = vadd.f32 %v2803, %v3026
      %v3028 = vpop.f32.mrf.mxu0
      %v3029 = vadd.f32 %v2803, %v3028
      %3030 = vmatmul.bf16.gmra.mxu0 %v2725
      %v3031 = vpop.f32.mrf.mxu0
      %v3032 = vadd.f32 %v2803, %v3031
      %v3033 = vpop.f32.mrf.mxu0
      %v3034 = vadd.f32 %v2803, %v3033
      %3035 = vmatmul.bf16.gmra.mxu0 %v2729
      %v3036 = vpop.f32.mrf.mxu0
      %v3037 = vadd.f32 %v2803, %v3036
      %v3038 = vpop.f32.mrf.mxu0
      %v3039 = vadd.f32 %v2803, %v3038
      %3040 = vmatmul.bf16.gmra.mxu0 %v2733
      %v3041 = vpop.f32.mrf.mxu0
      %v3042 = vadd.f32 %v2803, %v3041
      %v3043 = vpop.f32.mrf.mxu0
      %v3044 = vadd.f32 %v2803, %v3043
      %3045 = vdwg.mxu0
      %3046 = vmatpush.bf16.msra.mxu0 %v2948
      %3047 = vmatpush.bf16.msra.mxu0 %v2947
      %3048 = vmatpush.bf16.msra.mxu0 %v2946
      %3049 = vmatpush.bf16.msra.mxu0 %v2945
      %3050 = vmatpush.bf16.msra.mxu0 %v2944
      %3051 = vmatpush.bf16.msra.mxu0 %v2943
      %3052 = vmatpush.bf16.msra.mxu0 %v2942
      %3053 = vmatpush.bf16.msra.mxu0 %v2941
      %3054 = vmatmul.bf16.gmra.mxu0 %v2706
      %v3055 = vpop.f32.mrf.mxu0
      %v3056 = vadd.f32 %v3007, %v3055
      %v3057 = vpop.f32.mrf.mxu0
      %v3058 = vadd.f32 %v3009, %v3057
      %3059 = vmatmul.bf16.gmra.mxu0 %v2710
      %v3060 = vpop.f32.mrf.mxu0
      %v3061 = vadd.f32 %v3012, %v3060
      %v3062 = vpop.f32.mrf.mxu0
      %v3063 = vadd.f32 %v3014, %v3062
      %3064 = vmatmul.bf16.gmra.mxu0 %v2714
      %v3065 = vpop.f32.mrf.mxu0
      %v3066 = vadd.f32 %v3017, %v3065
      %v3067 = vpop.f32.mrf.mxu0
      %v3068 = vadd.f32 %v3019, %v3067
      %3069 = vmatmul.bf16.gmra.mxu0 %v2718
      %v3070 = vpop.f32.mrf.mxu0
      %v3071 = vadd.f32 %v3022, %v3070
      %v3072 = vpop.f32.mrf.mxu0
      %v3073 = vadd.f32 %v3024, %v3072
      %3074 = vmatmul.bf16.gmra.mxu0 %v2722
      %v3075 = vpop.f32.mrf.mxu0
      %v3076 = vadd.f32 %v3027, %v3075
      %v3077 = vpop.f32.mrf.mxu0
      %v3078 = vadd.f32 %v3029, %v3077
      %3079 = vmatmul.bf16.gmra.mxu0 %v2726
      %v3080 = vpop.f32.mrf.mxu0
      %v3081 = vadd.f32 %v3032, %v3080
      %v3082 = vpop.f32.mrf.mxu0
      %v3083 = vadd.f32 %v3034, %v3082
      %3084 = vmatmul.bf16.gmra.mxu0 %v2730
      %v3085 = vpop.f32.mrf.mxu0
      %v3086 = vadd.f32 %v3037, %v3085
      %v3087 = vpop.f32.mrf.mxu0
      %v3088 = vadd.f32 %v3039, %v3087
      %3089 = vmatmul.bf16.gmra.mxu0 %v2734
      %v3090 = vpop.f32.mrf.mxu0
      %v3091 = vadd.f32 %v3042, %v3090
      %v3092 = vpop.f32.mrf.mxu0
      %v3093 = vadd.f32 %v3044, %v3092
      %3094 = vdwg.mxu0
      %3095 = vmatpush.bf16.msra.mxu0 %v2956
      %3096 = vmatpush.bf16.msra.mxu0 %v2955
      %3097 = vmatpush.bf16.msra.mxu0 %v2954
      %3098 = vmatpush.bf16.msra.mxu0 %v2953
      %3099 = vmatpush.bf16.msra.mxu0 %v2952
      %3100 = vmatpush.bf16.msra.mxu0 %v2951
      %3101 = vmatpush.bf16.msra.mxu0 %v2950
      %3102 = vmatpush.bf16.msra.mxu0 %v2949
      %3103 = vmatmul.bf16.gmra.mxu0 %v2707
      %v3104 = vpop.f32.mrf.mxu0
      %v3105 = vadd.f32 %v3056, %v3104
      %v3106 = vpop.f32.mrf.mxu0
      %v3107 = vadd.f32 %v3058, %v3106
      %3108 = vmatmul.bf16.gmra.mxu0 %v2711
      %v3109 = vpop.f32.mrf.mxu0
      %v3110 = vadd.f32 %v3061, %v3109
      %v3111 = vpop.f32.mrf.mxu0
      %v3112 = vadd.f32 %v3063, %v3111
      %3113 = vmatmul.bf16.gmra.mxu0 %v2715
      %v3114 = vpop.f32.mrf.mxu0
      %v3115 = vadd.f32 %v3066, %v3114
      %v3116 = vpop.f32.mrf.mxu0
      %v3117 = vadd.f32 %v3068, %v3116
      %3118 = vmatmul.bf16.gmra.mxu0 %v2719
      %v3119 = vpop.f32.mrf.mxu0
      %v3120 = vadd.f32 %v3071, %v3119
      %v3121 = vpop.f32.mrf.mxu0
      %v3122 = vadd.f32 %v3073, %v3121
      %3123 = vmatmul.bf16.gmra.mxu0 %v2723
      %v3124 = vpop.f32.mrf.mxu0
      %v3125 = vadd.f32 %v3076, %v3124
      %v3126 = vpop.f32.mrf.mxu0
      %v3127 = vadd.f32 %v3078, %v3126
      %3128 = vmatmul.bf16.gmra.mxu0 %v2727
      %v3129 = vpop.f32.mrf.mxu0
      %v3130 = vadd.f32 %v3081, %v3129
      %v3131 = vpop.f32.mrf.mxu0
      %v3132 = vadd.f32 %v3083, %v3131
      %3133 = vmatmul.bf16.gmra.mxu0 %v2731
      %v3134 = vpop.f32.mrf.mxu0
      %v3135 = vadd.f32 %v3086, %v3134
      %v3136 = vpop.f32.mrf.mxu0
      %v3137 = vadd.f32 %v3088, %v3136
      %3138 = vmatmul.bf16.gmra.mxu0 %v2735
      %v3139 = vpop.f32.mrf.mxu0
      %v3140 = vadd.f32 %v3091, %v3139
      %v3141 = vpop.f32.mrf.mxu0
      %v3142 = vadd.f32 %v3093, %v3141
      %3143 = vdwg.mxu0
      %3144 = vmatpush.bf16.msra.mxu0 %v2964
      %3145 = vmatpush.bf16.msra.mxu0 %v2963
      %3146 = vmatpush.bf16.msra.mxu0 %v2962
      %3147 = vmatpush.bf16.msra.mxu0 %v2961
      %3148 = vmatpush.bf16.msra.mxu0 %v2960
      %3149 = vmatpush.bf16.msra.mxu0 %v2959
      %3150 = vmatpush.bf16.msra.mxu0 %v2958
      %3151 = vmatpush.bf16.msra.mxu0 %v2957
      %3152 = vmatmul.bf16.gmra.mxu0 %v2708
      %v3153 = vpop.f32.mrf.mxu0
      %v3154 = vadd.f32 %v3105, %v3153
      %v3155 = vpop.f32.mrf.mxu0
      %v3156 = vadd.f32 %v3107, %v3155
      %3157 = vmatmul.bf16.gmra.mxu0 %v2712
      %v3158 = vpop.f32.mrf.mxu0
      %v3159 = vadd.f32 %v3110, %v3158
      %v3160 = vpop.f32.mrf.mxu0
      %v3161 = vadd.f32 %v3112, %v3160
      %3162 = vmatmul.bf16.gmra.mxu0 %v2716
      %v3163 = vpop.f32.mrf.mxu0
      %v3164 = vadd.f32 %v3115, %v3163
      %v3165 = vpop.f32.mrf.mxu0
      %v3166 = vadd.f32 %v3117, %v3165
      %3167 = vmatmul.bf16.gmra.mxu0 %v2720
      %v3168 = vpop.f32.mrf.mxu0
      %v3169 = vadd.f32 %v3120, %v3168
      %v3170 = vpop.f32.mrf.mxu0
      %v3171 = vadd.f32 %v3122, %v3170
      %3172 = vmatmul.bf16.gmra.mxu0 %v2724
      %v3173 = vpop.f32.mrf.mxu0
      %v3174 = vadd.f32 %v3125, %v3173
      %v3175 = vpop.f32.mrf.mxu0
      %v3176 = vadd.f32 %v3127, %v3175
      %3177 = vmatmul.bf16.gmra.mxu0 %v2728
      %v3178 = vpop.f32.mrf.mxu0
      %v3179 = vadd.f32 %v3130, %v3178
      %v3180 = vpop.f32.mrf.mxu0
      %v3181 = vadd.f32 %v3132, %v3180
      %3182 = vmatmul.bf16.gmra.mxu0 %v2732
      %v3183 = vpop.f32.mrf.mxu0
      %v3184 = vadd.f32 %v3135, %v3183
      %v3185 = vpop.f32.mrf.mxu0
      %v3186 = vadd.f32 %v3137, %v3185
      %3187 = vmatmul.bf16.gmra.mxu0 %v2736
      %v3188 = vpop.f32.mrf.mxu0
      %v3189 = vadd.f32 %v3140, %v3188
      %v3190 = vpop.f32.mrf.mxu0
      %v3191 = vadd.f32 %v3142, %v3190
      %3192 = vdwg.mxu0
      %v3193 = vadd.f32 %v1707, %v3154
      %v3194 = vadd.f32 %v1708, %v3156
      %v3195 = vadd.f32 %v1709, %v3159
      %v3196 = vadd.f32 %v1710, %v3161
      %v3197 = vadd.f32 %v1711, %v3164
      %v3198 = vadd.f32 %v1712, %v3166
      %v3199 = vadd.f32 %v1713, %v3169
      %v3200 = vadd.f32 %v1714, %v3171
      %v3201 = vadd.f32 %v1715, %v3174
      %v3202 = vadd.f32 %v1716, %v3176
      %v3203 = vadd.f32 %v1717, %v3179
      %v3204 = vadd.f32 %v1718, %v3181
      %v3205 = vadd.f32 %v1719, %v3184
      %v3206 = vadd.f32 %v1720, %v3186
      %v3207 = vadd.f32 %v1721, %v3189
      %v3208 = vadd.f32 %v1722, %v3191
      %v3209 = vld [vmem:[%s12] sm:$0x1]
      %v3210 = vld [vmem:[%s13] sm:$0x1]
      %3211 = vadd.xlane.f32.xlu0 %v3193
      %v3212 = vpop.xlane.xlu0 %3211
      %3213 = vadd.xlane.f32.xlu0 %v3194
      %v3214 = vpop.xlane.xlu0 %3213
      %3215 = vadd.xlane.f32.xlu0 %v3195
      %v3216 = vpop.xlane.xlu0 %3215
      %3217 = vadd.xlane.f32.xlu0 %v3196
      %v3218 = vpop.xlane.xlu0 %3217
      %3219 = vadd.xlane.f32.xlu0 %v3197
      %v3220 = vpop.xlane.xlu0 %3219
      %3221 = vadd.xlane.f32.xlu0 %v3198
      %v3222 = vpop.xlane.xlu0 %3221
      %3223 = vadd.xlane.f32.xlu0 %v3199
      %v3224 = vpop.xlane.xlu0 %3223
      %3225 = vadd.xlane.f32.xlu0 %v3200
      %v3226 = vpop.xlane.xlu0 %3225
      %3227 = vadd.xlane.f32.xlu0 %v3201
      %v3228 = vpop.xlane.xlu0 %3227
      %3229 = vadd.xlane.f32.xlu0 %v3202
      %v3230 = vpop.xlane.xlu0 %3229
      %3231 = vadd.xlane.f32.xlu0 %v3203
      %v3232 = vpop.xlane.xlu0 %3231
      %3233 = vadd.xlane.f32.xlu0 %v3204
      %v3234 = vpop.xlane.xlu0 %3233
      %3235 = vadd.xlane.f32.xlu0 %v3205
      %v3236 = vpop.xlane.xlu0 %3235
      %3237 = vadd.xlane.f32.xlu0 %v3206
      %v3238 = vpop.xlane.xlu0 %3237
      %3239 = vadd.xlane.f32.xlu0 %v3207
      %v3240 = vpop.xlane.xlu0 %3239
      %3241 = vadd.xlane.f32.xlu0 %v3208
      %v3242 = vpop.xlane.xlu0 %3241
      %v3243 = vmul.f32 %v3212, %v1396
      %v3244 = vmul.f32 %v3214, %v1396
      %v3245 = vmul.f32 %v3216, %v1396
      %v3246 = vmul.f32 %v3218, %v1396
      %v3247 = vmul.f32 %v3220, %v1396
      %v3248 = vmul.f32 %v3222, %v1396
      %v3249 = vmul.f32 %v3224, %v1396
      %v3250 = vmul.f32 %v3226, %v1396
      %v3251 = vmul.f32 %v3228, %v1396
      %v3252 = vmul.f32 %v3230, %v1396
      %v3253 = vmul.f32 %v3232, %v1396
      %v3254 = vmul.f32 %v3234, %v1396
      %v3255 = vmul.f32 %v3236, %v1396
      %v3256 = vmul.f32 %v3238, %v1396
      %v3257 = vmul.f32 %v3240, %v1396
      %v3258 = vmul.f32 %v3242, %v1396
      %v3259 = vsub.f32 %v3193, %v3243
      %v3260 = vsub.f32 %v3194, %v3244
      %v3261 = vsub.f32 %v3195, %v3245
      %v3262 = vsub.f32 %v3196, %v3246
      %v3263 = vsub.f32 %v3197, %v3247
      %v3264 = vsub.f32 %v3198, %v3248
      %v3265 = vsub.f32 %v3199, %v3249
      %v3266 = vsub.f32 %v3200, %v3250
      %v3267 = vsub.f32 %v3201, %v3251
      %v3268 = vsub.f32 %v3202, %v3252
      %v3269 = vsub.f32 %v3203, %v3253
      %v3270 = vsub.f32 %v3204, %v3254
      %v3271 = vsub.f32 %v3205, %v3255
      %v3272 = vsub.f32 %v3206, %v3256
      %v3273 = vsub.f32 %v3207, %v3257
      %v3274 = vsub.f32 %v3208, %v3258
      %v3275 = vmul.f32 %v3259, %v3259
      %v3276 = vmul.f32 %v3260, %v3260
      %v3277 = vmul.f32 %v3261, %v3261
      %v3278 = vmul.f32 %v3262, %v3262
      %v3279 = vmul.f32 %v3263, %v3263
      %v3280 = vmul.f32 %v3264, %v3264
      %v3281 = vmul.f32 %v3265, %v3265
      %v3282 = vmul.f32 %v3266, %v3266
      %v3283 = vmul.f32 %v3267, %v3267
      %v3284 = vmul.f32 %v3268, %v3268
      %v3285 = vmul.f32 %v3269, %v3269
      %v3286 = vmul.f32 %v3270, %v3270
      %v3287 = vmul.f32 %v3271, %v3271
      %v3288 = vmul.f32 %v3272, %v3272
      %v3289 = vmul.f32 %v3273, %v3273
      %v3290 = vmul.f32 %v3274, %v3274
      %3291 = vadd.xlane.f32.xlu0 %v3275
      %v3292 = vpop.xlane.xlu0 %3291
      %3293 = vadd.xlane.f32.xlu0 %v3276
      %v3294 = vpop.xlane.xlu0 %3293
      %3295 = vadd.xlane.f32.xlu0 %v3277
      %v3296 = vpop.xlane.xlu0 %3295
      %3297 = vadd.xlane.f32.xlu0 %v3278
      %v3298 = vpop.xlane.xlu0 %3297
      %3299 = vadd.xlane.f32.xlu0 %v3279
      %v3300 = vpop.xlane.xlu0 %3299
      %3301 = vadd.xlane.f32.xlu0 %v3280
      %v3302 = vpop.xlane.xlu0 %3301
      %3303 = vadd.xlane.f32.xlu0 %v3281
      %v3304 = vpop.xlane.xlu0 %3303
      %3305 = vadd.xlane.f32.xlu0 %v3282
      %v3306 = vpop.xlane.xlu0 %3305
      %3307 = vadd.xlane.f32.xlu0 %v3283
      %v3308 = vpop.xlane.xlu0 %3307
      %3309 = vadd.xlane.f32.xlu0 %v3284
      %v3310 = vpop.xlane.xlu0 %3309
      %3311 = vadd.xlane.f32.xlu0 %v3285
      %v3312 = vpop.xlane.xlu0 %3311
      %3313 = vadd.xlane.f32.xlu0 %v3286
      %v3314 = vpop.xlane.xlu0 %3313
      %3315 = vadd.xlane.f32.xlu0 %v3287
      %v3316 = vpop.xlane.xlu0 %3315
      %3317 = vadd.xlane.f32.xlu0 %v3288
      %v3318 = vpop.xlane.xlu0 %3317
      %3319 = vadd.xlane.f32.xlu0 %v3289
      %v3320 = vpop.xlane.xlu0 %3319
      %3321 = vadd.xlane.f32.xlu0 %v3290
      %v3322 = vpop.xlane.xlu0 %3321
      %v3323 = vmul.f32 %v3292, %v1396
      %v3324 = vmul.f32 %v3294, %v1396
      %v3325 = vmul.f32 %v3296, %v1396
      %v3326 = vmul.f32 %v3298, %v1396
      %v3327 = vmul.f32 %v3300, %v1396
      %v3328 = vmul.f32 %v3302, %v1396
      %v3329 = vmul.f32 %v3304, %v1396
      %v3330 = vmul.f32 %v3306, %v1396
      %v3331 = vmul.f32 %v3308, %v1396
      %v3332 = vmul.f32 %v3310, %v1396
      %v3333 = vmul.f32 %v3312, %v1396
      %v3334 = vmul.f32 %v3314, %v1396
      %v3335 = vmul.f32 %v3316, %v1396
      %v3336 = vmul.f32 %v3318, %v1396
      %v3337 = vmul.f32 %v3320, %v1396
      %v3338 = vmul.f32 %v3322, %v1396
      %v3339 = vadd.f32 %v3323, 1e-05
      %v3340 = vadd.f32 %v3324, 1e-05
      %v3341 = vadd.f32 %v3325, 1e-05
      %v3342 = vadd.f32 %v3326, 1e-05
      %v3343 = vadd.f32 %v3327, 1e-05
      %v3344 = vadd.f32 %v3328, 1e-05
      %v3345 = vadd.f32 %v3329, 1e-05
      %v3346 = vadd.f32 %v3330, 1e-05
      %v3347 = vadd.f32 %v3331, 1e-05
      %v3348 = vadd.f32 %v3332, 1e-05
      %v3349 = vadd.f32 %v3333, 1e-05
      %v3350 = vadd.f32 %v3334, 1e-05
      %v3351 = vadd.f32 %v3335, 1e-05
      %v3352 = vadd.f32 %v3336, 1e-05
      %v3353 = vadd.f32 %v3337, 1e-05
      %v3354 = vadd.f32 %v3338, 1e-05
      %v3355 = vrsqrt.pop %v3339
      %v3356 = vmul.f32 %v3355, %v3339
      %v3357 = vmul.f32 %v3356, %v3355
      %v3358 = vmul.f32 0.5, %v3357
      %v3359 = vsub.f32 1.5, %v3358
      %v3360 = vmul.f32 %v3355, %v3359
      %vm3361 = vweird.f32 %v3339
      %vm3362 = vweird.f32 %v3355
      %vm3363 = vmor %vm3361, %vm3362
      %v3364 = vsel %vm3363, %v3355, %v3360
      %v3365 = vrsqrt.pop %v3340
      %v3366 = vmul.f32 %v3365, %v3340
      %v3367 = vmul.f32 %v3366, %v3365
      %v3368 = vmul.f32 0.5, %v3367
      %v3369 = vsub.f32 1.5, %v3368
      %v3370 = vmul.f32 %v3365, %v3369
      %vm3371 = vweird.f32 %v3340
      %vm3372 = vweird.f32 %v3365
      %vm3373 = vmor %vm3371, %vm3372
      %v3374 = vsel %vm3373, %v3365, %v3370
      %v3375 = vrsqrt.pop %v3341
      %v3376 = vmul.f32 %v3375, %v3341
      %v3377 = vmul.f32 %v3376, %v3375
      %v3378 = vmul.f32 0.5, %v3377
      %v3379 = vsub.f32 1.5, %v3378
      %v3380 = vmul.f32 %v3375, %v3379
      %vm3381 = vweird.f32 %v3341
      %vm3382 = vweird.f32 %v3375
      %vm3383 = vmor %vm3381, %vm3382
      %v3384 = vsel %vm3383, %v3375, %v3380
      %v3385 = vrsqrt.pop %v3342
      %v3386 = vmul.f32 %v3385, %v3342
      %v3387 = vmul.f32 %v3386, %v3385
      %v3388 = vmul.f32 0.5, %v3387
      %v3389 = vsub.f32 1.5, %v3388
      %v3390 = vmul.f32 %v3385, %v3389
      %vm3391 = vweird.f32 %v3342
      %vm3392 = vweird.f32 %v3385
      %vm3393 = vmor %vm3391, %vm3392
      %v3394 = vsel %vm3393, %v3385, %v3390
      %v3395 = vrsqrt.pop %v3343
      %v3396 = vmul.f32 %v3395, %v3343
      %v3397 = vmul.f32 %v3396, %v3395
      %v3398 = vmul.f32 0.5, %v3397
      %v3399 = vsub.f32 1.5, %v3398
      %v3400 = vmul.f32 %v3395, %v3399
      %vm3401 = vweird.f32 %v3343
      %vm3402 = vweird.f32 %v3395
      %vm3403 = vmor %vm3401, %vm3402
      %v3404 = vsel %vm3403, %v3395, %v3400
      %v3405 = vrsqrt.pop %v3344
      %v3406 = vmul.f32 %v3405, %v3344
      %v3407 = vmul.f32 %v3406, %v3405
      %v3408 = vmul.f32 0.5, %v3407
      %v3409 = vsub.f32 1.5, %v3408
      %v3410 = vmul.f32 %v3405, %v3409
      %vm3411 = vweird.f32 %v3344
      %vm3412 = vweird.f32 %v3405
      %vm3413 = vmor %vm3411, %vm3412
      %v3414 = vsel %vm3413, %v3405, %v3410
      %v3415 = vrsqrt.pop %v3345
      %v3416 = vmul.f32 %v3415, %v3345
      %v3417 = vmul.f32 %v3416, %v3415
      %v3418 = vmul.f32 0.5, %v3417
      %v3419 = vsub.f32 1.5, %v3418
      %v3420 = vmul.f32 %v3415, %v3419
      %vm3421 = vweird.f32 %v3345
      %vm3422 = vweird.f32 %v3415
      %vm3423 = vmor %vm3421, %vm3422
      %v3424 = vsel %vm3423, %v3415, %v3420
      %v3425 = vrsqrt.pop %v3346
      %v3426 = vmul.f32 %v3425, %v3346
      %v3427 = vmul.f32 %v3426, %v3425
      %v3428 = vmul.f32 0.5, %v3427
      %v3429 = vsub.f32 1.5, %v3428
      %v3430 = vmul.f32 %v3425, %v3429
      %vm3431 = vweird.f32 %v3346
      %vm3432 = vweird.f32 %v3425
      %vm3433 = vmor %vm3431, %vm3432
      %v3434 = vsel %vm3433, %v3425, %v3430
      %v3435 = vrsqrt.pop %v3347
      %v3436 = vmul.f32 %v3435, %v3347
      %v3437 = vmul.f32 %v3436, %v3435
      %v3438 = vmul.f32 0.5, %v3437
      %v3439 = vsub.f32 1.5, %v3438
      %v3440 = vmul.f32 %v3435, %v3439
      %vm3441 = vweird.f32 %v3347
      %vm3442 = vweird.f32 %v3435
      %vm3443 = vmor %vm3441, %vm3442
      %v3444 = vsel %vm3443, %v3435, %v3440
      %v3445 = vrsqrt.pop %v3348
      %v3446 = vmul.f32 %v3445, %v3348
      %v3447 = vmul.f32 %v3446, %v3445
      %v3448 = vmul.f32 0.5, %v3447
      %v3449 = vsub.f32 1.5, %v3448
      %v3450 = vmul.f32 %v3445, %v3449
      %vm3451 = vweird.f32 %v3348
      %vm3452 = vweird.f32 %v3445
      %vm3453 = vmor %vm3451, %vm3452
      %v3454 = vsel %vm3453, %v3445, %v3450
      %v3455 = vrsqrt.pop %v3349
      %v3456 = vmul.f32 %v3455, %v3349
      %v3457 = vmul.f32 %v3456, %v3455
      %v3458 = vmul.f32 0.5, %v3457
      %v3459 = vsub.f32 1.5, %v3458
      %v3460 = vmul.f32 %v3455, %v3459
      %vm3461 = vweird.f32 %v3349
      %vm3462 = vweird.f32 %v3455
      %vm3463 = vmor %vm3461, %vm3462
      %v3464 = vsel %vm3463, %v3455, %v3460
      %v3465 = vrsqrt.pop %v3350
      %v3466 = vmul.f32 %v3465, %v3350
      %v3467 = vmul.f32 %v3466, %v3465
      %v3468 = vmul.f32 0.5, %v3467
      %v3469 = vsub.f32 1.5, %v3468
      %v3470 = vmul.f32 %v3465, %v3469
      %vm3471 = vweird.f32 %v3350
      %vm3472 = vweird.f32 %v3465
      %vm3473 = vmor %vm3471, %vm3472
      %v3474 = vsel %vm3473, %v3465, %v3470
      %v3475 = vrsqrt.pop %v3351
      %v3476 = vmul.f32 %v3475, %v3351
      %v3477 = vmul.f32 %v3476, %v3475
      %v3478 = vmul.f32 0.5, %v3477
      %v3479 = vsub.f32 1.5, %v3478
      %v3480 = vmul.f32 %v3475, %v3479
      %vm3481 = vweird.f32 %v3351
      %vm3482 = vweird.f32 %v3475
      %vm3483 = vmor %vm3481, %vm3482
      %v3484 = vsel %vm3483, %v3475, %v3480
      %v3485 = vrsqrt.pop %v3352
      %v3486 = vmul.f32 %v3485, %v3352
      %v3487 = vmul.f32 %v3486, %v3485
      %v3488 = vmul.f32 0.5, %v3487
      %v3489 = vsub.f32 1.5, %v3488
      %v3490 = vmul.f32 %v3485, %v3489
      %vm3491 = vweird.f32 %v3352
      %vm3492 = vweird.f32 %v3485
      %vm3493 = vmor %vm3491, %vm3492
      %v3494 = vsel %vm3493, %v3485, %v3490
      %v3495 = vrsqrt.pop %v3353
      %v3496 = vmul.f32 %v3495, %v3353
      %v3497 = vmul.f32 %v3496, %v3495
      %v3498 = vmul.f32 0.5, %v3497
      %v3499 = vsub.f32 1.5, %v3498
      %v3500 = vmul.f32 %v3495, %v3499
      %vm3501 = vweird.f32 %v3353
      %vm3502 = vweird.f32 %v3495
      %vm3503 = vmor %vm3501, %vm3502
      %v3504 = vsel %vm3503, %v3495, %v3500
      %v3505 = vrsqrt.pop %v3354
      %v3506 = vmul.f32 %v3505, %v3354
      %v3507 = vmul.f32 %v3506, %v3505
      %v3508 = vmul.f32 0.5, %v3507
      %v3509 = vsub.f32 1.5, %v3508
      %v3510 = vmul.f32 %v3505, %v3509
      %vm3511 = vweird.f32 %v3354
      %vm3512 = vweird.f32 %v3505
      %vm3513 = vmor %vm3511, %vm3512
      %v3514 = vsel %vm3513, %v3505, %v3510
      %v3515 = vmul.f32 %v3259, %v3364
      %v3516 = vmul.f32 %v3260, %v3374
      %v3517 = vmul.f32 %v3261, %v3384
      %v3518 = vmul.f32 %v3262, %v3394
      %v3519 = vmul.f32 %v3263, %v3404
      %v3520 = vmul.f32 %v3264, %v3414
      %v3521 = vmul.f32 %v3265, %v3424
      %v3522 = vmul.f32 %v3266, %v3434
      %v3523 = vmul.f32 %v3267, %v3444
      %v3524 = vmul.f32 %v3268, %v3454
      %v3525 = vmul.f32 %v3269, %v3464
      %v3526 = vmul.f32 %v3270, %v3474
      %v3527 = vmul.f32 %v3271, %v3484
      %v3528 = vmul.f32 %v3272, %v3494
      %v3529 = vmul.f32 %v3273, %v3504
      %v3530 = vmul.f32 %v3274, %v3514
      %v3532 = vperm.slane %v3209, 0
      %v3534 = vmul.f32 %v3515, %v3532
      %v3535 = vmul.f32 %v3516, %v3532
      %v3536 = vmul.f32 %v3517, %v3532
      %v3537 = vmul.f32 %v3518, %v3532
      %v3538 = vmul.f32 %v3519, %v3532
      %v3539 = vmul.f32 %v3520, %v3532
      %v3540 = vmul.f32 %v3521, %v3532
      %v3541 = vmul.f32 %v3522, %v3532
      %v3542 = vmul.f32 %v3523, %v3532
      %v3543 = vmul.f32 %v3524, %v3532
      %v3544 = vmul.f32 %v3525, %v3532
      %v3545 = vmul.f32 %v3526, %v3532
      %v3546 = vmul.f32 %v3527, %v3532
      %v3547 = vmul.f32 %v3528, %v3532
      %v3548 = vmul.f32 %v3529, %v3532
      %v3549 = vmul.f32 %v3530, %v3532
      %v3551 = vperm.slane %v3210, 0
      %v3553 = vadd.f32 %v3534, %v3551
      %v3554 = vadd.f32 %v3535, %v3551
      %v3555 = vadd.f32 %v3536, %v3551
      %v3556 = vadd.f32 %v3537, %v3551
      %v3557 = vadd.f32 %v3538, %v3551
      %v3558 = vadd.f32 %v3539, %v3551
      %v3559 = vadd.f32 %v3540, %v3551
      %v3560 = vadd.f32 %v3541, %v3551
      %v3561 = vadd.f32 %v3542, %v3551
      %v3562 = vadd.f32 %v3543, %v3551
      %v3563 = vadd.f32 %v3544, %v3551
      %v3564 = vadd.f32 %v3545, %v3551
      %v3565 = vadd.f32 %v3546, %v3551
      %v3566 = vadd.f32 %v3547, %v3551
      %v3567 = vadd.f32 %v3548, %v3551
      %v3568 = vadd.f32 %v3549, %v3551
      %v3569 = vpack.c.bf16 %v3553, %v3553
      %v3570 = vpack.c.bf16 %v3554, %v3554
      %v3571 = vpack.c.bf16 %v3555, %v3555
      %v3572 = vpack.c.bf16 %v3556, %v3556
      %v3573 = vpack.c.bf16 %v3557, %v3557
      %v3574 = vpack.c.bf16 %v3558, %v3558
      %v3575 = vpack.c.bf16 %v3559, %v3559
      %v3576 = vpack.c.bf16 %v3560, %v3560
      %v3577 = vpack.c.bf16 %v3561, %v3561
      %v3578 = vpack.c.bf16 %v3562, %v3562
      %v3579 = vpack.c.bf16 %v3563, %v3563
      %v3580 = vpack.c.bf16 %v3564, %v3564
      %v3581 = vpack.c.bf16 %v3565, %v3565
      %v3582 = vpack.c.bf16 %v3566, %v3566
      %v3583 = vpack.c.bf16 %v3567, %v3567
      %v3584 = vpack.c.bf16 %v3568, %v3568
      %3585 = vst [vmem:[%s496] sm:$0xf] %v3569
      %3586 = vst [vmem:[%s496 + $0x4] sm:$0xf] %v3570
      %3587 = vst [vmem:[%s496 + $0x8] sm:$0xf] %v3571
      %3588 = vst [vmem:[%s496 + $0xc] sm:$0xf] %v3572
      %3589 = vst [vmem:[%s496 + $0x10] sm:$0xf] %v3573
      %3590 = vst [vmem:[%s496 + $0x14] sm:$0xf] %v3574
      %3591 = vst [vmem:[%s496 + $0x18] sm:$0xf] %v3575
      %3592 = vst [vmem:[%s496 + $0x1c] sm:$0xf] %v3576
      %3593 = vst [vmem:[%s496 + $0x20] sm:$0xf] %v3577
      %3594 = vst [vmem:[%s496 + $0x24] sm:$0xf] %v3578
      %3595 = vst [vmem:[%s496 + $0x28] sm:$0xf] %v3579
      %3596 = vst [vmem:[%s496 + $0x2c] sm:$0xf] %v3580
      %3597 = vst [vmem:[%s496 + $0x30] sm:$0xf] %v3581
      %3598 = vst [vmem:[%s496 + $0x34] sm:$0xf] %v3582
      %3599 = vst [vmem:[%s496 + $0x38] sm:$0xf] %v3583
      %3600 = vst [vmem:[%s496 + $0x3c] sm:$0xf] %v3584
      %s3601 = smul.u32 8, %s25
      %p3602 = scmp.lt.s32.totalorder %s3601, 15
      %s3603 = scalar_select %p3602, %s3601, 15
      %s3604 = smul.addr %s3603, 2
      %s3605 = smul.addr %s3604, 4
      %s3606 = scalar_lea.vmem %s14, %s3605
      // Predicated region
      $region77: #{sliding_window_transformer.2} parent=75 // pred_check
        %p3607 = pneg %p347
      $region78: #{sliding_window_transformer.2} parent=75 // pred_check_branch
        %3609 = sbr.rel (%p3607) target = $region80
      $region79: #{sliding_window_transformer.2} parent=75 // pred_region
        %s3610 = smul.u32 8, %s25
      $region80: #{sliding_window_transformer.2} parent=75 // pred_fallthru
        _
    $region76: #{sliding_window_transformer.2} parent=5 // pred_fallthru
      _
    %p3611 = scmp.le.s32.totalorder 2, %s20
    // Predicated region
    $region81: #{sliding_window_transformer.2} parent=5 // pred_check
      %p3612 = pneg %p3611
    $region82: #{sliding_window_transformer.2} parent=5 // pred_check_branch
      %3614 = sbr.rel (%p3612) target = $region84
    $region83: #{sliding_window_transformer.2} parent=5 // pred_region
      %s3615 = ssub.s32 %s20, 2
      // Predicated region
      $region85: #{sliding_window_transformer.2} parent=83 // pred_check
        %p3616 = pneg %p353
      $region86: #{sliding_window_transformer.2} parent=83 // pred_check_branch
        %3618 = sbr.rel (%p3616) target = $region88
      $region87: #{sliding_window_transformer.2} parent=83 // pred_region
        %s3619 = smul.u32 8, %s26
        %p3620 = scmp.lt.s32.totalorder %s3619, 15
        %s3621 = scalar_select %p3620, %s3619, 15
        %s3622 = smul.addr %s3621, 2
        %s3623 = smul.addr %s3622, 4
        %s3624 = scalar_lea.vmem %s14, %s3623
      $region88: #{sliding_window_transformer.2} parent=83 // pred_fallthru
        _
    $region84: #{sliding_window_transformer.2} parent=5 // pred_fallthru
      _
  $region6: #{sliding_window_transformer.2} parent=0 // loop_footer
    %s24 = sadd.s32 1, %s20
  $region7: #{sliding_window_transformer.2} parent=0 // loop_footer_branch
    %19 = sbr.rel target = $region3
  $region8: #{sliding_window_transformer.2} parent=0 // loop_exit
    _

</llo_original>
